<compile_context>
chip_gen: v6e
topology: v6e:2x2x1
jax: 0.10.0
libtpu: 0.0.40
codegen_flags: <defaults>
</compile_context>

<pallas_src>
import functools

import jax
import jax.numpy as jnp
from jax.experimental import pallas as pl
from jax.experimental.pallas import tpu as pltpu

_EPS = 1e-5
_SLOPE = 0.2

# For a 4x4 / stride-2 / pad-1 conv, kernel offset a in {0,1,2,3} reads input
# rows 2u + a - 1.  For a fixed a those rows share one parity plane (rows r
# with r % 2 == _TAP_PLANE[a]) and form a unit-stride window starting at
# _TAP_START[a] inside the zero-padded plane (one pad row/col on each side).
_TAP_PLANE = (1, 0, 1, 0)
_TAP_START = (0, 1, 1, 2)


def _leaky(x):
    return jnp.where(x >= 0.0, x, _SLOPE * x)


def _batchnorm(y, gamma, beta, eps):
    """Train-mode BatchNorm over the row axis (biased variance), all in f32."""
    mean = jnp.mean(y, axis=0, keepdims=True)
    var = jnp.mean(jnp.square(y - mean), axis=0, keepdims=True)
    inv = jax.lax.rsqrt(var + eps)
    return (y - mean) * inv * gamma + beta


def _split_pad_planes(y):
    """[N, H, W, C] (H, W even) -> {(hp, wp): [N, H/2+2, W/2+2, C]} parity
    planes with one ring of zero padding:
        plane[(hp, wp)][n, a+1, b+1, :] == y[n, 2a+hp, 2b+wp, :].
    Uses only minor-dim-preserving reshapes, static indexing and concatenation
    (no strided slices, no transposes)."""
    n, h, w, c = y.shape
    hh, wh = h // 2, w // 2
    zr = jnp.zeros((n, 1, wh, c), y.dtype)
    zc = jnp.zeros((n, hh + 2, 1, c), y.dtype)
    yr = y.reshape(n, hh, 2, w, c)
    planes = {}
    for hp in range(2):
        rows = yr[:, :, hp, :, :]                       # [N, hh, W, C]
        rc = rows.reshape(n, hh, wh, 2, c)
        for wp in range(2):
            p = rc[:, :, :, wp, :]                      # [N, hh, wh, C]
            p = jnp.concatenate([zr, p, zr], axis=1)    # pad rows
            p = jnp.concatenate([zc, p, zc], axis=2)    # pad cols
            planes[(hp, wp)] = p                        # [N, hh+2, wh+2, C]
    return planes


def _s2_conv_patches(planes):
    """Patch matrix of a 4x4 / stride-2 / pad-1 conv built from the padded
    parity planes of its input.  Row order (n, u, v); column order
    (kh, kw, cin).  Returns [N*Ho*Wo, 16*Cin]."""
    slabs = []
    for i in range(4):
        r0 = _TAP_START[i]
        for j in range(4):
            c0 = _TAP_START[j]
            p = planes[(_TAP_PLANE[i], _TAP_PLANE[j])]
            oh, ow = p.shape[1] - 2, p.shape[2] - 2
            slabs.append(p[:, r0:r0 + oh, c0:c0 + ow, :])
    patch = jnp.concatenate(slabs, axis=-1)             # [N, Ho, Wo, 16*Cin]
    n, oh, ow, k = patch.shape
    return patch.reshape(n * oh * ow, k)


# ----------------------------------------------------------------------------
# Kernel 1: conv1 (C -> 64, k4 s2 p1) + LeakyReLU, gridded over batch
# ----------------------------------------------------------------------------
def _conv1_kernel(x_ref, w_ref, o_ref):
    """x_ref: [1, Hc, Wc, 4*Cin] bf16  (2x2 space-to-depth of the padded img)
       w_ref: [16*Cin, 64]       bf16  (taps concatenated along K)
       o_ref: [1, Ho*Wo, 64]     bf16
    """
    x = x_ref[0]
    hc, wc, k4 = x.shape
    ho, wo = hc - 1, wc - 1
    m = ho * wo
    slabs = [x[du:du + ho, dv:dv + wo, :].reshape(m, k4)
             for du in range(2) for dv in range(2)]
    patch = jnp.concatenate(slabs, axis=-1)             # [M, 16*Cin]
    y = jnp.dot(patch, w_ref[...], preferred_element_type=jnp.float32)
    o_ref[0] = _leaky(y).astype(o_ref.dtype)


def conv1_lrelu(x_s2d, w1c):
    n, hc, wc, k4 = x_s2d.shape
    kfull, cout = w1c.shape
    ho, wo = hc - 1, wc - 1
    m = ho * wo
    blk_bytes = (hc * wc * k4 + kfull * cout + m * cout) * 2
    cost = pl.CostEstimate(
        flops=2 * n * m * kfull * cout,
        transcendentals=0,
        bytes_accessed=2 * (x_s2d.size + w1c.size + n * m * cout),
    )
    return pl.pallas_call(
        _conv1_kernel,
        out_shape=jax.ShapeDtypeStruct((n, m, cout), jnp.bfloat16),
        grid=(n,),
        in_specs=[
            pl.BlockSpec((1, hc, wc, k4), lambda i: (i, 0, 0, 0)),
            pl.BlockSpec((kfull, cout), lambda i: (0, 0)),
        ],
        out_specs=pl.BlockSpec((1, m, cout), lambda i: (i, 0, 0)),
        compiler_params=pltpu.CompilerParams(
            dimension_semantics=("parallel",),
            vmem_limit_bytes=int(min(32 * 2**20, max(16 * 2**20, 8 * blk_bytes))),
        ),
        cost_estimate=cost,
    )(x_s2d, w1c)


# ----------------------------------------------------------------------------
# Kernel 2 (fused): conv2+LReLU+BN(128) + conv3+LReLU+BN(256)
#                   + conv4 (4x4 valid, Cout=1) + Sigmoid, whole batch
# ----------------------------------------------------------------------------
def _fused_tail_kernel(a1_ref, w2_ref, g2_ref, b2_ref, w3_ref, g3_ref, b3_ref,
                       w4_ref, o_ref, *, eps):
    """a1_ref: [N, 16, 16, 64] bf16     w2_ref: [1024, 128] bf16
       w3_ref: [2048, 256] bf16         w4_ref: [16, 256] f32
       g*/b*:  [1, C] f32               o_ref:  [N, 1] f32
    Whole batch in one block so train-mode BatchNorm statistics are exact."""
    a1 = a1_ref[...]
    n = a1.shape[0]

    # conv2: one [N*64, 1024] @ [1024, 128] MXU matmul (bf16 in, f32 acc)
    p2 = _s2_conv_patches(_split_pad_planes(a1))
    y2 = jnp.dot(p2, w2_ref[...], preferred_element_type=jnp.float32)
    y2 = _batchnorm(_leaky(y2), g2_ref[...], b2_ref[...], eps)   # [N*64, 128]

    # conv3: one [N*16, 2048] @ [2048, 256] MXU matmul
    h2 = a1.shape[1] // 2
    y2b = y2.astype(jnp.bfloat16).reshape(n, h2, h2, y2.shape[-1])
    p3 = _s2_conv_patches(_split_pad_planes(y2b))
    y3 = jnp.dot(p3, w3_ref[...], preferred_element_type=jnp.float32)
    y3 = _batchnorm(_leaky(y3), g3_ref[...], b3_ref[...], eps)   # [N*16, 256]

    # conv4 (256 -> 1, 4x4 valid) as a VPU multiply + reduce, then sigmoid.
    kk, c3 = w4_ref.shape                                        # 16, 256
    t = y3.reshape(n, kk, c3) * w4_ref[...][None, :, :]
    logits = jnp.sum(jnp.sum(t, axis=2), axis=1, keepdims=True)  # [N, 1]
    o_ref[...] = jax.nn.sigmoid(logits).astype(o_ref.dtype)


def fused_tail(a1, w2m, g2, b2, w3m, g3, b3, w4f, eps=_EPS):
    n, h1, _, _ = a1.shape
    h2, h3 = h1 // 2, h1 // 4
    c2, c3 = w2m.shape[1], w3m.shape[1]
    m2, m3 = n * h2 * h2, n * h3 * h3

    # Explicit VMEM budget computed from the actual block sizes (+ slack for
    # the per-tap slab copies Mosaic materializes).
    act_bytes = (a1.size * 2 + m2 * w2m.shape[0] * 2 + m2 * c2 * 4
                 + m3 * w3m.shape[0] * 2 + m3 * c3 * 4)
    wgt_bytes = (w2m.size + w3m.size) * 2 + (w4f.size + 2 * (c2 + c3)) * 4
    vlim = int(min(48 * 2**20, max(16 * 2**20, 4 * act_bytes + 2 * wgt_bytes)))

    cost = pl.CostEstimate(
        flops=2 * (m2 * w2m.shape[0] * c2 + m3 * w3m.shape[0] * c3
                   + n * w4f.size) + 12 * (m2 * c2 + m3 * c3),
        transcendentals=c2 + c3 + n,
        bytes_accessed=act_bytes + wgt_bytes + n * 4,
    )
    return pl.pallas_call(
        functools.partial(_fused_tail_kernel, eps=eps),
        out_shape=jax.ShapeDtypeStruct((n, 1), jnp.float32),
        in_specs=[pl.BlockSpec(memory_space=pltpu.MemorySpace.VMEM)] * 8,
        out_specs=pl.BlockSpec(memory_space=pltpu.MemorySpace.VMEM),
        compiler_params=pltpu.CompilerParams(vmem_limit_bytes=vlim),
        cost_estimate=cost,
    )(a1, w2m, g2, b2, w3m, g3, b3, w4f)


# ----------------------------------------------------------------------------
# Plain-JAX glue (input layer only) and full forward pass
# ----------------------------------------------------------------------------
def _space_to_depth_pad(x, pad=1):
    """[N,H,W,C] -> pad spatially by `pad`, then 2x2 space-to-depth:
       out[n, u, v, (p*2+q)*C + c] = xpad[n, 2u+p, 2v+q, c]."""
    n, h, w, c = x.shape
    xp = jnp.pad(x, ((0, 0), (pad, pad), (pad, pad), (0, 0)))
    hp, wp = h + 2 * pad, w + 2 * pad
    xs = xp.reshape(n, hp // 2, 2, wp // 2, 2, c)
    xs = jnp.transpose(xs, (0, 1, 3, 2, 4, 5))
    return xs.reshape(n, hp // 2, wp // 2, 4 * c)


def discriminator_forward(img_nchw, params):
    x = jnp.transpose(img_nchw, (0, 2, 3, 1)).astype(jnp.float32)  # NCHW->NHWC
    n, h = x.shape[0], x.shape[1]

    # conv1 (C -> 64) + LeakyReLU, gridded over batch.
    x1 = _space_to_depth_pad(x).astype(jnp.bfloat16)          # [N, 17, 17, 4C]
    a1 = conv1_lrelu(x1, params["w1c"])                        # [N, 256, 64] bf16
    a1 = a1.reshape(n, h // 2, h // 2, a1.shape[-1])           # layout-identical

    # conv2 + LReLU + BN(128) + conv3 + LReLU + BN(256) + conv4 + Sigmoid.
    prob = fused_tail(a1, params["w2m"], params["g2"], params["b2"],
                      params["w3m"], params["g3"], params["b3"], params["w4f"])
    return prob.reshape(n, 1, 1, 1)


# ----------------------------------------------------------------------------
# Parameter init: weights packed (and cast to bf16 for the MXU) once here
# ----------------------------------------------------------------------------
def _pack_conv1(w_oihw):
    """[64, Cin, 4, 4] -> [16*Cin, 64]; K blocks ordered (du, dv), inside a
    block (p, q, cin) -- matches the kernel's space-to-depth tap concat."""
    cout, cin, _, _ = w_oihw.shape
    w_hwio = jnp.transpose(w_oihw, (2, 3, 1, 0))               # [kh, kw, Cin, Cout]
    taps = [w_hwio[2 * du:2 * du + 2, 2 * dv:2 * dv + 2].reshape(4 * cin, cout)
            for du in range(2) for dv in range(2)]
    return jnp.concatenate(taps, axis=0)


def _pack_matmul(w_oihw):
    """[Cout, Cin, 4, 4] -> [16*Cin, Cout] in (kh, kw, cin) row order --
    matches the column order produced by _s2_conv_patches."""
    cout, cin, kh, kw = w_oihw.shape
    return jnp.transpose(w_oihw, (2, 3, 1, 0)).reshape(kh * kw * cin, cout)


def init_params(key, channels):
    ks = jax.random.split(key, 4)
    std = 0.02  # DCGAN-style init, deterministic given the key
    w1 = std * jax.random.normal(ks[0], (64, channels, 4, 4), jnp.float32)
    w2 = std * jax.random.normal(ks[1], (128, 64, 4, 4), jnp.float32)
    w3 = std * jax.random.normal(ks[2], (256, 128, 4, 4), jnp.float32)
    w4 = std * jax.random.normal(ks[3], (1, 256, 4, 4), jnp.float32)
    return {
        # MXU operands in bf16 (f32 accumulation inside the kernels).
        "w1c": _pack_conv1(w1).astype(jnp.bfloat16),               # [16C, 64]
        "w2m": _pack_matmul(w2).astype(jnp.bfloat16),              # [1024, 128]
        "w3m": _pack_matmul(w3).astype(jnp.bfloat16),              # [2048, 256]
        # conv4 runs on the VPU -> keep f32.
        "w4f": jnp.transpose(w4[0], (1, 2, 0)).reshape(16, 256),   # [16, 256]
        # BatchNorm affine params: PyTorch defaults weight=1, bias=0.
        "g2": jnp.ones((1, 128), jnp.float32),
        "b2": jnp.zeros((1, 128), jnp.float32),
        "g3": jnp.ones((1, 256), jnp.float32),
        "b3": jnp.zeros((1, 256), jnp.float32),
    }


if __name__ == "__main__":
    # batch=2, channels=4, img_size=32 (the smallest size for which the
    # final 4x4 valid conv is well defined: 32 -> 16 -> 8 -> 4 -> 1).
    batch, channels, img_size = 2, 4, 32

    key = jax.random.PRNGKey(0)
    k_img, k_par = jax.random.split(key)
    img = jax.random.normal(k_img, (batch, channels, img_size, img_size), jnp.float32)
    params = init_params(k_par, channels)

    prob = jax.jit(discriminator_forward)(img, params)
    prob = jax.block_until_ready(prob)

    assert prob.shape == (batch, 1, 1, 1), prob.shape
    assert bool(jnp.all(jnp.isfinite(prob)))
    assert bool(jnp.all((prob >= 0.0) & (prob <= 1.0)))
    print("KERNEL_OK")
</pallas_src>

<mosaic_0001>
module attributes {stable_mosaic.version = 11 : i64} {
  func.func @_conv1_kernel(%arg0: i32, %arg1: memref<1x17x17x16xbf16, #tpu.memory_space<vmem>>, %arg2: memref<64x64xbf16, #tpu.memory_space<vmem>>, %arg3: memref<1x256x64xbf16, #tpu.memory_space<vmem>>) attributes {dimension_semantics = [#tpu.dimension_semantics<parallel>], iteration_bounds = array<i64: 2>, scalar_prefetch = 0 : i64, scratch_operands = 0 : i64, tpu.core_type = #tpu.core_type<tc>, window_params = [{transform_indices = @transform_0, window_bounds = array<i64: 1, 17, 17, 16>}, {pipeline_mode = #tpu.pipeline_mode<synchronous>, transform_indices = @transform_1, window_bounds = array<i64: 64, 64>}, {transform_indices = @transform_2, window_bounds = array<i64: 1, 256, 64>}]} {
    %c0 = arith.constant 0 : index
    %c0_0 = arith.constant 0 : index
    %c0_1 = arith.constant 0 : index
    %c0_2 = arith.constant 0 : index
    %0 = vector.load %arg1[%c0, %c0_0, %c0_1, %c0_2] : memref<1x17x17x16xbf16, #tpu.memory_space<vmem>>, vector<1x17x17x16xbf16>
    %1 = vector.shape_cast %0 : vector<1x17x17x16xbf16> to vector<17x17x16xbf16>
    %2 = vector.extract_strided_slice %1 {offsets = [0, 0, 0], sizes = [16, 16, 16], strides = [1, 1, 1]} : vector<17x17x16xbf16> to vector<16x16x16xbf16>
    %3 = vector.shape_cast %2 : vector<16x16x16xbf16> to vector<256x16xbf16>
    %4 = vector.extract_strided_slice %1 {offsets = [0, 1, 0], sizes = [16, 16, 16], strides = [1, 1, 1]} : vector<17x17x16xbf16> to vector<16x16x16xbf16>
    %5 = vector.shape_cast %4 : vector<16x16x16xbf16> to vector<256x16xbf16>
    %6 = vector.extract_strided_slice %1 {offsets = [1, 0, 0], sizes = [16, 16, 16], strides = [1, 1, 1]} : vector<17x17x16xbf16> to vector<16x16x16xbf16>
    %7 = vector.shape_cast %6 : vector<16x16x16xbf16> to vector<256x16xbf16>
    %8 = vector.extract_strided_slice %1 {offsets = [1, 1, 0], sizes = [16, 16, 16], strides = [1, 1, 1]} : vector<17x17x16xbf16> to vector<16x16x16xbf16>
    %9 = vector.shape_cast %8 : vector<16x16x16xbf16> to vector<256x16xbf16>
    %10 = tpu.concatenate %3, %5, %7, %9 in 1 : vector<256x16xbf16>, vector<256x16xbf16>, vector<256x16xbf16>, vector<256x16xbf16> -> vector<256x64xbf16>
    %c0_3 = arith.constant 0 : index
    %c0_4 = arith.constant 0 : index
    %11 = vector.load %arg2[%c0_3, %c0_4] : memref<64x64xbf16, #tpu.memory_space<vmem>>, vector<64x64xbf16>
    %cst = arith.constant dense<0.000000e+00> : vector<256x64xf32>
    %12 = tpu.matmul %10, %11, %cst {dimension_numbers = #tpu.dot_dimension_numbers<[1], [0], [0], [1], [0, 0, 1, 1], [], []>} : vector<256x64xbf16>, vector<64x64xbf16>, vector<256x64xf32> -> vector<256x64xf32>
    %cst_5 = arith.constant 0.000000e+00 : f32
    %13 = vector.broadcast %cst_5 : f32 to vector<256x64xf32>
    %14 = arith.cmpf oge, %12, %13 : vector<256x64xf32>
    %cst_6 = arith.constant 2.000000e-01 : f32
    %15 = vector.broadcast %cst_6 : f32 to vector<256x64xf32>
    %16 = arith.mulf %15, %12 : vector<256x64xf32>
    %17 = arith.select %14, %12, %16 : vector<256x64xi1>, vector<256x64xf32>
    %18 = arith.truncf %17 : vector<256x64xf32> to vector<256x64xbf16>
    %c0_7 = arith.constant 0 : index
    %c0_8 = arith.constant 0 : index
    %c0_9 = arith.constant 0 : index
    %19 = vector.load %arg3[%c0_7, %c0_8, %c0_9] : memref<1x256x64xbf16, #tpu.memory_space<vmem>>, vector<1x256x64xbf16>
    %20 = vector.shape_cast %19 : vector<1x256x64xbf16> to vector<256x64xbf16>
    %21 = vector.shape_cast %18 : vector<256x64xbf16> to vector<1x256x64xbf16>
    tpu.vector_store %arg3[%c0_7, %c0_8, %c0_9], %21 {strides = array<i32>} : memref<1x256x64xbf16, #tpu.memory_space<vmem>>, vector<1x256x64xbf16>,
    return
  }
  func.func @transform_0(%arg0: i32) -> (i32, i32, i32, i32) {
    %c0_i32 = arith.constant 0 : i32
    %c0_i32_0 = arith.constant 0 : i32
    %c0_i32_1 = arith.constant 0 : i32
    %c0_i32_2 = arith.constant 0 : i32
    return %arg0, %c0_i32, %c0_i32_0, %c0_i32_1 : i32, i32, i32, i32
  }
  func.func @transform_1(%arg0: i32) -> (i32, i32) {
    %c0_i32 = arith.constant 0 : i32
    %c0_i32_0 = arith.constant 0 : i32
    %c0_i32_1 = arith.constant 0 : i32
    return %c0_i32, %c0_i32_0 : i32, i32
  }
  func.func @transform_2(%arg0: i32) -> (i32, i32, i32) {
    %c0_i32 = arith.constant 0 : i32
    %c0_i32_0 = arith.constant 0 : i32
    %c0_i32_1 = arith.constant 0 : i32
    return %arg0, %c0_i32, %c0_i32_0 : i32, i32, i32
  }
}

module attributes {stable_mosaic.version = 11 : i64} {
  func.func @_fused_tail_kernel(%arg0: memref<2x16x16x64xbf16, #tpu.memory_space<vmem>>, %arg1: memref<1024x128xbf16, #tpu.memory_space<vmem>>, %arg2: memref<1x128xf32, #tpu.memory_space<vmem>>, %arg3: memref<1x128xf32, #tpu.memory_space<vmem>>, %arg4: memref<2048x256xbf16, #tpu.memory_space<vmem>>, %arg5: memref<1x256xf32, #tpu.memory_space<vmem>>, %arg6: memref<1x256xf32, #tpu.memory_space<vmem>>, %arg7: memref<16x256xf32, #tpu.memory_space<vmem>>, %arg8: memref<2x1xf32, #tpu.memory_space<vmem>>) attributes {dimension_semantics = [], scalar_prefetch = 0 : i64, scratch_operands = 0 : i64, tpu.core_type = #tpu.core_type<tc>} {
    %c0 = arith.constant 0 : index
    %c0_0 = arith.constant 0 : index
    %c0_1 = arith.constant 0 : index
    %c0_2 = arith.constant 0 : index
    %0 = vector.load %arg0[%c0, %c0_0, %c0_1, %c0_2] : memref<2x16x16x64xbf16, #tpu.memory_space<vmem>>, vector<2x16x16x64xbf16>
    %cst = arith.constant 0.000000e+00 : bf16
    %1 = vector.broadcast %cst : bf16 to vector<2x1x8x64xbf16>
    %cst_3 = arith.constant 0.000000e+00 : bf16
    %2 = vector.broadcast %cst_3 : bf16 to vector<2x10x1x64xbf16>
    %3 = vector.shape_cast %0 : vector<2x16x16x64xbf16> to vector<2x8x2x16x64xbf16>
    %4 = vector.extract_strided_slice %3 {offsets = [0, 0, 0, 0, 0], sizes = [2, 8, 1, 16, 64], strides = [1, 1, 1, 1, 1]} : vector<2x8x2x16x64xbf16> to vector<2x8x1x16x64xbf16>
    %5 = vector.shape_cast %4 : vector<2x8x1x16x64xbf16> to vector<2x8x16x64xbf16>
    %6 = vector.shape_cast %5 : vector<2x8x16x64xbf16> to vector<2x8x8x2x64xbf16>
    %7 = vector.extract_strided_slice %6 {offsets = [0, 0, 0, 0, 0], sizes = [2, 8, 8, 1, 64], strides = [1, 1, 1, 1, 1]} : vector<2x8x8x2x64xbf16> to vector<2x8x8x1x64xbf16>
    %8 = vector.shape_cast %7 : vector<2x8x8x1x64xbf16> to vector<2x8x8x64xbf16>
    %9 = tpu.concatenate %1, %8, %1 in 1 : vector<2x1x8x64xbf16>, vector<2x8x8x64xbf16>, vector<2x1x8x64xbf16> -> vector<2x10x8x64xbf16>
    %10 = tpu.concatenate %2, %9, %2 in 2 : vector<2x10x1x64xbf16>, vector<2x10x8x64xbf16>, vector<2x10x1x64xbf16> -> vector<2x10x10x64xbf16>
    %11 = vector.extract_strided_slice %6 {offsets = [0, 0, 0, 1, 0], sizes = [2, 8, 8, 1, 64], strides = [1, 1, 1, 1, 1]} : vector<2x8x8x2x64xbf16> to vector<2x8x8x1x64xbf16>
    %12 = vector.shape_cast %11 : vector<2x8x8x1x64xbf16> to vector<2x8x8x64xbf16>
    %13 = tpu.concatenate %1, %12, %1 in 1 : vector<2x1x8x64xbf16>, vector<2x8x8x64xbf16>, vector<2x1x8x64xbf16> -> vector<2x10x8x64xbf16>
    %14 = tpu.concatenate %2, %13, %2 in 2 : vector<2x10x1x64xbf16>, vector<2x10x8x64xbf16>, vector<2x10x1x64xbf16> -> vector<2x10x10x64xbf16>
    %15 = vector.extract_strided_slice %3 {offsets = [0, 0, 1, 0, 0], sizes = [2, 8, 1, 16, 64], strides = [1, 1, 1, 1, 1]} : vector<2x8x2x16x64xbf16> to vector<2x8x1x16x64xbf16>
    %16 = vector.shape_cast %15 : vector<2x8x1x16x64xbf16> to vector<2x8x16x64xbf16>
    %17 = vector.shape_cast %16 : vector<2x8x16x64xbf16> to vector<2x8x8x2x64xbf16>
    %18 = vector.extract_strided_slice %17 {offsets = [0, 0, 0, 0, 0], sizes = [2, 8, 8, 1, 64], strides = [1, 1, 1, 1, 1]} : vector<2x8x8x2x64xbf16> to vector<2x8x8x1x64xbf16>
    %19 = vector.shape_cast %18 : vector<2x8x8x1x64xbf16> to vector<2x8x8x64xbf16>
    %20 = tpu.concatenate %1, %19, %1 in 1 : vector<2x1x8x64xbf16>, vector<2x8x8x64xbf16>, vector<2x1x8x64xbf16> -> vector<2x10x8x64xbf16>
    %21 = tpu.concatenate %2, %20, %2 in 2 : vector<2x10x1x64xbf16>, vector<2x10x8x64xbf16>, vector<2x10x1x64xbf16> -> vector<2x10x10x64xbf16>
    %22 = vector.extract_strided_slice %17 {offsets = [0, 0, 0, 1, 0], sizes = [2, 8, 8, 1, 64], strides = [1, 1, 1, 1, 1]} : vector<2x8x8x2x64xbf16> to vector<2x8x8x1x64xbf16>
    %23 = vector.shape_cast %22 : vector<2x8x8x1x64xbf16> to vector<2x8x8x64xbf16>
    %24 = tpu.concatenate %1, %23, %1 in 1 : vector<2x1x8x64xbf16>, vector<2x8x8x64xbf16>, vector<2x1x8x64xbf16> -> vector<2x10x8x64xbf16>
    %25 = tpu.concatenate %2, %24, %2 in 2 : vector<2x10x1x64xbf16>, vector<2x10x8x64xbf16>, vector<2x10x1x64xbf16> -> vector<2x10x10x64xbf16>
    %26 = vector.extract_strided_slice %25 {offsets = [0, 0, 0, 0], sizes = [2, 8, 8, 64], strides = [1, 1, 1, 1]} : vector<2x10x10x64xbf16> to vector<2x8x8x64xbf16>
    %27 = vector.extract_strided_slice %21 {offsets = [0, 0, 1, 0], sizes = [2, 8, 8, 64], strides = [1, 1, 1, 1]} : vector<2x10x10x64xbf16> to vector<2x8x8x64xbf16>
    %28 = vector.extract_strided_slice %25 {offsets = [0, 0, 1, 0], sizes = [2, 8, 8, 64], strides = [1, 1, 1, 1]} : vector<2x10x10x64xbf16> to vector<2x8x8x64xbf16>
    %29 = vector.extract_strided_slice %21 {offsets = [0, 0, 2, 0], sizes = [2, 8, 8, 64], strides = [1, 1, 1, 1]} : vector<2x10x10x64xbf16> to vector<2x8x8x64xbf16>
    %30 = vector.extract_strided_slice %14 {offsets = [0, 1, 0, 0], sizes = [2, 8, 8, 64], strides = [1, 1, 1, 1]} : vector<2x10x10x64xbf16> to vector<2x8x8x64xbf16>
    %31 = vector.extract_strided_slice %10 {offsets = [0, 1, 1, 0], sizes = [2, 8, 8, 64], strides = [1, 1, 1, 1]} : vector<2x10x10x64xbf16> to vector<2x8x8x64xbf16>
    %32 = vector.extract_strided_slice %14 {offsets = [0, 1, 1, 0], sizes = [2, 8, 8, 64], strides = [1, 1, 1, 1]} : vector<2x10x10x64xbf16> to vector<2x8x8x64xbf16>
    %33 = vector.extract_strided_slice %10 {offsets = [0, 1, 2, 0], sizes = [2, 8, 8, 64], strides = [1, 1, 1, 1]} : vector<2x10x10x64xbf16> to vector<2x8x8x64xbf16>
    %34 = vector.extract_strided_slice %25 {offsets = [0, 1, 0, 0], sizes = [2, 8, 8, 64], strides = [1, 1, 1, 1]} : vector<2x10x10x64xbf16> to vector<2x8x8x64xbf16>
    %35 = vector.extract_strided_slice %21 {offsets = [0, 1, 1, 0], sizes = [2, 8, 8, 64], strides = [1, 1, 1, 1]} : vector<2x10x10x64xbf16> to vector<2x8x8x64xbf16>
    %36 = vector.extract_strided_slice %25 {offsets = [0, 1, 1, 0], sizes = [2, 8, 8, 64], strides = [1, 1, 1, 1]} : vector<2x10x10x64xbf16> to vector<2x8x8x64xbf16>
    %37 = vector.extract_strided_slice %21 {offsets = [0, 1, 2, 0], sizes = [2, 8, 8, 64], strides = [1, 1, 1, 1]} : vector<2x10x10x64xbf16> to vector<2x8x8x64xbf16>
    %38 = vector.extract_strided_slice %14 {offsets = [0, 2, 0, 0], sizes = [2, 8, 8, 64], strides = [1, 1, 1, 1]} : vector<2x10x10x64xbf16> to vector<2x8x8x64xbf16>
    %39 = vector.extract_strided_slice %10 {offsets = [0, 2, 1, 0], sizes = [2, 8, 8, 64], strides = [1, 1, 1, 1]} : vector<2x10x10x64xbf16> to vector<2x8x8x64xbf16>
    %40 = vector.extract_strided_slice %14 {offsets = [0, 2, 1, 0], sizes = [2, 8, 8, 64], strides = [1, 1, 1, 1]} : vector<2x10x10x64xbf16> to vector<2x8x8x64xbf16>
    %41 = vector.extract_strided_slice %10 {offsets = [0, 2, 2, 0], sizes = [2, 8, 8, 64], strides = [1, 1, 1, 1]} : vector<2x10x10x64xbf16> to vector<2x8x8x64xbf16>
    %42 = tpu.concatenate %26, %27, %28, %29, %30, %31, %32, %33, %34, %35, %36, %37, %38, %39, %40, %41 in 3 : vector<2x8x8x64xbf16>, vector<2x8x8x64xbf16>, vector<2x8x8x64xbf16>, vector<2x8x8x64xbf16>, vector<2x8x8x64xbf16>, vector<2x8x8x64xbf16>, vector<2x8x8x64xbf16>, vector<2x8x8x64xbf16>, vector<2x8x8x64xbf16>, vector<2x8x8x64xbf16>, vector<2x8x8x64xbf16>, vector<2x8x8x64xbf16>, vector<2x8x8x64xbf16>, vector<2x8x8x64xbf16>, vector<2x8x8x64xbf16>, vector<2x8x8x64xbf16> -> vector<2x8x8x1024xbf16>
    %43 = vector.shape_cast %42 : vector<2x8x8x1024xbf16> to vector<128x1024xbf16>
    %c0_4 = arith.constant 0 : index
    %c0_5 = arith.constant 0 : index
    %44 = vector.load %arg1[%c0_4, %c0_5] : memref<1024x128xbf16, #tpu.memory_space<vmem>>, vector<1024x128xbf16>
    %cst_6 = arith.constant dense<0.000000e+00> : vector<128x128xf32>
    %45 = tpu.matmul %43, %44, %cst_6 {dimension_numbers = #tpu.dot_dimension_numbers<[1], [0], [0], [1], [0, 0, 1, 1], [], []>} : vector<128x1024xbf16>, vector<1024x128xbf16>, vector<128x128xf32> -> vector<128x128xf32>
    %cst_7 = arith.constant 0.000000e+00 : f32
    %46 = vector.broadcast %cst_7 : f32 to vector<128x128xf32>
    %47 = arith.cmpf oge, %45, %46 : vector<128x128xf32>
    %cst_8 = arith.constant 2.000000e-01 : f32
    %48 = vector.broadcast %cst_8 : f32 to vector<128x128xf32>
    %49 = arith.mulf %48, %45 : vector<128x128xf32>
    %50 = arith.select %47, %45, %49 : vector<128x128xi1>, vector<128x128xf32>
    %c0_9 = arith.constant 0 : index
    %c0_10 = arith.constant 0 : index
    %51 = vector.load %arg2[%c0_9, %c0_10] : memref<1x128xf32, #tpu.memory_space<vmem>>, vector<1x128xf32>
    %c0_11 = arith.constant 0 : index
    %c0_12 = arith.constant 0 : index
    %52 = vector.load %arg3[%c0_11, %c0_12] : memref<1x128xf32, #tpu.memory_space<vmem>>, vector<1x128xf32>
    %cst_13 = arith.constant dense<0.000000e+00> : vector<128xf32>
    %53 = vector.multi_reduction <add>, %50, %cst_13 [0] : vector<128x128xf32> to vector<128xf32>
    %54 = vector.shape_cast %53 : vector<128xf32> to vector<1x128xf32>
    %cst_14 = arith.constant 1.280000e+02 : f32
    %55 = vector.broadcast %cst_14 : f32 to vector<1x128xf32>
    %56 = arith.divf %54, %55 : vector<1x128xf32>
    %57 = vector.broadcast %56 : vector<1x128xf32> to vector<128x128xf32>
    %58 = arith.subf %50, %57 : vector<128x128xf32>
    %59 = arith.mulf %58, %58 : vector<128x128xf32>
    %cst_15 = arith.constant dense<0.000000e+00> : vector<128xf32>
    %60 = vector.multi_reduction <add>, %59, %cst_15 [0] : vector<128x128xf32> to vector<128xf32>
    %61 = vector.shape_cast %60 : vector<128xf32> to vector<1x128xf32>
    %cst_16 = arith.constant 1.280000e+02 : f32
    %62 = vector.broadcast %cst_16 : f32 to vector<1x128xf32>
    %63 = arith.divf %61, %62 : vector<1x128xf32>
    %cst_17 = arith.constant 9.99999974E-6 : f32
    %64 = vector.broadcast %cst_17 : f32 to vector<1x128xf32>
    %65 = arith.addf %63, %64 : vector<1x128xf32>
    %66 = math.rsqrt %65 : vector<1x128xf32>
    %67 = vector.broadcast %56 : vector<1x128xf32> to vector<128x128xf32>
    %68 = arith.subf %50, %67 : vector<128x128xf32>
    %69 = vector.broadcast %66 : vector<1x128xf32> to vector<128x128xf32>
    %70 = arith.mulf %68, %69 : vector<128x128xf32>
    %71 = vector.broadcast %51 : vector<1x128xf32> to vector<128x128xf32>
    %72 = arith.mulf %70, %71 : vector<128x128xf32>
    %73 = vector.broadcast %52 : vector<1x128xf32> to vector<128x128xf32>
    %74 = arith.addf %72, %73 : vector<128x128xf32>
    %75 = arith.truncf %74 : vector<128x128xf32> to vector<128x128xbf16>
    %76 = vector.shape_cast %75 : vector<128x128xbf16> to vector<2x8x8x128xbf16>
    %cst_18 = arith.constant 0.000000e+00 : bf16
    %77 = vector.broadcast %cst_18 : bf16 to vector<2x1x4x128xbf16>
    %cst_19 = arith.constant 0.000000e+00 : bf16
    %78 = vector.broadcast %cst_19 : bf16 to vector<2x6x1x128xbf16>
    %79 = vector.shape_cast %76 : vector<2x8x8x128xbf16> to vector<2x4x2x8x128xbf16>
    %80 = vector.extract_strided_slice %79 {offsets = [0, 0, 0, 0, 0], sizes = [2, 4, 1, 8, 128], strides = [1, 1, 1, 1, 1]} : vector<2x4x2x8x128xbf16> to vector<2x4x1x8x128xbf16>
    %81 = vector.shape_cast %80 : vector<2x4x1x8x128xbf16> to vector<2x4x8x128xbf16>
    %82 = vector.shape_cast %81 : vector<2x4x8x128xbf16> to vector<2x4x4x2x128xbf16>
    %83 = vector.extract_strided_slice %82 {offsets = [0, 0, 0, 0, 0], sizes = [2, 4, 4, 1, 128], strides = [1, 1, 1, 1, 1]} : vector<2x4x4x2x128xbf16> to vector<2x4x4x1x128xbf16>
    %84 = vector.shape_cast %83 : vector<2x4x4x1x128xbf16> to vector<2x4x4x128xbf16>
    %85 = tpu.concatenate %77, %84, %77 in 1 : vector<2x1x4x128xbf16>, vector<2x4x4x128xbf16>, vector<2x1x4x128xbf16> -> vector<2x6x4x128xbf16>
    %86 = tpu.concatenate %78, %85, %78 in 2 : vector<2x6x1x128xbf16>, vector<2x6x4x128xbf16>, vector<2x6x1x128xbf16> -> vector<2x6x6x128xbf16>
    %87 = vector.extract_strided_slice %82 {offsets = [0, 0, 0, 1, 0], sizes = [2, 4, 4, 1, 128], strides = [1, 1, 1, 1, 1]} : vector<2x4x4x2x128xbf16> to vector<2x4x4x1x128xbf16>
    %88 = vector.shape_cast %87 : vector<2x4x4x1x128xbf16> to vector<2x4x4x128xbf16>
    %89 = tpu.concatenate %77, %88, %77 in 1 : vector<2x1x4x128xbf16>, vector<2x4x4x128xbf16>, vector<2x1x4x128xbf16> -> vector<2x6x4x128xbf16>
    %90 = tpu.concatenate %78, %89, %78 in 2 : vector<2x6x1x128xbf16>, vector<2x6x4x128xbf16>, vector<2x6x1x128xbf16> -> vector<2x6x6x128xbf16>
    %91 = vector.extract_strided_slice %79 {offsets = [0, 0, 1, 0, 0], sizes = [2, 4, 1, 8, 128], strides = [1, 1, 1, 1, 1]} : vector<2x4x2x8x128xbf16> to vector<2x4x1x8x128xbf16>
    %92 = vector.shape_cast %91 : vector<2x4x1x8x128xbf16> to vector<2x4x8x128xbf16>
    %93 = vector.shape_cast %92 : vector<2x4x8x128xbf16> to vector<2x4x4x2x128xbf16>
    %94 = vector.extract_strided_slice %93 {offsets = [0, 0, 0, 0, 0], sizes = [2, 4, 4, 1, 128], strides = [1, 1, 1, 1, 1]} : vector<2x4x4x2x128xbf16> to vector<2x4x4x1x128xbf16>
    %95 = vector.shape_cast %94 : vector<2x4x4x1x128xbf16> to vector<2x4x4x128xbf16>
    %96 = tpu.concatenate %77, %95, %77 in 1 : vector<2x1x4x128xbf16>, vector<2x4x4x128xbf16>, vector<2x1x4x128xbf16> -> vector<2x6x4x128xbf16>
    %97 = tpu.concatenate %78, %96, %78 in 2 : vector<2x6x1x128xbf16>, vector<2x6x4x128xbf16>, vector<2x6x1x128xbf16> -> vector<2x6x6x128xbf16>
    %98 = vector.extract_strided_slice %93 {offsets = [0, 0, 0, 1, 0], sizes = [2, 4, 4, 1, 128], strides = [1, 1, 1, 1, 1]} : vector<2x4x4x2x128xbf16> to vector<2x4x4x1x128xbf16>
    %99 = vector.shape_cast %98 : vector<2x4x4x1x128xbf16> to vector<2x4x4x128xbf16>
    %100 = tpu.concatenate %77, %99, %77 in 1 : vector<2x1x4x128xbf16>, vector<2x4x4x128xbf16>, vector<2x1x4x128xbf16> -> vector<2x6x4x128xbf16>
    %101 = tpu.concatenate %78, %100, %78 in 2 : vector<2x6x1x128xbf16>, vector<2x6x4x128xbf16>, vector<2x6x1x128xbf16> -> vector<2x6x6x128xbf16>
    %102 = vector.extract_strided_slice %101 {offsets = [0, 0, 0, 0], sizes = [2, 4, 4, 128], strides = [1, 1, 1, 1]} : vector<2x6x6x128xbf16> to vector<2x4x4x128xbf16>
    %103 = vector.extract_strided_slice %97 {offsets = [0, 0, 1, 0], sizes = [2, 4, 4, 128], strides = [1, 1, 1, 1]} : vector<2x6x6x128xbf16> to vector<2x4x4x128xbf16>
    %104 = vector.extract_strided_slice %101 {offsets = [0, 0, 1, 0], sizes = [2, 4, 4, 128], strides = [1, 1, 1, 1]} : vector<2x6x6x128xbf16> to vector<2x4x4x128xbf16>
    %105 = vector.extract_strided_slice %97 {offsets = [0, 0, 2, 0], sizes = [2, 4, 4, 128], strides = [1, 1, 1, 1]} : vector<2x6x6x128xbf16> to vector<2x4x4x128xbf16>
    %106 = vector.extract_strided_slice %90 {offsets = [0, 1, 0, 0], sizes = [2, 4, 4, 128], strides = [1, 1, 1, 1]} : vector<2x6x6x128xbf16> to vector<2x4x4x128xbf16>
    %107 = vector.extract_strided_slice %86 {offsets = [0, 1, 1, 0], sizes = [2, 4, 4, 128], strides = [1, 1, 1, 1]} : vector<2x6x6x128xbf16> to vector<2x4x4x128xbf16>
    %108 = vector.extract_strided_slice %90 {offsets = [0, 1, 1, 0], sizes = [2, 4, 4, 128], strides = [1, 1, 1, 1]} : vector<2x6x6x128xbf16> to vector<2x4x4x128xbf16>
    %109 = vector.extract_strided_slice %86 {offsets = [0, 1, 2, 0], sizes = [2, 4, 4, 128], strides = [1, 1, 1, 1]} : vector<2x6x6x128xbf16> to vector<2x4x4x128xbf16>
    %110 = vector.extract_strided_slice %101 {offsets = [0, 1, 0, 0], sizes = [2, 4, 4, 128], strides = [1, 1, 1, 1]} : vector<2x6x6x128xbf16> to vector<2x4x4x128xbf16>
    %111 = vector.extract_strided_slice %97 {offsets = [0, 1, 1, 0], sizes = [2, 4, 4, 128], strides = [1, 1, 1, 1]} : vector<2x6x6x128xbf16> to vector<2x4x4x128xbf16>
    %112 = vector.extract_strided_slice %101 {offsets = [0, 1, 1, 0], sizes = [2, 4, 4, 128], strides = [1, 1, 1, 1]} : vector<2x6x6x128xbf16> to vector<2x4x4x128xbf16>
    %113 = vector.extract_strided_slice %97 {offsets = [0, 1, 2, 0], sizes = [2, 4, 4, 128], strides = [1, 1, 1, 1]} : vector<2x6x6x128xbf16> to vector<2x4x4x128xbf16>
    %114 = vector.extract_strided_slice %90 {offsets = [0, 2, 0, 0], sizes = [2, 4, 4, 128], strides = [1, 1, 1, 1]} : vector<2x6x6x128xbf16> to vector<2x4x4x128xbf16>
    %115 = vector.extract_strided_slice %86 {offsets = [0, 2, 1, 0], sizes = [2, 4, 4, 128], strides = [1, 1, 1, 1]} : vector<2x6x6x128xbf16> to vector<2x4x4x128xbf16>
    %116 = vector.extract_strided_slice %90 {offsets = [0, 2, 1, 0], sizes = [2, 4, 4, 128], strides = [1, 1, 1, 1]} : vector<2x6x6x128xbf16> to vector<2x4x4x128xbf16>
    %117 = vector.extract_strided_slice %86 {offsets = [0, 2, 2, 0], sizes = [2, 4, 4, 128], strides = [1, 1, 1, 1]} : vector<2x6x6x128xbf16> to vector<2x4x4x128xbf16>
    %118 = tpu.concatenate %102, %103, %104, %105, %106, %107, %108, %109, %110, %111, %112, %113, %114, %115, %116, %117 in 3 : vector<2x4x4x128xbf16>, vector<2x4x4x128xbf16>, vector<2x4x4x128xbf16>, vector<2x4x4x128xbf16>, vector<2x4x4x128xbf16>, vector<2x4x4x128xbf16>, vector<2x4x4x128xbf16>, vector<2x4x4x128xbf16>, vector<2x4x4x128xbf16>, vector<2x4x4x128xbf16>, vector<2x4x4x128xbf16>, vector<2x4x4x128xbf16>, vector<2x4x4x128xbf16>, vector<2x4x4x128xbf16>, vector<2x4x4x128xbf16>, vector<2x4x4x128xbf16> -> vector<2x4x4x2048xbf16>
    %119 = vector.shape_cast %118 : vector<2x4x4x2048xbf16> to vector<32x2048xbf16>
    %c0_20 = arith.constant 0 : index
    %c0_21 = arith.constant 0 : index
    %120 = vector.load %arg4[%c0_20, %c0_21] : memref<2048x256xbf16, #tpu.memory_space<vmem>>, vector<2048x256xbf16>
    %cst_22 = arith.constant dense<0.000000e+00> : vector<32x256xf32>
    %121 = tpu.matmul %119, %120, %cst_22 {dimension_numbers = #tpu.dot_dimension_numbers<[1], [0], [0], [1], [0, 0, 1, 1], [], []>} : vector<32x2048xbf16>, vector<2048x256xbf16>, vector<32x256xf32> -> vector<32x256xf32>
    %cst_23 = arith.constant 0.000000e+00 : f32
    %122 = vector.broadcast %cst_23 : f32 to vector<32x256xf32>
    %123 = arith.cmpf oge, %121, %122 : vector<32x256xf32>
    %cst_24 = arith.constant 2.000000e-01 : f32
    %124 = vector.broadcast %cst_24 : f32 to vector<32x256xf32>
    %125 = arith.mulf %124, %121 : vector<32x256xf32>
    %126 = arith.select %123, %121, %125 : vector<32x256xi1>, vector<32x256xf32>
    %c0_25 = arith.constant 0 : index
    %c0_26 = arith.constant 0 : index
    %127 = vector.load %arg5[%c0_25, %c0_26] : memref<1x256xf32, #tpu.memory_space<vmem>>, vector<1x256xf32>
    %c0_27 = arith.constant 0 : index
    %c0_28 = arith.constant 0 : index
    %128 = vector.load %arg6[%c0_27, %c0_28] : memref<1x256xf32, #tpu.memory_space<vmem>>, vector<1x256xf32>
    %cst_29 = arith.constant dense<0.000000e+00> : vector<256xf32>
    %129 = vector.multi_reduction <add>, %126, %cst_29 [0] : vector<32x256xf32> to vector<256xf32>
    %130 = vector.shape_cast %129 : vector<256xf32> to vector<1x256xf32>
    %cst_30 = arith.constant 3.200000e+01 : f32
    %131 = vector.broadcast %cst_30 : f32 to vector<1x256xf32>
    %132 = arith.divf %130, %131 : vector<1x256xf32>
    %133 = vector.broadcast %132 : vector<1x256xf32> to vector<32x256xf32>
    %134 = arith.subf %126, %133 : vector<32x256xf32>
    %135 = arith.mulf %134, %134 : vector<32x256xf32>
    %cst_31 = arith.constant dense<0.000000e+00> : vector<256xf32>
    %136 = vector.multi_reduction <add>, %135, %cst_31 [0] : vector<32x256xf32> to vector<256xf32>
    %137 = vector.shape_cast %136 : vector<256xf32> to vector<1x256xf32>
    %cst_32 = arith.constant 3.200000e+01 : f32
    %138 = vector.broadcast %cst_32 : f32 to vector<1x256xf32>
    %139 = arith.divf %137, %138 : vector<1x256xf32>
    %cst_33 = arith.constant 9.99999974E-6 : f32
    %140 = vector.broadcast %cst_33 : f32 to vector<1x256xf32>
    %141 = arith.addf %139, %140 : vector<1x256xf32>
    %142 = math.rsqrt %141 : vector<1x256xf32>
    %143 = vector.broadcast %132 : vector<1x256xf32> to vector<32x256xf32>
    %144 = arith.subf %126, %143 : vector<32x256xf32>
    %145 = vector.broadcast %142 : vector<1x256xf32> to vector<32x256xf32>
    %146 = arith.mulf %144, %145 : vector<32x256xf32>
    %147 = vector.broadcast %127 : vector<1x256xf32> to vector<32x256xf32>
    %148 = arith.mulf %146, %147 : vector<32x256xf32>
    %149 = vector.broadcast %128 : vector<1x256xf32> to vector<32x256xf32>
    %150 = arith.addf %148, %149 : vector<32x256xf32>
    %151 = vector.shape_cast %150 : vector<32x256xf32> to vector<2x16x256xf32>
    %c0_34 = arith.constant 0 : index
    %c0_35 = arith.constant 0 : index
    %152 = vector.load %arg7[%c0_34, %c0_35] : memref<16x256xf32, #tpu.memory_space<vmem>>, vector<16x256xf32>
    %153 = vector.shape_cast %152 : vector<16x256xf32> to vector<1x16x256xf32>
    %154 = vector.broadcast %153 : vector<1x16x256xf32> to vector<2x16x256xf32>
    %155 = arith.mulf %151, %154 : vector<2x16x256xf32>
    %cst_36 = arith.constant dense<0.000000e+00> : vector<2x16xf32>
    %156 = vector.multi_reduction <add>, %155, %cst_36 [2] : vector<2x16x256xf32> to vector<2x16xf32>
    %cst_37 = arith.constant dense<0.000000e+00> : vector<2xf32>
    %157 = vector.multi_reduction <add>, %156, %cst_37 [1] : vector<2x16xf32> to vector<2xf32>
    %158 = vector.shape_cast %157 : vector<2xf32> to vector<2x1xf32>
    %159 = arith.negf %158 : vector<2x1xf32>
    %160 = math.exp %159 : vector<2x1xf32>
    %cst_38 = arith.constant 1.000000e+00 : f32
    %161 = vector.broadcast %cst_38 : f32 to vector<2x1xf32>
    %162 = arith.addf %161, %160 : vector<2x1xf32>
    %163 = arith.divf %161, %162 : vector<2x1xf32>
    %c0_39 = arith.constant 0 : index
    %c0_40 = arith.constant 0 : index
    %164 = vector.load %arg8[%c0_39, %c0_40] : memref<2x1xf32, #tpu.memory_space<vmem>>, vector<2x1xf32>
    tpu.vector_store %arg8[%c0_39, %c0_40], %163 {strides = array<i32>} : memref<2x1xf32, #tpu.memory_space<vmem>>, vector<2x1xf32>,
    return
  }
}

</mosaic_0001>

<llo_original>
// kernel: discriminator_forward.2
$region0: #{discriminator_forward.2}
  #allocation0 [shape = 'u32[]', space=smem, size = 0x4, offset = 0x4, fixed_abs, tag = 'smem constant byte address 0x4 - core index']
  #allocation1 [shape = 'u32[144,128]{1,0:T(1,128)}', space=vmem, size = 0x12000, scoped, tag = 'internal scratch']
  %s0 = inlined_call_operand.vmem [shape: bf16[2,17,17,16], index: 0, kind: input, shape index: {}]
  %s1 = inlined_call_operand.vmem [shape: bf16[64,64], index: 1, kind: input, shape index: {}]
  %s2 = inlined_call_operand.vmem [shape: bf16[2,256,64], index: 2, kind: output, shape index: {}]
  %s3 = sld [smem:[#allocation0]]
  $region41: #{discriminator_forward.2} parent=0
    _
  %s5 = ssub.s32 1, %s3
  %s6 = scalar_select 0, %s5, %s3
  loop: start=0, step=1, limit=4
  $region2: #{discriminator_forward.2} parent=0 // loop_pre_header
    _
  $region3: #{discriminator_forward.2} parent=0 // loop_header
    %s8 = sphi 0, %s12
    %p9 = scmp.ge.s32.totalorder %s8, 4
    %s18 = sphi 0, %s20
    %s21 = sphi 0, %s18
    %s22 = sphi 0, %s21
    %s38 = sphi 0, %s22
    %s42 = sphi 0, %s42
    %s44 = sphi 0, %s42
    %s45 = sphi 0, %s44
    %s59 = sphi 0, %s45
    %s65 = sphi 0, %s67
    %s68 = sphi 0, %s65
    %s69 = sphi 0, %s68
    %s85 = sphi 0, %s69
  $region4: #{discriminator_forward.2} parent=0 // loop_header_branch
    %11 = sbr.rel (%p9) target = $region8
  $region5: #{discriminator_forward.2} parent=0 // loop_body
    %s13 = ssub.s32 %s8, 1
    %s14 = ssub.s32 %s8, 2
    %s15 = sadd.s32 %s8, 1
    %s16 = ssub.s32 %s8, %s15
    %p17 = scmp.eq.s32.totalorder %s16, 0
    %s19 = sadd.s32 %s18, 1
    %s20 = scalar_select %p17, %s18, %s19
    %p23 = pneg %p17
    %p24 = scmp.eq.s32.totalorder %s8, 1
    %p25 = por %p23, %p24
    %p26 = scmp.ne.s32.totalorder %s18, %s21
    %p27 = scmp.eq.s32.totalorder %s8, 0
    %p28 = por %p26, %p27
    %p29 = scmp.ne.s32.totalorder %s18, %s21
    %p30 = scmp.eq.s32.totalorder %s13, 1
    %p31 = por %p29, %p30
    %p32 = scmp.ne.s32.totalorder %s21, %s22
    %p33 = scmp.eq.s32.totalorder %s13, 0
    %p34 = por %p32, %p33
    %p35 = scmp.ne.s32.totalorder %s21, %s22
    %p36 = scmp.eq.s32.totalorder %s14, 1
    %p37 = por %p35, %p36
    %p39 = scmp.ne.s32.totalorder %s22, %s38
    %p40 = scmp.eq.s32.totalorder %s14, 0
    %p41 = por %p39, %p40
    %s43 = sadd.s32 %s42, 1
    %p46 = scmp.eq.s32.totalorder %s8, 1
    %p47 = scmp.ne.s32.totalorder %s42, %s44
    %p48 = scmp.eq.s32.totalorder %s8, 0
    %p49 = por %p47, %p48
    %p50 = scmp.ne.s32.totalorder %s42, %s44
    %p51 = scmp.eq.s32.totalorder %s13, 1
    %p52 = por %p50, %p51
    %p53 = scmp.ne.s32.totalorder %s44, %s45
    %p54 = scmp.eq.s32.totalorder %s13, 0
    %p55 = por %p53, %p54
    %p56 = scmp.ne.s32.totalorder %s44, %s45
    %p57 = scmp.eq.s32.totalorder %s14, 1
    %p58 = por %p56, %p57
    %p60 = scmp.ne.s32.totalorder %s45, %s59
    %p61 = scmp.eq.s32.totalorder %s14, 0
    %p62 = por %p60, %p61
    %s63 = ssub.s32 %s8, %s15
    %p64 = scmp.eq.s32.totalorder %s63, 0
    %s66 = sadd.s32 %s65, 1
    %s67 = scalar_select %p64, %s65, %s66
    %p70 = pneg %p64
    %p71 = scmp.eq.s32.totalorder %s8, 1
    %p72 = por %p70, %p71
    %p73 = scmp.ne.s32.totalorder %s65, %s68
    %p74 = scmp.eq.s32.totalorder %s8, 0
    %p75 = por %p73, %p74
    %p76 = scmp.ne.s32.totalorder %s65, %s68
    %p77 = scmp.eq.s32.totalorder %s13, 1
    %p78 = por %p76, %p77
    %p79 = scmp.ne.s32.totalorder %s68, %s69
    %p80 = scmp.eq.s32.totalorder %s13, 0
    %p81 = por %p79, %p80
    %p82 = scmp.ne.s32.totalorder %s68, %s69
    %p83 = scmp.eq.s32.totalorder %s14, 1
    %p84 = por %p82, %p83
    %p86 = scmp.ne.s32.totalorder %s69, %s85
    %p87 = scmp.eq.s32.totalorder %s14, 0
    %p88 = por %p86, %p87
    %p89 = scmp.le.s32.totalorder 1, %s8
    %p90 = scmp.lt.s32.totalorder %s8, 3
    %p91 = pnand %p89, %p90
    %p92 = pneg %p91
    // Predicated region
    $region9: #{discriminator_forward.2} parent=5 // pred_check
      _
    $region10: #{discriminator_forward.2} parent=5 // pred_check_branch
      %94 = sbr.rel (%p91) target = $region12
    $region11: #{discriminator_forward.2} parent=5 // pred_region
      %s95 = ssub.s32 %s8, 1
      // Predicated region
      $region13: #{discriminator_forward.2} parent=11 // pred_check
        %p96 = pneg %p55
      $region14: #{discriminator_forward.2} parent=11 // pred_check_branch
        %98 = sbr.rel (%p96) target = $region16
      $region15: #{discriminator_forward.2} parent=11 // pred_region
        _
      $region16: #{discriminator_forward.2} parent=11 // pred_fallthru
        _
    $region12: #{discriminator_forward.2} parent=5 // pred_fallthru
      _
    %p99 = scmp.lt.s32.totalorder %s8, 2
    // Predicated region
    $region17: #{discriminator_forward.2} parent=5 // pred_check
      %p100 = pneg %p99
    $region18: #{discriminator_forward.2} parent=5 // pred_check_branch
      %102 = sbr.rel (%p100) target = $region20
    $region19: #{discriminator_forward.2} parent=5 // pred_region
      // Predicated region
      $region21: #{discriminator_forward.2} parent=19 // pred_check
        %p103 = pneg %p28
      $region22: #{discriminator_forward.2} parent=19 // pred_check_branch
        %105 = sbr.rel (%p103) target = $region24
      $region23: #{discriminator_forward.2} parent=19 // pred_region
        %p106 = scmp.lt.s32.totalorder %s8, 1
        %s107 = scalar_select %p106, %s8, 1
        %s108 = smul.addr %s107, 51
        %s109 = smul.addr %s108, 4
        %s110 = scalar_lea.vmem %s0, %s109
      $region24: #{discriminator_forward.2} parent=19 // pred_fallthru
        _
    $region20: #{discriminator_forward.2} parent=5 // pred_fallthru
      _
    %p111 = scmp.le.s32.totalorder 1, %s8
    %p112 = scmp.lt.s32.totalorder %s8, 3
    %p113 = pnand %p111, %p112
    %p114 = pneg %p113
    // Predicated region
    $region25: #{discriminator_forward.2} parent=5 // pred_check
      _
    $region26: #{discriminator_forward.2} parent=5 // pred_check_branch
      %116 = sbr.rel (%p113) target = $region28
    $region27: #{discriminator_forward.2} parent=5 // pred_region
      %s117 = ssub.s32 %s8, 1
      %p118 = scmp.lt.s32.totalorder %s13, 1
      %s119 = scalar_select %p118, %s13, 1
      %s120 = smul.addr %s119, 51
      %s121 = smul.addr %s120, 4
      %s122 = scalar_lea.vmem %s0, %s121
      %p123 = pneg %p34
      %p124 = pneg %p31
      %p125 = pneg %p55
      %p126 = pneg %p52
      %p127 = pneg %p81
      %p128 = pneg %p78
      %p129 = scmp.lt.s32.totalorder %s13, 1
      %s130 = scalar_select %p129, %s13, 1
      %s131 = smul.addr %s130, 32
      %s132 = smul.addr %s131, 4
      %s133 = scalar_lea.vmem %s2, %s132
      %p134 = scmp.lt.s32.totalorder %s13, 1
      %s135 = scalar_select %p134, %s13, 1
      %s136 = smul.addr %s135, 51
      %s137 = smul.addr %s136, 4
      %s138 = scalar_lea.vmem %s0, %s137
      %p139 = scmp.lt.s32.totalorder %s13, 1
      %s140 = scalar_select %p139, %s13, 1
      %s141 = smul.addr %s140, 32
      %s142 = smul.addr %s141, 4
      %s143 = scalar_lea.vmem %s2, %s142
      %v145 = vld [vmem:[%s138] sm:$0xf]
      %v146 = vld [vmem:[%s138 + $0x4] sm:$0xf]
      %v147 = vld [vmem:[%s138 + $0x8] sm:$0x1]
      %v148 = vld [vmem:[%s138 + $0xc] sm:$0xf]
      %v149 = vld [vmem:[%s138 + $0x10] sm:$0xf]
      %v150 = vld [vmem:[%s138 + $0x14] sm:$0x1]
      %v151 = vld [vmem:[%s138 + $0x18] sm:$0xf]
      %v152 = vld [vmem:[%s138 + $0x1c] sm:$0xf]
      %v153 = vld [vmem:[%s138 + $0x20] sm:$0x1]
      %v154 = vld [vmem:[%s138 + $0x24] sm:$0xf]
      %v155 = vld [vmem:[%s138 + $0x28] sm:$0xf]
      %v156 = vld [vmem:[%s138 + $0x2c] sm:$0x1]
      %v157 = vld [vmem:[%s138 + $0x30] sm:$0xf]
      %v158 = vld [vmem:[%s138 + $0x34] sm:$0xf]
      %v159 = vld [vmem:[%s138 + $0x38] sm:$0x1]
      %v160 = vld [vmem:[%s138 + $0x3c] sm:$0xf]
      %v161 = vld [vmem:[%s138 + $0x40] sm:$0xf]
      %v162 = vld [vmem:[%s138 + $0x44] sm:$0x1]
      %v163 = vld [vmem:[%s138 + $0x48] sm:$0xf]
      %v164 = vld [vmem:[%s138 + $0x4c] sm:$0xf]
      %v165 = vld [vmem:[%s138 + $0x50] sm:$0x1]
      %v166 = vld [vmem:[%s138 + $0x54] sm:$0xf]
      %v167 = vld [vmem:[%s138 + $0x58] sm:$0xf]
      %v168 = vld [vmem:[%s138 + $0x5c] sm:$0x1]
      %v169 = vld [vmem:[%s138 + $0x60] sm:$0xf]
      %v170 = vld [vmem:[%s138 + $0x64] sm:$0xf]
      %v171 = vld [vmem:[%s138 + $0x68] sm:$0x1]
      %v172 = vld [vmem:[%s138 + $0x6c] sm:$0xf]
      %v173 = vld [vmem:[%s138 + $0x70] sm:$0xf]
      %v174 = vld [vmem:[%s138 + $0x74] sm:$0x1]
      %v175 = vld [vmem:[%s138 + $0x78] sm:$0xf]
      %v176 = vld [vmem:[%s138 + $0x7c] sm:$0xf]
      %v177 = vld [vmem:[%s138 + $0x80] sm:$0x1]
      %v178 = vld [vmem:[%s138 + $0x84] sm:$0xf]
      %v179 = vld [vmem:[%s138 + $0x88] sm:$0xf]
      %v180 = vld [vmem:[%s138 + $0x8c] sm:$0x1]
      %v181 = vld [vmem:[%s138 + $0x90] sm:$0xf]
      %v182 = vld [vmem:[%s138 + $0x94] sm:$0xf]
      %v183 = vld [vmem:[%s138 + $0x98] sm:$0x1]
      %v184 = vld [vmem:[%s138 + $0x9c] sm:$0xf]
      %v185 = vld [vmem:[%s138 + $0xa0] sm:$0xf]
      %v186 = vld [vmem:[%s138 + $0xa4] sm:$0x1]
      %v187 = vld [vmem:[%s138 + $0xa8] sm:$0xf]
      %v188 = vld [vmem:[%s138 + $0xac] sm:$0xf]
      %v189 = vld [vmem:[%s138 + $0xb0] sm:$0x1]
      %v190 = vld [vmem:[%s138 + $0xb4] sm:$0xf]
      %v191 = vld [vmem:[%s138 + $0xb8] sm:$0xf]
      %v192 = vld [vmem:[%s138 + $0xbc] sm:$0x1]
      %v193 = vld [vmem:[%s138 + $0xc0] sm:$0xf]
      %v194 = vld [vmem:[%s138 + $0xc4] sm:$0xf]
      %v195 = vld [vmem:[%s138 + $0xc8] sm:$0x1]
      %vm196 = vsmask.f32 3328
      %vm197 = vsmask.f32 7440
      %vm198 = vmor %vm196, %vm197
      %v200 = vshrl.u32 %v145, 16
      %v202 = vrot.slane %v200, 4
      %v203 = vshll.u32 %v145, 16
      %v205 = vrot.slane %v203, 5
      %v206 = vor.u32 %v202, %v205
      %v207 = vrot.slane %v206, 4
      %v209 = vshll.u32 %v146, 16
      %v211 = vrot.slane %v209, 5
      %v212 = vsel %vm198, %v207, %v211
      %v213 = vshrl.u32 %v146, 16
      %v215 = vrot.slane %v213, 4
      %v216 = vor.u32 %v215, %v211
      %v217 = vrot.slane %v216, 4
      %v219 = vshll.u32 %v147, 16
      %v221 = vrot.slane %v219, 5
      %v222 = vsel %vm198, %v217, %v221
      %v224 = vshrl.u32 %v148, 16
      %v226 = vrot.slane %v224, 4
      %v227 = vshll.u32 %v148, 16
      %v229 = vrot.slane %v227, 5
      %v230 = vor.u32 %v226, %v229
      %v231 = vrot.slane %v230, 4
      %v233 = vshll.u32 %v149, 16
      %v235 = vrot.slane %v233, 5
      %v236 = vsel %vm198, %v231, %v235
      %v237 = vshrl.u32 %v149, 16
      %v239 = vrot.slane %v237, 4
      %v240 = vor.u32 %v239, %v235
      %v241 = vrot.slane %v240, 4
      %v243 = vshll.u32 %v150, 16
      %v245 = vrot.slane %v243, 5
      %v246 = vsel %vm198, %v241, %v245
      %v248 = vshrl.u32 %v151, 16
      %v250 = vrot.slane %v248, 4
      %v251 = vshll.u32 %v151, 16
      %v253 = vrot.slane %v251, 5
      %v254 = vor.u32 %v250, %v253
      %v255 = vrot.slane %v254, 4
      %v257 = vshll.u32 %v152, 16
      %v259 = vrot.slane %v257, 5
      %v260 = vsel %vm198, %v255, %v259
      %v261 = vshrl.u32 %v152, 16
      %v263 = vrot.slane %v261, 4
      %v264 = vor.u32 %v263, %v259
      %v265 = vrot.slane %v264, 4
      %v267 = vshll.u32 %v153, 16
      %v269 = vrot.slane %v267, 5
      %v270 = vsel %vm198, %v265, %v269
      %v272 = vshrl.u32 %v154, 16
      %v274 = vrot.slane %v272, 4
      %v275 = vshll.u32 %v154, 16
      %v277 = vrot.slane %v275, 5
      %v278 = vor.u32 %v274, %v277
      %v279 = vrot.slane %v278, 4
      %v281 = vshll.u32 %v155, 16
      %v283 = vrot.slane %v281, 5
      %v284 = vsel %vm198, %v279, %v283
      %v285 = vshrl.u32 %v155, 16
      %v287 = vrot.slane %v285, 4
      %v288 = vor.u32 %v287, %v283
      %v289 = vrot.slane %v288, 4
      %v291 = vshll.u32 %v156, 16
      %v293 = vrot.slane %v291, 5
      %v294 = vsel %vm198, %v289, %v293
      %v296 = vshrl.u32 %v157, 16
      %v298 = vrot.slane %v296, 4
      %v299 = vshll.u32 %v157, 16
      %v301 = vrot.slane %v299, 5
      %v302 = vor.u32 %v298, %v301
      %v303 = vrot.slane %v302, 4
      %v305 = vshll.u32 %v158, 16
      %v307 = vrot.slane %v305, 5
      %v308 = vsel %vm198, %v303, %v307
      %v309 = vshrl.u32 %v158, 16
      %v311 = vrot.slane %v309, 4
      %v312 = vor.u32 %v311, %v307
      %v313 = vrot.slane %v312, 4
      %v315 = vshll.u32 %v159, 16
      %v317 = vrot.slane %v315, 5
      %v318 = vsel %vm198, %v313, %v317
      %v320 = vshrl.u32 %v160, 16
      %v322 = vrot.slane %v320, 4
      %v323 = vshll.u32 %v160, 16
      %v325 = vrot.slane %v323, 5
      %v326 = vor.u32 %v322, %v325
      %v327 = vrot.slane %v326, 4
      %v329 = vshll.u32 %v161, 16
      %v331 = vrot.slane %v329, 5
      %v332 = vsel %vm198, %v327, %v331
      %v333 = vshrl.u32 %v161, 16
      %v335 = vrot.slane %v333, 4
      %v336 = vor.u32 %v335, %v331
      %v337 = vrot.slane %v336, 4
      %v339 = vshll.u32 %v162, 16
      %v341 = vrot.slane %v339, 5
      %v342 = vsel %vm198, %v337, %v341
      %v344 = vshrl.u32 %v163, 16
      %v346 = vrot.slane %v344, 4
      %v347 = vshll.u32 %v163, 16
      %v349 = vrot.slane %v347, 5
      %v350 = vor.u32 %v346, %v349
      %v351 = vrot.slane %v350, 4
      %v353 = vshll.u32 %v164, 16
      %v355 = vrot.slane %v353, 5
      %v356 = vsel %vm198, %v351, %v355
      %v357 = vshrl.u32 %v164, 16
      %v359 = vrot.slane %v357, 4
      %v360 = vor.u32 %v359, %v355
      %v361 = vrot.slane %v360, 4
      %v363 = vshll.u32 %v165, 16
      %v365 = vrot.slane %v363, 5
      %v366 = vsel %vm198, %v361, %v365
      %v368 = vshrl.u32 %v166, 16
      %v370 = vrot.slane %v368, 4
      %v371 = vshll.u32 %v166, 16
      %v373 = vrot.slane %v371, 5
      %v374 = vor.u32 %v370, %v373
      %v375 = vrot.slane %v374, 4
      %v377 = vshll.u32 %v167, 16
      %v379 = vrot.slane %v377, 5
      %v380 = vsel %vm198, %v375, %v379
      %v381 = vshrl.u32 %v167, 16
      %v383 = vrot.slane %v381, 4
      %v384 = vor.u32 %v383, %v379
      %v385 = vrot.slane %v384, 4
      %v387 = vshll.u32 %v168, 16
      %v389 = vrot.slane %v387, 5
      %v390 = vsel %vm198, %v385, %v389
      %v392 = vshrl.u32 %v169, 16
      %v394 = vrot.slane %v392, 4
      %v395 = vshll.u32 %v169, 16
      %v397 = vrot.slane %v395, 5
      %v398 = vor.u32 %v394, %v397
      %v399 = vrot.slane %v398, 4
      %v401 = vshll.u32 %v170, 16
      %v403 = vrot.slane %v401, 5
      %v404 = vsel %vm198, %v399, %v403
      %v405 = vshrl.u32 %v170, 16
      %v407 = vrot.slane %v405, 4
      %v408 = vor.u32 %v407, %v403
      %v409 = vrot.slane %v408, 4
      %v411 = vshll.u32 %v171, 16
      %v413 = vrot.slane %v411, 5
      %v414 = vsel %vm198, %v409, %v413
      %v416 = vshrl.u32 %v172, 16
      %v418 = vrot.slane %v416, 4
      %v419 = vshll.u32 %v172, 16
      %v421 = vrot.slane %v419, 5
      %v422 = vor.u32 %v418, %v421
      %v423 = vrot.slane %v422, 4
      %v425 = vshll.u32 %v173, 16
      %v427 = vrot.slane %v425, 5
      %v428 = vsel %vm198, %v423, %v427
      %v429 = vshrl.u32 %v173, 16
      %v431 = vrot.slane %v429, 4
      %v432 = vor.u32 %v431, %v427
      %v433 = vrot.slane %v432, 4
      %v435 = vshll.u32 %v174, 16
      %v437 = vrot.slane %v435, 5
      %v438 = vsel %vm198, %v433, %v437
      %v440 = vshrl.u32 %v175, 16
      %v442 = vrot.slane %v440, 4
      %v443 = vshll.u32 %v175, 16
      %v445 = vrot.slane %v443, 5
      %v446 = vor.u32 %v442, %v445
      %v447 = vrot.slane %v446, 4
      %v449 = vshll.u32 %v176, 16
      %v451 = vrot.slane %v449, 5
      %v452 = vsel %vm198, %v447, %v451
      %v453 = vshrl.u32 %v176, 16
      %v455 = vrot.slane %v453, 4
      %v456 = vor.u32 %v455, %v451
      %v457 = vrot.slane %v456, 4
      %v459 = vshll.u32 %v177, 16
      %v461 = vrot.slane %v459, 5
      %v462 = vsel %vm198, %v457, %v461
      %v464 = vshrl.u32 %v178, 16
      %v466 = vrot.slane %v464, 4
      %v467 = vshll.u32 %v178, 16
      %v469 = vrot.slane %v467, 5
      %v470 = vor.u32 %v466, %v469
      %v471 = vrot.slane %v470, 4
      %v473 = vshll.u32 %v179, 16
      %v475 = vrot.slane %v473, 5
      %v476 = vsel %vm198, %v471, %v475
      %v477 = vshrl.u32 %v179, 16
      %v479 = vrot.slane %v477, 4
      %v480 = vor.u32 %v479, %v475
      %v481 = vrot.slane %v480, 4
      %v483 = vshll.u32 %v180, 16
      %v485 = vrot.slane %v483, 5
      %v486 = vsel %vm198, %v481, %v485
      %v488 = vshrl.u32 %v181, 16
      %v490 = vrot.slane %v488, 4
      %v491 = vshll.u32 %v181, 16
      %v493 = vrot.slane %v491, 5
      %v494 = vor.u32 %v490, %v493
      %v495 = vrot.slane %v494, 4
      %v497 = vshll.u32 %v182, 16
      %v499 = vrot.slane %v497, 5
      %v500 = vsel %vm198, %v495, %v499
      %v501 = vshrl.u32 %v182, 16
      %v503 = vrot.slane %v501, 4
      %v504 = vor.u32 %v503, %v499
      %v505 = vrot.slane %v504, 4
      %v507 = vshll.u32 %v183, 16
      %v509 = vrot.slane %v507, 5
      %v510 = vsel %vm198, %v505, %v509
      %v512 = vshrl.u32 %v184, 16
      %v514 = vrot.slane %v512, 4
      %v515 = vshll.u32 %v184, 16
      %v517 = vrot.slane %v515, 5
      %v518 = vor.u32 %v514, %v517
      %v519 = vrot.slane %v518, 4
      %v521 = vshll.u32 %v185, 16
      %v523 = vrot.slane %v521, 5
      %v524 = vsel %vm198, %v519, %v523
      %v525 = vshrl.u32 %v185, 16
      %v527 = vrot.slane %v525, 4
      %v528 = vor.u32 %v527, %v523
      %v529 = vrot.slane %v528, 4
      %v531 = vshll.u32 %v186, 16
      %v533 = vrot.slane %v531, 5
      %v534 = vsel %vm198, %v529, %v533
      %v536 = vshrl.u32 %v187, 16
      %v538 = vrot.slane %v536, 4
      %v539 = vshll.u32 %v187, 16
      %v541 = vrot.slane %v539, 5
      %v542 = vor.u32 %v538, %v541
      %v543 = vrot.slane %v542, 4
      %v545 = vshll.u32 %v188, 16
      %v547 = vrot.slane %v545, 5
      %v548 = vsel %vm198, %v543, %v547
      %v549 = vshrl.u32 %v188, 16
      %v551 = vrot.slane %v549, 4
      %v552 = vor.u32 %v551, %v547
      %v553 = vrot.slane %v552, 4
      %v555 = vshll.u32 %v189, 16
      %v557 = vrot.slane %v555, 5
      %v558 = vsel %vm198, %v553, %v557
      %v560 = vshrl.u32 %v190, 16
      %v562 = vrot.slane %v560, 4
      %v563 = vshll.u32 %v190, 16
      %v565 = vrot.slane %v563, 5
      %v566 = vor.u32 %v562, %v565
      %v567 = vrot.slane %v566, 4
      %v569 = vshll.u32 %v191, 16
      %v571 = vrot.slane %v569, 5
      %v572 = vsel %vm198, %v567, %v571
      %v573 = vshrl.u32 %v191, 16
      %v575 = vrot.slane %v573, 4
      %v576 = vor.u32 %v575, %v571
      %v577 = vrot.slane %v576, 4
      %v579 = vshll.u32 %v192, 16
      %v581 = vrot.slane %v579, 5
      %v582 = vsel %vm198, %v577, %v581
      %v584 = vshrl.u32 %v193, 16
      %v586 = vrot.slane %v584, 4
      %v587 = vshll.u32 %v193, 16
      %v589 = vrot.slane %v587, 5
      %v590 = vor.u32 %v586, %v589
      %v591 = vrot.slane %v590, 4
      %v593 = vshll.u32 %v194, 16
      %v595 = vrot.slane %v593, 5
      %v596 = vsel %vm198, %v591, %v595
      %v597 = vshrl.u32 %v194, 16
      %v599 = vrot.slane %v597, 4
      %v600 = vor.u32 %v599, %v595
      %v601 = vrot.slane %v600, 4
      %v603 = vshll.u32 %v195, 16
      %v605 = vrot.slane %v603, 5
      %v606 = vsel %vm198, %v601, %v605
      %v639 = vunpack.c.l.b16 %v145
      %v640 = vunpack.c.l.b16 %v146
      %v641 = vunpack.c.l.b16 %v148
      %v642 = vunpack.c.l.b16 %v149
      %v643 = vunpack.c.l.b16 %v151
      %v644 = vunpack.c.l.b16 %v152
      %v645 = vunpack.c.l.b16 %v154
      %v646 = vunpack.c.l.b16 %v155
      %v647 = vunpack.c.l.b16 %v157
      %v648 = vunpack.c.l.b16 %v158
      %v649 = vunpack.c.l.b16 %v160
      %v650 = vunpack.c.l.b16 %v161
      %v651 = vunpack.c.l.b16 %v163
      %v652 = vunpack.c.l.b16 %v164
      %v653 = vunpack.c.l.b16 %v166
      %v654 = vunpack.c.l.b16 %v167
      %v655 = vunpack.c.l.b16 %v169
      %v656 = vunpack.c.l.b16 %v170
      %v657 = vunpack.c.l.b16 %v172
      %v658 = vunpack.c.l.b16 %v173
      %v659 = vunpack.c.l.b16 %v175
      %v660 = vunpack.c.l.b16 %v176
      %v661 = vunpack.c.l.b16 %v178
      %v662 = vunpack.c.l.b16 %v179
      %v663 = vunpack.c.l.b16 %v181
      %v664 = vunpack.c.l.b16 %v182
      %v665 = vunpack.c.l.b16 %v184
      %v666 = vunpack.c.l.b16 %v185
      %v667 = vunpack.c.l.b16 %v187
      %v668 = vunpack.c.l.b16 %v188
      %v669 = vunpack.c.l.b16 %v190
      %v670 = vunpack.c.l.b16 %v191
      %v671 = vpack.c.b16 %v640, %v639
      %v672 = vpack.c.b16 %v642, %v641
      %v673 = vpack.c.b16 %v644, %v643
      %v674 = vpack.c.b16 %v646, %v645
      %v675 = vpack.c.b16 %v648, %v647
      %v676 = vpack.c.b16 %v650, %v649
      %v677 = vpack.c.b16 %v652, %v651
      %v678 = vpack.c.b16 %v654, %v653
      %v679 = vpack.c.b16 %v656, %v655
      %v680 = vpack.c.b16 %v658, %v657
      %v681 = vpack.c.b16 %v660, %v659
      %v682 = vpack.c.b16 %v662, %v661
      %v683 = vpack.c.b16 %v664, %v663
      %v684 = vpack.c.b16 %v666, %v665
      %v685 = vpack.c.b16 %v668, %v667
      %v686 = vpack.c.b16 %v670, %v669
      %v687 = vunpack.c.l.b16 %v212
      %v688 = vunpack.c.l.b16 %v222
      %v689 = vunpack.c.l.b16 %v236
      %v690 = vunpack.c.l.b16 %v246
      %v691 = vunpack.c.l.b16 %v260
      %v692 = vunpack.c.l.b16 %v270
      %v693 = vunpack.c.l.b16 %v284
      %v694 = vunpack.c.l.b16 %v294
      %v695 = vunpack.c.l.b16 %v308
      %v696 = vunpack.c.l.b16 %v318
      %v697 = vunpack.c.l.b16 %v332
      %v698 = vunpack.c.l.b16 %v342
      %v699 = vunpack.c.l.b16 %v356
      %v700 = vunpack.c.l.b16 %v366
      %v701 = vunpack.c.l.b16 %v380
      %v702 = vunpack.c.l.b16 %v390
      %v703 = vunpack.c.l.b16 %v404
      %v704 = vunpack.c.l.b16 %v414
      %v705 = vunpack.c.l.b16 %v428
      %v706 = vunpack.c.l.b16 %v438
      %v707 = vunpack.c.l.b16 %v452
      %v708 = vunpack.c.l.b16 %v462
      %v709 = vunpack.c.l.b16 %v476
      %v710 = vunpack.c.l.b16 %v486
      %v711 = vunpack.c.l.b16 %v500
      %v712 = vunpack.c.l.b16 %v510
      %v713 = vunpack.c.l.b16 %v524
      %v714 = vunpack.c.l.b16 %v534
      %v715 = vunpack.c.l.b16 %v548
      %v716 = vunpack.c.l.b16 %v558
      %v717 = vunpack.c.l.b16 %v572
      %v718 = vunpack.c.l.b16 %v582
      %v719 = vpack.c.b16 %v688, %v687
      %v720 = vpack.c.b16 %v690, %v689
      %v721 = vpack.c.b16 %v692, %v691
      %v722 = vpack.c.b16 %v694, %v693
      %v723 = vpack.c.b16 %v696, %v695
      %v724 = vpack.c.b16 %v698, %v697
      %v725 = vpack.c.b16 %v700, %v699
      %v726 = vpack.c.b16 %v702, %v701
      %v727 = vpack.c.b16 %v704, %v703
      %v728 = vpack.c.b16 %v706, %v705
      %v729 = vpack.c.b16 %v708, %v707
      %v730 = vpack.c.b16 %v710, %v709
      %v731 = vpack.c.b16 %v712, %v711
      %v732 = vpack.c.b16 %v714, %v713
      %v733 = vpack.c.b16 %v716, %v715
      %v734 = vpack.c.b16 %v718, %v717
      %735 = vrot.lane.b32.xlu0 %v719, 16
      %v736 = vpop.permute.xlu0 %735
      %737 = vrot.lane.b32.xlu0 %v720, 16
      %v738 = vpop.permute.xlu0 %737
      %739 = vrot.lane.b32.xlu0 %v721, 16
      %v740 = vpop.permute.xlu0 %739
      %741 = vrot.lane.b32.xlu0 %v722, 16
      %v742 = vpop.permute.xlu0 %741
      %743 = vrot.lane.b32.xlu0 %v723, 16
      %v744 = vpop.permute.xlu0 %743
      %745 = vrot.lane.b32.xlu0 %v724, 16
      %v746 = vpop.permute.xlu0 %745
      %747 = vrot.lane.b32.xlu0 %v725, 16
      %v748 = vpop.permute.xlu0 %747
      %749 = vrot.lane.b32.xlu0 %v726, 16
      %v750 = vpop.permute.xlu0 %749
      %751 = vrot.lane.b32.xlu0 %v727, 16
      %v752 = vpop.permute.xlu0 %751
      %753 = vrot.lane.b32.xlu0 %v728, 16
      %v754 = vpop.permute.xlu0 %753
      %755 = vrot.lane.b32.xlu0 %v729, 16
      %v756 = vpop.permute.xlu0 %755
      %757 = vrot.lane.b32.xlu0 %v730, 16
      %v758 = vpop.permute.xlu0 %757
      %759 = vrot.lane.b32.xlu0 %v731, 16
      %v760 = vpop.permute.xlu0 %759
      %761 = vrot.lane.b32.xlu0 %v732, 16
      %v762 = vpop.permute.xlu0 %761
      %763 = vrot.lane.b32.xlu0 %v733, 16
      %v764 = vpop.permute.xlu0 %763
      %765 = vrot.lane.b32.xlu0 %v734, 16
      %v766 = vpop.permute.xlu0 %765
      %v769 = vunpack.c.l.b16 %v193
      %v770 = vunpack.c.l.b16 %v194
      %v771 = vpack.c.b16 %v770, %v769
      %772 = vrot.lane.b32.xlu0 %v672, 32
      %v773 = vpop.permute.xlu0 %772
      %774 = vrot.lane.b32.xlu0 %v673, 32
      %v775 = vpop.permute.xlu0 %774
      %776 = vrot.lane.b32.xlu0 %v674, 32
      %v777 = vpop.permute.xlu0 %776
      %778 = vrot.lane.b32.xlu0 %v675, 32
      %v779 = vpop.permute.xlu0 %778
      %780 = vrot.lane.b32.xlu0 %v676, 32
      %v781 = vpop.permute.xlu0 %780
      %782 = vrot.lane.b32.xlu0 %v677, 32
      %v783 = vpop.permute.xlu0 %782
      %784 = vrot.lane.b32.xlu0 %v678, 32
      %v785 = vpop.permute.xlu0 %784
      %786 = vrot.lane.b32.xlu0 %v679, 32
      %v787 = vpop.permute.xlu0 %786
      %788 = vrot.lane.b32.xlu0 %v680, 32
      %v789 = vpop.permute.xlu0 %788
      %790 = vrot.lane.b32.xlu0 %v681, 32
      %v791 = vpop.permute.xlu0 %790
      %792 = vrot.lane.b32.xlu0 %v682, 32
      %v793 = vpop.permute.xlu0 %792
      %794 = vrot.lane.b32.xlu0 %v683, 32
      %v795 = vpop.permute.xlu0 %794
      %796 = vrot.lane.b32.xlu0 %v684, 32
      %v797 = vpop.permute.xlu0 %796
      %798 = vrot.lane.b32.xlu0 %v685, 32
      %v799 = vpop.permute.xlu0 %798
      %800 = vrot.lane.b32.xlu0 %v686, 32
      %v801 = vpop.permute.xlu0 %800
      %802 = vrot.lane.b32.xlu0 %v771, 32
      %v803 = vpop.permute.xlu0 %802
      %v804 = vunpack.c.l.b16 %v596
      %v805 = vunpack.c.l.b16 %v606
      %v806 = vpack.c.b16 %v805, %v804
      %807 = vrot.lane.b32.xlu0 %v720, 48
      %v808 = vpop.permute.xlu0 %807
      %809 = vrot.lane.b32.xlu0 %v721, 48
      %v810 = vpop.permute.xlu0 %809
      %811 = vrot.lane.b32.xlu0 %v722, 48
      %v812 = vpop.permute.xlu0 %811
      %813 = vrot.lane.b32.xlu0 %v723, 48
      %v814 = vpop.permute.xlu0 %813
      %815 = vrot.lane.b32.xlu0 %v724, 48
      %v816 = vpop.permute.xlu0 %815
      %817 = vrot.lane.b32.xlu0 %v725, 48
      %v818 = vpop.permute.xlu0 %817
      %819 = vrot.lane.b32.xlu0 %v726, 48
      %v820 = vpop.permute.xlu0 %819
      %821 = vrot.lane.b32.xlu0 %v727, 48
      %v822 = vpop.permute.xlu0 %821
      %823 = vrot.lane.b32.xlu0 %v728, 48
      %v824 = vpop.permute.xlu0 %823
      %825 = vrot.lane.b32.xlu0 %v729, 48
      %v826 = vpop.permute.xlu0 %825
      %827 = vrot.lane.b32.xlu0 %v730, 48
      %v828 = vpop.permute.xlu0 %827
      %829 = vrot.lane.b32.xlu0 %v731, 48
      %v830 = vpop.permute.xlu0 %829
      %831 = vrot.lane.b32.xlu0 %v732, 48
      %v832 = vpop.permute.xlu0 %831
      %833 = vrot.lane.b32.xlu0 %v733, 48
      %v834 = vpop.permute.xlu0 %833
      %835 = vrot.lane.b32.xlu0 %v734, 48
      %v836 = vpop.permute.xlu0 %835
      %837 = vrot.lane.b32.xlu0 %v806, 48
      %v838 = vpop.permute.xlu0 %837
      %vm839 = vcmask 130048
      %v842 = vsel %vm839, %v671, %v736
      %v845 = vsel %vm839, %v672, %v738
      %v848 = vsel %vm839, %v673, %v740
      %v851 = vsel %vm839, %v674, %v742
      %v854 = vsel %vm839, %v675, %v744
      %v857 = vsel %vm839, %v676, %v746
      %v860 = vsel %vm839, %v677, %v748
      %v863 = vsel %vm839, %v678, %v750
      %v866 = vsel %vm839, %v679, %v752
      %v869 = vsel %vm839, %v680, %v754
      %v872 = vsel %vm839, %v681, %v756
      %v875 = vsel %vm839, %v682, %v758
      %v878 = vsel %vm839, %v683, %v760
      %v881 = vsel %vm839, %v684, %v762
      %v884 = vsel %vm839, %v685, %v764
      %v887 = vsel %vm839, %v686, %v766
      %vm888 = vcmask 261120
      %v890 = vsel %vm888, %v842, %v773
      %v892 = vsel %vm888, %v845, %v775
      %v894 = vsel %vm888, %v848, %v777
      %v896 = vsel %vm888, %v851, %v779
      %v898 = vsel %vm888, %v854, %v781
      %v900 = vsel %vm888, %v857, %v783
      %v902 = vsel %vm888, %v860, %v785
      %v904 = vsel %vm888, %v863, %v787
      %v906 = vsel %vm888, %v866, %v789
      %v908 = vsel %vm888, %v869, %v791
      %v910 = vsel %vm888, %v872, %v793
      %v912 = vsel %vm888, %v875, %v795
      %v914 = vsel %vm888, %v878, %v797
      %v916 = vsel %vm888, %v881, %v799
      %v918 = vsel %vm888, %v884, %v801
      %v920 = vsel %vm888, %v887, %v803
      %vm921 = vcmask 392192
      %v923 = vsel %vm921, %v890, %v808
      %v925 = vsel %vm921, %v892, %v810
      %v927 = vsel %vm921, %v894, %v812
      %v929 = vsel %vm921, %v896, %v814
      %v931 = vsel %vm921, %v898, %v816
      %v933 = vsel %vm921, %v900, %v818
      %v935 = vsel %vm921, %v902, %v820
      %v937 = vsel %vm921, %v904, %v822
      %v939 = vsel %vm921, %v906, %v824
      %v941 = vsel %vm921, %v908, %v826
      %v943 = vsel %vm921, %v910, %v828
      %v945 = vsel %vm921, %v912, %v830
      %v947 = vsel %vm921, %v914, %v832
      %v949 = vsel %vm921, %v916, %v834
      %v951 = vsel %vm921, %v918, %v836
      %v953 = vsel %vm921, %v920, %v838
      %v954 = vld [vmem:[%s1] sm:$0xf]
      %v955 = vld [vmem:[%s1 + $0x4] sm:$0xf]
      %v956 = vld [vmem:[%s1 + $0x8] sm:$0xf]
      %v957 = vld [vmem:[%s1 + $0xc] sm:$0xf]
      %v958 = vld [vmem:[%s1 + $0x10] sm:$0xf]
      %v959 = vld [vmem:[%s1 + $0x14] sm:$0xf]
      %v960 = vld [vmem:[%s1 + $0x18] sm:$0xf]
      %v961 = vld [vmem:[%s1 + $0x1c] sm:$0xf]
      %v970 = vunpack.c.l.b16 %v954
      %v971 = vunpack.c.l.b16 %v955
      %v972 = vunpack.c.l.b16 %v956
      %v973 = vunpack.c.l.b16 %v957
      %v974 = vunpack.c.l.b16 %v958
      %v975 = vunpack.c.l.b16 %v959
      %v976 = vunpack.c.l.b16 %v960
      %v977 = vunpack.c.l.b16 %v961
      %v978 = vpack.c.b16 %v971, %v970
      %v979 = vpack.c.b16 %v973, %v972
      %v980 = vpack.c.b16 %v975, %v974
      %v981 = vpack.c.b16 %v977, %v976
      %vm986 = vcmask 523264
      %v987 = vsel %vm986, %v923, 0
      %v989 = vsel %vm986, %v925, 0
      %v991 = vsel %vm986, %v927, 0
      %v993 = vsel %vm986, %v929, 0
      %v995 = vsel %vm986, %v931, 0
      %v997 = vsel %vm986, %v933, 0
      %v999 = vsel %vm986, %v935, 0
      %v1001 = vsel %vm986, %v937, 0
      %v1003 = vsel %vm986, %v939, 0
      %v1005 = vsel %vm986, %v941, 0
      %v1007 = vsel %vm986, %v943, 0
      %v1009 = vsel %vm986, %v945, 0
      %v1011 = vsel %vm986, %v947, 0
      %v1013 = vsel %vm986, %v949, 0
      %v1015 = vsel %vm986, %v951, 0
      %v1017 = vsel %vm986, %v953, 0
      %1019 = vmatprep.subr.bf16.mxu0 0
      %1020 = vmatpush1.bf16.msra.mxu0 0
      %1021 = vmatprep.subr.bf16.mxu0 0
      %1022 = vmatpush1.bf16.msra.mxu0 0
      %1023 = vmatprep.subr.bf16.mxu0 0
      %1024 = vmatpush1.bf16.msra.mxu0 0
      %1025 = vmatprep.subr.bf16.mxu0 0
      %1026 = vmatpush1.bf16.msra.mxu0 0
      %1027 = vmatprep.subr.bf16.mxu0 0
      %1028 = vmatpush1.bf16.msra.mxu0 %v981
      %1029 = vmatprep.subr.bf16.mxu0 0
      %1030 = vmatpush1.bf16.msra.mxu0 %v980
      %1031 = vmatprep.subr.bf16.mxu0 0
      %1032 = vmatpush1.bf16.msra.mxu0 %v979
      %1033 = vmatprep.subr.bf16.mxu0 0
      %1034 = vmatpush1.bf16.msra.mxu0 %v978
      %1035 = vmatprep.subr.bf16.mxu0 0
      %1036 = vmatpush2.bf16.msra.mxu0 0
      %1037 = vmatprep.subr.bf16.mxu0 0
      %1038 = vmatpush2.bf16.msra.mxu0 0
      %1039 = vmatprep.subr.bf16.mxu0 0
      %1040 = vmatpush2.bf16.msra.mxu0 0
      %1041 = vmatprep.subr.bf16.mxu0 0
      %1042 = vmatpush2.bf16.msra.mxu0 0
      %1043 = vmatprep.subr.bf16.mxu0 0
      %1044 = vmatpush2.bf16.msra.mxu0 0
      %1045 = vmatprep.subr.bf16.mxu0 0
      %1046 = vmatpush2.bf16.msra.mxu0 0
      %1047 = vmatprep.subr.bf16.mxu0 0
      %1048 = vmatpush2.bf16.msra.mxu0 0
      %1049 = vmatprep.subr.bf16.mxu0 0
      %1050 = vmatpush2.bf16.msra.mxu0 0
      %1051 = vmatprep.mubr.bf16.mxu0 0
      %1052 = vmatmul.mubr.bf16.gmra.mxu0 %v987
      %v1053 = vpop.f32.mrf.mxu0
      %v1054 = vadd.f32 0.0, %v1053
      %v1055 = vpop.f32.mrf.mxu0
      %v1056 = vpop.f32.mrf.mxu0
      %v1057 = vadd.f32 0.0, %v1056
      %v1058 = vpop.f32.mrf.mxu0
      %1059 = vmatprep.mubr.bf16.mxu0 0
      %1060 = vmatmul.mubr.bf16.gmra.mxu0 %v989
      %v1061 = vpop.f32.mrf.mxu0
      %v1062 = vadd.f32 0.0, %v1061
      %v1063 = vpop.f32.mrf.mxu0
      %v1064 = vpop.f32.mrf.mxu0
      %v1065 = vadd.f32 0.0, %v1064
      %v1066 = vpop.f32.mrf.mxu0
      %1067 = vmatprep.mubr.bf16.mxu0 0
      %1068 = vmatmul.mubr.bf16.gmra.mxu0 %v991
      %v1069 = vpop.f32.mrf.mxu0
      %v1070 = vadd.f32 0.0, %v1069
      %v1071 = vpop.f32.mrf.mxu0
      %v1072 = vpop.f32.mrf.mxu0
      %v1073 = vadd.f32 0.0, %v1072
      %v1074 = vpop.f32.mrf.mxu0
      %1075 = vmatprep.mubr.bf16.mxu0 0
      %1076 = vmatmul.mubr.bf16.gmra.mxu0 %v993
      %v1077 = vpop.f32.mrf.mxu0
      %v1078 = vadd.f32 0.0, %v1077
      %v1079 = vpop.f32.mrf.mxu0
      %v1080 = vpop.f32.mrf.mxu0
      %v1081 = vadd.f32 0.0, %v1080
      %v1082 = vpop.f32.mrf.mxu0
      %1083 = vmatprep.mubr.bf16.mxu0 0
      %1084 = vmatmul.mubr.bf16.gmra.mxu0 %v995
      %v1085 = vpop.f32.mrf.mxu0
      %v1086 = vadd.f32 0.0, %v1085
      %v1087 = vpop.f32.mrf.mxu0
      %v1088 = vpop.f32.mrf.mxu0
      %v1089 = vadd.f32 0.0, %v1088
      %v1090 = vpop.f32.mrf.mxu0
      %1091 = vmatprep.mubr.bf16.mxu0 0
      %1092 = vmatmul.mubr.bf16.gmra.mxu0 %v997
      %v1093 = vpop.f32.mrf.mxu0
      %v1094 = vadd.f32 0.0, %v1093
      %v1095 = vpop.f32.mrf.mxu0
      %v1096 = vpop.f32.mrf.mxu0
      %v1097 = vadd.f32 0.0, %v1096
      %v1098 = vpop.f32.mrf.mxu0
      %1099 = vmatprep.mubr.bf16.mxu0 0
      %1100 = vmatmul.mubr.bf16.gmra.mxu0 %v999
      %v1101 = vpop.f32.mrf.mxu0
      %v1102 = vadd.f32 0.0, %v1101
      %v1103 = vpop.f32.mrf.mxu0
      %v1104 = vpop.f32.mrf.mxu0
      %v1105 = vadd.f32 0.0, %v1104
      %v1106 = vpop.f32.mrf.mxu0
      %1107 = vmatprep.mubr.bf16.mxu0 0
      %1108 = vmatmul.mubr.bf16.gmra.mxu0 %v1001
      %v1109 = vpop.f32.mrf.mxu0
      %v1110 = vadd.f32 0.0, %v1109
      %v1111 = vpop.f32.mrf.mxu0
      %v1112 = vpop.f32.mrf.mxu0
      %v1113 = vadd.f32 0.0, %v1112
      %v1114 = vpop.f32.mrf.mxu0
      %1115 = vmatprep.mubr.bf16.mxu0 0
      %1116 = vmatmul.mubr.bf16.gmra.mxu0 %v1003
      %v1117 = vpop.f32.mrf.mxu0
      %v1118 = vadd.f32 0.0, %v1117
      %v1119 = vpop.f32.mrf.mxu0
      %v1120 = vpop.f32.mrf.mxu0
      %v1121 = vadd.f32 0.0, %v1120
      %v1122 = vpop.f32.mrf.mxu0
      %1123 = vmatprep.mubr.bf16.mxu0 0
      %1124 = vmatmul.mubr.bf16.gmra.mxu0 %v1005
      %v1125 = vpop.f32.mrf.mxu0
      %v1126 = vadd.f32 0.0, %v1125
      %v1127 = vpop.f32.mrf.mxu0
      %v1128 = vpop.f32.mrf.mxu0
      %v1129 = vadd.f32 0.0, %v1128
      %v1130 = vpop.f32.mrf.mxu0
      %1131 = vmatprep.mubr.bf16.mxu0 0
      %1132 = vmatmul.mubr.bf16.gmra.mxu0 %v1007
      %v1133 = vpop.f32.mrf.mxu0
      %v1134 = vadd.f32 0.0, %v1133
      %v1135 = vpop.f32.mrf.mxu0
      %v1136 = vpop.f32.mrf.mxu0
      %v1137 = vadd.f32 0.0, %v1136
      %v1138 = vpop.f32.mrf.mxu0
      %1139 = vmatprep.mubr.bf16.mxu0 0
      %1140 = vmatmul.mubr.bf16.gmra.mxu0 %v1009
      %v1141 = vpop.f32.mrf.mxu0
      %v1142 = vadd.f32 0.0, %v1141
      %v1143 = vpop.f32.mrf.mxu0
      %v1144 = vpop.f32.mrf.mxu0
      %v1145 = vadd.f32 0.0, %v1144
      %v1146 = vpop.f32.mrf.mxu0
      %1147 = vmatprep.mubr.bf16.mxu0 0
      %1148 = vmatmul.mubr.bf16.gmra.mxu0 %v1011
      %v1149 = vpop.f32.mrf.mxu0
      %v1150 = vadd.f32 0.0, %v1149
      %v1151 = vpop.f32.mrf.mxu0
      %v1152 = vpop.f32.mrf.mxu0
      %v1153 = vadd.f32 0.0, %v1152
      %v1154 = vpop.f32.mrf.mxu0
      %1155 = vmatprep.mubr.bf16.mxu0 0
      %1156 = vmatmul.mubr.bf16.gmra.mxu0 %v1013
      %v1157 = vpop.f32.mrf.mxu0
      %v1158 = vadd.f32 0.0, %v1157
      %v1159 = vpop.f32.mrf.mxu0
      %v1160 = vpop.f32.mrf.mxu0
      %v1161 = vadd.f32 0.0, %v1160
      %v1162 = vpop.f32.mrf.mxu0
      %1163 = vmatprep.mubr.bf16.mxu0 0
      %1164 = vmatmul.mubr.bf16.gmra.mxu0 %v1015
      %v1165 = vpop.f32.mrf.mxu0
      %v1166 = vadd.f32 0.0, %v1165
      %v1167 = vpop.f32.mrf.mxu0
      %v1168 = vpop.f32.mrf.mxu0
      %v1169 = vadd.f32 0.0, %v1168
      %v1170 = vpop.f32.mrf.mxu0
      %1171 = vmatprep.mubr.bf16.mxu0 0
      %1172 = vmatmul.mubr.bf16.gmra.mxu0 %v1017
      %v1173 = vpop.f32.mrf.mxu0
      %v1174 = vadd.f32 0.0, %v1173
      %v1175 = vpop.f32.mrf.mxu0
      %v1176 = vpop.f32.mrf.mxu0
      %v1177 = vadd.f32 0.0, %v1176
      %v1178 = vpop.f32.mrf.mxu0
      %1179 = vdwg.mxu0
      %vm1180 = vcmp.ge.f32.partialorder %v1054, 0.0
      %vm1181 = vcmp.ge.f32.partialorder %v1057, 0.0
      %vm1182 = vcmp.ge.f32.partialorder %v1062, 0.0
      %vm1183 = vcmp.ge.f32.partialorder %v1065, 0.0
      %vm1184 = vcmp.ge.f32.partialorder %v1070, 0.0
      %vm1185 = vcmp.ge.f32.partialorder %v1073, 0.0
      %vm1186 = vcmp.ge.f32.partialorder %v1078, 0.0
      %vm1187 = vcmp.ge.f32.partialorder %v1081, 0.0
      %vm1188 = vcmp.ge.f32.partialorder %v1086, 0.0
      %vm1189 = vcmp.ge.f32.partialorder %v1089, 0.0
      %vm1190 = vcmp.ge.f32.partialorder %v1094, 0.0
      %vm1191 = vcmp.ge.f32.partialorder %v1097, 0.0
      %vm1192 = vcmp.ge.f32.partialorder %v1102, 0.0
      %vm1193 = vcmp.ge.f32.partialorder %v1105, 0.0
      %vm1194 = vcmp.ge.f32.partialorder %v1110, 0.0
      %vm1195 = vcmp.ge.f32.partialorder %v1113, 0.0
      %vm1196 = vcmp.ge.f32.partialorder %v1118, 0.0
      %vm1197 = vcmp.ge.f32.partialorder %v1121, 0.0
      %vm1198 = vcmp.ge.f32.partialorder %v1126, 0.0
      %vm1199 = vcmp.ge.f32.partialorder %v1129, 0.0
      %vm1200 = vcmp.ge.f32.partialorder %v1134, 0.0
      %vm1201 = vcmp.ge.f32.partialorder %v1137, 0.0
      %vm1202 = vcmp.ge.f32.partialorder %v1142, 0.0
      %vm1203 = vcmp.ge.f32.partialorder %v1145, 0.0
      %vm1204 = vcmp.ge.f32.partialorder %v1150, 0.0
      %vm1205 = vcmp.ge.f32.partialorder %v1153, 0.0
      %vm1206 = vcmp.ge.f32.partialorder %v1158, 0.0
      %vm1207 = vcmp.ge.f32.partialorder %v1161, 0.0
      %vm1208 = vcmp.ge.f32.partialorder %v1166, 0.0
      %vm1209 = vcmp.ge.f32.partialorder %v1169, 0.0
      %vm1210 = vcmp.ge.f32.partialorder %v1174, 0.0
      %vm1211 = vcmp.ge.f32.partialorder %v1177, 0.0
      %v1212 = vmul.f32 %v1054, 0.2
      %v1213 = vmul.f32 %v1057, 0.2
      %v1214 = vmul.f32 %v1062, 0.2
      %v1215 = vmul.f32 %v1065, 0.2
      %v1216 = vmul.f32 %v1070, 0.2
      %v1217 = vmul.f32 %v1073, 0.2
      %v1218 = vmul.f32 %v1078, 0.2
      %v1219 = vmul.f32 %v1081, 0.2
      %v1220 = vmul.f32 %v1086, 0.2
      %v1221 = vmul.f32 %v1089, 0.2
      %v1222 = vmul.f32 %v1094, 0.2
      %v1223 = vmul.f32 %v1097, 0.2
      %v1224 = vmul.f32 %v1102, 0.2
      %v1225 = vmul.f32 %v1105, 0.2
      %v1226 = vmul.f32 %v1110, 0.2
      %v1227 = vmul.f32 %v1113, 0.2
      %v1228 = vmul.f32 %v1118, 0.2
      %v1229 = vmul.f32 %v1121, 0.2
      %v1230 = vmul.f32 %v1126, 0.2
      %v1231 = vmul.f32 %v1129, 0.2
      %v1232 = vmul.f32 %v1134, 0.2
      %v1233 = vmul.f32 %v1137, 0.2
      %v1234 = vmul.f32 %v1142, 0.2
      %v1235 = vmul.f32 %v1145, 0.2
      %v1236 = vmul.f32 %v1150, 0.2
      %v1237 = vmul.f32 %v1153, 0.2
      %v1238 = vmul.f32 %v1158, 0.2
      %v1239 = vmul.f32 %v1161, 0.2
      %v1240 = vmul.f32 %v1166, 0.2
      %v1241 = vmul.f32 %v1169, 0.2
      %v1242 = vmul.f32 %v1174, 0.2
      %v1243 = vmul.f32 %v1177, 0.2
      %v1244 = vsel %vm1180, %v1054, %v1212
      %v1245 = vsel %vm1181, %v1057, %v1213
      %v1246 = vsel %vm1182, %v1062, %v1214
      %v1247 = vsel %vm1183, %v1065, %v1215
      %v1248 = vsel %vm1184, %v1070, %v1216
      %v1249 = vsel %vm1185, %v1073, %v1217
      %v1250 = vsel %vm1186, %v1078, %v1218
      %v1251 = vsel %vm1187, %v1081, %v1219
      %v1252 = vsel %vm1188, %v1086, %v1220
      %v1253 = vsel %vm1189, %v1089, %v1221
      %v1254 = vsel %vm1190, %v1094, %v1222
      %v1255 = vsel %vm1191, %v1097, %v1223
      %v1256 = vsel %vm1192, %v1102, %v1224
      %v1257 = vsel %vm1193, %v1105, %v1225
      %v1258 = vsel %vm1194, %v1110, %v1226
      %v1259 = vsel %vm1195, %v1113, %v1227
      %v1260 = vsel %vm1196, %v1118, %v1228
      %v1261 = vsel %vm1197, %v1121, %v1229
      %v1262 = vsel %vm1198, %v1126, %v1230
      %v1263 = vsel %vm1199, %v1129, %v1231
      %v1264 = vsel %vm1200, %v1134, %v1232
      %v1265 = vsel %vm1201, %v1137, %v1233
      %v1266 = vsel %vm1202, %v1142, %v1234
      %v1267 = vsel %vm1203, %v1145, %v1235
      %v1268 = vsel %vm1204, %v1150, %v1236
      %v1269 = vsel %vm1205, %v1153, %v1237
      %v1270 = vsel %vm1206, %v1158, %v1238
      %v1271 = vsel %vm1207, %v1161, %v1239
      %v1272 = vsel %vm1208, %v1166, %v1240
      %v1273 = vsel %vm1209, %v1169, %v1241
      %v1274 = vsel %vm1210, %v1174, %v1242
      %v1275 = vsel %vm1211, %v1177, %v1243
      %v1276 = vpack.c.bf16 %v1245, %v1244
      %v1277 = vpack.c.bf16 %v1247, %v1246
      %v1278 = vpack.c.bf16 %v1249, %v1248
      %v1279 = vpack.c.bf16 %v1251, %v1250
      %v1280 = vpack.c.bf16 %v1253, %v1252
      %v1281 = vpack.c.bf16 %v1255, %v1254
      %v1282 = vpack.c.bf16 %v1257, %v1256
      %v1283 = vpack.c.bf16 %v1259, %v1258
      %v1284 = vpack.c.bf16 %v1261, %v1260
      %v1285 = vpack.c.bf16 %v1263, %v1262
      %v1286 = vpack.c.bf16 %v1265, %v1264
      %v1287 = vpack.c.bf16 %v1267, %v1266
      %v1288 = vpack.c.bf16 %v1269, %v1268
      %v1289 = vpack.c.bf16 %v1271, %v1270
      %v1290 = vpack.c.bf16 %v1273, %v1272
      %v1291 = vpack.c.bf16 %v1275, %v1274
      %v1308 = vunpack.c.l.b16 %v1276
      %v1309 = vunpack.c.h.b16 %v1276
      %v1310 = vunpack.c.l.b16 %v1277
      %v1311 = vunpack.c.h.b16 %v1277
      %v1312 = vunpack.c.l.b16 %v1278
      %v1313 = vunpack.c.h.b16 %v1278
      %v1314 = vunpack.c.l.b16 %v1279
      %v1315 = vunpack.c.h.b16 %v1279
      %v1316 = vunpack.c.l.b16 %v1280
      %v1317 = vunpack.c.h.b16 %v1280
      %v1318 = vunpack.c.l.b16 %v1281
      %v1319 = vunpack.c.h.b16 %v1281
      %v1320 = vunpack.c.l.b16 %v1282
      %v1321 = vunpack.c.h.b16 %v1282
      %v1322 = vunpack.c.l.b16 %v1283
      %v1323 = vunpack.c.h.b16 %v1283
      %v1324 = vunpack.c.l.b16 %v1284
      %v1325 = vunpack.c.h.b16 %v1284
      %v1326 = vunpack.c.l.b16 %v1285
      %v1327 = vunpack.c.h.b16 %v1285
      %v1328 = vunpack.c.l.b16 %v1286
      %v1329 = vunpack.c.h.b16 %v1286
      %v1330 = vunpack.c.l.b16 %v1287
      %v1331 = vunpack.c.h.b16 %v1287
      %v1332 = vunpack.c.l.b16 %v1288
      %v1333 = vunpack.c.h.b16 %v1288
      %v1334 = vunpack.c.l.b16 %v1289
      %v1335 = vunpack.c.h.b16 %v1289
      %v1336 = vunpack.c.l.b16 %v1290
      %v1337 = vunpack.c.h.b16 %v1290
      %v1338 = vunpack.c.l.b16 %v1291
      %v1339 = vunpack.c.h.b16 %v1291
      %v1340 = vpack.c.b16 %v1308, %v1308
      %v1341 = vpack.c.b16 %v1309, %v1309
      %v1342 = vpack.c.b16 %v1310, %v1310
      %v1343 = vpack.c.b16 %v1311, %v1311
      %v1344 = vpack.c.b16 %v1312, %v1312
      %v1345 = vpack.c.b16 %v1313, %v1313
      %v1346 = vpack.c.b16 %v1314, %v1314
      %v1347 = vpack.c.b16 %v1315, %v1315
      %v1348 = vpack.c.b16 %v1316, %v1316
      %v1349 = vpack.c.b16 %v1317, %v1317
      %v1350 = vpack.c.b16 %v1318, %v1318
      %v1351 = vpack.c.b16 %v1319, %v1319
      %v1352 = vpack.c.b16 %v1320, %v1320
      %v1353 = vpack.c.b16 %v1321, %v1321
      %v1354 = vpack.c.b16 %v1322, %v1322
      %v1355 = vpack.c.b16 %v1323, %v1323
      %v1356 = vpack.c.b16 %v1324, %v1324
      %v1357 = vpack.c.b16 %v1325, %v1325
      %v1358 = vpack.c.b16 %v1326, %v1326
      %v1359 = vpack.c.b16 %v1327, %v1327
      %v1360 = vpack.c.b16 %v1328, %v1328
      %v1361 = vpack.c.b16 %v1329, %v1329
      %v1362 = vpack.c.b16 %v1330, %v1330
      %v1363 = vpack.c.b16 %v1331, %v1331
      %v1364 = vpack.c.b16 %v1332, %v1332
      %v1365 = vpack.c.b16 %v1333, %v1333
      %v1366 = vpack.c.b16 %v1334, %v1334
      %v1367 = vpack.c.b16 %v1335, %v1335
      %v1368 = vpack.c.b16 %v1336, %v1336
      %v1369 = vpack.c.b16 %v1337, %v1337
      %v1370 = vpack.c.b16 %v1338, %v1338
      %v1371 = vpack.c.b16 %v1339, %v1339
      %vm1404 = vcmask 519168
      %1405 = vst.msk [vmem:[%s143] sm:$0xf] %vm1404, %v1340
      %1406 = vst.msk [vmem:[%s143 + $0x4] sm:$0xf] %vm1404, %v1341
      %1407 = vst.msk [vmem:[%s143 + $0x8] sm:$0xf] %vm1404, %v1342
      %1408 = vst.msk [vmem:[%s143 + $0xc] sm:$0xf] %vm1404, %v1343
      %1409 = vst.msk [vmem:[%s143 + $0x10] sm:$0xf] %vm1404, %v1344
      %1410 = vst.msk [vmem:[%s143 + $0x14] sm:$0xf] %vm1404, %v1345
      %1411 = vst.msk [vmem:[%s143 + $0x18] sm:$0xf] %vm1404, %v1346
      %1412 = vst.msk [vmem:[%s143 + $0x1c] sm:$0xf] %vm1404, %v1347
      %1413 = vst.msk [vmem:[%s143 + $0x20] sm:$0xf] %vm1404, %v1348
      %1414 = vst.msk [vmem:[%s143 + $0x24] sm:$0xf] %vm1404, %v1349
      %1415 = vst.msk [vmem:[%s143 + $0x28] sm:$0xf] %vm1404, %v1350
      %1416 = vst.msk [vmem:[%s143 + $0x2c] sm:$0xf] %vm1404, %v1351
      %1417 = vst.msk [vmem:[%s143 + $0x30] sm:$0xf] %vm1404, %v1352
      %1418 = vst.msk [vmem:[%s143 + $0x34] sm:$0xf] %vm1404, %v1353
      %1419 = vst.msk [vmem:[%s143 + $0x38] sm:$0xf] %vm1404, %v1354
      %1420 = vst.msk [vmem:[%s143 + $0x3c] sm:$0xf] %vm1404, %v1355
      %1421 = vst.msk [vmem:[%s143 + $0x40] sm:$0xf] %vm1404, %v1356
      %1422 = vst.msk [vmem:[%s143 + $0x44] sm:$0xf] %vm1404, %v1357
      %1423 = vst.msk [vmem:[%s143 + $0x48] sm:$0xf] %vm1404, %v1358
      %1424 = vst.msk [vmem:[%s143 + $0x4c] sm:$0xf] %vm1404, %v1359
      %1425 = vst.msk [vmem:[%s143 + $0x50] sm:$0xf] %vm1404, %v1360
      %1426 = vst.msk [vmem:[%s143 + $0x54] sm:$0xf] %vm1404, %v1361
      %1427 = vst.msk [vmem:[%s143 + $0x58] sm:$0xf] %vm1404, %v1362
      %1428 = vst.msk [vmem:[%s143 + $0x5c] sm:$0xf] %vm1404, %v1363
      %1429 = vst.msk [vmem:[%s143 + $0x60] sm:$0xf] %vm1404, %v1364
      %1430 = vst.msk [vmem:[%s143 + $0x64] sm:$0xf] %vm1404, %v1365
      %1431 = vst.msk [vmem:[%s143 + $0x68] sm:$0xf] %vm1404, %v1366
      %1432 = vst.msk [vmem:[%s143 + $0x6c] sm:$0xf] %vm1404, %v1367
      %1433 = vst.msk [vmem:[%s143 + $0x70] sm:$0xf] %vm1404, %v1368
      %1434 = vst.msk [vmem:[%s143 + $0x74] sm:$0xf] %vm1404, %v1369
      %1435 = vst.msk [vmem:[%s143 + $0x78] sm:$0xf] %vm1404, %v1370
      %1436 = vst.msk [vmem:[%s143 + $0x7c] sm:$0xf] %vm1404, %v1371
      %p1437 = scmp.lt.s32.totalorder %s13, 1
      %s1438 = scalar_select %p1437, %s13, 1
      %s1439 = smul.addr %s1438, 32
      %s1440 = smul.addr %s1439, 4
      %s1441 = scalar_lea.vmem %s2, %s1440
      // Predicated region
      $region29: #{discriminator_forward.2} parent=27 // pred_check
        %p1442 = pneg %p78
      $region30: #{discriminator_forward.2} parent=27 // pred_check_branch
        %1444 = sbr.rel (%p1442) target = $region32
      $region31: #{discriminator_forward.2} parent=27 // pred_region
        _
      $region32: #{discriminator_forward.2} parent=27 // pred_fallthru
        _
    $region28: #{discriminator_forward.2} parent=5 // pred_fallthru
      _
    %p1445 = scmp.le.s32.totalorder 2, %s8
    // Predicated region
    $region33: #{discriminator_forward.2} parent=5 // pred_check
      %p1446 = pneg %p1445
    $region34: #{discriminator_forward.2} parent=5 // pred_check_branch
      %1448 = sbr.rel (%p1446) target = $region36
    $region35: #{discriminator_forward.2} parent=5 // pred_region
      %s1449 = ssub.s32 %s8, 2
      // Predicated region
      $region37: #{discriminator_forward.2} parent=35 // pred_check
        %p1450 = pneg %p84
      $region38: #{discriminator_forward.2} parent=35 // pred_check_branch
        %1452 = sbr.rel (%p1450) target = $region40
      $region39: #{discriminator_forward.2} parent=35 // pred_region
        %p1453 = scmp.lt.s32.totalorder %s14, 1
        %s1454 = scalar_select %p1453, %s14, 1
        %s1455 = smul.addr %s1454, 32
        %s1456 = smul.addr %s1455, 4
        %s1457 = scalar_lea.vmem %s2, %s1456
      $region40: #{discriminator_forward.2} parent=35 // pred_fallthru
        _
    $region36: #{discriminator_forward.2} parent=5 // pred_fallthru
      _
  $region6: #{discriminator_forward.2} parent=0 // loop_footer
    %s12 = sadd.s32 1, %s8
  $region7: #{discriminator_forward.2} parent=0 // loop_footer_branch
    %7 = sbr.rel target = $region3
  $region8: #{discriminator_forward.2} parent=0 // loop_exit
    _

// kernel: discriminator_forward.3
$region0: #{discriminator_forward.3}
  #allocation0 [shape = 'u32[]', space=smem, size = 0x4, offset = 0x4, fixed_abs, tag = 'smem constant byte address 0x4 - core index']
  #allocation1 [shape = 'u32[144,128]{1,0:T(1,128)}', space=vmem, size = 0x12000, scoped, tag = 'internal scratch']
  %s0 = inlined_call_operand.vmem [shape: bf16[2,16,16,64], index: 0, kind: input, shape index: {}]
  %s1 = inlined_call_operand.vmem [shape: bf16[1024,128], index: 1, kind: input, shape index: {}]
  %s2 = inlined_call_operand.vmem [shape: f32[1,128], index: 2, kind: input, shape index: {}]
  %s3 = inlined_call_operand.vmem [shape: f32[1,128], index: 3, kind: input, shape index: {}]
  %s4 = inlined_call_operand.vmem [shape: bf16[2048,256], index: 4, kind: input, shape index: {}]
  %s5 = inlined_call_operand.vmem [shape: f32[1,256], index: 5, kind: input, shape index: {}]
  %s6 = inlined_call_operand.vmem [shape: f32[1,256], index: 6, kind: input, shape index: {}]
  %s7 = inlined_call_operand.vmem [shape: f32[16,256], index: 7, kind: input, shape index: {}]
  %s8 = inlined_call_operand.vmem [shape: f32[2,1], index: 8, kind: output, shape index: {}]
  %s9 = sld [smem:[#allocation0]]
  $region42: #{discriminator_forward.3} parent=0
    _
  %s11 = ssub.s32 1, %s9
  %s12 = scalar_select 0, %s11, %s9
  // Predicated region
  $region2: #{discriminator_forward.3} parent=0 // pred_check
    _
  $region3: #{discriminator_forward.3} parent=0 // pred_check_branch
    %14 = sbr.rel (0) target = $region5
  $region4: #{discriminator_forward.3} parent=0 // pred_region
    _
  $region5: #{discriminator_forward.3} parent=0 // pred_fallthru
    _
  // Predicated region
  $region6: #{discriminator_forward.3} parent=0 // pred_check
    _
  $region7: #{discriminator_forward.3} parent=0 // pred_check_branch
    %16 = sbr.rel (0) target = $region9
  $region8: #{discriminator_forward.3} parent=0 // pred_region
    _
  $region9: #{discriminator_forward.3} parent=0 // pred_fallthru
    _
  // Predicated region
  $region10: #{discriminator_forward.3} parent=0 // pred_check
    _
  $region11: #{discriminator_forward.3} parent=0 // pred_check_branch
    %18 = sbr.rel (0) target = $region13
  $region12: #{discriminator_forward.3} parent=0 // pred_region
    _
  $region13: #{discriminator_forward.3} parent=0 // pred_fallthru
    _
  // Predicated region
  $region14: #{discriminator_forward.3} parent=0 // pred_check
    _
  $region15: #{discriminator_forward.3} parent=0 // pred_check_branch
    %20 = sbr.rel (0) target = $region17
  $region16: #{discriminator_forward.3} parent=0 // pred_region
    _
  $region17: #{discriminator_forward.3} parent=0 // pred_fallthru
    _
  // Predicated region
  $region18: #{discriminator_forward.3} parent=0 // pred_check
    _
  $region19: #{discriminator_forward.3} parent=0 // pred_check_branch
    %22 = sbr.rel (0) target = $region21
  $region20: #{discriminator_forward.3} parent=0 // pred_region
    _
  $region21: #{discriminator_forward.3} parent=0 // pred_fallthru
    _
  // Predicated region
  $region22: #{discriminator_forward.3} parent=0 // pred_check
    _
  $region23: #{discriminator_forward.3} parent=0 // pred_check_branch
    %24 = sbr.rel (0) target = $region25
  $region24: #{discriminator_forward.3} parent=0 // pred_region
    _
  $region25: #{discriminator_forward.3} parent=0 // pred_fallthru
    _
  // Predicated region
  $region26: #{discriminator_forward.3} parent=0 // pred_check
    _
  $region27: #{discriminator_forward.3} parent=0 // pred_check_branch
    %26 = sbr.rel (0) target = $region29
  $region28: #{discriminator_forward.3} parent=0 // pred_region
    _
  $region29: #{discriminator_forward.3} parent=0 // pred_fallthru
    _
  // Predicated region
  $region30: #{discriminator_forward.3} parent=0 // pred_check
    _
  $region31: #{discriminator_forward.3} parent=0 // pred_check_branch
    %28 = sbr.rel (0) target = $region33
  $region32: #{discriminator_forward.3} parent=0 // pred_region
    _
  $region33: #{discriminator_forward.3} parent=0 // pred_fallthru
    _
  %v30 = vld [vmem:[%s0] sm:$0xf]
  %v31 = vld [vmem:[%s0 + $0x4] sm:$0xf]
  %v32 = vld [vmem:[%s0 + $0x8] sm:$0xf]
  %v33 = vld [vmem:[%s0 + $0xc] sm:$0xf]
  %v34 = vld [vmem:[%s0 + $0x10] sm:$0xf]
  %v35 = vld [vmem:[%s0 + $0x14] sm:$0xf]
  %v36 = vld [vmem:[%s0 + $0x18] sm:$0xf]
  %v37 = vld [vmem:[%s0 + $0x1c] sm:$0xf]
  %v38 = vld [vmem:[%s0 + $0x20] sm:$0xf]
  %v39 = vld [vmem:[%s0 + $0x24] sm:$0xf]
  %v40 = vld [vmem:[%s0 + $0x28] sm:$0xf]
  %v41 = vld [vmem:[%s0 + $0x2c] sm:$0xf]
  %v42 = vld [vmem:[%s0 + $0x30] sm:$0xf]
  %v43 = vld [vmem:[%s0 + $0x34] sm:$0xf]
  %v44 = vld [vmem:[%s0 + $0x38] sm:$0xf]
  %v45 = vld [vmem:[%s0 + $0x3c] sm:$0xf]
  %v46 = vld [vmem:[%s0 + $0x40] sm:$0xf]
  %v47 = vld [vmem:[%s0 + $0x44] sm:$0xf]
  %v48 = vld [vmem:[%s0 + $0x48] sm:$0xf]
  %v49 = vld [vmem:[%s0 + $0x4c] sm:$0xf]
  %v50 = vld [vmem:[%s0 + $0x50] sm:$0xf]
  %v51 = vld [vmem:[%s0 + $0x54] sm:$0xf]
  %v52 = vld [vmem:[%s0 + $0x58] sm:$0xf]
  %v53 = vld [vmem:[%s0 + $0x5c] sm:$0xf]
  %v54 = vld [vmem:[%s0 + $0x60] sm:$0xf]
  %v55 = vld [vmem:[%s0 + $0x64] sm:$0xf]
  %v56 = vld [vmem:[%s0 + $0x68] sm:$0xf]
  %v57 = vld [vmem:[%s0 + $0x6c] sm:$0xf]
  %v58 = vld [vmem:[%s0 + $0x70] sm:$0xf]
  %v59 = vld [vmem:[%s0 + $0x74] sm:$0xf]
  %v60 = vld [vmem:[%s0 + $0x78] sm:$0xf]
  %v61 = vld [vmem:[%s0 + $0x7c] sm:$0xf]
  %v62 = vld [vmem:[%s0 + $0x80] sm:$0xf]
  %v63 = vld [vmem:[%s0 + $0x84] sm:$0xf]
  %v64 = vld [vmem:[%s0 + $0x88] sm:$0xf]
  %v65 = vld [vmem:[%s0 + $0x8c] sm:$0xf]
  %v66 = vld [vmem:[%s0 + $0x90] sm:$0xf]
  %v67 = vld [vmem:[%s0 + $0x94] sm:$0xf]
  %v68 = vld [vmem:[%s0 + $0x98] sm:$0xf]
  %v69 = vld [vmem:[%s0 + $0x9c] sm:$0xf]
  %v70 = vld [vmem:[%s0 + $0xa0] sm:$0xf]
  %v71 = vld [vmem:[%s0 + $0xa4] sm:$0xf]
  %v72 = vld [vmem:[%s0 + $0xa8] sm:$0xf]
  %v73 = vld [vmem:[%s0 + $0xac] sm:$0xf]
  %v74 = vld [vmem:[%s0 + $0xb0] sm:$0xf]
  %v75 = vld [vmem:[%s0 + $0xb4] sm:$0xf]
  %v76 = vld [vmem:[%s0 + $0xb8] sm:$0xf]
  %v77 = vld [vmem:[%s0 + $0xbc] sm:$0xf]
  %v78 = vld [vmem:[%s0 + $0xc0] sm:$0xf]
  %v79 = vld [vmem:[%s0 + $0xc4] sm:$0xf]
  %v80 = vld [vmem:[%s0 + $0xc8] sm:$0xf]
  %v81 = vld [vmem:[%s0 + $0xcc] sm:$0xf]
  %v82 = vld [vmem:[%s0 + $0xd0] sm:$0xf]
  %v83 = vld [vmem:[%s0 + $0xd4] sm:$0xf]
  %v84 = vld [vmem:[%s0 + $0xd8] sm:$0xf]
  %v85 = vld [vmem:[%s0 + $0xdc] sm:$0xf]
  %v86 = vld [vmem:[%s0 + $0xe0] sm:$0xf]
  %v87 = vld [vmem:[%s0 + $0xe4] sm:$0xf]
  %v88 = vld [vmem:[%s0 + $0xe8] sm:$0xf]
  %v89 = vld [vmem:[%s0 + $0xec] sm:$0xf]
  %v90 = vld [vmem:[%s0 + $0xf0] sm:$0xf]
  %v91 = vld [vmem:[%s0 + $0xf4] sm:$0xf]
  %v92 = vld [vmem:[%s0 + $0xf8] sm:$0xf]
  %v93 = vld [vmem:[%s0 + $0xfc] sm:$0xf]
  %v127 = vunpack.c.l.s4 1966171168
  %v128 = vunpack.c.0.s8 %v127
  %v129 = vlaneseq
  %v130 = vshrl.u32 %v129, 7
  %v131 = vsub.s32 %v128, %v130
  %v132 = vrot.slane %v30, %v131
  %v133 = vcombine.high %v132, %v132
  %v135 = vunpack.c.l.s4 1966171168
  %v136 = vunpack.c.0.s8 %v135
  %v137 = vlaneseq
  %v138 = vshrl.u32 %v137, 7
  %v139 = vsub.s32 %v136, %v138
  %v140 = vrot.slane %v132, %v139
  %v142 = vunpack.c.l.s4 1966171168
  %v143 = vunpack.c.0.s8 %v142
  %v144 = vlaneseq
  %v145 = vshrl.u32 %v144, 7
  %v146 = vsub.s32 %v143, %v145
  %v147 = vrot.slane %v133, %v146
  %v148 = vcombine.high %v140, %v140
  %v149 = vcombine.high %v147, %v147
  %v151 = vunpack.c.l.s4 1966171168
  %v152 = vunpack.c.0.s8 %v151
  %v153 = vlaneseq
  %v154 = vshrl.u32 %v153, 7
  %v155 = vsub.s32 %v152, %v154
  %v156 = vrot.slane %v31, %v155
  %v157 = vcombine.high %v156, %v156
  %v159 = vunpack.c.l.s4 1966171168
  %v160 = vunpack.c.0.s8 %v159
  %v161 = vlaneseq
  %v162 = vshrl.u32 %v161, 7
  %v163 = vsub.s32 %v160, %v162
  %v164 = vrot.slane %v156, %v163
  %v166 = vunpack.c.l.s4 1966171168
  %v167 = vunpack.c.0.s8 %v166
  %v168 = vlaneseq
  %v169 = vshrl.u32 %v168, 7
  %v170 = vsub.s32 %v167, %v169
  %v171 = vrot.slane %v157, %v170
  %v172 = vcombine.high %v164, %v164
  %v173 = vcombine.high %v171, %v171
  %v175 = vunpack.c.l.s4 1966171168
  %v176 = vunpack.c.0.s8 %v175
  %v177 = vlaneseq
  %v178 = vshrl.u32 %v177, 7
  %v179 = vsub.s32 %v176, %v178
  %v180 = vrot.slane %v34, %v179
  %v181 = vcombine.high %v180, %v180
  %v183 = vunpack.c.l.s4 1966171168
  %v184 = vunpack.c.0.s8 %v183
  %v185 = vlaneseq
  %v186 = vshrl.u32 %v185, 7
  %v187 = vsub.s32 %v184, %v186
  %v188 = vrot.slane %v180, %v187
  %v190 = vunpack.c.l.s4 1966171168
  %v191 = vunpack.c.0.s8 %v190
  %v192 = vlaneseq
  %v193 = vshrl.u32 %v192, 7
  %v194 = vsub.s32 %v191, %v193
  %v195 = vrot.slane %v181, %v194
  %v196 = vcombine.high %v188, %v188
  %v197 = vcombine.high %v195, %v195
  %v199 = vunpack.c.l.s4 1966171168
  %v200 = vunpack.c.0.s8 %v199
  %v201 = vlaneseq
  %v202 = vshrl.u32 %v201, 7
  %v203 = vsub.s32 %v200, %v202
  %v204 = vrot.slane %v35, %v203
  %v205 = vcombine.high %v204, %v204
  %v207 = vunpack.c.l.s4 1966171168
  %v208 = vunpack.c.0.s8 %v207
  %v209 = vlaneseq
  %v210 = vshrl.u32 %v209, 7
  %v211 = vsub.s32 %v208, %v210
  %v212 = vrot.slane %v204, %v211
  %v214 = vunpack.c.l.s4 1966171168
  %v215 = vunpack.c.0.s8 %v214
  %v216 = vlaneseq
  %v217 = vshrl.u32 %v216, 7
  %v218 = vsub.s32 %v215, %v217
  %v219 = vrot.slane %v205, %v218
  %v220 = vcombine.high %v212, %v212
  %v221 = vcombine.high %v219, %v219
  %v223 = vunpack.c.l.s4 1966171168
  %v224 = vunpack.c.0.s8 %v223
  %v225 = vlaneseq
  %v226 = vshrl.u32 %v225, 7
  %v227 = vsub.s32 %v224, %v226
  %v228 = vrot.slane %v38, %v227
  %v229 = vcombine.high %v228, %v228
  %v231 = vunpack.c.l.s4 1966171168
  %v232 = vunpack.c.0.s8 %v231
  %v233 = vlaneseq
  %v234 = vshrl.u32 %v233, 7
  %v235 = vsub.s32 %v232, %v234
  %v236 = vrot.slane %v228, %v235
  %v238 = vunpack.c.l.s4 1966171168
  %v239 = vunpack.c.0.s8 %v238
  %v240 = vlaneseq
  %v241 = vshrl.u32 %v240, 7
  %v242 = vsub.s32 %v239, %v241
  %v243 = vrot.slane %v229, %v242
  %v244 = vcombine.high %v236, %v236
  %v245 = vcombine.high %v243, %v243
  %v247 = vunpack.c.l.s4 1966171168
  %v248 = vunpack.c.0.s8 %v247
  %v249 = vlaneseq
  %v250 = vshrl.u32 %v249, 7
  %v251 = vsub.s32 %v248, %v250
  %v252 = vrot.slane %v39, %v251
  %v253 = vcombine.high %v252, %v252
  %v255 = vunpack.c.l.s4 1966171168
  %v256 = vunpack.c.0.s8 %v255
  %v257 = vlaneseq
  %v258 = vshrl.u32 %v257, 7
  %v259 = vsub.s32 %v256, %v258
  %v260 = vrot.slane %v252, %v259
  %v262 = vunpack.c.l.s4 1966171168
  %v263 = vunpack.c.0.s8 %v262
  %v264 = vlaneseq
  %v265 = vshrl.u32 %v264, 7
  %v266 = vsub.s32 %v263, %v265
  %v267 = vrot.slane %v253, %v266
  %v268 = vcombine.high %v260, %v260
  %v269 = vcombine.high %v267, %v267
  %v271 = vunpack.c.l.s4 1966171168
  %v272 = vunpack.c.0.s8 %v271
  %v273 = vlaneseq
  %v274 = vshrl.u32 %v273, 7
  %v275 = vsub.s32 %v272, %v274
  %v276 = vrot.slane %v42, %v275
  %v277 = vcombine.high %v276, %v276
  %v279 = vunpack.c.l.s4 1966171168
  %v280 = vunpack.c.0.s8 %v279
  %v281 = vlaneseq
  %v282 = vshrl.u32 %v281, 7
  %v283 = vsub.s32 %v280, %v282
  %v284 = vrot.slane %v276, %v283
  %v286 = vunpack.c.l.s4 1966171168
  %v287 = vunpack.c.0.s8 %v286
  %v288 = vlaneseq
  %v289 = vshrl.u32 %v288, 7
  %v290 = vsub.s32 %v287, %v289
  %v291 = vrot.slane %v277, %v290
  %v292 = vcombine.high %v284, %v284
  %v293 = vcombine.high %v291, %v291
  %v295 = vunpack.c.l.s4 1966171168
  %v296 = vunpack.c.0.s8 %v295
  %v297 = vlaneseq
  %v298 = vshrl.u32 %v297, 7
  %v299 = vsub.s32 %v296, %v298
  %v300 = vrot.slane %v43, %v299
  %v301 = vcombine.high %v300, %v300
  %v303 = vunpack.c.l.s4 1966171168
  %v304 = vunpack.c.0.s8 %v303
  %v305 = vlaneseq
  %v306 = vshrl.u32 %v305, 7
  %v307 = vsub.s32 %v304, %v306
  %v308 = vrot.slane %v300, %v307
  %v310 = vunpack.c.l.s4 1966171168
  %v311 = vunpack.c.0.s8 %v310
  %v312 = vlaneseq
  %v313 = vshrl.u32 %v312, 7
  %v314 = vsub.s32 %v311, %v313
  %v315 = vrot.slane %v301, %v314
  %v316 = vcombine.high %v308, %v308
  %v317 = vcombine.high %v315, %v315
  %v319 = vunpack.c.l.s4 1966171168
  %v320 = vunpack.c.0.s8 %v319
  %v321 = vlaneseq
  %v322 = vshrl.u32 %v321, 7
  %v323 = vsub.s32 %v320, %v322
  %v324 = vrot.slane %v46, %v323
  %v325 = vcombine.high %v324, %v324
  %v327 = vunpack.c.l.s4 1966171168
  %v328 = vunpack.c.0.s8 %v327
  %v329 = vlaneseq
  %v330 = vshrl.u32 %v329, 7
  %v331 = vsub.s32 %v328, %v330
  %v332 = vrot.slane %v324, %v331
  %v334 = vunpack.c.l.s4 1966171168
  %v335 = vunpack.c.0.s8 %v334
  %v336 = vlaneseq
  %v337 = vshrl.u32 %v336, 7
  %v338 = vsub.s32 %v335, %v337
  %v339 = vrot.slane %v325, %v338
  %v340 = vcombine.high %v332, %v332
  %v341 = vcombine.high %v339, %v339
  %v343 = vunpack.c.l.s4 1966171168
  %v344 = vunpack.c.0.s8 %v343
  %v345 = vlaneseq
  %v346 = vshrl.u32 %v345, 7
  %v347 = vsub.s32 %v344, %v346
  %v348 = vrot.slane %v47, %v347
  %v349 = vcombine.high %v348, %v348
  %v351 = vunpack.c.l.s4 1966171168
  %v352 = vunpack.c.0.s8 %v351
  %v353 = vlaneseq
  %v354 = vshrl.u32 %v353, 7
  %v355 = vsub.s32 %v352, %v354
  %v356 = vrot.slane %v348, %v355
  %v358 = vunpack.c.l.s4 1966171168
  %v359 = vunpack.c.0.s8 %v358
  %v360 = vlaneseq
  %v361 = vshrl.u32 %v360, 7
  %v362 = vsub.s32 %v359, %v361
  %v363 = vrot.slane %v349, %v362
  %v364 = vcombine.high %v356, %v356
  %v365 = vcombine.high %v363, %v363
  %v367 = vunpack.c.l.s4 1966171168
  %v368 = vunpack.c.0.s8 %v367
  %v369 = vlaneseq
  %v370 = vshrl.u32 %v369, 7
  %v371 = vsub.s32 %v368, %v370
  %v372 = vrot.slane %v50, %v371
  %v373 = vcombine.high %v372, %v372
  %v375 = vunpack.c.l.s4 1966171168
  %v376 = vunpack.c.0.s8 %v375
  %v377 = vlaneseq
  %v378 = vshrl.u32 %v377, 7
  %v379 = vsub.s32 %v376, %v378
  %v380 = vrot.slane %v372, %v379
  %v382 = vunpack.c.l.s4 1966171168
  %v383 = vunpack.c.0.s8 %v382
  %v384 = vlaneseq
  %v385 = vshrl.u32 %v384, 7
  %v386 = vsub.s32 %v383, %v385
  %v387 = vrot.slane %v373, %v386
  %v388 = vcombine.high %v380, %v380
  %v389 = vcombine.high %v387, %v387
  %v391 = vunpack.c.l.s4 1966171168
  %v392 = vunpack.c.0.s8 %v391
  %v393 = vlaneseq
  %v394 = vshrl.u32 %v393, 7
  %v395 = vsub.s32 %v392, %v394
  %v396 = vrot.slane %v51, %v395
  %v397 = vcombine.high %v396, %v396
  %v399 = vunpack.c.l.s4 1966171168
  %v400 = vunpack.c.0.s8 %v399
  %v401 = vlaneseq
  %v402 = vshrl.u32 %v401, 7
  %v403 = vsub.s32 %v400, %v402
  %v404 = vrot.slane %v396, %v403
  %v406 = vunpack.c.l.s4 1966171168
  %v407 = vunpack.c.0.s8 %v406
  %v408 = vlaneseq
  %v409 = vshrl.u32 %v408, 7
  %v410 = vsub.s32 %v407, %v409
  %v411 = vrot.slane %v397, %v410
  %v412 = vcombine.high %v404, %v404
  %v413 = vcombine.high %v411, %v411
  %v415 = vunpack.c.l.s4 1966171168
  %v416 = vunpack.c.0.s8 %v415
  %v417 = vlaneseq
  %v418 = vshrl.u32 %v417, 7
  %v419 = vsub.s32 %v416, %v418
  %v420 = vrot.slane %v54, %v419
  %v421 = vcombine.high %v420, %v420
  %v423 = vunpack.c.l.s4 1966171168
  %v424 = vunpack.c.0.s8 %v423
  %v425 = vlaneseq
  %v426 = vshrl.u32 %v425, 7
  %v427 = vsub.s32 %v424, %v426
  %v428 = vrot.slane %v420, %v427
  %v430 = vunpack.c.l.s4 1966171168
  %v431 = vunpack.c.0.s8 %v430
  %v432 = vlaneseq
  %v433 = vshrl.u32 %v432, 7
  %v434 = vsub.s32 %v431, %v433
  %v435 = vrot.slane %v421, %v434
  %v436 = vcombine.high %v428, %v428
  %v437 = vcombine.high %v435, %v435
  %v439 = vunpack.c.l.s4 1966171168
  %v440 = vunpack.c.0.s8 %v439
  %v441 = vlaneseq
  %v442 = vshrl.u32 %v441, 7
  %v443 = vsub.s32 %v440, %v442
  %v444 = vrot.slane %v55, %v443
  %v445 = vcombine.high %v444, %v444
  %v447 = vunpack.c.l.s4 1966171168
  %v448 = vunpack.c.0.s8 %v447
  %v449 = vlaneseq
  %v450 = vshrl.u32 %v449, 7
  %v451 = vsub.s32 %v448, %v450
  %v452 = vrot.slane %v444, %v451
  %v454 = vunpack.c.l.s4 1966171168
  %v455 = vunpack.c.0.s8 %v454
  %v456 = vlaneseq
  %v457 = vshrl.u32 %v456, 7
  %v458 = vsub.s32 %v455, %v457
  %v459 = vrot.slane %v445, %v458
  %v460 = vcombine.high %v452, %v452
  %v461 = vcombine.high %v459, %v459
  %v463 = vunpack.c.l.s4 1966171168
  %v464 = vunpack.c.0.s8 %v463
  %v465 = vlaneseq
  %v466 = vshrl.u32 %v465, 7
  %v467 = vsub.s32 %v464, %v466
  %v468 = vrot.slane %v58, %v467
  %v469 = vcombine.high %v468, %v468
  %v471 = vunpack.c.l.s4 1966171168
  %v472 = vunpack.c.0.s8 %v471
  %v473 = vlaneseq
  %v474 = vshrl.u32 %v473, 7
  %v475 = vsub.s32 %v472, %v474
  %v476 = vrot.slane %v468, %v475
  %v478 = vunpack.c.l.s4 1966171168
  %v479 = vunpack.c.0.s8 %v478
  %v480 = vlaneseq
  %v481 = vshrl.u32 %v480, 7
  %v482 = vsub.s32 %v479, %v481
  %v483 = vrot.slane %v469, %v482
  %v484 = vcombine.high %v476, %v476
  %v485 = vcombine.high %v483, %v483
  %v487 = vunpack.c.l.s4 1966171168
  %v488 = vunpack.c.0.s8 %v487
  %v489 = vlaneseq
  %v490 = vshrl.u32 %v489, 7
  %v491 = vsub.s32 %v488, %v490
  %v492 = vrot.slane %v59, %v491
  %v493 = vcombine.high %v492, %v492
  %v495 = vunpack.c.l.s4 1966171168
  %v496 = vunpack.c.0.s8 %v495
  %v497 = vlaneseq
  %v498 = vshrl.u32 %v497, 7
  %v499 = vsub.s32 %v496, %v498
  %v500 = vrot.slane %v492, %v499
  %v502 = vunpack.c.l.s4 1966171168
  %v503 = vunpack.c.0.s8 %v502
  %v504 = vlaneseq
  %v505 = vshrl.u32 %v504, 7
  %v506 = vsub.s32 %v503, %v505
  %v507 = vrot.slane %v493, %v506
  %v508 = vcombine.high %v500, %v500
  %v509 = vcombine.high %v507, %v507
  %v511 = vunpack.c.l.s4 1966171168
  %v512 = vunpack.c.0.s8 %v511
  %v513 = vlaneseq
  %v514 = vshrl.u32 %v513, 7
  %v515 = vsub.s32 %v512, %v514
  %v516 = vrot.slane %v62, %v515
  %v517 = vcombine.high %v516, %v516
  %v519 = vunpack.c.l.s4 1966171168
  %v520 = vunpack.c.0.s8 %v519
  %v521 = vlaneseq
  %v522 = vshrl.u32 %v521, 7
  %v523 = vsub.s32 %v520, %v522
  %v524 = vrot.slane %v516, %v523
  %v526 = vunpack.c.l.s4 1966171168
  %v527 = vunpack.c.0.s8 %v526
  %v528 = vlaneseq
  %v529 = vshrl.u32 %v528, 7
  %v530 = vsub.s32 %v527, %v529
  %v531 = vrot.slane %v517, %v530
  %v532 = vcombine.high %v524, %v524
  %v533 = vcombine.high %v531, %v531
  %v535 = vunpack.c.l.s4 1966171168
  %v536 = vunpack.c.0.s8 %v535
  %v537 = vlaneseq
  %v538 = vshrl.u32 %v537, 7
  %v539 = vsub.s32 %v536, %v538
  %v540 = vrot.slane %v63, %v539
  %v541 = vcombine.high %v540, %v540
  %v543 = vunpack.c.l.s4 1966171168
  %v544 = vunpack.c.0.s8 %v543
  %v545 = vlaneseq
  %v546 = vshrl.u32 %v545, 7
  %v547 = vsub.s32 %v544, %v546
  %v548 = vrot.slane %v540, %v547
  %v550 = vunpack.c.l.s4 1966171168
  %v551 = vunpack.c.0.s8 %v550
  %v552 = vlaneseq
  %v553 = vshrl.u32 %v552, 7
  %v554 = vsub.s32 %v551, %v553
  %v555 = vrot.slane %v541, %v554
  %v556 = vcombine.high %v548, %v548
  %v557 = vcombine.high %v555, %v555
  %v559 = vunpack.c.l.s4 1966171168
  %v560 = vunpack.c.0.s8 %v559
  %v561 = vlaneseq
  %v562 = vshrl.u32 %v561, 7
  %v563 = vsub.s32 %v560, %v562
  %v564 = vrot.slane %v66, %v563
  %v565 = vcombine.high %v564, %v564
  %v567 = vunpack.c.l.s4 1966171168
  %v568 = vunpack.c.0.s8 %v567
  %v569 = vlaneseq
  %v570 = vshrl.u32 %v569, 7
  %v571 = vsub.s32 %v568, %v570
  %v572 = vrot.slane %v564, %v571
  %v574 = vunpack.c.l.s4 1966171168
  %v575 = vunpack.c.0.s8 %v574
  %v576 = vlaneseq
  %v577 = vshrl.u32 %v576, 7
  %v578 = vsub.s32 %v575, %v577
  %v579 = vrot.slane %v565, %v578
  %v580 = vcombine.high %v572, %v572
  %v581 = vcombine.high %v579, %v579
  %v583 = vunpack.c.l.s4 1966171168
  %v584 = vunpack.c.0.s8 %v583
  %v585 = vlaneseq
  %v586 = vshrl.u32 %v585, 7
  %v587 = vsub.s32 %v584, %v586
  %v588 = vrot.slane %v67, %v587
  %v589 = vcombine.high %v588, %v588
  %v591 = vunpack.c.l.s4 1966171168
  %v592 = vunpack.c.0.s8 %v591
  %v593 = vlaneseq
  %v594 = vshrl.u32 %v593, 7
  %v595 = vsub.s32 %v592, %v594
  %v596 = vrot.slane %v588, %v595
  %v598 = vunpack.c.l.s4 1966171168
  %v599 = vunpack.c.0.s8 %v598
  %v600 = vlaneseq
  %v601 = vshrl.u32 %v600, 7
  %v602 = vsub.s32 %v599, %v601
  %v603 = vrot.slane %v589, %v602
  %v604 = vcombine.high %v596, %v596
  %v605 = vcombine.high %v603, %v603
  %v607 = vunpack.c.l.s4 1966171168
  %v608 = vunpack.c.0.s8 %v607
  %v609 = vlaneseq
  %v610 = vshrl.u32 %v609, 7
  %v611 = vsub.s32 %v608, %v610
  %v612 = vrot.slane %v70, %v611
  %v613 = vcombine.high %v612, %v612
  %v615 = vunpack.c.l.s4 1966171168
  %v616 = vunpack.c.0.s8 %v615
  %v617 = vlaneseq
  %v618 = vshrl.u32 %v617, 7
  %v619 = vsub.s32 %v616, %v618
  %v620 = vrot.slane %v612, %v619
  %v622 = vunpack.c.l.s4 1966171168
  %v623 = vunpack.c.0.s8 %v622
  %v624 = vlaneseq
  %v625 = vshrl.u32 %v624, 7
  %v626 = vsub.s32 %v623, %v625
  %v627 = vrot.slane %v613, %v626
  %v628 = vcombine.high %v620, %v620
  %v629 = vcombine.high %v627, %v627
  %v631 = vunpack.c.l.s4 1966171168
  %v632 = vunpack.c.0.s8 %v631
  %v633 = vlaneseq
  %v634 = vshrl.u32 %v633, 7
  %v635 = vsub.s32 %v632, %v634
  %v636 = vrot.slane %v71, %v635
  %v637 = vcombine.high %v636, %v636
  %v639 = vunpack.c.l.s4 1966171168
  %v640 = vunpack.c.0.s8 %v639
  %v641 = vlaneseq
  %v642 = vshrl.u32 %v641, 7
  %v643 = vsub.s32 %v640, %v642
  %v644 = vrot.slane %v636, %v643
  %v646 = vunpack.c.l.s4 1966171168
  %v647 = vunpack.c.0.s8 %v646
  %v648 = vlaneseq
  %v649 = vshrl.u32 %v648, 7
  %v650 = vsub.s32 %v647, %v649
  %v651 = vrot.slane %v637, %v650
  %v652 = vcombine.high %v644, %v644
  %v653 = vcombine.high %v651, %v651
  %v655 = vunpack.c.l.s4 1966171168
  %v656 = vunpack.c.0.s8 %v655
  %v657 = vlaneseq
  %v658 = vshrl.u32 %v657, 7
  %v659 = vsub.s32 %v656, %v658
  %v660 = vrot.slane %v74, %v659
  %v661 = vcombine.high %v660, %v660
  %v663 = vunpack.c.l.s4 1966171168
  %v664 = vunpack.c.0.s8 %v663
  %v665 = vlaneseq
  %v666 = vshrl.u32 %v665, 7
  %v667 = vsub.s32 %v664, %v666
  %v668 = vrot.slane %v660, %v667
  %v670 = vunpack.c.l.s4 1966171168
  %v671 = vunpack.c.0.s8 %v670
  %v672 = vlaneseq
  %v673 = vshrl.u32 %v672, 7
  %v674 = vsub.s32 %v671, %v673
  %v675 = vrot.slane %v661, %v674
  %v676 = vcombine.high %v668, %v668
  %v677 = vcombine.high %v675, %v675
  %v679 = vunpack.c.l.s4 1966171168
  %v680 = vunpack.c.0.s8 %v679
  %v681 = vlaneseq
  %v682 = vshrl.u32 %v681, 7
  %v683 = vsub.s32 %v680, %v682
  %v684 = vrot.slane %v75, %v683
  %v685 = vcombine.high %v684, %v684
  %v687 = vunpack.c.l.s4 1966171168
  %v688 = vunpack.c.0.s8 %v687
  %v689 = vlaneseq
  %v690 = vshrl.u32 %v689, 7
  %v691 = vsub.s32 %v688, %v690
  %v692 = vrot.slane %v684, %v691
  %v694 = vunpack.c.l.s4 1966171168
  %v695 = vunpack.c.0.s8 %v694
  %v696 = vlaneseq
  %v697 = vshrl.u32 %v696, 7
  %v698 = vsub.s32 %v695, %v697
  %v699 = vrot.slane %v685, %v698
  %v700 = vcombine.high %v692, %v692
  %v701 = vcombine.high %v699, %v699
  %v703 = vunpack.c.l.s4 1966171168
  %v704 = vunpack.c.0.s8 %v703
  %v705 = vlaneseq
  %v706 = vshrl.u32 %v705, 7
  %v707 = vsub.s32 %v704, %v706
  %v708 = vrot.slane %v78, %v707
  %v709 = vcombine.high %v708, %v708
  %v711 = vunpack.c.l.s4 1966171168
  %v712 = vunpack.c.0.s8 %v711
  %v713 = vlaneseq
  %v714 = vshrl.u32 %v713, 7
  %v715 = vsub.s32 %v712, %v714
  %v716 = vrot.slane %v708, %v715
  %v718 = vunpack.c.l.s4 1966171168
  %v719 = vunpack.c.0.s8 %v718
  %v720 = vlaneseq
  %v721 = vshrl.u32 %v720, 7
  %v722 = vsub.s32 %v719, %v721
  %v723 = vrot.slane %v709, %v722
  %v724 = vcombine.high %v716, %v716
  %v725 = vcombine.high %v723, %v723
  %v727 = vunpack.c.l.s4 1966171168
  %v728 = vunpack.c.0.s8 %v727
  %v729 = vlaneseq
  %v730 = vshrl.u32 %v729, 7
  %v731 = vsub.s32 %v728, %v730
  %v732 = vrot.slane %v79, %v731
  %v733 = vcombine.high %v732, %v732
  %v735 = vunpack.c.l.s4 1966171168
  %v736 = vunpack.c.0.s8 %v735
  %v737 = vlaneseq
  %v738 = vshrl.u32 %v737, 7
  %v739 = vsub.s32 %v736, %v738
  %v740 = vrot.slane %v732, %v739
  %v742 = vunpack.c.l.s4 1966171168
  %v743 = vunpack.c.0.s8 %v742
  %v744 = vlaneseq
  %v745 = vshrl.u32 %v744, 7
  %v746 = vsub.s32 %v743, %v745
  %v747 = vrot.slane %v733, %v746
  %v748 = vcombine.high %v740, %v740
  %v749 = vcombine.high %v747, %v747
  %v751 = vunpack.c.l.s4 1966171168
  %v752 = vunpack.c.0.s8 %v751
  %v753 = vlaneseq
  %v754 = vshrl.u32 %v753, 7
  %v755 = vsub.s32 %v752, %v754
  %v756 = vrot.slane %v82, %v755
  %v757 = vcombine.high %v756, %v756
  %v759 = vunpack.c.l.s4 1966171168
  %v760 = vunpack.c.0.s8 %v759
  %v761 = vlaneseq
  %v762 = vshrl.u32 %v761, 7
  %v763 = vsub.s32 %v760, %v762
  %v764 = vrot.slane %v756, %v763
  %v766 = vunpack.c.l.s4 1966171168
  %v767 = vunpack.c.0.s8 %v766
  %v768 = vlaneseq
  %v769 = vshrl.u32 %v768, 7
  %v770 = vsub.s32 %v767, %v769
  %v771 = vrot.slane %v757, %v770
  %v772 = vcombine.high %v764, %v764
  %v773 = vcombine.high %v771, %v771
  %v775 = vunpack.c.l.s4 1966171168
  %v776 = vunpack.c.0.s8 %v775
  %v777 = vlaneseq
  %v778 = vshrl.u32 %v777, 7
  %v779 = vsub.s32 %v776, %v778
  %v780 = vrot.slane %v83, %v779
  %v781 = vcombine.high %v780, %v780
  %v783 = vunpack.c.l.s4 1966171168
  %v784 = vunpack.c.0.s8 %v783
  %v785 = vlaneseq
  %v786 = vshrl.u32 %v785, 7
  %v787 = vsub.s32 %v784, %v786
  %v788 = vrot.slane %v780, %v787
  %v790 = vunpack.c.l.s4 1966171168
  %v791 = vunpack.c.0.s8 %v790
  %v792 = vlaneseq
  %v793 = vshrl.u32 %v792, 7
  %v794 = vsub.s32 %v791, %v793
  %v795 = vrot.slane %v781, %v794
  %v796 = vcombine.high %v788, %v788
  %v797 = vcombine.high %v795, %v795
  %v799 = vunpack.c.l.s4 1966171168
  %v800 = vunpack.c.0.s8 %v799
  %v801 = vlaneseq
  %v802 = vshrl.u32 %v801, 7
  %v803 = vsub.s32 %v800, %v802
  %v804 = vrot.slane %v86, %v803
  %v805 = vcombine.high %v804, %v804
  %v807 = vunpack.c.l.s4 1966171168
  %v808 = vunpack.c.0.s8 %v807
  %v809 = vlaneseq
  %v810 = vshrl.u32 %v809, 7
  %v811 = vsub.s32 %v808, %v810
  %v812 = vrot.slane %v804, %v811
  %v814 = vunpack.c.l.s4 1966171168
  %v815 = vunpack.c.0.s8 %v814
  %v816 = vlaneseq
  %v817 = vshrl.u32 %v816, 7
  %v818 = vsub.s32 %v815, %v817
  %v819 = vrot.slane %v805, %v818
  %v820 = vcombine.high %v812, %v812
  %v821 = vcombine.high %v819, %v819
  %v823 = vunpack.c.l.s4 1966171168
  %v824 = vunpack.c.0.s8 %v823
  %v825 = vlaneseq
  %v826 = vshrl.u32 %v825, 7
  %v827 = vsub.s32 %v824, %v826
  %v828 = vrot.slane %v87, %v827
  %v829 = vcombine.high %v828, %v828
  %v831 = vunpack.c.l.s4 1966171168
  %v832 = vunpack.c.0.s8 %v831
  %v833 = vlaneseq
  %v834 = vshrl.u32 %v833, 7
  %v835 = vsub.s32 %v832, %v834
  %v836 = vrot.slane %v828, %v835
  %v838 = vunpack.c.l.s4 1966171168
  %v839 = vunpack.c.0.s8 %v838
  %v840 = vlaneseq
  %v841 = vshrl.u32 %v840, 7
  %v842 = vsub.s32 %v839, %v841
  %v843 = vrot.slane %v829, %v842
  %v844 = vcombine.high %v836, %v836
  %v845 = vcombine.high %v843, %v843
  %v847 = vunpack.c.l.s4 1966171168
  %v848 = vunpack.c.0.s8 %v847
  %v849 = vlaneseq
  %v850 = vshrl.u32 %v849, 7
  %v851 = vsub.s32 %v848, %v850
  %v852 = vrot.slane %v90, %v851
  %v853 = vcombine.high %v852, %v852
  %v855 = vunpack.c.l.s4 1966171168
  %v856 = vunpack.c.0.s8 %v855
  %v857 = vlaneseq
  %v858 = vshrl.u32 %v857, 7
  %v859 = vsub.s32 %v856, %v858
  %v860 = vrot.slane %v852, %v859
  %v862 = vunpack.c.l.s4 1966171168
  %v863 = vunpack.c.0.s8 %v862
  %v864 = vlaneseq
  %v865 = vshrl.u32 %v864, 7
  %v866 = vsub.s32 %v863, %v865
  %v867 = vrot.slane %v853, %v866
  %v868 = vcombine.high %v860, %v860
  %v869 = vcombine.high %v867, %v867
  %v871 = vunpack.c.l.s4 1966171168
  %v872 = vunpack.c.0.s8 %v871
  %v873 = vlaneseq
  %v874 = vshrl.u32 %v873, 7
  %v875 = vsub.s32 %v872, %v874
  %v876 = vrot.slane %v91, %v875
  %v877 = vcombine.high %v876, %v876
  %v879 = vunpack.c.l.s4 1966171168
  %v880 = vunpack.c.0.s8 %v879
  %v881 = vlaneseq
  %v882 = vshrl.u32 %v881, 7
  %v883 = vsub.s32 %v880, %v882
  %v884 = vrot.slane %v876, %v883
  %v886 = vunpack.c.l.s4 1966171168
  %v887 = vunpack.c.0.s8 %v886
  %v888 = vlaneseq
  %v889 = vshrl.u32 %v888, 7
  %v890 = vsub.s32 %v887, %v889
  %v891 = vrot.slane %v877, %v890
  %v892 = vcombine.high %v884, %v884
  %v893 = vcombine.high %v891, %v891
  %v895 = vunpack.c.l.s4 1966171168
  %v896 = vunpack.c.0.s8 %v895
  %v897 = vlaneseq
  %v898 = vshrl.u32 %v897, 7
  %v899 = vsub.s32 %v896, %v898
  %v900 = vrot.slane %v140, %v899
  %v902 = vunpack.c.l.s4 1966171168
  %v903 = vunpack.c.0.s8 %v902
  %v904 = vlaneseq
  %v905 = vshrl.u32 %v904, 7
  %v906 = vsub.s32 %v903, %v905
  %v907 = vrot.slane %v900, %v906
  %v909 = vunpack.c.l.s4 1966171168
  %v910 = vunpack.c.0.s8 %v909
  %v911 = vlaneseq
  %v912 = vshrl.u32 %v911, 7
  %v913 = vsub.s32 %v910, %v912
  %v914 = vrot.slane %v147, %v913
  %v916 = vunpack.c.l.s4 1966171168
  %v917 = vunpack.c.0.s8 %v916
  %v918 = vlaneseq
  %v919 = vshrl.u32 %v918, 7
  %v920 = vsub.s32 %v917, %v919
  %v921 = vrot.slane %v914, %v920
  %v923 = vunpack.c.l.s4 1966171168
  %v924 = vunpack.c.0.s8 %v923
  %v925 = vlaneseq
  %v926 = vshrl.u32 %v925, 7
  %v927 = vsub.s32 %v924, %v926
  %v928 = vrot.slane %v148, %v927
  %v930 = vunpack.c.l.s4 1966171168
  %v931 = vunpack.c.0.s8 %v930
  %v932 = vlaneseq
  %v933 = vshrl.u32 %v932, 7
  %v934 = vsub.s32 %v931, %v933
  %v935 = vrot.slane %v928, %v934
  %v937 = vunpack.c.l.s4 1966171168
  %v938 = vunpack.c.0.s8 %v937
  %v939 = vlaneseq
  %v940 = vshrl.u32 %v939, 7
  %v941 = vsub.s32 %v938, %v940
  %v942 = vrot.slane %v149, %v941
  %v944 = vunpack.c.l.s4 1966171168
  %v945 = vunpack.c.0.s8 %v944
  %v946 = vlaneseq
  %v947 = vshrl.u32 %v946, 7
  %v948 = vsub.s32 %v945, %v947
  %v949 = vrot.slane %v942, %v948
  %v951 = vunpack.c.l.s4 1966171168
  %v952 = vunpack.c.0.s8 %v951
  %v953 = vlaneseq
  %v954 = vshrl.u32 %v953, 7
  %v955 = vsub.s32 %v952, %v954
  %v956 = vrot.slane %v164, %v955
  %v958 = vunpack.c.l.s4 1966171168
  %v959 = vunpack.c.0.s8 %v958
  %v960 = vlaneseq
  %v961 = vshrl.u32 %v960, 7
  %v962 = vsub.s32 %v959, %v961
  %v963 = vrot.slane %v956, %v962
  %v965 = vunpack.c.l.s4 1966171168
  %v966 = vunpack.c.0.s8 %v965
  %v967 = vlaneseq
  %v968 = vshrl.u32 %v967, 7
  %v969 = vsub.s32 %v966, %v968
  %v970 = vrot.slane %v171, %v969
  %v972 = vunpack.c.l.s4 1966171168
  %v973 = vunpack.c.0.s8 %v972
  %v974 = vlaneseq
  %v975 = vshrl.u32 %v974, 7
  %v976 = vsub.s32 %v973, %v975
  %v977 = vrot.slane %v970, %v976
  %v979 = vunpack.c.l.s4 1966171168
  %v980 = vunpack.c.0.s8 %v979
  %v981 = vlaneseq
  %v982 = vshrl.u32 %v981, 7
  %v983 = vsub.s32 %v980, %v982
  %v984 = vrot.slane %v172, %v983
  %v986 = vunpack.c.l.s4 1966171168
  %v987 = vunpack.c.0.s8 %v986
  %v988 = vlaneseq
  %v989 = vshrl.u32 %v988, 7
  %v990 = vsub.s32 %v987, %v989
  %v991 = vrot.slane %v984, %v990
  %v993 = vunpack.c.l.s4 1966171168
  %v994 = vunpack.c.0.s8 %v993
  %v995 = vlaneseq
  %v996 = vshrl.u32 %v995, 7
  %v997 = vsub.s32 %v994, %v996
  %v998 = vrot.slane %v173, %v997
  %v1000 = vunpack.c.l.s4 1966171168
  %v1001 = vunpack.c.0.s8 %v1000
  %v1002 = vlaneseq
  %v1003 = vshrl.u32 %v1002, 7
  %v1004 = vsub.s32 %v1001, %v1003
  %v1005 = vrot.slane %v998, %v1004
  %v1007 = vunpack.c.l.s4 1966171168
  %v1008 = vunpack.c.0.s8 %v1007
  %v1009 = vlaneseq
  %v1010 = vshrl.u32 %v1009, 7
  %v1011 = vsub.s32 %v1008, %v1010
  %v1012 = vrot.slane %v188, %v1011
  %v1014 = vunpack.c.l.s4 1966171168
  %v1015 = vunpack.c.0.s8 %v1014
  %v1016 = vlaneseq
  %v1017 = vshrl.u32 %v1016, 7
  %v1018 = vsub.s32 %v1015, %v1017
  %v1019 = vrot.slane %v1012, %v1018
  %v1021 = vunpack.c.l.s4 1966171168
  %v1022 = vunpack.c.0.s8 %v1021
  %v1023 = vlaneseq
  %v1024 = vshrl.u32 %v1023, 7
  %v1025 = vsub.s32 %v1022, %v1024
  %v1026 = vrot.slane %v195, %v1025
  %v1028 = vunpack.c.l.s4 1966171168
  %v1029 = vunpack.c.0.s8 %v1028
  %v1030 = vlaneseq
  %v1031 = vshrl.u32 %v1030, 7
  %v1032 = vsub.s32 %v1029, %v1031
  %v1033 = vrot.slane %v1026, %v1032
  %v1035 = vunpack.c.l.s4 1966171168
  %v1036 = vunpack.c.0.s8 %v1035
  %v1037 = vlaneseq
  %v1038 = vshrl.u32 %v1037, 7
  %v1039 = vsub.s32 %v1036, %v1038
  %v1040 = vrot.slane %v196, %v1039
  %v1042 = vunpack.c.l.s4 1966171168
  %v1043 = vunpack.c.0.s8 %v1042
  %v1044 = vlaneseq
  %v1045 = vshrl.u32 %v1044, 7
  %v1046 = vsub.s32 %v1043, %v1045
  %v1047 = vrot.slane %v1040, %v1046
  %v1049 = vunpack.c.l.s4 1966171168
  %v1050 = vunpack.c.0.s8 %v1049
  %v1051 = vlaneseq
  %v1052 = vshrl.u32 %v1051, 7
  %v1053 = vsub.s32 %v1050, %v1052
  %v1054 = vrot.slane %v197, %v1053
  %v1056 = vunpack.c.l.s4 1966171168
  %v1057 = vunpack.c.0.s8 %v1056
  %v1058 = vlaneseq
  %v1059 = vshrl.u32 %v1058, 7
  %v1060 = vsub.s32 %v1057, %v1059
  %v1061 = vrot.slane %v1054, %v1060
  %v1063 = vunpack.c.l.s4 1966171168
  %v1064 = vunpack.c.0.s8 %v1063
  %v1065 = vlaneseq
  %v1066 = vshrl.u32 %v1065, 7
  %v1067 = vsub.s32 %v1064, %v1066
  %v1068 = vrot.slane %v212, %v1067
  %v1070 = vunpack.c.l.s4 1966171168
  %v1071 = vunpack.c.0.s8 %v1070
  %v1072 = vlaneseq
  %v1073 = vshrl.u32 %v1072, 7
  %v1074 = vsub.s32 %v1071, %v1073
  %v1075 = vrot.slane %v1068, %v1074
  %v1077 = vunpack.c.l.s4 1966171168
  %v1078 = vunpack.c.0.s8 %v1077
  %v1079 = vlaneseq
  %v1080 = vshrl.u32 %v1079, 7
  %v1081 = vsub.s32 %v1078, %v1080
  %v1082 = vrot.slane %v219, %v1081
  %v1084 = vunpack.c.l.s4 1966171168
  %v1085 = vunpack.c.0.s8 %v1084
  %v1086 = vlaneseq
  %v1087 = vshrl.u32 %v1086, 7
  %v1088 = vsub.s32 %v1085, %v1087
  %v1089 = vrot.slane %v1082, %v1088
  %v1091 = vunpack.c.l.s4 1966171168
  %v1092 = vunpack.c.0.s8 %v1091
  %v1093 = vlaneseq
  %v1094 = vshrl.u32 %v1093, 7
  %v1095 = vsub.s32 %v1092, %v1094
  %v1096 = vrot.slane %v220, %v1095
  %v1098 = vunpack.c.l.s4 1966171168
  %v1099 = vunpack.c.0.s8 %v1098
  %v1100 = vlaneseq
  %v1101 = vshrl.u32 %v1100, 7
  %v1102 = vsub.s32 %v1099, %v1101
  %v1103 = vrot.slane %v1096, %v1102
  %v1105 = vunpack.c.l.s4 1966171168
  %v1106 = vunpack.c.0.s8 %v1105
  %v1107 = vlaneseq
  %v1108 = vshrl.u32 %v1107, 7
  %v1109 = vsub.s32 %v1106, %v1108
  %v1110 = vrot.slane %v221, %v1109
  %v1112 = vunpack.c.l.s4 1966171168
  %v1113 = vunpack.c.0.s8 %v1112
  %v1114 = vlaneseq
  %v1115 = vshrl.u32 %v1114, 7
  %v1116 = vsub.s32 %v1113, %v1115
  %v1117 = vrot.slane %v1110, %v1116
  %v1119 = vunpack.c.l.s4 1966171168
  %v1120 = vunpack.c.0.s8 %v1119
  %v1121 = vlaneseq
  %v1122 = vshrl.u32 %v1121, 7
  %v1123 = vsub.s32 %v1120, %v1122
  %v1124 = vrot.slane %v236, %v1123
  %v1126 = vunpack.c.l.s4 1966171168
  %v1127 = vunpack.c.0.s8 %v1126
  %v1128 = vlaneseq
  %v1129 = vshrl.u32 %v1128, 7
  %v1130 = vsub.s32 %v1127, %v1129
  %v1131 = vrot.slane %v1124, %v1130
  %v1133 = vunpack.c.l.s4 1966171168
  %v1134 = vunpack.c.0.s8 %v1133
  %v1135 = vlaneseq
  %v1136 = vshrl.u32 %v1135, 7
  %v1137 = vsub.s32 %v1134, %v1136
  %v1138 = vrot.slane %v243, %v1137
  %v1140 = vunpack.c.l.s4 1966171168
  %v1141 = vunpack.c.0.s8 %v1140
  %v1142 = vlaneseq
  %v1143 = vshrl.u32 %v1142, 7
  %v1144 = vsub.s32 %v1141, %v1143
  %v1145 = vrot.slane %v1138, %v1144
  %v1147 = vunpack.c.l.s4 1966171168
  %v1148 = vunpack.c.0.s8 %v1147
  %v1149 = vlaneseq
  %v1150 = vshrl.u32 %v1149, 7
  %v1151 = vsub.s32 %v1148, %v1150
  %v1152 = vrot.slane %v244, %v1151
  %v1154 = vunpack.c.l.s4 1966171168
  %v1155 = vunpack.c.0.s8 %v1154
  %v1156 = vlaneseq
  %v1157 = vshrl.u32 %v1156, 7
  %v1158 = vsub.s32 %v1155, %v1157
  %v1159 = vrot.slane %v1152, %v1158
  %v1161 = vunpack.c.l.s4 1966171168
  %v1162 = vunpack.c.0.s8 %v1161
  %v1163 = vlaneseq
  %v1164 = vshrl.u32 %v1163, 7
  %v1165 = vsub.s32 %v1162, %v1164
  %v1166 = vrot.slane %v245, %v1165
  %v1168 = vunpack.c.l.s4 1966171168
  %v1169 = vunpack.c.0.s8 %v1168
  %v1170 = vlaneseq
  %v1171 = vshrl.u32 %v1170, 7
  %v1172 = vsub.s32 %v1169, %v1171
  %v1173 = vrot.slane %v1166, %v1172
  %v1175 = vunpack.c.l.s4 1966171168
  %v1176 = vunpack.c.0.s8 %v1175
  %v1177 = vlaneseq
  %v1178 = vshrl.u32 %v1177, 7
  %v1179 = vsub.s32 %v1176, %v1178
  %v1180 = vrot.slane %v260, %v1179
  %v1182 = vunpack.c.l.s4 1966171168
  %v1183 = vunpack.c.0.s8 %v1182
  %v1184 = vlaneseq
  %v1185 = vshrl.u32 %v1184, 7
  %v1186 = vsub.s32 %v1183, %v1185
  %v1187 = vrot.slane %v1180, %v1186
  %v1189 = vunpack.c.l.s4 1966171168
  %v1190 = vunpack.c.0.s8 %v1189
  %v1191 = vlaneseq
  %v1192 = vshrl.u32 %v1191, 7
  %v1193 = vsub.s32 %v1190, %v1192
  %v1194 = vrot.slane %v267, %v1193
  %v1196 = vunpack.c.l.s4 1966171168
  %v1197 = vunpack.c.0.s8 %v1196
  %v1198 = vlaneseq
  %v1199 = vshrl.u32 %v1198, 7
  %v1200 = vsub.s32 %v1197, %v1199
  %v1201 = vrot.slane %v1194, %v1200
  %v1203 = vunpack.c.l.s4 1966171168
  %v1204 = vunpack.c.0.s8 %v1203
  %v1205 = vlaneseq
  %v1206 = vshrl.u32 %v1205, 7
  %v1207 = vsub.s32 %v1204, %v1206
  %v1208 = vrot.slane %v268, %v1207
  %v1210 = vunpack.c.l.s4 1966171168
  %v1211 = vunpack.c.0.s8 %v1210
  %v1212 = vlaneseq
  %v1213 = vshrl.u32 %v1212, 7
  %v1214 = vsub.s32 %v1211, %v1213
  %v1215 = vrot.slane %v1208, %v1214
  %v1217 = vunpack.c.l.s4 1966171168
  %v1218 = vunpack.c.0.s8 %v1217
  %v1219 = vlaneseq
  %v1220 = vshrl.u32 %v1219, 7
  %v1221 = vsub.s32 %v1218, %v1220
  %v1222 = vrot.slane %v269, %v1221
  %v1224 = vunpack.c.l.s4 1966171168
  %v1225 = vunpack.c.0.s8 %v1224
  %v1226 = vlaneseq
  %v1227 = vshrl.u32 %v1226, 7
  %v1228 = vsub.s32 %v1225, %v1227
  %v1229 = vrot.slane %v1222, %v1228
  %v1231 = vunpack.c.l.s4 1966171168
  %v1232 = vunpack.c.0.s8 %v1231
  %v1233 = vlaneseq
  %v1234 = vshrl.u32 %v1233, 7
  %v1235 = vsub.s32 %v1232, %v1234
  %v1236 = vrot.slane %v284, %v1235
  %v1238 = vunpack.c.l.s4 1966171168
  %v1239 = vunpack.c.0.s8 %v1238
  %v1240 = vlaneseq
  %v1241 = vshrl.u32 %v1240, 7
  %v1242 = vsub.s32 %v1239, %v1241
  %v1243 = vrot.slane %v1236, %v1242
  %v1245 = vunpack.c.l.s4 1966171168
  %v1246 = vunpack.c.0.s8 %v1245
  %v1247 = vlaneseq
  %v1248 = vshrl.u32 %v1247, 7
  %v1249 = vsub.s32 %v1246, %v1248
  %v1250 = vrot.slane %v291, %v1249
  %v1252 = vunpack.c.l.s4 1966171168
  %v1253 = vunpack.c.0.s8 %v1252
  %v1254 = vlaneseq
  %v1255 = vshrl.u32 %v1254, 7
  %v1256 = vsub.s32 %v1253, %v1255
  %v1257 = vrot.slane %v1250, %v1256
  %v1259 = vunpack.c.l.s4 1966171168
  %v1260 = vunpack.c.0.s8 %v1259
  %v1261 = vlaneseq
  %v1262 = vshrl.u32 %v1261, 7
  %v1263 = vsub.s32 %v1260, %v1262
  %v1264 = vrot.slane %v292, %v1263
  %v1266 = vunpack.c.l.s4 1966171168
  %v1267 = vunpack.c.0.s8 %v1266
  %v1268 = vlaneseq
  %v1269 = vshrl.u32 %v1268, 7
  %v1270 = vsub.s32 %v1267, %v1269
  %v1271 = vrot.slane %v1264, %v1270
  %v1273 = vunpack.c.l.s4 1966171168
  %v1274 = vunpack.c.0.s8 %v1273
  %v1275 = vlaneseq
  %v1276 = vshrl.u32 %v1275, 7
  %v1277 = vsub.s32 %v1274, %v1276
  %v1278 = vrot.slane %v293, %v1277
  %v1280 = vunpack.c.l.s4 1966171168
  %v1281 = vunpack.c.0.s8 %v1280
  %v1282 = vlaneseq
  %v1283 = vshrl.u32 %v1282, 7
  %v1284 = vsub.s32 %v1281, %v1283
  %v1285 = vrot.slane %v1278, %v1284
  %v1287 = vunpack.c.l.s4 1966171168
  %v1288 = vunpack.c.0.s8 %v1287
  %v1289 = vlaneseq
  %v1290 = vshrl.u32 %v1289, 7
  %v1291 = vsub.s32 %v1288, %v1290
  %v1292 = vrot.slane %v308, %v1291
  %v1294 = vunpack.c.l.s4 1966171168
  %v1295 = vunpack.c.0.s8 %v1294
  %v1296 = vlaneseq
  %v1297 = vshrl.u32 %v1296, 7
  %v1298 = vsub.s32 %v1295, %v1297
  %v1299 = vrot.slane %v1292, %v1298
  %v1301 = vunpack.c.l.s4 1966171168
  %v1302 = vunpack.c.0.s8 %v1301
  %v1303 = vlaneseq
  %v1304 = vshrl.u32 %v1303, 7
  %v1305 = vsub.s32 %v1302, %v1304
  %v1306 = vrot.slane %v315, %v1305
  %v1308 = vunpack.c.l.s4 1966171168
  %v1309 = vunpack.c.0.s8 %v1308
  %v1310 = vlaneseq
  %v1311 = vshrl.u32 %v1310, 7
  %v1312 = vsub.s32 %v1309, %v1311
  %v1313 = vrot.slane %v1306, %v1312
  %v1315 = vunpack.c.l.s4 1966171168
  %v1316 = vunpack.c.0.s8 %v1315
  %v1317 = vlaneseq
  %v1318 = vshrl.u32 %v1317, 7
  %v1319 = vsub.s32 %v1316, %v1318
  %v1320 = vrot.slane %v316, %v1319
  %v1322 = vunpack.c.l.s4 1966171168
  %v1323 = vunpack.c.0.s8 %v1322
  %v1324 = vlaneseq
  %v1325 = vshrl.u32 %v1324, 7
  %v1326 = vsub.s32 %v1323, %v1325
  %v1327 = vrot.slane %v1320, %v1326
  %v1329 = vunpack.c.l.s4 1966171168
  %v1330 = vunpack.c.0.s8 %v1329
  %v1331 = vlaneseq
  %v1332 = vshrl.u32 %v1331, 7
  %v1333 = vsub.s32 %v1330, %v1332
  %v1334 = vrot.slane %v317, %v1333
  %v1336 = vunpack.c.l.s4 1966171168
  %v1337 = vunpack.c.0.s8 %v1336
  %v1338 = vlaneseq
  %v1339 = vshrl.u32 %v1338, 7
  %v1340 = vsub.s32 %v1337, %v1339
  %v1341 = vrot.slane %v1334, %v1340
  %v1343 = vunpack.c.l.s4 1966171168
  %v1344 = vunpack.c.0.s8 %v1343
  %v1345 = vlaneseq
  %v1346 = vshrl.u32 %v1345, 7
  %v1347 = vsub.s32 %v1344, %v1346
  %v1348 = vrot.slane %v332, %v1347
  %v1350 = vunpack.c.l.s4 1966171168
  %v1351 = vunpack.c.0.s8 %v1350
  %v1352 = vlaneseq
  %v1353 = vshrl.u32 %v1352, 7
  %v1354 = vsub.s32 %v1351, %v1353
  %v1355 = vrot.slane %v1348, %v1354
  %v1357 = vunpack.c.l.s4 1966171168
  %v1358 = vunpack.c.0.s8 %v1357
  %v1359 = vlaneseq
  %v1360 = vshrl.u32 %v1359, 7
  %v1361 = vsub.s32 %v1358, %v1360
  %v1362 = vrot.slane %v339, %v1361
  %v1364 = vunpack.c.l.s4 1966171168
  %v1365 = vunpack.c.0.s8 %v1364
  %v1366 = vlaneseq
  %v1367 = vshrl.u32 %v1366, 7
  %v1368 = vsub.s32 %v1365, %v1367
  %v1369 = vrot.slane %v1362, %v1368
  %v1371 = vunpack.c.l.s4 1966171168
  %v1372 = vunpack.c.0.s8 %v1371
  %v1373 = vlaneseq
  %v1374 = vshrl.u32 %v1373, 7
  %v1375 = vsub.s32 %v1372, %v1374
  %v1376 = vrot.slane %v340, %v1375
  %v1378 = vunpack.c.l.s4 1966171168
  %v1379 = vunpack.c.0.s8 %v1378
  %v1380 = vlaneseq
  %v1381 = vshrl.u32 %v1380, 7
  %v1382 = vsub.s32 %v1379, %v1381
  %v1383 = vrot.slane %v1376, %v1382
  %v1385 = vunpack.c.l.s4 1966171168
  %v1386 = vunpack.c.0.s8 %v1385
  %v1387 = vlaneseq
  %v1388 = vshrl.u32 %v1387, 7
  %v1389 = vsub.s32 %v1386, %v1388
  %v1390 = vrot.slane %v341, %v1389
  %v1392 = vunpack.c.l.s4 1966171168
  %v1393 = vunpack.c.0.s8 %v1392
  %v1394 = vlaneseq
  %v1395 = vshrl.u32 %v1394, 7
  %v1396 = vsub.s32 %v1393, %v1395
  %v1397 = vrot.slane %v1390, %v1396
  %v1399 = vunpack.c.l.s4 1966171168
  %v1400 = vunpack.c.0.s8 %v1399
  %v1401 = vlaneseq
  %v1402 = vshrl.u32 %v1401, 7
  %v1403 = vsub.s32 %v1400, %v1402
  %v1404 = vrot.slane %v356, %v1403
  %v1406 = vunpack.c.l.s4 1966171168
  %v1407 = vunpack.c.0.s8 %v1406
  %v1408 = vlaneseq
  %v1409 = vshrl.u32 %v1408, 7
  %v1410 = vsub.s32 %v1407, %v1409
  %v1411 = vrot.slane %v1404, %v1410
  %v1413 = vunpack.c.l.s4 1966171168
  %v1414 = vunpack.c.0.s8 %v1413
  %v1415 = vlaneseq
  %v1416 = vshrl.u32 %v1415, 7
  %v1417 = vsub.s32 %v1414, %v1416
  %v1418 = vrot.slane %v363, %v1417
  %v1420 = vunpack.c.l.s4 1966171168
  %v1421 = vunpack.c.0.s8 %v1420
  %v1422 = vlaneseq
  %v1423 = vshrl.u32 %v1422, 7
  %v1424 = vsub.s32 %v1421, %v1423
  %v1425 = vrot.slane %v1418, %v1424
  %v1427 = vunpack.c.l.s4 1966171168
  %v1428 = vunpack.c.0.s8 %v1427
  %v1429 = vlaneseq
  %v1430 = vshrl.u32 %v1429, 7
  %v1431 = vsub.s32 %v1428, %v1430
  %v1432 = vrot.slane %v364, %v1431
  %v1434 = vunpack.c.l.s4 1966171168
  %v1435 = vunpack.c.0.s8 %v1434
  %v1436 = vlaneseq
  %v1437 = vshrl.u32 %v1436, 7
  %v1438 = vsub.s32 %v1435, %v1437
  %v1439 = vrot.slane %v1432, %v1438
  %v1441 = vunpack.c.l.s4 1966171168
  %v1442 = vunpack.c.0.s8 %v1441
  %v1443 = vlaneseq
  %v1444 = vshrl.u32 %v1443, 7
  %v1445 = vsub.s32 %v1442, %v1444
  %v1446 = vrot.slane %v365, %v1445
  %v1448 = vunpack.c.l.s4 1966171168
  %v1449 = vunpack.c.0.s8 %v1448
  %v1450 = vlaneseq
  %v1451 = vshrl.u32 %v1450, 7
  %v1452 = vsub.s32 %v1449, %v1451
  %v1453 = vrot.slane %v1446, %v1452
  %v1455 = vunpack.c.l.s4 1966171168
  %v1456 = vunpack.c.0.s8 %v1455
  %v1457 = vlaneseq
  %v1458 = vshrl.u32 %v1457, 7
  %v1459 = vsub.s32 %v1456, %v1458
  %v1460 = vrot.slane %v380, %v1459
  %v1462 = vunpack.c.l.s4 1966171168
  %v1463 = vunpack.c.0.s8 %v1462
  %v1464 = vlaneseq
  %v1465 = vshrl.u32 %v1464, 7
  %v1466 = vsub.s32 %v1463, %v1465
  %v1467 = vrot.slane %v1460, %v1466
  %v1469 = vunpack.c.l.s4 1966171168
  %v1470 = vunpack.c.0.s8 %v1469
  %v1471 = vlaneseq
  %v1472 = vshrl.u32 %v1471, 7
  %v1473 = vsub.s32 %v1470, %v1472
  %v1474 = vrot.slane %v387, %v1473
  %v1476 = vunpack.c.l.s4 1966171168
  %v1477 = vunpack.c.0.s8 %v1476
  %v1478 = vlaneseq
  %v1479 = vshrl.u32 %v1478, 7
  %v1480 = vsub.s32 %v1477, %v1479
  %v1481 = vrot.slane %v1474, %v1480
  %v1483 = vunpack.c.l.s4 1966171168
  %v1484 = vunpack.c.0.s8 %v1483
  %v1485 = vlaneseq
  %v1486 = vshrl.u32 %v1485, 7
  %v1487 = vsub.s32 %v1484, %v1486
  %v1488 = vrot.slane %v388, %v1487
  %v1490 = vunpack.c.l.s4 1966171168
  %v1491 = vunpack.c.0.s8 %v1490
  %v1492 = vlaneseq
  %v1493 = vshrl.u32 %v1492, 7
  %v1494 = vsub.s32 %v1491, %v1493
  %v1495 = vrot.slane %v1488, %v1494
  %v1497 = vunpack.c.l.s4 1966171168
  %v1498 = vunpack.c.0.s8 %v1497
  %v1499 = vlaneseq
  %v1500 = vshrl.u32 %v1499, 7
  %v1501 = vsub.s32 %v1498, %v1500
  %v1502 = vrot.slane %v389, %v1501
  %v1504 = vunpack.c.l.s4 1966171168
  %v1505 = vunpack.c.0.s8 %v1504
  %v1506 = vlaneseq
  %v1507 = vshrl.u32 %v1506, 7
  %v1508 = vsub.s32 %v1505, %v1507
  %v1509 = vrot.slane %v1502, %v1508
  %v1511 = vunpack.c.l.s4 1966171168
  %v1512 = vunpack.c.0.s8 %v1511
  %v1513 = vlaneseq
  %v1514 = vshrl.u32 %v1513, 7
  %v1515 = vsub.s32 %v1512, %v1514
  %v1516 = vrot.slane %v404, %v1515
  %v1518 = vunpack.c.l.s4 1966171168
  %v1519 = vunpack.c.0.s8 %v1518
  %v1520 = vlaneseq
  %v1521 = vshrl.u32 %v1520, 7
  %v1522 = vsub.s32 %v1519, %v1521
  %v1523 = vrot.slane %v1516, %v1522
  %v1525 = vunpack.c.l.s4 1966171168
  %v1526 = vunpack.c.0.s8 %v1525
  %v1527 = vlaneseq
  %v1528 = vshrl.u32 %v1527, 7
  %v1529 = vsub.s32 %v1526, %v1528
  %v1530 = vrot.slane %v411, %v1529
  %v1532 = vunpack.c.l.s4 1966171168
  %v1533 = vunpack.c.0.s8 %v1532
  %v1534 = vlaneseq
  %v1535 = vshrl.u32 %v1534, 7
  %v1536 = vsub.s32 %v1533, %v1535
  %v1537 = vrot.slane %v1530, %v1536
  %v1539 = vunpack.c.l.s4 1966171168
  %v1540 = vunpack.c.0.s8 %v1539
  %v1541 = vlaneseq
  %v1542 = vshrl.u32 %v1541, 7
  %v1543 = vsub.s32 %v1540, %v1542
  %v1544 = vrot.slane %v412, %v1543
  %v1546 = vunpack.c.l.s4 1966171168
  %v1547 = vunpack.c.0.s8 %v1546
  %v1548 = vlaneseq
  %v1549 = vshrl.u32 %v1548, 7
  %v1550 = vsub.s32 %v1547, %v1549
  %v1551 = vrot.slane %v1544, %v1550
  %v1553 = vunpack.c.l.s4 1966171168
  %v1554 = vunpack.c.0.s8 %v1553
  %v1555 = vlaneseq
  %v1556 = vshrl.u32 %v1555, 7
  %v1557 = vsub.s32 %v1554, %v1556
  %v1558 = vrot.slane %v413, %v1557
  %v1560 = vunpack.c.l.s4 1966171168
  %v1561 = vunpack.c.0.s8 %v1560
  %v1562 = vlaneseq
  %v1563 = vshrl.u32 %v1562, 7
  %v1564 = vsub.s32 %v1561, %v1563
  %v1565 = vrot.slane %v1558, %v1564
  %v1567 = vunpack.c.l.s4 1966171168
  %v1568 = vunpack.c.0.s8 %v1567
  %v1569 = vlaneseq
  %v1570 = vshrl.u32 %v1569, 7
  %v1571 = vsub.s32 %v1568, %v1570
  %v1572 = vrot.slane %v428, %v1571
  %v1574 = vunpack.c.l.s4 1966171168
  %v1575 = vunpack.c.0.s8 %v1574
  %v1576 = vlaneseq
  %v1577 = vshrl.u32 %v1576, 7
  %v1578 = vsub.s32 %v1575, %v1577
  %v1579 = vrot.slane %v1572, %v1578
  %v1581 = vunpack.c.l.s4 1966171168
  %v1582 = vunpack.c.0.s8 %v1581
  %v1583 = vlaneseq
  %v1584 = vshrl.u32 %v1583, 7
  %v1585 = vsub.s32 %v1582, %v1584
  %v1586 = vrot.slane %v435, %v1585
  %v1588 = vunpack.c.l.s4 1966171168
  %v1589 = vunpack.c.0.s8 %v1588
  %v1590 = vlaneseq
  %v1591 = vshrl.u32 %v1590, 7
  %v1592 = vsub.s32 %v1589, %v1591
  %v1593 = vrot.slane %v1586, %v1592
  %v1595 = vunpack.c.l.s4 1966171168
  %v1596 = vunpack.c.0.s8 %v1595
  %v1597 = vlaneseq
  %v1598 = vshrl.u32 %v1597, 7
  %v1599 = vsub.s32 %v1596, %v1598
  %v1600 = vrot.slane %v436, %v1599
  %v1602 = vunpack.c.l.s4 1966171168
  %v1603 = vunpack.c.0.s8 %v1602
  %v1604 = vlaneseq
  %v1605 = vshrl.u32 %v1604, 7
  %v1606 = vsub.s32 %v1603, %v1605
  %v1607 = vrot.slane %v1600, %v1606
  %v1609 = vunpack.c.l.s4 1966171168
  %v1610 = vunpack.c.0.s8 %v1609
  %v1611 = vlaneseq
  %v1612 = vshrl.u32 %v1611, 7
  %v1613 = vsub.s32 %v1610, %v1612
  %v1614 = vrot.slane %v437, %v1613
  %v1616 = vunpack.c.l.s4 1966171168
  %v1617 = vunpack.c.0.s8 %v1616
  %v1618 = vlaneseq
  %v1619 = vshrl.u32 %v1618, 7
  %v1620 = vsub.s32 %v1617, %v1619
  %v1621 = vrot.slane %v1614, %v1620
  %v1623 = vunpack.c.l.s4 1966171168
  %v1624 = vunpack.c.0.s8 %v1623
  %v1625 = vlaneseq
  %v1626 = vshrl.u32 %v1625, 7
  %v1627 = vsub.s32 %v1624, %v1626
  %v1628 = vrot.slane %v452, %v1627
  %v1630 = vunpack.c.l.s4 1966171168
  %v1631 = vunpack.c.0.s8 %v1630
  %v1632 = vlaneseq
  %v1633 = vshrl.u32 %v1632, 7
  %v1634 = vsub.s32 %v1631, %v1633
  %v1635 = vrot.slane %v1628, %v1634
  %v1637 = vunpack.c.l.s4 1966171168
  %v1638 = vunpack.c.0.s8 %v1637
  %v1639 = vlaneseq
  %v1640 = vshrl.u32 %v1639, 7
  %v1641 = vsub.s32 %v1638, %v1640
  %v1642 = vrot.slane %v459, %v1641
  %v1644 = vunpack.c.l.s4 1966171168
  %v1645 = vunpack.c.0.s8 %v1644
  %v1646 = vlaneseq
  %v1647 = vshrl.u32 %v1646, 7
  %v1648 = vsub.s32 %v1645, %v1647
  %v1649 = vrot.slane %v1642, %v1648
  %v1651 = vunpack.c.l.s4 1966171168
  %v1652 = vunpack.c.0.s8 %v1651
  %v1653 = vlaneseq
  %v1654 = vshrl.u32 %v1653, 7
  %v1655 = vsub.s32 %v1652, %v1654
  %v1656 = vrot.slane %v460, %v1655
  %v1658 = vunpack.c.l.s4 1966171168
  %v1659 = vunpack.c.0.s8 %v1658
  %v1660 = vlaneseq
  %v1661 = vshrl.u32 %v1660, 7
  %v1662 = vsub.s32 %v1659, %v1661
  %v1663 = vrot.slane %v1656, %v1662
  %v1665 = vunpack.c.l.s4 1966171168
  %v1666 = vunpack.c.0.s8 %v1665
  %v1667 = vlaneseq
  %v1668 = vshrl.u32 %v1667, 7
  %v1669 = vsub.s32 %v1666, %v1668
  %v1670 = vrot.slane %v461, %v1669
  %v1672 = vunpack.c.l.s4 1966171168
  %v1673 = vunpack.c.0.s8 %v1672
  %v1674 = vlaneseq
  %v1675 = vshrl.u32 %v1674, 7
  %v1676 = vsub.s32 %v1673, %v1675
  %v1677 = vrot.slane %v1670, %v1676
  %v1679 = vunpack.c.l.s4 1966171168
  %v1680 = vunpack.c.0.s8 %v1679
  %v1681 = vlaneseq
  %v1682 = vshrl.u32 %v1681, 7
  %v1683 = vsub.s32 %v1680, %v1682
  %v1684 = vrot.slane %v476, %v1683
  %v1686 = vunpack.c.l.s4 1966171168
  %v1687 = vunpack.c.0.s8 %v1686
  %v1688 = vlaneseq
  %v1689 = vshrl.u32 %v1688, 7
  %v1690 = vsub.s32 %v1687, %v1689
  %v1691 = vrot.slane %v1684, %v1690
  %v1693 = vunpack.c.l.s4 1966171168
  %v1694 = vunpack.c.0.s8 %v1693
  %v1695 = vlaneseq
  %v1696 = vshrl.u32 %v1695, 7
  %v1697 = vsub.s32 %v1694, %v1696
  %v1698 = vrot.slane %v483, %v1697
  %v1700 = vunpack.c.l.s4 1966171168
  %v1701 = vunpack.c.0.s8 %v1700
  %v1702 = vlaneseq
  %v1703 = vshrl.u32 %v1702, 7
  %v1704 = vsub.s32 %v1701, %v1703
  %v1705 = vrot.slane %v1698, %v1704
  %v1707 = vunpack.c.l.s4 1966171168
  %v1708 = vunpack.c.0.s8 %v1707
  %v1709 = vlaneseq
  %v1710 = vshrl.u32 %v1709, 7
  %v1711 = vsub.s32 %v1708, %v1710
  %v1712 = vrot.slane %v484, %v1711
  %v1714 = vunpack.c.l.s4 1966171168
  %v1715 = vunpack.c.0.s8 %v1714
  %v1716 = vlaneseq
  %v1717 = vshrl.u32 %v1716, 7
  %v1718 = vsub.s32 %v1715, %v1717
  %v1719 = vrot.slane %v1712, %v1718
  %v1721 = vunpack.c.l.s4 1966171168
  %v1722 = vunpack.c.0.s8 %v1721
  %v1723 = vlaneseq
  %v1724 = vshrl.u32 %v1723, 7
  %v1725 = vsub.s32 %v1722, %v1724
  %v1726 = vrot.slane %v485, %v1725
  %v1728 = vunpack.c.l.s4 1966171168
  %v1729 = vunpack.c.0.s8 %v1728
  %v1730 = vlaneseq
  %v1731 = vshrl.u32 %v1730, 7
  %v1732 = vsub.s32 %v1729, %v1731
  %v1733 = vrot.slane %v1726, %v1732
  %v1735 = vunpack.c.l.s4 1966171168
  %v1736 = vunpack.c.0.s8 %v1735
  %v1737 = vlaneseq
  %v1738 = vshrl.u32 %v1737, 7
  %v1739 = vsub.s32 %v1736, %v1738
  %v1740 = vrot.slane %v500, %v1739
  %v1742 = vunpack.c.l.s4 1966171168
  %v1743 = vunpack.c.0.s8 %v1742
  %v1744 = vlaneseq
  %v1745 = vshrl.u32 %v1744, 7
  %v1746 = vsub.s32 %v1743, %v1745
  %v1747 = vrot.slane %v1740, %v1746
  %v1749 = vunpack.c.l.s4 1966171168
  %v1750 = vunpack.c.0.s8 %v1749
  %v1751 = vlaneseq
  %v1752 = vshrl.u32 %v1751, 7
  %v1753 = vsub.s32 %v1750, %v1752
  %v1754 = vrot.slane %v507, %v1753
  %v1756 = vunpack.c.l.s4 1966171168
  %v1757 = vunpack.c.0.s8 %v1756
  %v1758 = vlaneseq
  %v1759 = vshrl.u32 %v1758, 7
  %v1760 = vsub.s32 %v1757, %v1759
  %v1761 = vrot.slane %v1754, %v1760
  %v1763 = vunpack.c.l.s4 1966171168
  %v1764 = vunpack.c.0.s8 %v1763
  %v1765 = vlaneseq
  %v1766 = vshrl.u32 %v1765, 7
  %v1767 = vsub.s32 %v1764, %v1766
  %v1768 = vrot.slane %v508, %v1767
  %v1770 = vunpack.c.l.s4 1966171168
  %v1771 = vunpack.c.0.s8 %v1770
  %v1772 = vlaneseq
  %v1773 = vshrl.u32 %v1772, 7
  %v1774 = vsub.s32 %v1771, %v1773
  %v1775 = vrot.slane %v1768, %v1774
  %v1777 = vunpack.c.l.s4 1966171168
  %v1778 = vunpack.c.0.s8 %v1777
  %v1779 = vlaneseq
  %v1780 = vshrl.u32 %v1779, 7
  %v1781 = vsub.s32 %v1778, %v1780
  %v1782 = vrot.slane %v509, %v1781
  %v1784 = vunpack.c.l.s4 1966171168
  %v1785 = vunpack.c.0.s8 %v1784
  %v1786 = vlaneseq
  %v1787 = vshrl.u32 %v1786, 7
  %v1788 = vsub.s32 %v1785, %v1787
  %v1789 = vrot.slane %v1782, %v1788
  %v1791 = vunpack.c.l.s4 1966171168
  %v1792 = vunpack.c.0.s8 %v1791
  %v1793 = vlaneseq
  %v1794 = vshrl.u32 %v1793, 7
  %v1795 = vsub.s32 %v1792, %v1794
  %v1796 = vrot.slane %v524, %v1795
  %v1798 = vunpack.c.l.s4 1966171168
  %v1799 = vunpack.c.0.s8 %v1798
  %v1800 = vlaneseq
  %v1801 = vshrl.u32 %v1800, 7
  %v1802 = vsub.s32 %v1799, %v1801
  %v1803 = vrot.slane %v1796, %v1802
  %v1805 = vunpack.c.l.s4 1966171168
  %v1806 = vunpack.c.0.s8 %v1805
  %v1807 = vlaneseq
  %v1808 = vshrl.u32 %v1807, 7
  %v1809 = vsub.s32 %v1806, %v1808
  %v1810 = vrot.slane %v531, %v1809
  %v1812 = vunpack.c.l.s4 1966171168
  %v1813 = vunpack.c.0.s8 %v1812
  %v1814 = vlaneseq
  %v1815 = vshrl.u32 %v1814, 7
  %v1816 = vsub.s32 %v1813, %v1815
  %v1817 = vrot.slane %v1810, %v1816
  %v1819 = vunpack.c.l.s4 1966171168
  %v1820 = vunpack.c.0.s8 %v1819
  %v1821 = vlaneseq
  %v1822 = vshrl.u32 %v1821, 7
  %v1823 = vsub.s32 %v1820, %v1822
  %v1824 = vrot.slane %v532, %v1823
  %v1826 = vunpack.c.l.s4 1966171168
  %v1827 = vunpack.c.0.s8 %v1826
  %v1828 = vlaneseq
  %v1829 = vshrl.u32 %v1828, 7
  %v1830 = vsub.s32 %v1827, %v1829
  %v1831 = vrot.slane %v1824, %v1830
  %v1833 = vunpack.c.l.s4 1966171168
  %v1834 = vunpack.c.0.s8 %v1833
  %v1835 = vlaneseq
  %v1836 = vshrl.u32 %v1835, 7
  %v1837 = vsub.s32 %v1834, %v1836
  %v1838 = vrot.slane %v533, %v1837
  %v1840 = vunpack.c.l.s4 1966171168
  %v1841 = vunpack.c.0.s8 %v1840
  %v1842 = vlaneseq
  %v1843 = vshrl.u32 %v1842, 7
  %v1844 = vsub.s32 %v1841, %v1843
  %v1845 = vrot.slane %v1838, %v1844
  %v1847 = vunpack.c.l.s4 1966171168
  %v1848 = vunpack.c.0.s8 %v1847
  %v1849 = vlaneseq
  %v1850 = vshrl.u32 %v1849, 7
  %v1851 = vsub.s32 %v1848, %v1850
  %v1852 = vrot.slane %v548, %v1851
  %v1854 = vunpack.c.l.s4 1966171168
  %v1855 = vunpack.c.0.s8 %v1854
  %v1856 = vlaneseq
  %v1857 = vshrl.u32 %v1856, 7
  %v1858 = vsub.s32 %v1855, %v1857
  %v1859 = vrot.slane %v1852, %v1858
  %v1861 = vunpack.c.l.s4 1966171168
  %v1862 = vunpack.c.0.s8 %v1861
  %v1863 = vlaneseq
  %v1864 = vshrl.u32 %v1863, 7
  %v1865 = vsub.s32 %v1862, %v1864
  %v1866 = vrot.slane %v555, %v1865
  %v1868 = vunpack.c.l.s4 1966171168
  %v1869 = vunpack.c.0.s8 %v1868
  %v1870 = vlaneseq
  %v1871 = vshrl.u32 %v1870, 7
  %v1872 = vsub.s32 %v1869, %v1871
  %v1873 = vrot.slane %v1866, %v1872
  %v1875 = vunpack.c.l.s4 1966171168
  %v1876 = vunpack.c.0.s8 %v1875
  %v1877 = vlaneseq
  %v1878 = vshrl.u32 %v1877, 7
  %v1879 = vsub.s32 %v1876, %v1878
  %v1880 = vrot.slane %v556, %v1879
  %v1882 = vunpack.c.l.s4 1966171168
  %v1883 = vunpack.c.0.s8 %v1882
  %v1884 = vlaneseq
  %v1885 = vshrl.u32 %v1884, 7
  %v1886 = vsub.s32 %v1883, %v1885
  %v1887 = vrot.slane %v1880, %v1886
  %v1889 = vunpack.c.l.s4 1966171168
  %v1890 = vunpack.c.0.s8 %v1889
  %v1891 = vlaneseq
  %v1892 = vshrl.u32 %v1891, 7
  %v1893 = vsub.s32 %v1890, %v1892
  %v1894 = vrot.slane %v557, %v1893
  %v1896 = vunpack.c.l.s4 1966171168
  %v1897 = vunpack.c.0.s8 %v1896
  %v1898 = vlaneseq
  %v1899 = vshrl.u32 %v1898, 7
  %v1900 = vsub.s32 %v1897, %v1899
  %v1901 = vrot.slane %v1894, %v1900
  %v1903 = vunpack.c.l.s4 1966171168
  %v1904 = vunpack.c.0.s8 %v1903
  %v1905 = vlaneseq
  %v1906 = vshrl.u32 %v1905, 7
  %v1907 = vsub.s32 %v1904, %v1906
  %v1908 = vrot.slane %v572, %v1907
  %v1910 = vunpack.c.l.s4 1966171168
  %v1911 = vunpack.c.0.s8 %v1910
  %v1912 = vlaneseq
  %v1913 = vshrl.u32 %v1912, 7
  %v1914 = vsub.s32 %v1911, %v1913
  %v1915 = vrot.slane %v1908, %v1914
  %v1917 = vunpack.c.l.s4 1966171168
  %v1918 = vunpack.c.0.s8 %v1917
  %v1919 = vlaneseq
  %v1920 = vshrl.u32 %v1919, 7
  %v1921 = vsub.s32 %v1918, %v1920
  %v1922 = vrot.slane %v579, %v1921
  %v1924 = vunpack.c.l.s4 1966171168
  %v1925 = vunpack.c.0.s8 %v1924
  %v1926 = vlaneseq
  %v1927 = vshrl.u32 %v1926, 7
  %v1928 = vsub.s32 %v1925, %v1927
  %v1929 = vrot.slane %v1922, %v1928
  %v1931 = vunpack.c.l.s4 1966171168
  %v1932 = vunpack.c.0.s8 %v1931
  %v1933 = vlaneseq
  %v1934 = vshrl.u32 %v1933, 7
  %v1935 = vsub.s32 %v1932, %v1934
  %v1936 = vrot.slane %v580, %v1935
  %v1938 = vunpack.c.l.s4 1966171168
  %v1939 = vunpack.c.0.s8 %v1938
  %v1940 = vlaneseq
  %v1941 = vshrl.u32 %v1940, 7
  %v1942 = vsub.s32 %v1939, %v1941
  %v1943 = vrot.slane %v1936, %v1942
  %v1945 = vunpack.c.l.s4 1966171168
  %v1946 = vunpack.c.0.s8 %v1945
  %v1947 = vlaneseq
  %v1948 = vshrl.u32 %v1947, 7
  %v1949 = vsub.s32 %v1946, %v1948
  %v1950 = vrot.slane %v581, %v1949
  %v1952 = vunpack.c.l.s4 1966171168
  %v1953 = vunpack.c.0.s8 %v1952
  %v1954 = vlaneseq
  %v1955 = vshrl.u32 %v1954, 7
  %v1956 = vsub.s32 %v1953, %v1955
  %v1957 = vrot.slane %v1950, %v1956
  %v1959 = vunpack.c.l.s4 1966171168
  %v1960 = vunpack.c.0.s8 %v1959
  %v1961 = vlaneseq
  %v1962 = vshrl.u32 %v1961, 7
  %v1963 = vsub.s32 %v1960, %v1962
  %v1964 = vrot.slane %v596, %v1963
  %v1966 = vunpack.c.l.s4 1966171168
  %v1967 = vunpack.c.0.s8 %v1966
  %v1968 = vlaneseq
  %v1969 = vshrl.u32 %v1968, 7
  %v1970 = vsub.s32 %v1967, %v1969
  %v1971 = vrot.slane %v1964, %v1970
  %v1973 = vunpack.c.l.s4 1966171168
  %v1974 = vunpack.c.0.s8 %v1973
  %v1975 = vlaneseq
  %v1976 = vshrl.u32 %v1975, 7
  %v1977 = vsub.s32 %v1974, %v1976
  %v1978 = vrot.slane %v603, %v1977
  %v1980 = vunpack.c.l.s4 1966171168
  %v1981 = vunpack.c.0.s8 %v1980
  %v1982 = vlaneseq
  %v1983 = vshrl.u32 %v1982, 7
  %v1984 = vsub.s32 %v1981, %v1983
  %v1985 = vrot.slane %v1978, %v1984
  %v1987 = vunpack.c.l.s4 1966171168
  %v1988 = vunpack.c.0.s8 %v1987
  %v1989 = vlaneseq
  %v1990 = vshrl.u32 %v1989, 7
  %v1991 = vsub.s32 %v1988, %v1990
  %v1992 = vrot.slane %v604, %v1991
  %v1994 = vunpack.c.l.s4 1966171168
  %v1995 = vunpack.c.0.s8 %v1994
  %v1996 = vlaneseq
  %v1997 = vshrl.u32 %v1996, 7
  %v1998 = vsub.s32 %v1995, %v1997
  %v1999 = vrot.slane %v1992, %v1998
  %v2001 = vunpack.c.l.s4 1966171168
  %v2002 = vunpack.c.0.s8 %v2001
  %v2003 = vlaneseq
  %v2004 = vshrl.u32 %v2003, 7
  %v2005 = vsub.s32 %v2002, %v2004
  %v2006 = vrot.slane %v605, %v2005
  %v2008 = vunpack.c.l.s4 1966171168
  %v2009 = vunpack.c.0.s8 %v2008
  %v2010 = vlaneseq
  %v2011 = vshrl.u32 %v2010, 7
  %v2012 = vsub.s32 %v2009, %v2011
  %v2013 = vrot.slane %v2006, %v2012
  %v2015 = vunpack.c.l.s4 1966171168
  %v2016 = vunpack.c.0.s8 %v2015
  %v2017 = vlaneseq
  %v2018 = vshrl.u32 %v2017, 7
  %v2019 = vsub.s32 %v2016, %v2018
  %v2020 = vrot.slane %v620, %v2019
  %v2022 = vunpack.c.l.s4 1966171168
  %v2023 = vunpack.c.0.s8 %v2022
  %v2024 = vlaneseq
  %v2025 = vshrl.u32 %v2024, 7
  %v2026 = vsub.s32 %v2023, %v2025
  %v2027 = vrot.slane %v2020, %v2026
  %v2029 = vunpack.c.l.s4 1966171168
  %v2030 = vunpack.c.0.s8 %v2029
  %v2031 = vlaneseq
  %v2032 = vshrl.u32 %v2031, 7
  %v2033 = vsub.s32 %v2030, %v2032
  %v2034 = vrot.slane %v627, %v2033
  %v2036 = vunpack.c.l.s4 1966171168
  %v2037 = vunpack.c.0.s8 %v2036
  %v2038 = vlaneseq
  %v2039 = vshrl.u32 %v2038, 7
  %v2040 = vsub.s32 %v2037, %v2039
  %v2041 = vrot.slane %v2034, %v2040
  %v2043 = vunpack.c.l.s4 1966171168
  %v2044 = vunpack.c.0.s8 %v2043
  %v2045 = vlaneseq
  %v2046 = vshrl.u32 %v2045, 7
  %v2047 = vsub.s32 %v2044, %v2046
  %v2048 = vrot.slane %v628, %v2047
  %v2050 = vunpack.c.l.s4 1966171168
  %v2051 = vunpack.c.0.s8 %v2050
  %v2052 = vlaneseq
  %v2053 = vshrl.u32 %v2052, 7
  %v2054 = vsub.s32 %v2051, %v2053
  %v2055 = vrot.slane %v2048, %v2054
  %v2057 = vunpack.c.l.s4 1966171168
  %v2058 = vunpack.c.0.s8 %v2057
  %v2059 = vlaneseq
  %v2060 = vshrl.u32 %v2059, 7
  %v2061 = vsub.s32 %v2058, %v2060
  %v2062 = vrot.slane %v629, %v2061
  %v2064 = vunpack.c.l.s4 1966171168
  %v2065 = vunpack.c.0.s8 %v2064
  %v2066 = vlaneseq
  %v2067 = vshrl.u32 %v2066, 7
  %v2068 = vsub.s32 %v2065, %v2067
  %v2069 = vrot.slane %v2062, %v2068
  %v2071 = vunpack.c.l.s4 1966171168
  %v2072 = vunpack.c.0.s8 %v2071
  %v2073 = vlaneseq
  %v2074 = vshrl.u32 %v2073, 7
  %v2075 = vsub.s32 %v2072, %v2074
  %v2076 = vrot.slane %v644, %v2075
  %v2078 = vunpack.c.l.s4 1966171168
  %v2079 = vunpack.c.0.s8 %v2078
  %v2080 = vlaneseq
  %v2081 = vshrl.u32 %v2080, 7
  %v2082 = vsub.s32 %v2079, %v2081
  %v2083 = vrot.slane %v2076, %v2082
  %v2085 = vunpack.c.l.s4 1966171168
  %v2086 = vunpack.c.0.s8 %v2085
  %v2087 = vlaneseq
  %v2088 = vshrl.u32 %v2087, 7
  %v2089 = vsub.s32 %v2086, %v2088
  %v2090 = vrot.slane %v651, %v2089
  %v2092 = vunpack.c.l.s4 1966171168
  %v2093 = vunpack.c.0.s8 %v2092
  %v2094 = vlaneseq
  %v2095 = vshrl.u32 %v2094, 7
  %v2096 = vsub.s32 %v2093, %v2095
  %v2097 = vrot.slane %v2090, %v2096
  %v2099 = vunpack.c.l.s4 1966171168
  %v2100 = vunpack.c.0.s8 %v2099
  %v2101 = vlaneseq
  %v2102 = vshrl.u32 %v2101, 7
  %v2103 = vsub.s32 %v2100, %v2102
  %v2104 = vrot.slane %v652, %v2103
  %v2106 = vunpack.c.l.s4 1966171168
  %v2107 = vunpack.c.0.s8 %v2106
  %v2108 = vlaneseq
  %v2109 = vshrl.u32 %v2108, 7
  %v2110 = vsub.s32 %v2107, %v2109
  %v2111 = vrot.slane %v2104, %v2110
  %v2113 = vunpack.c.l.s4 1966171168
  %v2114 = vunpack.c.0.s8 %v2113
  %v2115 = vlaneseq
  %v2116 = vshrl.u32 %v2115, 7
  %v2117 = vsub.s32 %v2114, %v2116
  %v2118 = vrot.slane %v653, %v2117
  %v2120 = vunpack.c.l.s4 1966171168
  %v2121 = vunpack.c.0.s8 %v2120
  %v2122 = vlaneseq
  %v2123 = vshrl.u32 %v2122, 7
  %v2124 = vsub.s32 %v2121, %v2123
  %v2125 = vrot.slane %v2118, %v2124
  %v2127 = vunpack.c.l.s4 1966171168
  %v2128 = vunpack.c.0.s8 %v2127
  %v2129 = vlaneseq
  %v2130 = vshrl.u32 %v2129, 7
  %v2131 = vsub.s32 %v2128, %v2130
  %v2132 = vrot.slane %v668, %v2131
  %v2134 = vunpack.c.l.s4 1966171168
  %v2135 = vunpack.c.0.s8 %v2134
  %v2136 = vlaneseq
  %v2137 = vshrl.u32 %v2136, 7
  %v2138 = vsub.s32 %v2135, %v2137
  %v2139 = vrot.slane %v2132, %v2138
  %v2141 = vunpack.c.l.s4 1966171168
  %v2142 = vunpack.c.0.s8 %v2141
  %v2143 = vlaneseq
  %v2144 = vshrl.u32 %v2143, 7
  %v2145 = vsub.s32 %v2142, %v2144
  %v2146 = vrot.slane %v675, %v2145
  %v2148 = vunpack.c.l.s4 1966171168
  %v2149 = vunpack.c.0.s8 %v2148
  %v2150 = vlaneseq
  %v2151 = vshrl.u32 %v2150, 7
  %v2152 = vsub.s32 %v2149, %v2151
  %v2153 = vrot.slane %v2146, %v2152
  %v2155 = vunpack.c.l.s4 1966171168
  %v2156 = vunpack.c.0.s8 %v2155
  %v2157 = vlaneseq
  %v2158 = vshrl.u32 %v2157, 7
  %v2159 = vsub.s32 %v2156, %v2158
  %v2160 = vrot.slane %v676, %v2159
  %v2162 = vunpack.c.l.s4 1966171168
  %v2163 = vunpack.c.0.s8 %v2162
  %v2164 = vlaneseq
  %v2165 = vshrl.u32 %v2164, 7
  %v2166 = vsub.s32 %v2163, %v2165
  %v2167 = vrot.slane %v2160, %v2166
  %v2169 = vunpack.c.l.s4 1966171168
  %v2170 = vunpack.c.0.s8 %v2169
  %v2171 = vlaneseq
  %v2172 = vshrl.u32 %v2171, 7
  %v2173 = vsub.s32 %v2170, %v2172
  %v2174 = vrot.slane %v677, %v2173
  %v2176 = vunpack.c.l.s4 1966171168
  %v2177 = vunpack.c.0.s8 %v2176
  %v2178 = vlaneseq
  %v2179 = vshrl.u32 %v2178, 7
  %v2180 = vsub.s32 %v2177, %v2179
  %v2181 = vrot.slane %v2174, %v2180
  %v2183 = vunpack.c.l.s4 1966171168
  %v2184 = vunpack.c.0.s8 %v2183
  %v2185 = vlaneseq
  %v2186 = vshrl.u32 %v2185, 7
  %v2187 = vsub.s32 %v2184, %v2186
  %v2188 = vrot.slane %v692, %v2187
  %v2190 = vunpack.c.l.s4 1966171168
  %v2191 = vunpack.c.0.s8 %v2190
  %v2192 = vlaneseq
  %v2193 = vshrl.u32 %v2192, 7
  %v2194 = vsub.s32 %v2191, %v2193
  %v2195 = vrot.slane %v2188, %v2194
  %v2197 = vunpack.c.l.s4 1966171168
  %v2198 = vunpack.c.0.s8 %v2197
  %v2199 = vlaneseq
  %v2200 = vshrl.u32 %v2199, 7
  %v2201 = vsub.s32 %v2198, %v2200
  %v2202 = vrot.slane %v699, %v2201
  %v2204 = vunpack.c.l.s4 1966171168
  %v2205 = vunpack.c.0.s8 %v2204
  %v2206 = vlaneseq
  %v2207 = vshrl.u32 %v2206, 7
  %v2208 = vsub.s32 %v2205, %v2207
  %v2209 = vrot.slane %v2202, %v2208
  %v2211 = vunpack.c.l.s4 1966171168
  %v2212 = vunpack.c.0.s8 %v2211
  %v2213 = vlaneseq
  %v2214 = vshrl.u32 %v2213, 7
  %v2215 = vsub.s32 %v2212, %v2214
  %v2216 = vrot.slane %v700, %v2215
  %v2218 = vunpack.c.l.s4 1966171168
  %v2219 = vunpack.c.0.s8 %v2218
  %v2220 = vlaneseq
  %v2221 = vshrl.u32 %v2220, 7
  %v2222 = vsub.s32 %v2219, %v2221
  %v2223 = vrot.slane %v2216, %v2222
  %v2225 = vunpack.c.l.s4 1966171168
  %v2226 = vunpack.c.0.s8 %v2225
  %v2227 = vlaneseq
  %v2228 = vshrl.u32 %v2227, 7
  %v2229 = vsub.s32 %v2226, %v2228
  %v2230 = vrot.slane %v701, %v2229
  %v2232 = vunpack.c.l.s4 1966171168
  %v2233 = vunpack.c.0.s8 %v2232
  %v2234 = vlaneseq
  %v2235 = vshrl.u32 %v2234, 7
  %v2236 = vsub.s32 %v2233, %v2235
  %v2237 = vrot.slane %v2230, %v2236
  %v2239 = vunpack.c.l.s4 1966171168
  %v2240 = vunpack.c.0.s8 %v2239
  %v2241 = vlaneseq
  %v2242 = vshrl.u32 %v2241, 7
  %v2243 = vsub.s32 %v2240, %v2242
  %v2244 = vrot.slane %v716, %v2243
  %v2246 = vunpack.c.l.s4 1966171168
  %v2247 = vunpack.c.0.s8 %v2246
  %v2248 = vlaneseq
  %v2249 = vshrl.u32 %v2248, 7
  %v2250 = vsub.s32 %v2247, %v2249
  %v2251 = vrot.slane %v2244, %v2250
  %v2253 = vunpack.c.l.s4 1966171168
  %v2254 = vunpack.c.0.s8 %v2253
  %v2255 = vlaneseq
  %v2256 = vshrl.u32 %v2255, 7
  %v2257 = vsub.s32 %v2254, %v2256
  %v2258 = vrot.slane %v723, %v2257
  %v2260 = vunpack.c.l.s4 1966171168
  %v2261 = vunpack.c.0.s8 %v2260
  %v2262 = vlaneseq
  %v2263 = vshrl.u32 %v2262, 7
  %v2264 = vsub.s32 %v2261, %v2263
  %v2265 = vrot.slane %v2258, %v2264
  %v2267 = vunpack.c.l.s4 1966171168
  %v2268 = vunpack.c.0.s8 %v2267
  %v2269 = vlaneseq
  %v2270 = vshrl.u32 %v2269, 7
  %v2271 = vsub.s32 %v2268, %v2270
  %v2272 = vrot.slane %v724, %v2271
  %v2274 = vunpack.c.l.s4 1966171168
  %v2275 = vunpack.c.0.s8 %v2274
  %v2276 = vlaneseq
  %v2277 = vshrl.u32 %v2276, 7
  %v2278 = vsub.s32 %v2275, %v2277
  %v2279 = vrot.slane %v2272, %v2278
  %v2281 = vunpack.c.l.s4 1966171168
  %v2282 = vunpack.c.0.s8 %v2281
  %v2283 = vlaneseq
  %v2284 = vshrl.u32 %v2283, 7
  %v2285 = vsub.s32 %v2282, %v2284
  %v2286 = vrot.slane %v725, %v2285
  %v2288 = vunpack.c.l.s4 1966171168
  %v2289 = vunpack.c.0.s8 %v2288
  %v2290 = vlaneseq
  %v2291 = vshrl.u32 %v2290, 7
  %v2292 = vsub.s32 %v2289, %v2291
  %v2293 = vrot.slane %v2286, %v2292
  %v2295 = vunpack.c.l.s4 1966171168
  %v2296 = vunpack.c.0.s8 %v2295
  %v2297 = vlaneseq
  %v2298 = vshrl.u32 %v2297, 7
  %v2299 = vsub.s32 %v2296, %v2298
  %v2300 = vrot.slane %v740, %v2299
  %v2302 = vunpack.c.l.s4 1966171168
  %v2303 = vunpack.c.0.s8 %v2302
  %v2304 = vlaneseq
  %v2305 = vshrl.u32 %v2304, 7
  %v2306 = vsub.s32 %v2303, %v2305
  %v2307 = vrot.slane %v2300, %v2306
  %v2309 = vunpack.c.l.s4 1966171168
  %v2310 = vunpack.c.0.s8 %v2309
  %v2311 = vlaneseq
  %v2312 = vshrl.u32 %v2311, 7
  %v2313 = vsub.s32 %v2310, %v2312
  %v2314 = vrot.slane %v747, %v2313
  %v2316 = vunpack.c.l.s4 1966171168
  %v2317 = vunpack.c.0.s8 %v2316
  %v2318 = vlaneseq
  %v2319 = vshrl.u32 %v2318, 7
  %v2320 = vsub.s32 %v2317, %v2319
  %v2321 = vrot.slane %v2314, %v2320
  %v2323 = vunpack.c.l.s4 1966171168
  %v2324 = vunpack.c.0.s8 %v2323
  %v2325 = vlaneseq
  %v2326 = vshrl.u32 %v2325, 7
  %v2327 = vsub.s32 %v2324, %v2326
  %v2328 = vrot.slane %v748, %v2327
  %v2330 = vunpack.c.l.s4 1966171168
  %v2331 = vunpack.c.0.s8 %v2330
  %v2332 = vlaneseq
  %v2333 = vshrl.u32 %v2332, 7
  %v2334 = vsub.s32 %v2331, %v2333
  %v2335 = vrot.slane %v2328, %v2334
  %v2337 = vunpack.c.l.s4 1966171168
  %v2338 = vunpack.c.0.s8 %v2337
  %v2339 = vlaneseq
  %v2340 = vshrl.u32 %v2339, 7
  %v2341 = vsub.s32 %v2338, %v2340
  %v2342 = vrot.slane %v749, %v2341
  %v2344 = vunpack.c.l.s4 1966171168
  %v2345 = vunpack.c.0.s8 %v2344
  %v2346 = vlaneseq
  %v2347 = vshrl.u32 %v2346, 7
  %v2348 = vsub.s32 %v2345, %v2347
  %v2349 = vrot.slane %v2342, %v2348
  %v2351 = vunpack.c.l.s4 1966171168
  %v2352 = vunpack.c.0.s8 %v2351
  %v2353 = vlaneseq
  %v2354 = vshrl.u32 %v2353, 7
  %v2355 = vsub.s32 %v2352, %v2354
  %v2356 = vrot.slane %v764, %v2355
  %v2358 = vunpack.c.l.s4 1966171168
  %v2359 = vunpack.c.0.s8 %v2358
  %v2360 = vlaneseq
  %v2361 = vshrl.u32 %v2360, 7
  %v2362 = vsub.s32 %v2359, %v2361
  %v2363 = vrot.slane %v2356, %v2362
  %v2365 = vunpack.c.l.s4 1966171168
  %v2366 = vunpack.c.0.s8 %v2365
  %v2367 = vlaneseq
  %v2368 = vshrl.u32 %v2367, 7
  %v2369 = vsub.s32 %v2366, %v2368
  %v2370 = vrot.slane %v771, %v2369
  %v2372 = vunpack.c.l.s4 1966171168
  %v2373 = vunpack.c.0.s8 %v2372
  %v2374 = vlaneseq
  %v2375 = vshrl.u32 %v2374, 7
  %v2376 = vsub.s32 %v2373, %v2375
  %v2377 = vrot.slane %v2370, %v2376
  %v2379 = vunpack.c.l.s4 1966171168
  %v2380 = vunpack.c.0.s8 %v2379
  %v2381 = vlaneseq
  %v2382 = vshrl.u32 %v2381, 7
  %v2383 = vsub.s32 %v2380, %v2382
  %v2384 = vrot.slane %v772, %v2383
  %v2386 = vunpack.c.l.s4 1966171168
  %v2387 = vunpack.c.0.s8 %v2386
  %v2388 = vlaneseq
  %v2389 = vshrl.u32 %v2388, 7
  %v2390 = vsub.s32 %v2387, %v2389
  %v2391 = vrot.slane %v2384, %v2390
  %v2393 = vunpack.c.l.s4 1966171168
  %v2394 = vunpack.c.0.s8 %v2393
  %v2395 = vlaneseq
  %v2396 = vshrl.u32 %v2395, 7
  %v2397 = vsub.s32 %v2394, %v2396
  %v2398 = vrot.slane %v773, %v2397
  %v2400 = vunpack.c.l.s4 1966171168
  %v2401 = vunpack.c.0.s8 %v2400
  %v2402 = vlaneseq
  %v2403 = vshrl.u32 %v2402, 7
  %v2404 = vsub.s32 %v2401, %v2403
  %v2405 = vrot.slane %v2398, %v2404
  %v2407 = vunpack.c.l.s4 1966171168
  %v2408 = vunpack.c.0.s8 %v2407
  %v2409 = vlaneseq
  %v2410 = vshrl.u32 %v2409, 7
  %v2411 = vsub.s32 %v2408, %v2410
  %v2412 = vrot.slane %v788, %v2411
  %v2414 = vunpack.c.l.s4 1966171168
  %v2415 = vunpack.c.0.s8 %v2414
  %v2416 = vlaneseq
  %v2417 = vshrl.u32 %v2416, 7
  %v2418 = vsub.s32 %v2415, %v2417
  %v2419 = vrot.slane %v2412, %v2418
  %v2421 = vunpack.c.l.s4 1966171168
  %v2422 = vunpack.c.0.s8 %v2421
  %v2423 = vlaneseq
  %v2424 = vshrl.u32 %v2423, 7
  %v2425 = vsub.s32 %v2422, %v2424
  %v2426 = vrot.slane %v795, %v2425
  %v2428 = vunpack.c.l.s4 1966171168
  %v2429 = vunpack.c.0.s8 %v2428
  %v2430 = vlaneseq
  %v2431 = vshrl.u32 %v2430, 7
  %v2432 = vsub.s32 %v2429, %v2431
  %v2433 = vrot.slane %v2426, %v2432
  %v2435 = vunpack.c.l.s4 1966171168
  %v2436 = vunpack.c.0.s8 %v2435
  %v2437 = vlaneseq
  %v2438 = vshrl.u32 %v2437, 7
  %v2439 = vsub.s32 %v2436, %v2438
  %v2440 = vrot.slane %v796, %v2439
  %v2442 = vunpack.c.l.s4 1966171168
  %v2443 = vunpack.c.0.s8 %v2442
  %v2444 = vlaneseq
  %v2445 = vshrl.u32 %v2444, 7
  %v2446 = vsub.s32 %v2443, %v2445
  %v2447 = vrot.slane %v2440, %v2446
  %v2449 = vunpack.c.l.s4 1966171168
  %v2450 = vunpack.c.0.s8 %v2449
  %v2451 = vlaneseq
  %v2452 = vshrl.u32 %v2451, 7
  %v2453 = vsub.s32 %v2450, %v2452
  %v2454 = vrot.slane %v797, %v2453
  %v2456 = vunpack.c.l.s4 1966171168
  %v2457 = vunpack.c.0.s8 %v2456
  %v2458 = vlaneseq
  %v2459 = vshrl.u32 %v2458, 7
  %v2460 = vsub.s32 %v2457, %v2459
  %v2461 = vrot.slane %v2454, %v2460
  %v2463 = vunpack.c.l.s4 1966171168
  %v2464 = vunpack.c.0.s8 %v2463
  %v2465 = vlaneseq
  %v2466 = vshrl.u32 %v2465, 7
  %v2467 = vsub.s32 %v2464, %v2466
  %v2468 = vrot.slane %v812, %v2467
  %v2470 = vunpack.c.l.s4 1966171168
  %v2471 = vunpack.c.0.s8 %v2470
  %v2472 = vlaneseq
  %v2473 = vshrl.u32 %v2472, 7
  %v2474 = vsub.s32 %v2471, %v2473
  %v2475 = vrot.slane %v2468, %v2474
  %v2477 = vunpack.c.l.s4 1966171168
  %v2478 = vunpack.c.0.s8 %v2477
  %v2479 = vlaneseq
  %v2480 = vshrl.u32 %v2479, 7
  %v2481 = vsub.s32 %v2478, %v2480
  %v2482 = vrot.slane %v819, %v2481
  %v2484 = vunpack.c.l.s4 1966171168
  %v2485 = vunpack.c.0.s8 %v2484
  %v2486 = vlaneseq
  %v2487 = vshrl.u32 %v2486, 7
  %v2488 = vsub.s32 %v2485, %v2487
  %v2489 = vrot.slane %v2482, %v2488
  %v2491 = vunpack.c.l.s4 1966171168
  %v2492 = vunpack.c.0.s8 %v2491
  %v2493 = vlaneseq
  %v2494 = vshrl.u32 %v2493, 7
  %v2495 = vsub.s32 %v2492, %v2494
  %v2496 = vrot.slane %v820, %v2495
  %v2498 = vunpack.c.l.s4 1966171168
  %v2499 = vunpack.c.0.s8 %v2498
  %v2500 = vlaneseq
  %v2501 = vshrl.u32 %v2500, 7
  %v2502 = vsub.s32 %v2499, %v2501
  %v2503 = vrot.slane %v2496, %v2502
  %v2505 = vunpack.c.l.s4 1966171168
  %v2506 = vunpack.c.0.s8 %v2505
  %v2507 = vlaneseq
  %v2508 = vshrl.u32 %v2507, 7
  %v2509 = vsub.s32 %v2506, %v2508
  %v2510 = vrot.slane %v821, %v2509
  %v2512 = vunpack.c.l.s4 1966171168
  %v2513 = vunpack.c.0.s8 %v2512
  %v2514 = vlaneseq
  %v2515 = vshrl.u32 %v2514, 7
  %v2516 = vsub.s32 %v2513, %v2515
  %v2517 = vrot.slane %v2510, %v2516
  %v2519 = vunpack.c.l.s4 1966171168
  %v2520 = vunpack.c.0.s8 %v2519
  %v2521 = vlaneseq
  %v2522 = vshrl.u32 %v2521, 7
  %v2523 = vsub.s32 %v2520, %v2522
  %v2524 = vrot.slane %v836, %v2523
  %v2526 = vunpack.c.l.s4 1966171168
  %v2527 = vunpack.c.0.s8 %v2526
  %v2528 = vlaneseq
  %v2529 = vshrl.u32 %v2528, 7
  %v2530 = vsub.s32 %v2527, %v2529
  %v2531 = vrot.slane %v2524, %v2530
  %v2533 = vunpack.c.l.s4 1966171168
  %v2534 = vunpack.c.0.s8 %v2533
  %v2535 = vlaneseq
  %v2536 = vshrl.u32 %v2535, 7
  %v2537 = vsub.s32 %v2534, %v2536
  %v2538 = vrot.slane %v843, %v2537
  %v2540 = vunpack.c.l.s4 1966171168
  %v2541 = vunpack.c.0.s8 %v2540
  %v2542 = vlaneseq
  %v2543 = vshrl.u32 %v2542, 7
  %v2544 = vsub.s32 %v2541, %v2543
  %v2545 = vrot.slane %v2538, %v2544
  %v2547 = vunpack.c.l.s4 1966171168
  %v2548 = vunpack.c.0.s8 %v2547
  %v2549 = vlaneseq
  %v2550 = vshrl.u32 %v2549, 7
  %v2551 = vsub.s32 %v2548, %v2550
  %v2552 = vrot.slane %v844, %v2551
  %v2554 = vunpack.c.l.s4 1966171168
  %v2555 = vunpack.c.0.s8 %v2554
  %v2556 = vlaneseq
  %v2557 = vshrl.u32 %v2556, 7
  %v2558 = vsub.s32 %v2555, %v2557
  %v2559 = vrot.slane %v2552, %v2558
  %v2561 = vunpack.c.l.s4 1966171168
  %v2562 = vunpack.c.0.s8 %v2561
  %v2563 = vlaneseq
  %v2564 = vshrl.u32 %v2563, 7
  %v2565 = vsub.s32 %v2562, %v2564
  %v2566 = vrot.slane %v845, %v2565
  %v2568 = vunpack.c.l.s4 1966171168
  %v2569 = vunpack.c.0.s8 %v2568
  %v2570 = vlaneseq
  %v2571 = vshrl.u32 %v2570, 7
  %v2572 = vsub.s32 %v2569, %v2571
  %v2573 = vrot.slane %v2566, %v2572
  %v2575 = vunpack.c.l.s4 1966171168
  %v2576 = vunpack.c.0.s8 %v2575
  %v2577 = vlaneseq
  %v2578 = vshrl.u32 %v2577, 7
  %v2579 = vsub.s32 %v2576, %v2578
  %v2580 = vrot.slane %v860, %v2579
  %v2582 = vunpack.c.l.s4 1966171168
  %v2583 = vunpack.c.0.s8 %v2582
  %v2584 = vlaneseq
  %v2585 = vshrl.u32 %v2584, 7
  %v2586 = vsub.s32 %v2583, %v2585
  %v2587 = vrot.slane %v2580, %v2586
  %v2589 = vunpack.c.l.s4 1966171168
  %v2590 = vunpack.c.0.s8 %v2589
  %v2591 = vlaneseq
  %v2592 = vshrl.u32 %v2591, 7
  %v2593 = vsub.s32 %v2590, %v2592
  %v2594 = vrot.slane %v867, %v2593
  %v2596 = vunpack.c.l.s4 1966171168
  %v2597 = vunpack.c.0.s8 %v2596
  %v2598 = vlaneseq
  %v2599 = vshrl.u32 %v2598, 7
  %v2600 = vsub.s32 %v2597, %v2599
  %v2601 = vrot.slane %v2594, %v2600
  %v2603 = vunpack.c.l.s4 1966171168
  %v2604 = vunpack.c.0.s8 %v2603
  %v2605 = vlaneseq
  %v2606 = vshrl.u32 %v2605, 7
  %v2607 = vsub.s32 %v2604, %v2606
  %v2608 = vrot.slane %v868, %v2607
  %v2610 = vunpack.c.l.s4 1966171168
  %v2611 = vunpack.c.0.s8 %v2610
  %v2612 = vlaneseq
  %v2613 = vshrl.u32 %v2612, 7
  %v2614 = vsub.s32 %v2611, %v2613
  %v2615 = vrot.slane %v2608, %v2614
  %v2617 = vunpack.c.l.s4 1966171168
  %v2618 = vunpack.c.0.s8 %v2617
  %v2619 = vlaneseq
  %v2620 = vshrl.u32 %v2619, 7
  %v2621 = vsub.s32 %v2618, %v2620
  %v2622 = vrot.slane %v869, %v2621
  %v2624 = vunpack.c.l.s4 1966171168
  %v2625 = vunpack.c.0.s8 %v2624
  %v2626 = vlaneseq
  %v2627 = vshrl.u32 %v2626, 7
  %v2628 = vsub.s32 %v2625, %v2627
  %v2629 = vrot.slane %v2622, %v2628
  %v2631 = vunpack.c.l.s4 1966171168
  %v2632 = vunpack.c.0.s8 %v2631
  %v2633 = vlaneseq
  %v2634 = vshrl.u32 %v2633, 7
  %v2635 = vsub.s32 %v2632, %v2634
  %v2636 = vrot.slane %v884, %v2635
  %v2638 = vunpack.c.l.s4 1966171168
  %v2639 = vunpack.c.0.s8 %v2638
  %v2640 = vlaneseq
  %v2641 = vshrl.u32 %v2640, 7
  %v2642 = vsub.s32 %v2639, %v2641
  %v2643 = vrot.slane %v2636, %v2642
  %v2645 = vunpack.c.l.s4 1966171168
  %v2646 = vunpack.c.0.s8 %v2645
  %v2647 = vlaneseq
  %v2648 = vshrl.u32 %v2647, 7
  %v2649 = vsub.s32 %v2646, %v2648
  %v2650 = vrot.slane %v891, %v2649
  %v2652 = vunpack.c.l.s4 1966171168
  %v2653 = vunpack.c.0.s8 %v2652
  %v2654 = vlaneseq
  %v2655 = vshrl.u32 %v2654, 7
  %v2656 = vsub.s32 %v2653, %v2655
  %v2657 = vrot.slane %v2650, %v2656
  %v2659 = vunpack.c.l.s4 1966171168
  %v2660 = vunpack.c.0.s8 %v2659
  %v2661 = vlaneseq
  %v2662 = vshrl.u32 %v2661, 7
  %v2663 = vsub.s32 %v2660, %v2662
  %v2664 = vrot.slane %v892, %v2663
  %v2666 = vunpack.c.l.s4 1966171168
  %v2667 = vunpack.c.0.s8 %v2666
  %v2668 = vlaneseq
  %v2669 = vshrl.u32 %v2668, 7
  %v2670 = vsub.s32 %v2667, %v2669
  %v2671 = vrot.slane %v2664, %v2670
  %v2673 = vunpack.c.l.s4 1966171168
  %v2674 = vunpack.c.0.s8 %v2673
  %v2675 = vlaneseq
  %v2676 = vshrl.u32 %v2675, 7
  %v2677 = vsub.s32 %v2674, %v2676
  %v2678 = vrot.slane %v893, %v2677
  %v2680 = vunpack.c.l.s4 1966171168
  %v2681 = vunpack.c.0.s8 %v2680
  %v2682 = vlaneseq
  %v2683 = vshrl.u32 %v2682, 7
  %v2684 = vsub.s32 %v2681, %v2683
  %v2685 = vrot.slane %v2678, %v2684
  %v2686 = vunpack.c.l.b16 %v907
  %v2687 = vunpack.c.l.b16 %v921
  %v2688 = vunpack.c.l.b16 %v935
  %v2689 = vunpack.c.l.b16 %v949
  %v2690 = vunpack.c.l.b16 %v963
  %v2691 = vunpack.c.l.b16 %v977
  %v2692 = vunpack.c.l.b16 %v991
  %v2693 = vunpack.c.l.b16 %v1005
  %v2694 = vunpack.c.l.b16 %v1019
  %v2695 = vunpack.c.l.b16 %v1033
  %v2696 = vunpack.c.l.b16 %v1047
  %v2697 = vunpack.c.l.b16 %v1061
  %v2698 = vunpack.c.l.b16 %v1075
  %v2699 = vunpack.c.l.b16 %v1089
  %v2700 = vunpack.c.l.b16 %v1103
  %v2701 = vunpack.c.l.b16 %v1117
  %v2702 = vunpack.c.l.b16 %v1131
  %v2703 = vunpack.c.l.b16 %v1145
  %v2704 = vunpack.c.l.b16 %v1159
  %v2705 = vunpack.c.l.b16 %v1173
  %v2706 = vunpack.c.l.b16 %v1187
  %v2707 = vunpack.c.l.b16 %v1201
  %v2708 = vunpack.c.l.b16 %v1215
  %v2709 = vunpack.c.l.b16 %v1229
  %v2710 = vunpack.c.l.b16 %v1243
  %v2711 = vunpack.c.l.b16 %v1257
  %v2712 = vunpack.c.l.b16 %v1271
  %v2713 = vunpack.c.l.b16 %v1285
  %v2714 = vunpack.c.l.b16 %v1299
  %v2715 = vunpack.c.l.b16 %v1313
  %v2716 = vunpack.c.l.b16 %v1327
  %v2717 = vunpack.c.l.b16 %v1341
  %v2718 = vunpack.c.l.b16 %v1355
  %v2719 = vunpack.c.l.b16 %v1369
  %v2720 = vunpack.c.l.b16 %v1383
  %v2721 = vunpack.c.l.b16 %v1397
  %v2722 = vunpack.c.l.b16 %v1411
  %v2723 = vunpack.c.l.b16 %v1425
  %v2724 = vunpack.c.l.b16 %v1439
  %v2725 = vunpack.c.l.b16 %v1453
  %v2726 = vunpack.c.l.b16 %v1467
  %v2727 = vunpack.c.l.b16 %v1481
  %v2728 = vunpack.c.l.b16 %v1495
  %v2729 = vunpack.c.l.b16 %v1509
  %v2730 = vunpack.c.l.b16 %v1523
  %v2731 = vunpack.c.l.b16 %v1537
  %v2732 = vunpack.c.l.b16 %v1551
  %v2733 = vunpack.c.l.b16 %v1565
  %v2734 = vunpack.c.l.b16 %v1579
  %v2735 = vunpack.c.l.b16 %v1593
  %v2736 = vunpack.c.l.b16 %v1607
  %v2737 = vunpack.c.l.b16 %v1621
  %v2738 = vunpack.c.l.b16 %v1635
  %v2739 = vunpack.c.l.b16 %v1649
  %v2740 = vunpack.c.l.b16 %v1663
  %v2741 = vunpack.c.l.b16 %v1677
  %v2742 = vunpack.c.l.b16 %v1691
  %v2743 = vunpack.c.l.b16 %v1705
  %v2744 = vunpack.c.l.b16 %v1719
  %v2745 = vunpack.c.l.b16 %v1733
  %v2746 = vunpack.c.l.b16 %v1747
  %v2747 = vunpack.c.l.b16 %v1761
  %v2748 = vunpack.c.l.b16 %v1775
  %v2749 = vunpack.c.l.b16 %v1789
  %v2750 = vunpack.c.l.b16 %v1803
  %v2751 = vunpack.c.l.b16 %v1817
  %v2752 = vunpack.c.l.b16 %v1831
  %v2753 = vunpack.c.l.b16 %v1845
  %v2754 = vunpack.c.l.b16 %v1859
  %v2755 = vunpack.c.l.b16 %v1873
  %v2756 = vunpack.c.l.b16 %v1887
  %v2757 = vunpack.c.l.b16 %v1901
  %v2758 = vunpack.c.l.b16 %v1915
  %v2759 = vunpack.c.l.b16 %v1929
  %v2760 = vunpack.c.l.b16 %v1943
  %v2761 = vunpack.c.l.b16 %v1957
  %v2762 = vunpack.c.l.b16 %v1971
  %v2763 = vunpack.c.l.b16 %v1985
  %v2764 = vunpack.c.l.b16 %v1999
  %v2765 = vunpack.c.l.b16 %v2013
  %v2766 = vunpack.c.l.b16 %v2027
  %v2767 = vunpack.c.l.b16 %v2041
  %v2768 = vunpack.c.l.b16 %v2055
  %v2769 = vunpack.c.l.b16 %v2069
  %v2770 = vunpack.c.l.b16 %v2083
  %v2771 = vunpack.c.l.b16 %v2097
  %v2772 = vunpack.c.l.b16 %v2111
  %v2773 = vunpack.c.l.b16 %v2125
  %v2774 = vunpack.c.l.b16 %v2139
  %v2775 = vunpack.c.l.b16 %v2153
  %v2776 = vunpack.c.l.b16 %v2167
  %v2777 = vunpack.c.l.b16 %v2181
  %v2778 = vunpack.c.l.b16 %v2195
  %v2779 = vunpack.c.l.b16 %v2209
  %v2780 = vunpack.c.l.b16 %v2223
  %v2781 = vunpack.c.l.b16 %v2237
  %v2782 = vunpack.c.l.b16 %v2251
  %v2783 = vunpack.c.l.b16 %v2265
  %v2784 = vunpack.c.l.b16 %v2279
  %v2785 = vunpack.c.l.b16 %v2293
  %v2786 = vunpack.c.l.b16 %v2307
  %v2787 = vunpack.c.l.b16 %v2321
  %v2788 = vunpack.c.l.b16 %v2335
  %v2789 = vunpack.c.l.b16 %v2349
  %v2790 = vunpack.c.l.b16 %v2363
  %v2791 = vunpack.c.l.b16 %v2377
  %v2792 = vunpack.c.l.b16 %v2391
  %v2793 = vunpack.c.l.b16 %v2405
  %v2794 = vunpack.c.l.b16 %v2419
  %v2795 = vunpack.c.l.b16 %v2433
  %v2796 = vunpack.c.l.b16 %v2447
  %v2797 = vunpack.c.l.b16 %v2461
  %v2798 = vunpack.c.l.b16 %v2475
  %v2799 = vunpack.c.l.b16 %v2489
  %v2800 = vunpack.c.l.b16 %v2503
  %v2801 = vunpack.c.l.b16 %v2517
  %v2802 = vunpack.c.l.b16 %v2531
  %v2803 = vunpack.c.l.b16 %v2545
  %v2804 = vunpack.c.l.b16 %v2559
  %v2805 = vunpack.c.l.b16 %v2573
  %v2806 = vunpack.c.l.b16 %v2587
  %v2807 = vunpack.c.l.b16 %v2601
  %v2808 = vunpack.c.l.b16 %v2615
  %v2809 = vunpack.c.l.b16 %v2629
  %v2810 = vunpack.c.l.b16 %v2643
  %v2811 = vunpack.c.l.b16 %v2657
  %v2812 = vunpack.c.l.b16 %v2671
  %v2813 = vunpack.c.l.b16 %v2685
  %v2814 = vrot.slane %v2687, 7
  %vm2815 = vcmask 1041409
  %v2816 = vsel %vm2815, %v2814, %v2686
  %v2817 = vrot.slane %v2688, 6
  %vm2818 = vcmask 1042434
  %v2819 = vsel %vm2818, %v2817, %v2816
  %v2820 = vrot.slane %v2689, 5
  %vm2821 = vcmask 1043459
  %v2822 = vsel %vm2821, %v2820, %v2819
  %v2823 = vrot.slane %v2690, 4
  %vm2824 = vcmask 1044484
  %v2825 = vsel %vm2824, %v2823, %v2822
  %v2826 = vrot.slane %v2691, 3
  %vm2827 = vcmask 1045509
  %v2828 = vsel %vm2827, %v2826, %v2825
  %v2829 = vrot.slane %v2692, 2
  %vm2830 = vcmask 1046534
  %v2831 = vsel %vm2830, %v2829, %v2828
  %v2832 = vrot.slane %v2693, 1
  %vm2833 = vcmask 1047559
  %v2834 = vsel %vm2833, %v2832, %v2831
  %v2835 = vrot.slane %v2695, 7
  %v2836 = vsel %vm2815, %v2835, %v2694
  %v2837 = vrot.slane %v2696, 6
  %v2838 = vsel %vm2818, %v2837, %v2836
  %v2839 = vrot.slane %v2697, 5
  %v2840 = vsel %vm2821, %v2839, %v2838
  %v2841 = vrot.slane %v2698, 4
  %v2842 = vsel %vm2824, %v2841, %v2840
  %v2843 = vrot.slane %v2699, 3
  %v2844 = vsel %vm2827, %v2843, %v2842
  %v2845 = vrot.slane %v2700, 2
  %v2846 = vsel %vm2830, %v2845, %v2844
  %v2847 = vrot.slane %v2701, 1
  %v2848 = vsel %vm2833, %v2847, %v2846
  %v2849 = vrot.slane %v2703, 7
  %v2850 = vsel %vm2815, %v2849, %v2702
  %v2851 = vrot.slane %v2704, 6
  %v2852 = vsel %vm2818, %v2851, %v2850
  %v2853 = vrot.slane %v2705, 5
  %v2854 = vsel %vm2821, %v2853, %v2852
  %v2855 = vrot.slane %v2706, 4
  %v2856 = vsel %vm2824, %v2855, %v2854
  %v2857 = vrot.slane %v2707, 3
  %v2858 = vsel %vm2827, %v2857, %v2856
  %v2859 = vrot.slane %v2708, 2
  %v2860 = vsel %vm2830, %v2859, %v2858
  %v2861 = vrot.slane %v2709, 1
  %v2862 = vsel %vm2833, %v2861, %v2860
  %v2863 = vrot.slane %v2711, 7
  %v2864 = vsel %vm2815, %v2863, %v2710
  %v2865 = vrot.slane %v2712, 6
  %v2866 = vsel %vm2818, %v2865, %v2864
  %v2867 = vrot.slane %v2713, 5
  %v2868 = vsel %vm2821, %v2867, %v2866
  %v2869 = vrot.slane %v2714, 4
  %v2870 = vsel %vm2824, %v2869, %v2868
  %v2871 = vrot.slane %v2715, 3
  %v2872 = vsel %vm2827, %v2871, %v2870
  %v2873 = vrot.slane %v2716, 2
  %v2874 = vsel %vm2830, %v2873, %v2872
  %v2875 = vrot.slane %v2717, 1
  %v2876 = vsel %vm2833, %v2875, %v2874
  %v2877 = vrot.slane %v2719, 7
  %v2878 = vsel %vm2815, %v2877, %v2718
  %v2879 = vrot.slane %v2720, 6
  %v2880 = vsel %vm2818, %v2879, %v2878
  %v2881 = vrot.slane %v2721, 5
  %v2882 = vsel %vm2821, %v2881, %v2880
  %v2883 = vrot.slane %v2722, 4
  %v2884 = vsel %vm2824, %v2883, %v2882
  %v2885 = vrot.slane %v2723, 3
  %v2886 = vsel %vm2827, %v2885, %v2884
  %v2887 = vrot.slane %v2724, 2
  %v2888 = vsel %vm2830, %v2887, %v2886
  %v2889 = vrot.slane %v2725, 1
  %v2890 = vsel %vm2833, %v2889, %v2888
  %v2891 = vrot.slane %v2727, 7
  %v2892 = vsel %vm2815, %v2891, %v2726
  %v2893 = vrot.slane %v2728, 6
  %v2894 = vsel %vm2818, %v2893, %v2892
  %v2895 = vrot.slane %v2729, 5
  %v2896 = vsel %vm2821, %v2895, %v2894
  %v2897 = vrot.slane %v2730, 4
  %v2898 = vsel %vm2824, %v2897, %v2896
  %v2899 = vrot.slane %v2731, 3
  %v2900 = vsel %vm2827, %v2899, %v2898
  %v2901 = vrot.slane %v2732, 2
  %v2902 = vsel %vm2830, %v2901, %v2900
  %v2903 = vrot.slane %v2733, 1
  %v2904 = vsel %vm2833, %v2903, %v2902
  %v2905 = vrot.slane %v2735, 7
  %v2906 = vsel %vm2815, %v2905, %v2734
  %v2907 = vrot.slane %v2736, 6
  %v2908 = vsel %vm2818, %v2907, %v2906
  %v2909 = vrot.slane %v2737, 5
  %v2910 = vsel %vm2821, %v2909, %v2908
  %v2911 = vrot.slane %v2738, 4
  %v2912 = vsel %vm2824, %v2911, %v2910
  %v2913 = vrot.slane %v2739, 3
  %v2914 = vsel %vm2827, %v2913, %v2912
  %v2915 = vrot.slane %v2740, 2
  %v2916 = vsel %vm2830, %v2915, %v2914
  %v2917 = vrot.slane %v2741, 1
  %v2918 = vsel %vm2833, %v2917, %v2916
  %v2919 = vrot.slane %v2743, 7
  %v2920 = vsel %vm2815, %v2919, %v2742
  %v2921 = vrot.slane %v2744, 6
  %v2922 = vsel %vm2818, %v2921, %v2920
  %v2923 = vrot.slane %v2745, 5
  %v2924 = vsel %vm2821, %v2923, %v2922
  %v2925 = vrot.slane %v2746, 4
  %v2926 = vsel %vm2824, %v2925, %v2924
  %v2927 = vrot.slane %v2747, 3
  %v2928 = vsel %vm2827, %v2927, %v2926
  %v2929 = vrot.slane %v2748, 2
  %v2930 = vsel %vm2830, %v2929, %v2928
  %v2931 = vrot.slane %v2749, 1
  %v2932 = vsel %vm2833, %v2931, %v2930
  %v2933 = vrot.slane %v2751, 7
  %v2934 = vsel %vm2815, %v2933, %v2750
  %v2935 = vrot.slane %v2752, 6
  %v2936 = vsel %vm2818, %v2935, %v2934
  %v2937 = vrot.slane %v2753, 5
  %v2938 = vsel %vm2821, %v2937, %v2936
  %v2939 = vrot.slane %v2754, 4
  %v2940 = vsel %vm2824, %v2939, %v2938
  %v2941 = vrot.slane %v2755, 3
  %v2942 = vsel %vm2827, %v2941, %v2940
  %v2943 = vrot.slane %v2756, 2
  %v2944 = vsel %vm2830, %v2943, %v2942
  %v2945 = vrot.slane %v2757, 1
  %v2946 = vsel %vm2833, %v2945, %v2944
  %v2947 = vrot.slane %v2759, 7
  %v2948 = vsel %vm2815, %v2947, %v2758
  %v2949 = vrot.slane %v2760, 6
  %v2950 = vsel %vm2818, %v2949, %v2948
  %v2951 = vrot.slane %v2761, 5
  %v2952 = vsel %vm2821, %v2951, %v2950
  %v2953 = vrot.slane %v2762, 4
  %v2954 = vsel %vm2824, %v2953, %v2952
  %v2955 = vrot.slane %v2763, 3
  %v2956 = vsel %vm2827, %v2955, %v2954
  %v2957 = vrot.slane %v2764, 2
  %v2958 = vsel %vm2830, %v2957, %v2956
  %v2959 = vrot.slane %v2765, 1
  %v2960 = vsel %vm2833, %v2959, %v2958
  %v2961 = vrot.slane %v2767, 7
  %v2962 = vsel %vm2815, %v2961, %v2766
  %v2963 = vrot.slane %v2768, 6
  %v2964 = vsel %vm2818, %v2963, %v2962
  %v2965 = vrot.slane %v2769, 5
  %v2966 = vsel %vm2821, %v2965, %v2964
  %v2967 = vrot.slane %v2770, 4
  %v2968 = vsel %vm2824, %v2967, %v2966
  %v2969 = vrot.slane %v2771, 3
  %v2970 = vsel %vm2827, %v2969, %v2968
  %v2971 = vrot.slane %v2772, 2
  %v2972 = vsel %vm2830, %v2971, %v2970
  %v2973 = vrot.slane %v2773, 1
  %v2974 = vsel %vm2833, %v2973, %v2972
  %v2975 = vrot.slane %v2775, 7
  %v2976 = vsel %vm2815, %v2975, %v2774
  %v2977 = vrot.slane %v2776, 6
  %v2978 = vsel %vm2818, %v2977, %v2976
  %v2979 = vrot.slane %v2777, 5
  %v2980 = vsel %vm2821, %v2979, %v2978
  %v2981 = vrot.slane %v2778, 4
  %v2982 = vsel %vm2824, %v2981, %v2980
  %v2983 = vrot.slane %v2779, 3
  %v2984 = vsel %vm2827, %v2983, %v2982
  %v2985 = vrot.slane %v2780, 2
  %v2986 = vsel %vm2830, %v2985, %v2984
  %v2987 = vrot.slane %v2781, 1
  %v2988 = vsel %vm2833, %v2987, %v2986
  %v2989 = vrot.slane %v2783, 7
  %v2990 = vsel %vm2815, %v2989, %v2782
  %v2991 = vrot.slane %v2784, 6
  %v2992 = vsel %vm2818, %v2991, %v2990
  %v2993 = vrot.slane %v2785, 5
  %v2994 = vsel %vm2821, %v2993, %v2992
  %v2995 = vrot.slane %v2786, 4
  %v2996 = vsel %vm2824, %v2995, %v2994
  %v2997 = vrot.slane %v2787, 3
  %v2998 = vsel %vm2827, %v2997, %v2996
  %v2999 = vrot.slane %v2788, 2
  %v3000 = vsel %vm2830, %v2999, %v2998
  %v3001 = vrot.slane %v2789, 1
  %v3002 = vsel %vm2833, %v3001, %v3000
  %v3003 = vrot.slane %v2791, 7
  %v3004 = vsel %vm2815, %v3003, %v2790
  %v3005 = vrot.slane %v2792, 6
  %v3006 = vsel %vm2818, %v3005, %v3004
  %v3007 = vrot.slane %v2793, 5
  %v3008 = vsel %vm2821, %v3007, %v3006
  %v3009 = vrot.slane %v2794, 4
  %v3010 = vsel %vm2824, %v3009, %v3008
  %v3011 = vrot.slane %v2795, 3
  %v3012 = vsel %vm2827, %v3011, %v3010
  %v3013 = vrot.slane %v2796, 2
  %v3014 = vsel %vm2830, %v3013, %v3012
  %v3015 = vrot.slane %v2797, 1
  %v3016 = vsel %vm2833, %v3015, %v3014
  %v3017 = vrot.slane %v2799, 7
  %v3018 = vsel %vm2815, %v3017, %v2798
  %v3019 = vrot.slane %v2800, 6
  %v3020 = vsel %vm2818, %v3019, %v3018
  %v3021 = vrot.slane %v2801, 5
  %v3022 = vsel %vm2821, %v3021, %v3020
  %v3023 = vrot.slane %v2802, 4
  %v3024 = vsel %vm2824, %v3023, %v3022
  %v3025 = vrot.slane %v2803, 3
  %v3026 = vsel %vm2827, %v3025, %v3024
  %v3027 = vrot.slane %v2804, 2
  %v3028 = vsel %vm2830, %v3027, %v3026
  %v3029 = vrot.slane %v2805, 1
  %v3030 = vsel %vm2833, %v3029, %v3028
  %v3031 = vrot.slane %v2807, 7
  %v3032 = vsel %vm2815, %v3031, %v2806
  %v3033 = vrot.slane %v2808, 6
  %v3034 = vsel %vm2818, %v3033, %v3032
  %v3035 = vrot.slane %v2809, 5
  %v3036 = vsel %vm2821, %v3035, %v3034
  %v3037 = vrot.slane %v2810, 4
  %v3038 = vsel %vm2824, %v3037, %v3036
  %v3039 = vrot.slane %v2811, 3
  %v3040 = vsel %vm2827, %v3039, %v3038
  %v3041 = vrot.slane %v2812, 2
  %v3042 = vsel %vm2830, %v3041, %v3040
  %v3043 = vrot.slane %v2813, 1
  %v3044 = vsel %vm2833, %v3043, %v3042
  %v3045 = vpack.c.b16 %v2834, %v2834
  %v3046 = vpack.c.b16 %v2848, %v2848
  %v3047 = vpack.c.b16 %v2862, %v2862
  %v3048 = vpack.c.b16 %v2876, %v2876
  %v3049 = vpack.c.b16 %v2890, %v2890
  %v3050 = vpack.c.b16 %v2904, %v2904
  %v3051 = vpack.c.b16 %v2918, %v2918
  %v3052 = vpack.c.b16 %v2932, %v2932
  %v3053 = vpack.c.b16 %v2946, %v2946
  %v3054 = vpack.c.b16 %v2960, %v2960
  %v3055 = vpack.c.b16 %v2974, %v2974
  %v3056 = vpack.c.b16 %v2988, %v2988
  %v3057 = vpack.c.b16 %v3002, %v3002
  %v3058 = vpack.c.b16 %v3016, %v3016
  %v3059 = vpack.c.b16 %v3030, %v3030
  %v3060 = vpack.c.b16 %v3044, %v3044
  %v3062 = vshrl.u32 %v3045, 16
  %v3064 = vrot.slane %v3062, 7
  %v3065 = vshll.u32 %v3045, 16
  %v3067 = vor.u32 %v3064, %v3065
  %v3069 = vshrl.u32 %v3046, 16
  %v3071 = vrot.slane %v3069, 7
  %v3072 = vshll.u32 %v3046, 16
  %v3074 = vor.u32 %v3071, %v3072
  %v3076 = vshrl.u32 %v3047, 16
  %v3078 = vrot.slane %v3076, 7
  %v3079 = vshll.u32 %v3047, 16
  %v3081 = vor.u32 %v3078, %v3079
  %v3083 = vshrl.u32 %v3048, 16
  %v3085 = vrot.slane %v3083, 7
  %v3086 = vshll.u32 %v3048, 16
  %v3088 = vor.u32 %v3085, %v3086
  %v3090 = vshrl.u32 %v3049, 16
  %v3092 = vrot.slane %v3090, 7
  %v3093 = vshll.u32 %v3049, 16
  %v3095 = vor.u32 %v3092, %v3093
  %v3097 = vshrl.u32 %v3050, 16
  %v3099 = vrot.slane %v3097, 7
  %v3100 = vshll.u32 %v3050, 16
  %v3102 = vor.u32 %v3099, %v3100
  %v3104 = vshrl.u32 %v3051, 16
  %v3106 = vrot.slane %v3104, 7
  %v3107 = vshll.u32 %v3051, 16
  %v3109 = vor.u32 %v3106, %v3107
  %v3111 = vshrl.u32 %v3052, 16
  %v3113 = vrot.slane %v3111, 7
  %v3114 = vshll.u32 %v3052, 16
  %v3116 = vor.u32 %v3113, %v3114
  %v3118 = vshrl.u32 0, 16
  %v3120 = vrot.slane %v3118, 7
  %v3121 = vshll.u32 0, 16
  %v3123 = vor.u32 %v3120, %v3121
  %v3125 = vshrl.u32 %v3053, 16
  %v3127 = vrot.slane %v3125, 7
  %v3128 = vshll.u32 %v3053, 16
  %v3130 = vor.u32 %v3127, %v3128
  %v3132 = vshrl.u32 %v3054, 16
  %v3134 = vrot.slane %v3132, 7
  %v3135 = vshll.u32 %v3054, 16
  %v3137 = vor.u32 %v3134, %v3135
  %v3139 = vshrl.u32 %v3055, 16
  %v3141 = vrot.slane %v3139, 7
  %v3142 = vshll.u32 %v3055, 16
  %v3144 = vor.u32 %v3141, %v3142
  %v3146 = vshrl.u32 %v3056, 16
  %v3148 = vrot.slane %v3146, 7
  %v3149 = vshll.u32 %v3056, 16
  %v3151 = vor.u32 %v3148, %v3149
  %v3153 = vshrl.u32 %v3057, 16
  %v3155 = vrot.slane %v3153, 7
  %v3156 = vshll.u32 %v3057, 16
  %v3158 = vor.u32 %v3155, %v3156
  %v3160 = vshrl.u32 %v3058, 16
  %v3162 = vrot.slane %v3160, 7
  %v3163 = vshll.u32 %v3058, 16
  %v3165 = vor.u32 %v3162, %v3163
  %v3167 = vshrl.u32 %v3059, 16
  %v3169 = vrot.slane %v3167, 7
  %v3170 = vshll.u32 %v3059, 16
  %v3172 = vor.u32 %v3169, %v3170
  %v3174 = vshrl.u32 %v3060, 16
  %v3176 = vrot.slane %v3174, 7
  %v3177 = vshll.u32 %v3060, 16
  %v3179 = vor.u32 %v3176, %v3177
  %vm3197 = vcmask 1040384
  %vm3198 = vsmask.f32 256
  %vm3199 = vmand %vm3197, %vm3198
  %v3200 = vsel %vm3199, 0, %v3067
  %v3201 = vsel %vm3199, 0, %v3074
  %v3202 = vsel %vm3199, 0, %v3081
  %v3203 = vsel %vm3199, 0, %v3088
  %v3204 = vsel %vm3199, 0, %v3095
  %v3205 = vsel %vm3199, 0, %v3102
  %v3206 = vsel %vm3199, 0, %v3109
  %v3207 = vsel %vm3199, 0, %v3116
  %v3208 = vsel %vm3199, 0, %v3123
  %v3209 = vsel %vm3199, 0, %v3130
  %v3210 = vsel %vm3199, 0, %v3137
  %v3211 = vsel %vm3199, 0, %v3144
  %v3212 = vsel %vm3199, 0, %v3151
  %v3213 = vsel %vm3199, 0, %v3158
  %v3214 = vsel %vm3199, 0, %v3165
  %v3215 = vsel %vm3199, 0, %v3172
  %v3216 = vsel %vm3199, 0, %v3179
  %vm3217 = vcmask 1044480
  %vm3218 = vsmask.f32 4352
  %vm3219 = vmand %vm3217, %vm3218
  %v3220 = vsel %vm3219, %v3200, 0
  %v3221 = vsel %vm3219, %v3201, 0
  %v3222 = vsel %vm3219, %v3202, 0
  %v3223 = vsel %vm3219, %v3203, 0
  %v3224 = vsel %vm3219, %v3204, 0
  %v3225 = vsel %vm3219, %v3205, 0
  %v3226 = vsel %vm3219, %v3206, 0
  %v3227 = vsel %vm3219, %v3207, 0
  %v3228 = vsel %vm3219, %v3208, 0
  %v3229 = vsel %vm3219, %v3209, 0
  %v3230 = vsel %vm3219, %v3210, 0
  %v3231 = vsel %vm3219, %v3211, 0
  %v3232 = vsel %vm3219, %v3212, 0
  %v3233 = vsel %vm3219, %v3213, 0
  %v3234 = vsel %vm3219, %v3214, 0
  %v3235 = vsel %vm3219, %v3215, 0
  %v3236 = vsel %vm3219, %v3216, 0
  %v3237 = vrot.slane %v2686, 1
  %v3238 = vsel %vm2815, %v2687, %v3237
  %v3239 = vrot.slane %v2688, 7
  %v3240 = vsel %vm2818, %v3239, %v3238
  %v3241 = vrot.slane %v2689, 6
  %v3242 = vsel %vm2821, %v3241, %v3240
  %v3243 = vrot.slane %v2690, 5
  %v3244 = vsel %vm2824, %v3243, %v3242
  %v3245 = vrot.slane %v2691, 4
  %v3246 = vsel %vm2827, %v3245, %v3244
  %v3247 = vrot.slane %v2692, 3
  %v3248 = vsel %vm2830, %v3247, %v3246
  %v3249 = vrot.slane %v2693, 2
  %v3250 = vsel %vm2833, %v3249, %v3248
  %v3251 = vrot.slane %v2694, 1
  %v3252 = vsel %vm2815, %v2695, %v3251
  %v3253 = vrot.slane %v2696, 7
  %v3254 = vsel %vm2818, %v3253, %v3252
  %v3255 = vrot.slane %v2697, 6
  %v3256 = vsel %vm2821, %v3255, %v3254
  %v3257 = vrot.slane %v2698, 5
  %v3258 = vsel %vm2824, %v3257, %v3256
  %v3259 = vrot.slane %v2699, 4
  %v3260 = vsel %vm2827, %v3259, %v3258
  %v3261 = vrot.slane %v2700, 3
  %v3262 = vsel %vm2830, %v3261, %v3260
  %v3263 = vrot.slane %v2701, 2
  %v3264 = vsel %vm2833, %v3263, %v3262
  %v3265 = vrot.slane %v2702, 1
  %v3266 = vsel %vm2815, %v2703, %v3265
  %v3267 = vrot.slane %v2704, 7
  %v3268 = vsel %vm2818, %v3267, %v3266
  %v3269 = vrot.slane %v2705, 6
  %v3270 = vsel %vm2821, %v3269, %v3268
  %v3271 = vrot.slane %v2706, 5
  %v3272 = vsel %vm2824, %v3271, %v3270
  %v3273 = vrot.slane %v2707, 4
  %v3274 = vsel %vm2827, %v3273, %v3272
  %v3275 = vrot.slane %v2708, 3
  %v3276 = vsel %vm2830, %v3275, %v3274
  %v3277 = vrot.slane %v2709, 2
  %v3278 = vsel %vm2833, %v3277, %v3276
  %v3279 = vrot.slane %v2710, 1
  %v3280 = vsel %vm2815, %v2711, %v3279
  %v3281 = vrot.slane %v2712, 7
  %v3282 = vsel %vm2818, %v3281, %v3280
  %v3283 = vrot.slane %v2713, 6
  %v3284 = vsel %vm2821, %v3283, %v3282
  %v3285 = vrot.slane %v2714, 5
  %v3286 = vsel %vm2824, %v3285, %v3284
  %v3287 = vrot.slane %v2715, 4
  %v3288 = vsel %vm2827, %v3287, %v3286
  %v3289 = vrot.slane %v2716, 3
  %v3290 = vsel %vm2830, %v3289, %v3288
  %v3291 = vrot.slane %v2717, 2
  %v3292 = vsel %vm2833, %v3291, %v3290
  %v3293 = vrot.slane %v2718, 1
  %v3294 = vsel %vm2815, %v2719, %v3293
  %v3295 = vrot.slane %v2720, 7
  %v3296 = vsel %vm2818, %v3295, %v3294
  %v3297 = vrot.slane %v2721, 6
  %v3298 = vsel %vm2821, %v3297, %v3296
  %v3299 = vrot.slane %v2722, 5
  %v3300 = vsel %vm2824, %v3299, %v3298
  %v3301 = vrot.slane %v2723, 4
  %v3302 = vsel %vm2827, %v3301, %v3300
  %v3303 = vrot.slane %v2724, 3
  %v3304 = vsel %vm2830, %v3303, %v3302
  %v3305 = vrot.slane %v2725, 2
  %v3306 = vsel %vm2833, %v3305, %v3304
  %v3307 = vrot.slane %v2726, 1
  %v3308 = vsel %vm2815, %v2727, %v3307
  %v3309 = vrot.slane %v2728, 7
  %v3310 = vsel %vm2818, %v3309, %v3308
  %v3311 = vrot.slane %v2729, 6
  %v3312 = vsel %vm2821, %v3311, %v3310
  %v3313 = vrot.slane %v2730, 5
  %v3314 = vsel %vm2824, %v3313, %v3312
  %v3315 = vrot.slane %v2731, 4
  %v3316 = vsel %vm2827, %v3315, %v3314
  %v3317 = vrot.slane %v2732, 3
  %v3318 = vsel %vm2830, %v3317, %v3316
  %v3319 = vrot.slane %v2733, 2
  %v3320 = vsel %vm2833, %v3319, %v3318
  %v3321 = vrot.slane %v2734, 1
  %v3322 = vsel %vm2815, %v2735, %v3321
  %v3323 = vrot.slane %v2736, 7
  %v3324 = vsel %vm2818, %v3323, %v3322
  %v3325 = vrot.slane %v2737, 6
  %v3326 = vsel %vm2821, %v3325, %v3324
  %v3327 = vrot.slane %v2738, 5
  %v3328 = vsel %vm2824, %v3327, %v3326
  %v3329 = vrot.slane %v2739, 4
  %v3330 = vsel %vm2827, %v3329, %v3328
  %v3331 = vrot.slane %v2740, 3
  %v3332 = vsel %vm2830, %v3331, %v3330
  %v3333 = vrot.slane %v2741, 2
  %v3334 = vsel %vm2833, %v3333, %v3332
  %v3335 = vrot.slane %v2742, 1
  %v3336 = vsel %vm2815, %v2743, %v3335
  %v3337 = vrot.slane %v2744, 7
  %v3338 = vsel %vm2818, %v3337, %v3336
  %v3339 = vrot.slane %v2745, 6
  %v3340 = vsel %vm2821, %v3339, %v3338
  %v3341 = vrot.slane %v2746, 5
  %v3342 = vsel %vm2824, %v3341, %v3340
  %v3343 = vrot.slane %v2747, 4
  %v3344 = vsel %vm2827, %v3343, %v3342
  %v3345 = vrot.slane %v2748, 3
  %v3346 = vsel %vm2830, %v3345, %v3344
  %v3347 = vrot.slane %v2749, 2
  %v3348 = vsel %vm2833, %v3347, %v3346
  %v3349 = vrot.slane %v2750, 1
  %v3350 = vsel %vm2815, %v2751, %v3349
  %v3351 = vrot.slane %v2752, 7
  %v3352 = vsel %vm2818, %v3351, %v3350
  %v3353 = vrot.slane %v2753, 6
  %v3354 = vsel %vm2821, %v3353, %v3352
  %v3355 = vrot.slane %v2754, 5
  %v3356 = vsel %vm2824, %v3355, %v3354
  %v3357 = vrot.slane %v2755, 4
  %v3358 = vsel %vm2827, %v3357, %v3356
  %v3359 = vrot.slane %v2756, 3
  %v3360 = vsel %vm2830, %v3359, %v3358
  %v3361 = vrot.slane %v2757, 2
  %v3362 = vsel %vm2833, %v3361, %v3360
  %v3363 = vrot.slane %v2758, 1
  %v3364 = vsel %vm2815, %v2759, %v3363
  %v3365 = vrot.slane %v2760, 7
  %v3366 = vsel %vm2818, %v3365, %v3364
  %v3367 = vrot.slane %v2761, 6
  %v3368 = vsel %vm2821, %v3367, %v3366
  %v3369 = vrot.slane %v2762, 5
  %v3370 = vsel %vm2824, %v3369, %v3368
  %v3371 = vrot.slane %v2763, 4
  %v3372 = vsel %vm2827, %v3371, %v3370
  %v3373 = vrot.slane %v2764, 3
  %v3374 = vsel %vm2830, %v3373, %v3372
  %v3375 = vrot.slane %v2765, 2
  %v3376 = vsel %vm2833, %v3375, %v3374
  %v3377 = vrot.slane %v2766, 1
  %v3378 = vsel %vm2815, %v2767, %v3377
  %v3379 = vrot.slane %v2768, 7
  %v3380 = vsel %vm2818, %v3379, %v3378
  %v3381 = vrot.slane %v2769, 6
  %v3382 = vsel %vm2821, %v3381, %v3380
  %v3383 = vrot.slane %v2770, 5
  %v3384 = vsel %vm2824, %v3383, %v3382
  %v3385 = vrot.slane %v2771, 4
  %v3386 = vsel %vm2827, %v3385, %v3384
  %v3387 = vrot.slane %v2772, 3
  %v3388 = vsel %vm2830, %v3387, %v3386
  %v3389 = vrot.slane %v2773, 2
  %v3390 = vsel %vm2833, %v3389, %v3388
  %v3391 = vrot.slane %v2774, 1
  %v3392 = vsel %vm2815, %v2775, %v3391
  %v3393 = vrot.slane %v2776, 7
  %v3394 = vsel %vm2818, %v3393, %v3392
  %v3395 = vrot.slane %v2777, 6
  %v3396 = vsel %vm2821, %v3395, %v3394
  %v3397 = vrot.slane %v2778, 5
  %v3398 = vsel %vm2824, %v3397, %v3396
  %v3399 = vrot.slane %v2779, 4
  %v3400 = vsel %vm2827, %v3399, %v3398
  %v3401 = vrot.slane %v2780, 3
  %v3402 = vsel %vm2830, %v3401, %v3400
  %v3403 = vrot.slane %v2781, 2
  %v3404 = vsel %vm2833, %v3403, %v3402
  %v3405 = vrot.slane %v2782, 1
  %v3406 = vsel %vm2815, %v2783, %v3405
  %v3407 = vrot.slane %v2784, 7
  %v3408 = vsel %vm2818, %v3407, %v3406
  %v3409 = vrot.slane %v2785, 6
  %v3410 = vsel %vm2821, %v3409, %v3408
  %v3411 = vrot.slane %v2786, 5
  %v3412 = vsel %vm2824, %v3411, %v3410
  %v3413 = vrot.slane %v2787, 4
  %v3414 = vsel %vm2827, %v3413, %v3412
  %v3415 = vrot.slane %v2788, 3
  %v3416 = vsel %vm2830, %v3415, %v3414
  %v3417 = vrot.slane %v2789, 2
  %v3418 = vsel %vm2833, %v3417, %v3416
  %v3419 = vrot.slane %v2790, 1
  %v3420 = vsel %vm2815, %v2791, %v3419
  %v3421 = vrot.slane %v2792, 7
  %v3422 = vsel %vm2818, %v3421, %v3420
  %v3423 = vrot.slane %v2793, 6
  %v3424 = vsel %vm2821, %v3423, %v3422
  %v3425 = vrot.slane %v2794, 5
  %v3426 = vsel %vm2824, %v3425, %v3424
  %v3427 = vrot.slane %v2795, 4
  %v3428 = vsel %vm2827, %v3427, %v3426
  %v3429 = vrot.slane %v2796, 3
  %v3430 = vsel %vm2830, %v3429, %v3428
  %v3431 = vrot.slane %v2797, 2
  %v3432 = vsel %vm2833, %v3431, %v3430
  %v3433 = vrot.slane %v2798, 1
  %v3434 = vsel %vm2815, %v2799, %v3433
  %v3435 = vrot.slane %v2800, 7
  %v3436 = vsel %vm2818, %v3435, %v3434
  %v3437 = vrot.slane %v2801, 6
  %v3438 = vsel %vm2821, %v3437, %v3436
  %v3439 = vrot.slane %v2802, 5
  %v3440 = vsel %vm2824, %v3439, %v3438
  %v3441 = vrot.slane %v2803, 4
  %v3442 = vsel %vm2827, %v3441, %v3440
  %v3443 = vrot.slane %v2804, 3
  %v3444 = vsel %vm2830, %v3443, %v3442
  %v3445 = vrot.slane %v2805, 2
  %v3446 = vsel %vm2833, %v3445, %v3444
  %v3447 = vrot.slane %v2806, 1
  %v3448 = vsel %vm2815, %v2807, %v3447
  %v3449 = vrot.slane %v2808, 7
  %v3450 = vsel %vm2818, %v3449, %v3448
  %v3451 = vrot.slane %v2809, 6
  %v3452 = vsel %vm2821, %v3451, %v3450
  %v3453 = vrot.slane %v2810, 5
  %v3454 = vsel %vm2824, %v3453, %v3452
  %v3455 = vrot.slane %v2811, 4
  %v3456 = vsel %vm2827, %v3455, %v3454
  %v3457 = vrot.slane %v2812, 3
  %v3458 = vsel %vm2830, %v3457, %v3456
  %v3459 = vrot.slane %v2813, 2
  %v3460 = vsel %vm2833, %v3459, %v3458
  %v3461 = vpack.c.b16 %v3250, %v3250
  %v3462 = vpack.c.b16 %v3264, %v3264
  %v3463 = vpack.c.b16 %v3278, %v3278
  %v3464 = vpack.c.b16 %v3292, %v3292
  %v3465 = vpack.c.b16 %v3306, %v3306
  %v3466 = vpack.c.b16 %v3320, %v3320
  %v3467 = vpack.c.b16 %v3334, %v3334
  %v3468 = vpack.c.b16 %v3348, %v3348
  %v3469 = vpack.c.b16 %v3362, %v3362
  %v3470 = vpack.c.b16 %v3376, %v3376
  %v3471 = vpack.c.b16 %v3390, %v3390
  %v3472 = vpack.c.b16 %v3404, %v3404
  %v3473 = vpack.c.b16 %v3418, %v3418
  %v3474 = vpack.c.b16 %v3432, %v3432
  %v3475 = vpack.c.b16 %v3446, %v3446
  %v3476 = vpack.c.b16 %v3460, %v3460
  %v3478 = vshrl.u32 %v3461, 16
  %v3480 = vrot.slane %v3478, 7
  %v3481 = vshll.u32 %v3461, 16
  %v3483 = vor.u32 %v3480, %v3481
  %v3485 = vshrl.u32 %v3462, 16
  %v3487 = vrot.slane %v3485, 7
  %v3488 = vshll.u32 %v3462, 16
  %v3490 = vor.u32 %v3487, %v3488
  %v3492 = vshrl.u32 %v3463, 16
  %v3494 = vrot.slane %v3492, 7
  %v3495 = vshll.u32 %v3463, 16
  %v3497 = vor.u32 %v3494, %v3495
  %v3499 = vshrl.u32 %v3464, 16
  %v3501 = vrot.slane %v3499, 7
  %v3502 = vshll.u32 %v3464, 16
  %v3504 = vor.u32 %v3501, %v3502
  %v3506 = vshrl.u32 %v3465, 16
  %v3508 = vrot.slane %v3506, 7
  %v3509 = vshll.u32 %v3465, 16
  %v3511 = vor.u32 %v3508, %v3509
  %v3513 = vshrl.u32 %v3466, 16
  %v3515 = vrot.slane %v3513, 7
  %v3516 = vshll.u32 %v3466, 16
  %v3518 = vor.u32 %v3515, %v3516
  %v3520 = vshrl.u32 %v3467, 16
  %v3522 = vrot.slane %v3520, 7
  %v3523 = vshll.u32 %v3467, 16
  %v3525 = vor.u32 %v3522, %v3523
  %v3527 = vshrl.u32 %v3468, 16
  %v3529 = vrot.slane %v3527, 7
  %v3530 = vshll.u32 %v3468, 16
  %v3532 = vor.u32 %v3529, %v3530
  %v3534 = vshrl.u32 %v3469, 16
  %v3536 = vrot.slane %v3534, 7
  %v3537 = vshll.u32 %v3469, 16
  %v3539 = vor.u32 %v3536, %v3537
  %v3541 = vshrl.u32 %v3470, 16
  %v3543 = vrot.slane %v3541, 7
  %v3544 = vshll.u32 %v3470, 16
  %v3546 = vor.u32 %v3543, %v3544
  %v3548 = vshrl.u32 %v3471, 16
  %v3550 = vrot.slane %v3548, 7
  %v3551 = vshll.u32 %v3471, 16
  %v3553 = vor.u32 %v3550, %v3551
  %v3555 = vshrl.u32 %v3472, 16
  %v3557 = vrot.slane %v3555, 7
  %v3558 = vshll.u32 %v3472, 16
  %v3560 = vor.u32 %v3557, %v3558
  %v3562 = vshrl.u32 %v3473, 16
  %v3564 = vrot.slane %v3562, 7
  %v3565 = vshll.u32 %v3473, 16
  %v3567 = vor.u32 %v3564, %v3565
  %v3569 = vshrl.u32 %v3474, 16
  %v3571 = vrot.slane %v3569, 7
  %v3572 = vshll.u32 %v3474, 16
  %v3574 = vor.u32 %v3571, %v3572
  %v3576 = vshrl.u32 %v3475, 16
  %v3578 = vrot.slane %v3576, 7
  %v3579 = vshll.u32 %v3475, 16
  %v3581 = vor.u32 %v3578, %v3579
  %v3583 = vshrl.u32 %v3476, 16
  %v3585 = vrot.slane %v3583, 7
  %v3586 = vshll.u32 %v3476, 16
  %v3588 = vor.u32 %v3585, %v3586
  %v3605 = vsel %vm3199, 0, %v3483
  %v3606 = vsel %vm3199, 0, %v3490
  %v3607 = vsel %vm3199, 0, %v3497
  %v3608 = vsel %vm3199, 0, %v3504
  %v3609 = vsel %vm3199, 0, %v3511
  %v3610 = vsel %vm3199, 0, %v3518
  %v3611 = vsel %vm3199, 0, %v3525
  %v3612 = vsel %vm3199, 0, %v3532
  %v3613 = vsel %vm3199, 0, %v3539
  %v3614 = vsel %vm3199, 0, %v3546
  %v3615 = vsel %vm3199, 0, %v3553
  %v3616 = vsel %vm3199, 0, %v3560
  %v3617 = vsel %vm3199, 0, %v3567
  %v3618 = vsel %vm3199, 0, %v3574
  %v3619 = vsel %vm3199, 0, %v3581
  %v3620 = vsel %vm3199, 0, %v3588
  %v3621 = vsel %vm3219, %v3605, 0
  %v3622 = vsel %vm3219, %v3606, 0
  %v3623 = vsel %vm3219, %v3607, 0
  %v3624 = vsel %vm3219, %v3608, 0
  %v3625 = vsel %vm3219, %v3609, 0
  %v3626 = vsel %vm3219, %v3610, 0
  %v3627 = vsel %vm3219, %v3611, 0
  %v3628 = vsel %vm3219, %v3612, 0
  %v3629 = vsel %vm3219, %v3613, 0
  %v3630 = vsel %vm3219, %v3614, 0
  %v3631 = vsel %vm3219, %v3615, 0
  %v3632 = vsel %vm3219, %v3616, 0
  %v3633 = vsel %vm3219, %v3617, 0
  %v3634 = vsel %vm3219, %v3618, 0
  %v3635 = vsel %vm3219, %v3619, 0
  %v3636 = vsel %vm3219, %v3620, 0
  %v3670 = vunpack.c.l.s4 1966171168
  %v3671 = vunpack.c.0.s8 %v3670
  %v3672 = vlaneseq
  %v3673 = vshrl.u32 %v3672, 7
  %v3674 = vsub.s32 %v3671, %v3673
  %v3675 = vrot.slane %v32, %v3674
  %v3676 = vcombine.high %v3675, %v3675
  %v3678 = vunpack.c.l.s4 1966171168
  %v3679 = vunpack.c.0.s8 %v3678
  %v3680 = vlaneseq
  %v3681 = vshrl.u32 %v3680, 7
  %v3682 = vsub.s32 %v3679, %v3681
  %v3683 = vrot.slane %v3675, %v3682
  %v3685 = vunpack.c.l.s4 1966171168
  %v3686 = vunpack.c.0.s8 %v3685
  %v3687 = vlaneseq
  %v3688 = vshrl.u32 %v3687, 7
  %v3689 = vsub.s32 %v3686, %v3688
  %v3690 = vrot.slane %v3676, %v3689
  %v3691 = vcombine.high %v3683, %v3683
  %v3692 = vcombine.high %v3690, %v3690
  %v3694 = vunpack.c.l.s4 1966171168
  %v3695 = vunpack.c.0.s8 %v3694
  %v3696 = vlaneseq
  %v3697 = vshrl.u32 %v3696, 7
  %v3698 = vsub.s32 %v3695, %v3697
  %v3699 = vrot.slane %v33, %v3698
  %v3700 = vcombine.high %v3699, %v3699
  %v3702 = vunpack.c.l.s4 1966171168
  %v3703 = vunpack.c.0.s8 %v3702
  %v3704 = vlaneseq
  %v3705 = vshrl.u32 %v3704, 7
  %v3706 = vsub.s32 %v3703, %v3705
  %v3707 = vrot.slane %v3699, %v3706
  %v3709 = vunpack.c.l.s4 1966171168
  %v3710 = vunpack.c.0.s8 %v3709
  %v3711 = vlaneseq
  %v3712 = vshrl.u32 %v3711, 7
  %v3713 = vsub.s32 %v3710, %v3712
  %v3714 = vrot.slane %v3700, %v3713
  %v3715 = vcombine.high %v3707, %v3707
  %v3716 = vcombine.high %v3714, %v3714
  %v3718 = vunpack.c.l.s4 1966171168
  %v3719 = vunpack.c.0.s8 %v3718
  %v3720 = vlaneseq
  %v3721 = vshrl.u32 %v3720, 7
  %v3722 = vsub.s32 %v3719, %v3721
  %v3723 = vrot.slane %v36, %v3722
  %v3724 = vcombine.high %v3723, %v3723
  %v3726 = vunpack.c.l.s4 1966171168
  %v3727 = vunpack.c.0.s8 %v3726
  %v3728 = vlaneseq
  %v3729 = vshrl.u32 %v3728, 7
  %v3730 = vsub.s32 %v3727, %v3729
  %v3731 = vrot.slane %v3723, %v3730
  %v3733 = vunpack.c.l.s4 1966171168
  %v3734 = vunpack.c.0.s8 %v3733
  %v3735 = vlaneseq
  %v3736 = vshrl.u32 %v3735, 7
  %v3737 = vsub.s32 %v3734, %v3736
  %v3738 = vrot.slane %v3724, %v3737
  %v3739 = vcombine.high %v3731, %v3731
  %v3740 = vcombine.high %v3738, %v3738
  %v3742 = vunpack.c.l.s4 1966171168
  %v3743 = vunpack.c.0.s8 %v3742
  %v3744 = vlaneseq
  %v3745 = vshrl.u32 %v3744, 7
  %v3746 = vsub.s32 %v3743, %v3745
  %v3747 = vrot.slane %v37, %v3746
  %v3748 = vcombine.high %v3747, %v3747
  %v3750 = vunpack.c.l.s4 1966171168
  %v3751 = vunpack.c.0.s8 %v3750
  %v3752 = vlaneseq
  %v3753 = vshrl.u32 %v3752, 7
  %v3754 = vsub.s32 %v3751, %v3753
  %v3755 = vrot.slane %v3747, %v3754
  %v3757 = vunpack.c.l.s4 1966171168
  %v3758 = vunpack.c.0.s8 %v3757
  %v3759 = vlaneseq
  %v3760 = vshrl.u32 %v3759, 7
  %v3761 = vsub.s32 %v3758, %v3760
  %v3762 = vrot.slane %v3748, %v3761
  %v3763 = vcombine.high %v3755, %v3755
  %v3764 = vcombine.high %v3762, %v3762
  %v3766 = vunpack.c.l.s4 1966171168
  %v3767 = vunpack.c.0.s8 %v3766
  %v3768 = vlaneseq
  %v3769 = vshrl.u32 %v3768, 7
  %v3770 = vsub.s32 %v3767, %v3769
  %v3771 = vrot.slane %v40, %v3770
  %v3772 = vcombine.high %v3771, %v3771
  %v3774 = vunpack.c.l.s4 1966171168
  %v3775 = vunpack.c.0.s8 %v3774
  %v3776 = vlaneseq
  %v3777 = vshrl.u32 %v3776, 7
  %v3778 = vsub.s32 %v3775, %v3777
  %v3779 = vrot.slane %v3771, %v3778
  %v3781 = vunpack.c.l.s4 1966171168
  %v3782 = vunpack.c.0.s8 %v3781
  %v3783 = vlaneseq
  %v3784 = vshrl.u32 %v3783, 7
  %v3785 = vsub.s32 %v3782, %v3784
  %v3786 = vrot.slane %v3772, %v3785
  %v3787 = vcombine.high %v3779, %v3779
  %v3788 = vcombine.high %v3786, %v3786
  %v3790 = vunpack.c.l.s4 1966171168
  %v3791 = vunpack.c.0.s8 %v3790
  %v3792 = vlaneseq
  %v3793 = vshrl.u32 %v3792, 7
  %v3794 = vsub.s32 %v3791, %v3793
  %v3795 = vrot.slane %v41, %v3794
  %v3796 = vcombine.high %v3795, %v3795
  %v3798 = vunpack.c.l.s4 1966171168
  %v3799 = vunpack.c.0.s8 %v3798
  %v3800 = vlaneseq
  %v3801 = vshrl.u32 %v3800, 7
  %v3802 = vsub.s32 %v3799, %v3801
  %v3803 = vrot.slane %v3795, %v3802
  %v3805 = vunpack.c.l.s4 1966171168
  %v3806 = vunpack.c.0.s8 %v3805
  %v3807 = vlaneseq
  %v3808 = vshrl.u32 %v3807, 7
  %v3809 = vsub.s32 %v3806, %v3808
  %v3810 = vrot.slane %v3796, %v3809
  %v3811 = vcombine.high %v3803, %v3803
  %v3812 = vcombine.high %v3810, %v3810
  %v3814 = vunpack.c.l.s4 1966171168
  %v3815 = vunpack.c.0.s8 %v3814
  %v3816 = vlaneseq
  %v3817 = vshrl.u32 %v3816, 7
  %v3818 = vsub.s32 %v3815, %v3817
  %v3819 = vrot.slane %v44, %v3818
  %v3820 = vcombine.high %v3819, %v3819
  %v3822 = vunpack.c.l.s4 1966171168
  %v3823 = vunpack.c.0.s8 %v3822
  %v3824 = vlaneseq
  %v3825 = vshrl.u32 %v3824, 7
  %v3826 = vsub.s32 %v3823, %v3825
  %v3827 = vrot.slane %v3819, %v3826
  %v3829 = vunpack.c.l.s4 1966171168
  %v3830 = vunpack.c.0.s8 %v3829
  %v3831 = vlaneseq
  %v3832 = vshrl.u32 %v3831, 7
  %v3833 = vsub.s32 %v3830, %v3832
  %v3834 = vrot.slane %v3820, %v3833
  %v3835 = vcombine.high %v3827, %v3827
  %v3836 = vcombine.high %v3834, %v3834
  %v3838 = vunpack.c.l.s4 1966171168
  %v3839 = vunpack.c.0.s8 %v3838
  %v3840 = vlaneseq
  %v3841 = vshrl.u32 %v3840, 7
  %v3842 = vsub.s32 %v3839, %v3841
  %v3843 = vrot.slane %v45, %v3842
  %v3844 = vcombine.high %v3843, %v3843
  %v3846 = vunpack.c.l.s4 1966171168
  %v3847 = vunpack.c.0.s8 %v3846
  %v3848 = vlaneseq
  %v3849 = vshrl.u32 %v3848, 7
  %v3850 = vsub.s32 %v3847, %v3849
  %v3851 = vrot.slane %v3843, %v3850
  %v3853 = vunpack.c.l.s4 1966171168
  %v3854 = vunpack.c.0.s8 %v3853
  %v3855 = vlaneseq
  %v3856 = vshrl.u32 %v3855, 7
  %v3857 = vsub.s32 %v3854, %v3856
  %v3858 = vrot.slane %v3844, %v3857
  %v3859 = vcombine.high %v3851, %v3851
  %v3860 = vcombine.high %v3858, %v3858
  %v3862 = vunpack.c.l.s4 1966171168
  %v3863 = vunpack.c.0.s8 %v3862
  %v3864 = vlaneseq
  %v3865 = vshrl.u32 %v3864, 7
  %v3866 = vsub.s32 %v3863, %v3865
  %v3867 = vrot.slane %v48, %v3866
  %v3868 = vcombine.high %v3867, %v3867
  %v3870 = vunpack.c.l.s4 1966171168
  %v3871 = vunpack.c.0.s8 %v3870
  %v3872 = vlaneseq
  %v3873 = vshrl.u32 %v3872, 7
  %v3874 = vsub.s32 %v3871, %v3873
  %v3875 = vrot.slane %v3867, %v3874
  %v3877 = vunpack.c.l.s4 1966171168
  %v3878 = vunpack.c.0.s8 %v3877
  %v3879 = vlaneseq
  %v3880 = vshrl.u32 %v3879, 7
  %v3881 = vsub.s32 %v3878, %v3880
  %v3882 = vrot.slane %v3868, %v3881
  %v3883 = vcombine.high %v3875, %v3875
  %v3884 = vcombine.high %v3882, %v3882
  %v3886 = vunpack.c.l.s4 1966171168
  %v3887 = vunpack.c.0.s8 %v3886
  %v3888 = vlaneseq
  %v3889 = vshrl.u32 %v3888, 7
  %v3890 = vsub.s32 %v3887, %v3889
  %v3891 = vrot.slane %v49, %v3890
  %v3892 = vcombine.high %v3891, %v3891
  %v3894 = vunpack.c.l.s4 1966171168
  %v3895 = vunpack.c.0.s8 %v3894
  %v3896 = vlaneseq
  %v3897 = vshrl.u32 %v3896, 7
  %v3898 = vsub.s32 %v3895, %v3897
  %v3899 = vrot.slane %v3891, %v3898
  %v3901 = vunpack.c.l.s4 1966171168
  %v3902 = vunpack.c.0.s8 %v3901
  %v3903 = vlaneseq
  %v3904 = vshrl.u32 %v3903, 7
  %v3905 = vsub.s32 %v3902, %v3904
  %v3906 = vrot.slane %v3892, %v3905
  %v3907 = vcombine.high %v3899, %v3899
  %v3908 = vcombine.high %v3906, %v3906
  %v3910 = vunpack.c.l.s4 1966171168
  %v3911 = vunpack.c.0.s8 %v3910
  %v3912 = vlaneseq
  %v3913 = vshrl.u32 %v3912, 7
  %v3914 = vsub.s32 %v3911, %v3913
  %v3915 = vrot.slane %v52, %v3914
  %v3916 = vcombine.high %v3915, %v3915
  %v3918 = vunpack.c.l.s4 1966171168
  %v3919 = vunpack.c.0.s8 %v3918
  %v3920 = vlaneseq
  %v3921 = vshrl.u32 %v3920, 7
  %v3922 = vsub.s32 %v3919, %v3921
  %v3923 = vrot.slane %v3915, %v3922
  %v3925 = vunpack.c.l.s4 1966171168
  %v3926 = vunpack.c.0.s8 %v3925
  %v3927 = vlaneseq
  %v3928 = vshrl.u32 %v3927, 7
  %v3929 = vsub.s32 %v3926, %v3928
  %v3930 = vrot.slane %v3916, %v3929
  %v3931 = vcombine.high %v3923, %v3923
  %v3932 = vcombine.high %v3930, %v3930
  %v3934 = vunpack.c.l.s4 1966171168
  %v3935 = vunpack.c.0.s8 %v3934
  %v3936 = vlaneseq
  %v3937 = vshrl.u32 %v3936, 7
  %v3938 = vsub.s32 %v3935, %v3937
  %v3939 = vrot.slane %v53, %v3938
  %v3940 = vcombine.high %v3939, %v3939
  %v3942 = vunpack.c.l.s4 1966171168
  %v3943 = vunpack.c.0.s8 %v3942
  %v3944 = vlaneseq
  %v3945 = vshrl.u32 %v3944, 7
  %v3946 = vsub.s32 %v3943, %v3945
  %v3947 = vrot.slane %v3939, %v3946
  %v3949 = vunpack.c.l.s4 1966171168
  %v3950 = vunpack.c.0.s8 %v3949
  %v3951 = vlaneseq
  %v3952 = vshrl.u32 %v3951, 7
  %v3953 = vsub.s32 %v3950, %v3952
  %v3954 = vrot.slane %v3940, %v3953
  %v3955 = vcombine.high %v3947, %v3947
  %v3956 = vcombine.high %v3954, %v3954
  %v3958 = vunpack.c.l.s4 1966171168
  %v3959 = vunpack.c.0.s8 %v3958
  %v3960 = vlaneseq
  %v3961 = vshrl.u32 %v3960, 7
  %v3962 = vsub.s32 %v3959, %v3961
  %v3963 = vrot.slane %v56, %v3962
  %v3964 = vcombine.high %v3963, %v3963
  %v3966 = vunpack.c.l.s4 1966171168
  %v3967 = vunpack.c.0.s8 %v3966
  %v3968 = vlaneseq
  %v3969 = vshrl.u32 %v3968, 7
  %v3970 = vsub.s32 %v3967, %v3969
  %v3971 = vrot.slane %v3963, %v3970
  %v3973 = vunpack.c.l.s4 1966171168
  %v3974 = vunpack.c.0.s8 %v3973
  %v3975 = vlaneseq
  %v3976 = vshrl.u32 %v3975, 7
  %v3977 = vsub.s32 %v3974, %v3976
  %v3978 = vrot.slane %v3964, %v3977
  %v3979 = vcombine.high %v3971, %v3971
  %v3980 = vcombine.high %v3978, %v3978
  %v3982 = vunpack.c.l.s4 1966171168
  %v3983 = vunpack.c.0.s8 %v3982
  %v3984 = vlaneseq
  %v3985 = vshrl.u32 %v3984, 7
  %v3986 = vsub.s32 %v3983, %v3985
  %v3987 = vrot.slane %v57, %v3986
  %v3988 = vcombine.high %v3987, %v3987
  %v3990 = vunpack.c.l.s4 1966171168
  %v3991 = vunpack.c.0.s8 %v3990
  %v3992 = vlaneseq
  %v3993 = vshrl.u32 %v3992, 7
  %v3994 = vsub.s32 %v3991, %v3993
  %v3995 = vrot.slane %v3987, %v3994
  %v3997 = vunpack.c.l.s4 1966171168
  %v3998 = vunpack.c.0.s8 %v3997
  %v3999 = vlaneseq
  %v4000 = vshrl.u32 %v3999, 7
  %v4001 = vsub.s32 %v3998, %v4000
  %v4002 = vrot.slane %v3988, %v4001
  %v4003 = vcombine.high %v3995, %v3995
  %v4004 = vcombine.high %v4002, %v4002
  %v4006 = vunpack.c.l.s4 1966171168
  %v4007 = vunpack.c.0.s8 %v4006
  %v4008 = vlaneseq
  %v4009 = vshrl.u32 %v4008, 7
  %v4010 = vsub.s32 %v4007, %v4009
  %v4011 = vrot.slane %v60, %v4010
  %v4012 = vcombine.high %v4011, %v4011
  %v4014 = vunpack.c.l.s4 1966171168
  %v4015 = vunpack.c.0.s8 %v4014
  %v4016 = vlaneseq
  %v4017 = vshrl.u32 %v4016, 7
  %v4018 = vsub.s32 %v4015, %v4017
  %v4019 = vrot.slane %v4011, %v4018
  %v4021 = vunpack.c.l.s4 1966171168
  %v4022 = vunpack.c.0.s8 %v4021
  %v4023 = vlaneseq
  %v4024 = vshrl.u32 %v4023, 7
  %v4025 = vsub.s32 %v4022, %v4024
  %v4026 = vrot.slane %v4012, %v4025
  %v4027 = vcombine.high %v4019, %v4019
  %v4028 = vcombine.high %v4026, %v4026
  %v4030 = vunpack.c.l.s4 1966171168
  %v4031 = vunpack.c.0.s8 %v4030
  %v4032 = vlaneseq
  %v4033 = vshrl.u32 %v4032, 7
  %v4034 = vsub.s32 %v4031, %v4033
  %v4035 = vrot.slane %v61, %v4034
  %v4036 = vcombine.high %v4035, %v4035
  %v4038 = vunpack.c.l.s4 1966171168
  %v4039 = vunpack.c.0.s8 %v4038
  %v4040 = vlaneseq
  %v4041 = vshrl.u32 %v4040, 7
  %v4042 = vsub.s32 %v4039, %v4041
  %v4043 = vrot.slane %v4035, %v4042
  %v4045 = vunpack.c.l.s4 1966171168
  %v4046 = vunpack.c.0.s8 %v4045
  %v4047 = vlaneseq
  %v4048 = vshrl.u32 %v4047, 7
  %v4049 = vsub.s32 %v4046, %v4048
  %v4050 = vrot.slane %v4036, %v4049
  %v4051 = vcombine.high %v4043, %v4043
  %v4052 = vcombine.high %v4050, %v4050
  %v4054 = vunpack.c.l.s4 1966171168
  %v4055 = vunpack.c.0.s8 %v4054
  %v4056 = vlaneseq
  %v4057 = vshrl.u32 %v4056, 7
  %v4058 = vsub.s32 %v4055, %v4057
  %v4059 = vrot.slane %v64, %v4058
  %v4060 = vcombine.high %v4059, %v4059
  %v4062 = vunpack.c.l.s4 1966171168
  %v4063 = vunpack.c.0.s8 %v4062
  %v4064 = vlaneseq
  %v4065 = vshrl.u32 %v4064, 7
  %v4066 = vsub.s32 %v4063, %v4065
  %v4067 = vrot.slane %v4059, %v4066
  %v4069 = vunpack.c.l.s4 1966171168
  %v4070 = vunpack.c.0.s8 %v4069
  %v4071 = vlaneseq
  %v4072 = vshrl.u32 %v4071, 7
  %v4073 = vsub.s32 %v4070, %v4072
  %v4074 = vrot.slane %v4060, %v4073
  %v4075 = vcombine.high %v4067, %v4067
  %v4076 = vcombine.high %v4074, %v4074
  %v4078 = vunpack.c.l.s4 1966171168
  %v4079 = vunpack.c.0.s8 %v4078
  %v4080 = vlaneseq
  %v4081 = vshrl.u32 %v4080, 7
  %v4082 = vsub.s32 %v4079, %v4081
  %v4083 = vrot.slane %v65, %v4082
  %v4084 = vcombine.high %v4083, %v4083
  %v4086 = vunpack.c.l.s4 1966171168
  %v4087 = vunpack.c.0.s8 %v4086
  %v4088 = vlaneseq
  %v4089 = vshrl.u32 %v4088, 7
  %v4090 = vsub.s32 %v4087, %v4089
  %v4091 = vrot.slane %v4083, %v4090
  %v4093 = vunpack.c.l.s4 1966171168
  %v4094 = vunpack.c.0.s8 %v4093
  %v4095 = vlaneseq
  %v4096 = vshrl.u32 %v4095, 7
  %v4097 = vsub.s32 %v4094, %v4096
  %v4098 = vrot.slane %v4084, %v4097
  %v4099 = vcombine.high %v4091, %v4091
  %v4100 = vcombine.high %v4098, %v4098
  %v4102 = vunpack.c.l.s4 1966171168
  %v4103 = vunpack.c.0.s8 %v4102
  %v4104 = vlaneseq
  %v4105 = vshrl.u32 %v4104, 7
  %v4106 = vsub.s32 %v4103, %v4105
  %v4107 = vrot.slane %v68, %v4106
  %v4108 = vcombine.high %v4107, %v4107
  %v4110 = vunpack.c.l.s4 1966171168
  %v4111 = vunpack.c.0.s8 %v4110
  %v4112 = vlaneseq
  %v4113 = vshrl.u32 %v4112, 7
  %v4114 = vsub.s32 %v4111, %v4113
  %v4115 = vrot.slane %v4107, %v4114
  %v4117 = vunpack.c.l.s4 1966171168
  %v4118 = vunpack.c.0.s8 %v4117
  %v4119 = vlaneseq
  %v4120 = vshrl.u32 %v4119, 7
  %v4121 = vsub.s32 %v4118, %v4120
  %v4122 = vrot.slane %v4108, %v4121
  %v4123 = vcombine.high %v4115, %v4115
  %v4124 = vcombine.high %v4122, %v4122
  %v4126 = vunpack.c.l.s4 1966171168
  %v4127 = vunpack.c.0.s8 %v4126
  %v4128 = vlaneseq
  %v4129 = vshrl.u32 %v4128, 7
  %v4130 = vsub.s32 %v4127, %v4129
  %v4131 = vrot.slane %v69, %v4130
  %v4132 = vcombine.high %v4131, %v4131
  %v4134 = vunpack.c.l.s4 1966171168
  %v4135 = vunpack.c.0.s8 %v4134
  %v4136 = vlaneseq
  %v4137 = vshrl.u32 %v4136, 7
  %v4138 = vsub.s32 %v4135, %v4137
  %v4139 = vrot.slane %v4131, %v4138
  %v4141 = vunpack.c.l.s4 1966171168
  %v4142 = vunpack.c.0.s8 %v4141
  %v4143 = vlaneseq
  %v4144 = vshrl.u32 %v4143, 7
  %v4145 = vsub.s32 %v4142, %v4144
  %v4146 = vrot.slane %v4132, %v4145
  %v4147 = vcombine.high %v4139, %v4139
  %v4148 = vcombine.high %v4146, %v4146
  %v4150 = vunpack.c.l.s4 1966171168
  %v4151 = vunpack.c.0.s8 %v4150
  %v4152 = vlaneseq
  %v4153 = vshrl.u32 %v4152, 7
  %v4154 = vsub.s32 %v4151, %v4153
  %v4155 = vrot.slane %v72, %v4154
  %v4156 = vcombine.high %v4155, %v4155
  %v4158 = vunpack.c.l.s4 1966171168
  %v4159 = vunpack.c.0.s8 %v4158
  %v4160 = vlaneseq
  %v4161 = vshrl.u32 %v4160, 7
  %v4162 = vsub.s32 %v4159, %v4161
  %v4163 = vrot.slane %v4155, %v4162
  %v4165 = vunpack.c.l.s4 1966171168
  %v4166 = vunpack.c.0.s8 %v4165
  %v4167 = vlaneseq
  %v4168 = vshrl.u32 %v4167, 7
  %v4169 = vsub.s32 %v4166, %v4168
  %v4170 = vrot.slane %v4156, %v4169
  %v4171 = vcombine.high %v4163, %v4163
  %v4172 = vcombine.high %v4170, %v4170
  %v4174 = vunpack.c.l.s4 1966171168
  %v4175 = vunpack.c.0.s8 %v4174
  %v4176 = vlaneseq
  %v4177 = vshrl.u32 %v4176, 7
  %v4178 = vsub.s32 %v4175, %v4177
  %v4179 = vrot.slane %v73, %v4178
  %v4180 = vcombine.high %v4179, %v4179
  %v4182 = vunpack.c.l.s4 1966171168
  %v4183 = vunpack.c.0.s8 %v4182
  %v4184 = vlaneseq
  %v4185 = vshrl.u32 %v4184, 7
  %v4186 = vsub.s32 %v4183, %v4185
  %v4187 = vrot.slane %v4179, %v4186
  %v4189 = vunpack.c.l.s4 1966171168
  %v4190 = vunpack.c.0.s8 %v4189
  %v4191 = vlaneseq
  %v4192 = vshrl.u32 %v4191, 7
  %v4193 = vsub.s32 %v4190, %v4192
  %v4194 = vrot.slane %v4180, %v4193
  %v4195 = vcombine.high %v4187, %v4187
  %v4196 = vcombine.high %v4194, %v4194
  %v4198 = vunpack.c.l.s4 1966171168
  %v4199 = vunpack.c.0.s8 %v4198
  %v4200 = vlaneseq
  %v4201 = vshrl.u32 %v4200, 7
  %v4202 = vsub.s32 %v4199, %v4201
  %v4203 = vrot.slane %v76, %v4202
  %v4204 = vcombine.high %v4203, %v4203
  %v4206 = vunpack.c.l.s4 1966171168
  %v4207 = vunpack.c.0.s8 %v4206
  %v4208 = vlaneseq
  %v4209 = vshrl.u32 %v4208, 7
  %v4210 = vsub.s32 %v4207, %v4209
  %v4211 = vrot.slane %v4203, %v4210
  %v4213 = vunpack.c.l.s4 1966171168
  %v4214 = vunpack.c.0.s8 %v4213
  %v4215 = vlaneseq
  %v4216 = vshrl.u32 %v4215, 7
  %v4217 = vsub.s32 %v4214, %v4216
  %v4218 = vrot.slane %v4204, %v4217
  %v4219 = vcombine.high %v4211, %v4211
  %v4220 = vcombine.high %v4218, %v4218
  %v4222 = vunpack.c.l.s4 1966171168
  %v4223 = vunpack.c.0.s8 %v4222
  %v4224 = vlaneseq
  %v4225 = vshrl.u32 %v4224, 7
  %v4226 = vsub.s32 %v4223, %v4225
  %v4227 = vrot.slane %v77, %v4226
  %v4228 = vcombine.high %v4227, %v4227
  %v4230 = vunpack.c.l.s4 1966171168
  %v4231 = vunpack.c.0.s8 %v4230
  %v4232 = vlaneseq
  %v4233 = vshrl.u32 %v4232, 7
  %v4234 = vsub.s32 %v4231, %v4233
  %v4235 = vrot.slane %v4227, %v4234
  %v4237 = vunpack.c.l.s4 1966171168
  %v4238 = vunpack.c.0.s8 %v4237
  %v4239 = vlaneseq
  %v4240 = vshrl.u32 %v4239, 7
  %v4241 = vsub.s32 %v4238, %v4240
  %v4242 = vrot.slane %v4228, %v4241
  %v4243 = vcombine.high %v4235, %v4235
  %v4244 = vcombine.high %v4242, %v4242
  %v4246 = vunpack.c.l.s4 1966171168
  %v4247 = vunpack.c.0.s8 %v4246
  %v4248 = vlaneseq
  %v4249 = vshrl.u32 %v4248, 7
  %v4250 = vsub.s32 %v4247, %v4249
  %v4251 = vrot.slane %v80, %v4250
  %v4252 = vcombine.high %v4251, %v4251
  %v4254 = vunpack.c.l.s4 1966171168
  %v4255 = vunpack.c.0.s8 %v4254
  %v4256 = vlaneseq
  %v4257 = vshrl.u32 %v4256, 7
  %v4258 = vsub.s32 %v4255, %v4257
  %v4259 = vrot.slane %v4251, %v4258
  %v4261 = vunpack.c.l.s4 1966171168
  %v4262 = vunpack.c.0.s8 %v4261
  %v4263 = vlaneseq
  %v4264 = vshrl.u32 %v4263, 7
  %v4265 = vsub.s32 %v4262, %v4264
  %v4266 = vrot.slane %v4252, %v4265
  %v4267 = vcombine.high %v4259, %v4259
  %v4268 = vcombine.high %v4266, %v4266
  %v4270 = vunpack.c.l.s4 1966171168
  %v4271 = vunpack.c.0.s8 %v4270
  %v4272 = vlaneseq
  %v4273 = vshrl.u32 %v4272, 7
  %v4274 = vsub.s32 %v4271, %v4273
  %v4275 = vrot.slane %v81, %v4274
  %v4276 = vcombine.high %v4275, %v4275
  %v4278 = vunpack.c.l.s4 1966171168
  %v4279 = vunpack.c.0.s8 %v4278
  %v4280 = vlaneseq
  %v4281 = vshrl.u32 %v4280, 7
  %v4282 = vsub.s32 %v4279, %v4281
  %v4283 = vrot.slane %v4275, %v4282
  %v4285 = vunpack.c.l.s4 1966171168
  %v4286 = vunpack.c.0.s8 %v4285
  %v4287 = vlaneseq
  %v4288 = vshrl.u32 %v4287, 7
  %v4289 = vsub.s32 %v4286, %v4288
  %v4290 = vrot.slane %v4276, %v4289
  %v4291 = vcombine.high %v4283, %v4283
  %v4292 = vcombine.high %v4290, %v4290
  %v4294 = vunpack.c.l.s4 1966171168
  %v4295 = vunpack.c.0.s8 %v4294
  %v4296 = vlaneseq
  %v4297 = vshrl.u32 %v4296, 7
  %v4298 = vsub.s32 %v4295, %v4297
  %v4299 = vrot.slane %v84, %v4298
  %v4300 = vcombine.high %v4299, %v4299
  %v4302 = vunpack.c.l.s4 1966171168
  %v4303 = vunpack.c.0.s8 %v4302
  %v4304 = vlaneseq
  %v4305 = vshrl.u32 %v4304, 7
  %v4306 = vsub.s32 %v4303, %v4305
  %v4307 = vrot.slane %v4299, %v4306
  %v4309 = vunpack.c.l.s4 1966171168
  %v4310 = vunpack.c.0.s8 %v4309
  %v4311 = vlaneseq
  %v4312 = vshrl.u32 %v4311, 7
  %v4313 = vsub.s32 %v4310, %v4312
  %v4314 = vrot.slane %v4300, %v4313
  %v4315 = vcombine.high %v4307, %v4307
  %v4316 = vcombine.high %v4314, %v4314
  %v4318 = vunpack.c.l.s4 1966171168
  %v4319 = vunpack.c.0.s8 %v4318
  %v4320 = vlaneseq
  %v4321 = vshrl.u32 %v4320, 7
  %v4322 = vsub.s32 %v4319, %v4321
  %v4323 = vrot.slane %v85, %v4322
  %v4324 = vcombine.high %v4323, %v4323
  %v4326 = vunpack.c.l.s4 1966171168
  %v4327 = vunpack.c.0.s8 %v4326
  %v4328 = vlaneseq
  %v4329 = vshrl.u32 %v4328, 7
  %v4330 = vsub.s32 %v4327, %v4329
  %v4331 = vrot.slane %v4323, %v4330
  %v4333 = vunpack.c.l.s4 1966171168
  %v4334 = vunpack.c.0.s8 %v4333
  %v4335 = vlaneseq
  %v4336 = vshrl.u32 %v4335, 7
  %v4337 = vsub.s32 %v4334, %v4336
  %v4338 = vrot.slane %v4324, %v4337
  %v4339 = vcombine.high %v4331, %v4331
  %v4340 = vcombine.high %v4338, %v4338
  %v4342 = vunpack.c.l.s4 1966171168
  %v4343 = vunpack.c.0.s8 %v4342
  %v4344 = vlaneseq
  %v4345 = vshrl.u32 %v4344, 7
  %v4346 = vsub.s32 %v4343, %v4345
  %v4347 = vrot.slane %v88, %v4346
  %v4348 = vcombine.high %v4347, %v4347
  %v4350 = vunpack.c.l.s4 1966171168
  %v4351 = vunpack.c.0.s8 %v4350
  %v4352 = vlaneseq
  %v4353 = vshrl.u32 %v4352, 7
  %v4354 = vsub.s32 %v4351, %v4353
  %v4355 = vrot.slane %v4347, %v4354
  %v4357 = vunpack.c.l.s4 1966171168
  %v4358 = vunpack.c.0.s8 %v4357
  %v4359 = vlaneseq
  %v4360 = vshrl.u32 %v4359, 7
  %v4361 = vsub.s32 %v4358, %v4360
  %v4362 = vrot.slane %v4348, %v4361
  %v4363 = vcombine.high %v4355, %v4355
  %v4364 = vcombine.high %v4362, %v4362
  %v4366 = vunpack.c.l.s4 1966171168
  %v4367 = vunpack.c.0.s8 %v4366
  %v4368 = vlaneseq
  %v4369 = vshrl.u32 %v4368, 7
  %v4370 = vsub.s32 %v4367, %v4369
  %v4371 = vrot.slane %v89, %v4370
  %v4372 = vcombine.high %v4371, %v4371
  %v4374 = vunpack.c.l.s4 1966171168
  %v4375 = vunpack.c.0.s8 %v4374
  %v4376 = vlaneseq
  %v4377 = vshrl.u32 %v4376, 7
  %v4378 = vsub.s32 %v4375, %v4377
  %v4379 = vrot.slane %v4371, %v4378
  %v4381 = vunpack.c.l.s4 1966171168
  %v4382 = vunpack.c.0.s8 %v4381
  %v4383 = vlaneseq
  %v4384 = vshrl.u32 %v4383, 7
  %v4385 = vsub.s32 %v4382, %v4384
  %v4386 = vrot.slane %v4372, %v4385
  %v4387 = vcombine.high %v4379, %v4379
  %v4388 = vcombine.high %v4386, %v4386
  %v4390 = vunpack.c.l.s4 1966171168
  %v4391 = vunpack.c.0.s8 %v4390
  %v4392 = vlaneseq
  %v4393 = vshrl.u32 %v4392, 7
  %v4394 = vsub.s32 %v4391, %v4393
  %v4395 = vrot.slane %v92, %v4394
  %v4396 = vcombine.high %v4395, %v4395
  %v4398 = vunpack.c.l.s4 1966171168
  %v4399 = vunpack.c.0.s8 %v4398
  %v4400 = vlaneseq
  %v4401 = vshrl.u32 %v4400, 7
  %v4402 = vsub.s32 %v4399, %v4401
  %v4403 = vrot.slane %v4395, %v4402
  %v4405 = vunpack.c.l.s4 1966171168
  %v4406 = vunpack.c.0.s8 %v4405
  %v4407 = vlaneseq
  %v4408 = vshrl.u32 %v4407, 7
  %v4409 = vsub.s32 %v4406, %v4408
  %v4410 = vrot.slane %v4396, %v4409
  %v4411 = vcombine.high %v4403, %v4403
  %v4412 = vcombine.high %v4410, %v4410
  %v4414 = vunpack.c.l.s4 1966171168
  %v4415 = vunpack.c.0.s8 %v4414
  %v4416 = vlaneseq
  %v4417 = vshrl.u32 %v4416, 7
  %v4418 = vsub.s32 %v4415, %v4417
  %v4419 = vrot.slane %v93, %v4418
  %v4420 = vcombine.high %v4419, %v4419
  %v4422 = vunpack.c.l.s4 1966171168
  %v4423 = vunpack.c.0.s8 %v4422
  %v4424 = vlaneseq
  %v4425 = vshrl.u32 %v4424, 7
  %v4426 = vsub.s32 %v4423, %v4425
  %v4427 = vrot.slane %v4419, %v4426
  %v4429 = vunpack.c.l.s4 1966171168
  %v4430 = vunpack.c.0.s8 %v4429
  %v4431 = vlaneseq
  %v4432 = vshrl.u32 %v4431, 7
  %v4433 = vsub.s32 %v4430, %v4432
  %v4434 = vrot.slane %v4420, %v4433
  %v4435 = vcombine.high %v4427, %v4427
  %v4436 = vcombine.high %v4434, %v4434
  %v4438 = vunpack.c.l.s4 1966171168
  %v4439 = vunpack.c.0.s8 %v4438
  %v4440 = vlaneseq
  %v4441 = vshrl.u32 %v4440, 7
  %v4442 = vsub.s32 %v4439, %v4441
  %v4443 = vrot.slane %v3683, %v4442
  %v4445 = vunpack.c.l.s4 1966171168
  %v4446 = vunpack.c.0.s8 %v4445
  %v4447 = vlaneseq
  %v4448 = vshrl.u32 %v4447, 7
  %v4449 = vsub.s32 %v4446, %v4448
  %v4450 = vrot.slane %v4443, %v4449
  %v4452 = vunpack.c.l.s4 1966171168
  %v4453 = vunpack.c.0.s8 %v4452
  %v4454 = vlaneseq
  %v4455 = vshrl.u32 %v4454, 7
  %v4456 = vsub.s32 %v4453, %v4455
  %v4457 = vrot.slane %v3690, %v4456
  %v4459 = vunpack.c.l.s4 1966171168
  %v4460 = vunpack.c.0.s8 %v4459
  %v4461 = vlaneseq
  %v4462 = vshrl.u32 %v4461, 7
  %v4463 = vsub.s32 %v4460, %v4462
  %v4464 = vrot.slane %v4457, %v4463
  %v4466 = vunpack.c.l.s4 1966171168
  %v4467 = vunpack.c.0.s8 %v4466
  %v4468 = vlaneseq
  %v4469 = vshrl.u32 %v4468, 7
  %v4470 = vsub.s32 %v4467, %v4469
  %v4471 = vrot.slane %v3691, %v4470
  %v4473 = vunpack.c.l.s4 1966171168
  %v4474 = vunpack.c.0.s8 %v4473
  %v4475 = vlaneseq
  %v4476 = vshrl.u32 %v4475, 7
  %v4477 = vsub.s32 %v4474, %v4476
  %v4478 = vrot.slane %v4471, %v4477
  %v4480 = vunpack.c.l.s4 1966171168
  %v4481 = vunpack.c.0.s8 %v4480
  %v4482 = vlaneseq
  %v4483 = vshrl.u32 %v4482, 7
  %v4484 = vsub.s32 %v4481, %v4483
  %v4485 = vrot.slane %v3692, %v4484
  %v4487 = vunpack.c.l.s4 1966171168
  %v4488 = vunpack.c.0.s8 %v4487
  %v4489 = vlaneseq
  %v4490 = vshrl.u32 %v4489, 7
  %v4491 = vsub.s32 %v4488, %v4490
  %v4492 = vrot.slane %v4485, %v4491
  %v4494 = vunpack.c.l.s4 1966171168
  %v4495 = vunpack.c.0.s8 %v4494
  %v4496 = vlaneseq
  %v4497 = vshrl.u32 %v4496, 7
  %v4498 = vsub.s32 %v4495, %v4497
  %v4499 = vrot.slane %v3707, %v4498
  %v4501 = vunpack.c.l.s4 1966171168
  %v4502 = vunpack.c.0.s8 %v4501
  %v4503 = vlaneseq
  %v4504 = vshrl.u32 %v4503, 7
  %v4505 = vsub.s32 %v4502, %v4504
  %v4506 = vrot.slane %v4499, %v4505
  %v4508 = vunpack.c.l.s4 1966171168
  %v4509 = vunpack.c.0.s8 %v4508
  %v4510 = vlaneseq
  %v4511 = vshrl.u32 %v4510, 7
  %v4512 = vsub.s32 %v4509, %v4511
  %v4513 = vrot.slane %v3714, %v4512
  %v4515 = vunpack.c.l.s4 1966171168
  %v4516 = vunpack.c.0.s8 %v4515
  %v4517 = vlaneseq
  %v4518 = vshrl.u32 %v4517, 7
  %v4519 = vsub.s32 %v4516, %v4518
  %v4520 = vrot.slane %v4513, %v4519
  %v4522 = vunpack.c.l.s4 1966171168
  %v4523 = vunpack.c.0.s8 %v4522
  %v4524 = vlaneseq
  %v4525 = vshrl.u32 %v4524, 7
  %v4526 = vsub.s32 %v4523, %v4525
  %v4527 = vrot.slane %v3715, %v4526
  %v4529 = vunpack.c.l.s4 1966171168
  %v4530 = vunpack.c.0.s8 %v4529
  %v4531 = vlaneseq
  %v4532 = vshrl.u32 %v4531, 7
  %v4533 = vsub.s32 %v4530, %v4532
  %v4534 = vrot.slane %v4527, %v4533
  %v4536 = vunpack.c.l.s4 1966171168
  %v4537 = vunpack.c.0.s8 %v4536
  %v4538 = vlaneseq
  %v4539 = vshrl.u32 %v4538, 7
  %v4540 = vsub.s32 %v4537, %v4539
  %v4541 = vrot.slane %v3716, %v4540
  %v4543 = vunpack.c.l.s4 1966171168
  %v4544 = vunpack.c.0.s8 %v4543
  %v4545 = vlaneseq
  %v4546 = vshrl.u32 %v4545, 7
  %v4547 = vsub.s32 %v4544, %v4546
  %v4548 = vrot.slane %v4541, %v4547
  %v4550 = vunpack.c.l.s4 1966171168
  %v4551 = vunpack.c.0.s8 %v4550
  %v4552 = vlaneseq
  %v4553 = vshrl.u32 %v4552, 7
  %v4554 = vsub.s32 %v4551, %v4553
  %v4555 = vrot.slane %v3731, %v4554
  %v4557 = vunpack.c.l.s4 1966171168
  %v4558 = vunpack.c.0.s8 %v4557
  %v4559 = vlaneseq
  %v4560 = vshrl.u32 %v4559, 7
  %v4561 = vsub.s32 %v4558, %v4560
  %v4562 = vrot.slane %v4555, %v4561
  %v4564 = vunpack.c.l.s4 1966171168
  %v4565 = vunpack.c.0.s8 %v4564
  %v4566 = vlaneseq
  %v4567 = vshrl.u32 %v4566, 7
  %v4568 = vsub.s32 %v4565, %v4567
  %v4569 = vrot.slane %v3738, %v4568
  %v4571 = vunpack.c.l.s4 1966171168
  %v4572 = vunpack.c.0.s8 %v4571
  %v4573 = vlaneseq
  %v4574 = vshrl.u32 %v4573, 7
  %v4575 = vsub.s32 %v4572, %v4574
  %v4576 = vrot.slane %v4569, %v4575
  %v4578 = vunpack.c.l.s4 1966171168
  %v4579 = vunpack.c.0.s8 %v4578
  %v4580 = vlaneseq
  %v4581 = vshrl.u32 %v4580, 7
  %v4582 = vsub.s32 %v4579, %v4581
  %v4583 = vrot.slane %v3739, %v4582
  %v4585 = vunpack.c.l.s4 1966171168
  %v4586 = vunpack.c.0.s8 %v4585
  %v4587 = vlaneseq
  %v4588 = vshrl.u32 %v4587, 7
  %v4589 = vsub.s32 %v4586, %v4588
  %v4590 = vrot.slane %v4583, %v4589
  %v4592 = vunpack.c.l.s4 1966171168
  %v4593 = vunpack.c.0.s8 %v4592
  %v4594 = vlaneseq
  %v4595 = vshrl.u32 %v4594, 7
  %v4596 = vsub.s32 %v4593, %v4595
  %v4597 = vrot.slane %v3740, %v4596
  %v4599 = vunpack.c.l.s4 1966171168
  %v4600 = vunpack.c.0.s8 %v4599
  %v4601 = vlaneseq
  %v4602 = vshrl.u32 %v4601, 7
  %v4603 = vsub.s32 %v4600, %v4602
  %v4604 = vrot.slane %v4597, %v4603
  %v4606 = vunpack.c.l.s4 1966171168
  %v4607 = vunpack.c.0.s8 %v4606
  %v4608 = vlaneseq
  %v4609 = vshrl.u32 %v4608, 7
  %v4610 = vsub.s32 %v4607, %v4609
  %v4611 = vrot.slane %v3755, %v4610
  %v4613 = vunpack.c.l.s4 1966171168
  %v4614 = vunpack.c.0.s8 %v4613
  %v4615 = vlaneseq
  %v4616 = vshrl.u32 %v4615, 7
  %v4617 = vsub.s32 %v4614, %v4616
  %v4618 = vrot.slane %v4611, %v4617
  %v4620 = vunpack.c.l.s4 1966171168
  %v4621 = vunpack.c.0.s8 %v4620
  %v4622 = vlaneseq
  %v4623 = vshrl.u32 %v4622, 7
  %v4624 = vsub.s32 %v4621, %v4623
  %v4625 = vrot.slane %v3762, %v4624
  %v4627 = vunpack.c.l.s4 1966171168
  %v4628 = vunpack.c.0.s8 %v4627
  %v4629 = vlaneseq
  %v4630 = vshrl.u32 %v4629, 7
  %v4631 = vsub.s32 %v4628, %v4630
  %v4632 = vrot.slane %v4625, %v4631
  %v4634 = vunpack.c.l.s4 1966171168
  %v4635 = vunpack.c.0.s8 %v4634
  %v4636 = vlaneseq
  %v4637 = vshrl.u32 %v4636, 7
  %v4638 = vsub.s32 %v4635, %v4637
  %v4639 = vrot.slane %v3763, %v4638
  %v4641 = vunpack.c.l.s4 1966171168
  %v4642 = vunpack.c.0.s8 %v4641
  %v4643 = vlaneseq
  %v4644 = vshrl.u32 %v4643, 7
  %v4645 = vsub.s32 %v4642, %v4644
  %v4646 = vrot.slane %v4639, %v4645
  %v4648 = vunpack.c.l.s4 1966171168
  %v4649 = vunpack.c.0.s8 %v4648
  %v4650 = vlaneseq
  %v4651 = vshrl.u32 %v4650, 7
  %v4652 = vsub.s32 %v4649, %v4651
  %v4653 = vrot.slane %v3764, %v4652
  %v4655 = vunpack.c.l.s4 1966171168
  %v4656 = vunpack.c.0.s8 %v4655
  %v4657 = vlaneseq
  %v4658 = vshrl.u32 %v4657, 7
  %v4659 = vsub.s32 %v4656, %v4658
  %v4660 = vrot.slane %v4653, %v4659
  %v4662 = vunpack.c.l.s4 1966171168
  %v4663 = vunpack.c.0.s8 %v4662
  %v4664 = vlaneseq
  %v4665 = vshrl.u32 %v4664, 7
  %v4666 = vsub.s32 %v4663, %v4665
  %v4667 = vrot.slane %v3779, %v4666
  %v4669 = vunpack.c.l.s4 1966171168
  %v4670 = vunpack.c.0.s8 %v4669
  %v4671 = vlaneseq
  %v4672 = vshrl.u32 %v4671, 7
  %v4673 = vsub.s32 %v4670, %v4672
  %v4674 = vrot.slane %v4667, %v4673
  %v4676 = vunpack.c.l.s4 1966171168
  %v4677 = vunpack.c.0.s8 %v4676
  %v4678 = vlaneseq
  %v4679 = vshrl.u32 %v4678, 7
  %v4680 = vsub.s32 %v4677, %v4679
  %v4681 = vrot.slane %v3786, %v4680
  %v4683 = vunpack.c.l.s4 1966171168
  %v4684 = vunpack.c.0.s8 %v4683
  %v4685 = vlaneseq
  %v4686 = vshrl.u32 %v4685, 7
  %v4687 = vsub.s32 %v4684, %v4686
  %v4688 = vrot.slane %v4681, %v4687
  %v4690 = vunpack.c.l.s4 1966171168
  %v4691 = vunpack.c.0.s8 %v4690
  %v4692 = vlaneseq
  %v4693 = vshrl.u32 %v4692, 7
  %v4694 = vsub.s32 %v4691, %v4693
  %v4695 = vrot.slane %v3787, %v4694
  %v4697 = vunpack.c.l.s4 1966171168
  %v4698 = vunpack.c.0.s8 %v4697
  %v4699 = vlaneseq
  %v4700 = vshrl.u32 %v4699, 7
  %v4701 = vsub.s32 %v4698, %v4700
  %v4702 = vrot.slane %v4695, %v4701
  %v4704 = vunpack.c.l.s4 1966171168
  %v4705 = vunpack.c.0.s8 %v4704
  %v4706 = vlaneseq
  %v4707 = vshrl.u32 %v4706, 7
  %v4708 = vsub.s32 %v4705, %v4707
  %v4709 = vrot.slane %v3788, %v4708
  %v4711 = vunpack.c.l.s4 1966171168
  %v4712 = vunpack.c.0.s8 %v4711
  %v4713 = vlaneseq
  %v4714 = vshrl.u32 %v4713, 7
  %v4715 = vsub.s32 %v4712, %v4714
  %v4716 = vrot.slane %v4709, %v4715
  %v4718 = vunpack.c.l.s4 1966171168
  %v4719 = vunpack.c.0.s8 %v4718
  %v4720 = vlaneseq
  %v4721 = vshrl.u32 %v4720, 7
  %v4722 = vsub.s32 %v4719, %v4721
  %v4723 = vrot.slane %v3803, %v4722
  %v4725 = vunpack.c.l.s4 1966171168
  %v4726 = vunpack.c.0.s8 %v4725
  %v4727 = vlaneseq
  %v4728 = vshrl.u32 %v4727, 7
  %v4729 = vsub.s32 %v4726, %v4728
  %v4730 = vrot.slane %v4723, %v4729
  %v4732 = vunpack.c.l.s4 1966171168
  %v4733 = vunpack.c.0.s8 %v4732
  %v4734 = vlaneseq
  %v4735 = vshrl.u32 %v4734, 7
  %v4736 = vsub.s32 %v4733, %v4735
  %v4737 = vrot.slane %v3810, %v4736
  %v4739 = vunpack.c.l.s4 1966171168
  %v4740 = vunpack.c.0.s8 %v4739
  %v4741 = vlaneseq
  %v4742 = vshrl.u32 %v4741, 7
  %v4743 = vsub.s32 %v4740, %v4742
  %v4744 = vrot.slane %v4737, %v4743
  %v4746 = vunpack.c.l.s4 1966171168
  %v4747 = vunpack.c.0.s8 %v4746
  %v4748 = vlaneseq
  %v4749 = vshrl.u32 %v4748, 7
  %v4750 = vsub.s32 %v4747, %v4749
  %v4751 = vrot.slane %v3811, %v4750
  %v4753 = vunpack.c.l.s4 1966171168
  %v4754 = vunpack.c.0.s8 %v4753
  %v4755 = vlaneseq
  %v4756 = vshrl.u32 %v4755, 7
  %v4757 = vsub.s32 %v4754, %v4756
  %v4758 = vrot.slane %v4751, %v4757
  %v4760 = vunpack.c.l.s4 1966171168
  %v4761 = vunpack.c.0.s8 %v4760
  %v4762 = vlaneseq
  %v4763 = vshrl.u32 %v4762, 7
  %v4764 = vsub.s32 %v4761, %v4763
  %v4765 = vrot.slane %v3812, %v4764
  %v4767 = vunpack.c.l.s4 1966171168
  %v4768 = vunpack.c.0.s8 %v4767
  %v4769 = vlaneseq
  %v4770 = vshrl.u32 %v4769, 7
  %v4771 = vsub.s32 %v4768, %v4770
  %v4772 = vrot.slane %v4765, %v4771
  %v4774 = vunpack.c.l.s4 1966171168
  %v4775 = vunpack.c.0.s8 %v4774
  %v4776 = vlaneseq
  %v4777 = vshrl.u32 %v4776, 7
  %v4778 = vsub.s32 %v4775, %v4777
  %v4779 = vrot.slane %v3827, %v4778
  %v4781 = vunpack.c.l.s4 1966171168
  %v4782 = vunpack.c.0.s8 %v4781
  %v4783 = vlaneseq
  %v4784 = vshrl.u32 %v4783, 7
  %v4785 = vsub.s32 %v4782, %v4784
  %v4786 = vrot.slane %v4779, %v4785
  %v4788 = vunpack.c.l.s4 1966171168
  %v4789 = vunpack.c.0.s8 %v4788
  %v4790 = vlaneseq
  %v4791 = vshrl.u32 %v4790, 7
  %v4792 = vsub.s32 %v4789, %v4791
  %v4793 = vrot.slane %v3834, %v4792
  %v4795 = vunpack.c.l.s4 1966171168
  %v4796 = vunpack.c.0.s8 %v4795
  %v4797 = vlaneseq
  %v4798 = vshrl.u32 %v4797, 7
  %v4799 = vsub.s32 %v4796, %v4798
  %v4800 = vrot.slane %v4793, %v4799
  %v4802 = vunpack.c.l.s4 1966171168
  %v4803 = vunpack.c.0.s8 %v4802
  %v4804 = vlaneseq
  %v4805 = vshrl.u32 %v4804, 7
  %v4806 = vsub.s32 %v4803, %v4805
  %v4807 = vrot.slane %v3835, %v4806
  %v4809 = vunpack.c.l.s4 1966171168
  %v4810 = vunpack.c.0.s8 %v4809
  %v4811 = vlaneseq
  %v4812 = vshrl.u32 %v4811, 7
  %v4813 = vsub.s32 %v4810, %v4812
  %v4814 = vrot.slane %v4807, %v4813
  %v4816 = vunpack.c.l.s4 1966171168
  %v4817 = vunpack.c.0.s8 %v4816
  %v4818 = vlaneseq
  %v4819 = vshrl.u32 %v4818, 7
  %v4820 = vsub.s32 %v4817, %v4819
  %v4821 = vrot.slane %v3836, %v4820
  %v4823 = vunpack.c.l.s4 1966171168
  %v4824 = vunpack.c.0.s8 %v4823
  %v4825 = vlaneseq
  %v4826 = vshrl.u32 %v4825, 7
  %v4827 = vsub.s32 %v4824, %v4826
  %v4828 = vrot.slane %v4821, %v4827
  %v4830 = vunpack.c.l.s4 1966171168
  %v4831 = vunpack.c.0.s8 %v4830
  %v4832 = vlaneseq
  %v4833 = vshrl.u32 %v4832, 7
  %v4834 = vsub.s32 %v4831, %v4833
  %v4835 = vrot.slane %v3851, %v4834
  %v4837 = vunpack.c.l.s4 1966171168
  %v4838 = vunpack.c.0.s8 %v4837
  %v4839 = vlaneseq
  %v4840 = vshrl.u32 %v4839, 7
  %v4841 = vsub.s32 %v4838, %v4840
  %v4842 = vrot.slane %v4835, %v4841
  %v4844 = vunpack.c.l.s4 1966171168
  %v4845 = vunpack.c.0.s8 %v4844
  %v4846 = vlaneseq
  %v4847 = vshrl.u32 %v4846, 7
  %v4848 = vsub.s32 %v4845, %v4847
  %v4849 = vrot.slane %v3858, %v4848
  %v4851 = vunpack.c.l.s4 1966171168
  %v4852 = vunpack.c.0.s8 %v4851
  %v4853 = vlaneseq
  %v4854 = vshrl.u32 %v4853, 7
  %v4855 = vsub.s32 %v4852, %v4854
  %v4856 = vrot.slane %v4849, %v4855
  %v4858 = vunpack.c.l.s4 1966171168
  %v4859 = vunpack.c.0.s8 %v4858
  %v4860 = vlaneseq
  %v4861 = vshrl.u32 %v4860, 7
  %v4862 = vsub.s32 %v4859, %v4861
  %v4863 = vrot.slane %v3859, %v4862
  %v4865 = vunpack.c.l.s4 1966171168
  %v4866 = vunpack.c.0.s8 %v4865
  %v4867 = vlaneseq
  %v4868 = vshrl.u32 %v4867, 7
  %v4869 = vsub.s32 %v4866, %v4868
  %v4870 = vrot.slane %v4863, %v4869
  %v4872 = vunpack.c.l.s4 1966171168
  %v4873 = vunpack.c.0.s8 %v4872
  %v4874 = vlaneseq
  %v4875 = vshrl.u32 %v4874, 7
  %v4876 = vsub.s32 %v4873, %v4875
  %v4877 = vrot.slane %v3860, %v4876
  %v4879 = vunpack.c.l.s4 1966171168
  %v4880 = vunpack.c.0.s8 %v4879
  %v4881 = vlaneseq
  %v4882 = vshrl.u32 %v4881, 7
  %v4883 = vsub.s32 %v4880, %v4882
  %v4884 = vrot.slane %v4877, %v4883
  %v4886 = vunpack.c.l.s4 1966171168
  %v4887 = vunpack.c.0.s8 %v4886
  %v4888 = vlaneseq
  %v4889 = vshrl.u32 %v4888, 7
  %v4890 = vsub.s32 %v4887, %v4889
  %v4891 = vrot.slane %v3875, %v4890
  %v4893 = vunpack.c.l.s4 1966171168
  %v4894 = vunpack.c.0.s8 %v4893
  %v4895 = vlaneseq
  %v4896 = vshrl.u32 %v4895, 7
  %v4897 = vsub.s32 %v4894, %v4896
  %v4898 = vrot.slane %v4891, %v4897
  %v4900 = vunpack.c.l.s4 1966171168
  %v4901 = vunpack.c.0.s8 %v4900
  %v4902 = vlaneseq
  %v4903 = vshrl.u32 %v4902, 7
  %v4904 = vsub.s32 %v4901, %v4903
  %v4905 = vrot.slane %v3882, %v4904
  %v4907 = vunpack.c.l.s4 1966171168
  %v4908 = vunpack.c.0.s8 %v4907
  %v4909 = vlaneseq
  %v4910 = vshrl.u32 %v4909, 7
  %v4911 = vsub.s32 %v4908, %v4910
  %v4912 = vrot.slane %v4905, %v4911
  %v4914 = vunpack.c.l.s4 1966171168
  %v4915 = vunpack.c.0.s8 %v4914
  %v4916 = vlaneseq
  %v4917 = vshrl.u32 %v4916, 7
  %v4918 = vsub.s32 %v4915, %v4917
  %v4919 = vrot.slane %v3883, %v4918
  %v4921 = vunpack.c.l.s4 1966171168
  %v4922 = vunpack.c.0.s8 %v4921
  %v4923 = vlaneseq
  %v4924 = vshrl.u32 %v4923, 7
  %v4925 = vsub.s32 %v4922, %v4924
  %v4926 = vrot.slane %v4919, %v4925
  %v4928 = vunpack.c.l.s4 1966171168
  %v4929 = vunpack.c.0.s8 %v4928
  %v4930 = vlaneseq
  %v4931 = vshrl.u32 %v4930, 7
  %v4932 = vsub.s32 %v4929, %v4931
  %v4933 = vrot.slane %v3884, %v4932
  %v4935 = vunpack.c.l.s4 1966171168
  %v4936 = vunpack.c.0.s8 %v4935
  %v4937 = vlaneseq
  %v4938 = vshrl.u32 %v4937, 7
  %v4939 = vsub.s32 %v4936, %v4938
  %v4940 = vrot.slane %v4933, %v4939
  %v4942 = vunpack.c.l.s4 1966171168
  %v4943 = vunpack.c.0.s8 %v4942
  %v4944 = vlaneseq
  %v4945 = vshrl.u32 %v4944, 7
  %v4946 = vsub.s32 %v4943, %v4945
  %v4947 = vrot.slane %v3899, %v4946
  %v4949 = vunpack.c.l.s4 1966171168
  %v4950 = vunpack.c.0.s8 %v4949
  %v4951 = vlaneseq
  %v4952 = vshrl.u32 %v4951, 7
  %v4953 = vsub.s32 %v4950, %v4952
  %v4954 = vrot.slane %v4947, %v4953
  %v4956 = vunpack.c.l.s4 1966171168
  %v4957 = vunpack.c.0.s8 %v4956
  %v4958 = vlaneseq
  %v4959 = vshrl.u32 %v4958, 7
  %v4960 = vsub.s32 %v4957, %v4959
  %v4961 = vrot.slane %v3906, %v4960
  %v4963 = vunpack.c.l.s4 1966171168
  %v4964 = vunpack.c.0.s8 %v4963
  %v4965 = vlaneseq
  %v4966 = vshrl.u32 %v4965, 7
  %v4967 = vsub.s32 %v4964, %v4966
  %v4968 = vrot.slane %v4961, %v4967
  %v4970 = vunpack.c.l.s4 1966171168
  %v4971 = vunpack.c.0.s8 %v4970
  %v4972 = vlaneseq
  %v4973 = vshrl.u32 %v4972, 7
  %v4974 = vsub.s32 %v4971, %v4973
  %v4975 = vrot.slane %v3907, %v4974
  %v4977 = vunpack.c.l.s4 1966171168
  %v4978 = vunpack.c.0.s8 %v4977
  %v4979 = vlaneseq
  %v4980 = vshrl.u32 %v4979, 7
  %v4981 = vsub.s32 %v4978, %v4980
  %v4982 = vrot.slane %v4975, %v4981
  %v4984 = vunpack.c.l.s4 1966171168
  %v4985 = vunpack.c.0.s8 %v4984
  %v4986 = vlaneseq
  %v4987 = vshrl.u32 %v4986, 7
  %v4988 = vsub.s32 %v4985, %v4987
  %v4989 = vrot.slane %v3908, %v4988
  %v4991 = vunpack.c.l.s4 1966171168
  %v4992 = vunpack.c.0.s8 %v4991
  %v4993 = vlaneseq
  %v4994 = vshrl.u32 %v4993, 7
  %v4995 = vsub.s32 %v4992, %v4994
  %v4996 = vrot.slane %v4989, %v4995
  %v4998 = vunpack.c.l.s4 1966171168
  %v4999 = vunpack.c.0.s8 %v4998
  %v5000 = vlaneseq
  %v5001 = vshrl.u32 %v5000, 7
  %v5002 = vsub.s32 %v4999, %v5001
  %v5003 = vrot.slane %v3923, %v5002
  %v5005 = vunpack.c.l.s4 1966171168
  %v5006 = vunpack.c.0.s8 %v5005
  %v5007 = vlaneseq
  %v5008 = vshrl.u32 %v5007, 7
  %v5009 = vsub.s32 %v5006, %v5008
  %v5010 = vrot.slane %v5003, %v5009
  %v5012 = vunpack.c.l.s4 1966171168
  %v5013 = vunpack.c.0.s8 %v5012
  %v5014 = vlaneseq
  %v5015 = vshrl.u32 %v5014, 7
  %v5016 = vsub.s32 %v5013, %v5015
  %v5017 = vrot.slane %v3930, %v5016
  %v5019 = vunpack.c.l.s4 1966171168
  %v5020 = vunpack.c.0.s8 %v5019
  %v5021 = vlaneseq
  %v5022 = vshrl.u32 %v5021, 7
  %v5023 = vsub.s32 %v5020, %v5022
  %v5024 = vrot.slane %v5017, %v5023
  %v5026 = vunpack.c.l.s4 1966171168
  %v5027 = vunpack.c.0.s8 %v5026
  %v5028 = vlaneseq
  %v5029 = vshrl.u32 %v5028, 7
  %v5030 = vsub.s32 %v5027, %v5029
  %v5031 = vrot.slane %v3931, %v5030
  %v5033 = vunpack.c.l.s4 1966171168
  %v5034 = vunpack.c.0.s8 %v5033
  %v5035 = vlaneseq
  %v5036 = vshrl.u32 %v5035, 7
  %v5037 = vsub.s32 %v5034, %v5036
  %v5038 = vrot.slane %v5031, %v5037
  %v5040 = vunpack.c.l.s4 1966171168
  %v5041 = vunpack.c.0.s8 %v5040
  %v5042 = vlaneseq
  %v5043 = vshrl.u32 %v5042, 7
  %v5044 = vsub.s32 %v5041, %v5043
  %v5045 = vrot.slane %v3932, %v5044
  %v5047 = vunpack.c.l.s4 1966171168
  %v5048 = vunpack.c.0.s8 %v5047
  %v5049 = vlaneseq
  %v5050 = vshrl.u32 %v5049, 7
  %v5051 = vsub.s32 %v5048, %v5050
  %v5052 = vrot.slane %v5045, %v5051
  %v5054 = vunpack.c.l.s4 1966171168
  %v5055 = vunpack.c.0.s8 %v5054
  %v5056 = vlaneseq
  %v5057 = vshrl.u32 %v5056, 7
  %v5058 = vsub.s32 %v5055, %v5057
  %v5059 = vrot.slane %v3947, %v5058
  %v5061 = vunpack.c.l.s4 1966171168
  %v5062 = vunpack.c.0.s8 %v5061
  %v5063 = vlaneseq
  %v5064 = vshrl.u32 %v5063, 7
  %v5065 = vsub.s32 %v5062, %v5064
  %v5066 = vrot.slane %v5059, %v5065
  %v5068 = vunpack.c.l.s4 1966171168
  %v5069 = vunpack.c.0.s8 %v5068
  %v5070 = vlaneseq
  %v5071 = vshrl.u32 %v5070, 7
  %v5072 = vsub.s32 %v5069, %v5071
  %v5073 = vrot.slane %v3954, %v5072
  %v5075 = vunpack.c.l.s4 1966171168
  %v5076 = vunpack.c.0.s8 %v5075
  %v5077 = vlaneseq
  %v5078 = vshrl.u32 %v5077, 7
  %v5079 = vsub.s32 %v5076, %v5078
  %v5080 = vrot.slane %v5073, %v5079
  %v5082 = vunpack.c.l.s4 1966171168
  %v5083 = vunpack.c.0.s8 %v5082
  %v5084 = vlaneseq
  %v5085 = vshrl.u32 %v5084, 7
  %v5086 = vsub.s32 %v5083, %v5085
  %v5087 = vrot.slane %v3955, %v5086
  %v5089 = vunpack.c.l.s4 1966171168
  %v5090 = vunpack.c.0.s8 %v5089
  %v5091 = vlaneseq
  %v5092 = vshrl.u32 %v5091, 7
  %v5093 = vsub.s32 %v5090, %v5092
  %v5094 = vrot.slane %v5087, %v5093
  %v5096 = vunpack.c.l.s4 1966171168
  %v5097 = vunpack.c.0.s8 %v5096
  %v5098 = vlaneseq
  %v5099 = vshrl.u32 %v5098, 7
  %v5100 = vsub.s32 %v5097, %v5099
  %v5101 = vrot.slane %v3956, %v5100
  %v5103 = vunpack.c.l.s4 1966171168
  %v5104 = vunpack.c.0.s8 %v5103
  %v5105 = vlaneseq
  %v5106 = vshrl.u32 %v5105, 7
  %v5107 = vsub.s32 %v5104, %v5106
  %v5108 = vrot.slane %v5101, %v5107
  %v5110 = vunpack.c.l.s4 1966171168
  %v5111 = vunpack.c.0.s8 %v5110
  %v5112 = vlaneseq
  %v5113 = vshrl.u32 %v5112, 7
  %v5114 = vsub.s32 %v5111, %v5113
  %v5115 = vrot.slane %v3971, %v5114
  %v5117 = vunpack.c.l.s4 1966171168
  %v5118 = vunpack.c.0.s8 %v5117
  %v5119 = vlaneseq
  %v5120 = vshrl.u32 %v5119, 7
  %v5121 = vsub.s32 %v5118, %v5120
  %v5122 = vrot.slane %v5115, %v5121
  %v5124 = vunpack.c.l.s4 1966171168
  %v5125 = vunpack.c.0.s8 %v5124
  %v5126 = vlaneseq
  %v5127 = vshrl.u32 %v5126, 7
  %v5128 = vsub.s32 %v5125, %v5127
  %v5129 = vrot.slane %v3978, %v5128
  %v5131 = vunpack.c.l.s4 1966171168
  %v5132 = vunpack.c.0.s8 %v5131
  %v5133 = vlaneseq
  %v5134 = vshrl.u32 %v5133, 7
  %v5135 = vsub.s32 %v5132, %v5134
  %v5136 = vrot.slane %v5129, %v5135
  %v5138 = vunpack.c.l.s4 1966171168
  %v5139 = vunpack.c.0.s8 %v5138
  %v5140 = vlaneseq
  %v5141 = vshrl.u32 %v5140, 7
  %v5142 = vsub.s32 %v5139, %v5141
  %v5143 = vrot.slane %v3979, %v5142
  %v5145 = vunpack.c.l.s4 1966171168
  %v5146 = vunpack.c.0.s8 %v5145
  %v5147 = vlaneseq
  %v5148 = vshrl.u32 %v5147, 7
  %v5149 = vsub.s32 %v5146, %v5148
  %v5150 = vrot.slane %v5143, %v5149
  %v5152 = vunpack.c.l.s4 1966171168
  %v5153 = vunpack.c.0.s8 %v5152
  %v5154 = vlaneseq
  %v5155 = vshrl.u32 %v5154, 7
  %v5156 = vsub.s32 %v5153, %v5155
  %v5157 = vrot.slane %v3980, %v5156
  %v5159 = vunpack.c.l.s4 1966171168
  %v5160 = vunpack.c.0.s8 %v5159
  %v5161 = vlaneseq
  %v5162 = vshrl.u32 %v5161, 7
  %v5163 = vsub.s32 %v5160, %v5162
  %v5164 = vrot.slane %v5157, %v5163
  %v5166 = vunpack.c.l.s4 1966171168
  %v5167 = vunpack.c.0.s8 %v5166
  %v5168 = vlaneseq
  %v5169 = vshrl.u32 %v5168, 7
  %v5170 = vsub.s32 %v5167, %v5169
  %v5171 = vrot.slane %v3995, %v5170
  %v5173 = vunpack.c.l.s4 1966171168
  %v5174 = vunpack.c.0.s8 %v5173
  %v5175 = vlaneseq
  %v5176 = vshrl.u32 %v5175, 7
  %v5177 = vsub.s32 %v5174, %v5176
  %v5178 = vrot.slane %v5171, %v5177
  %v5180 = vunpack.c.l.s4 1966171168
  %v5181 = vunpack.c.0.s8 %v5180
  %v5182 = vlaneseq
  %v5183 = vshrl.u32 %v5182, 7
  %v5184 = vsub.s32 %v5181, %v5183
  %v5185 = vrot.slane %v4002, %v5184
  %v5187 = vunpack.c.l.s4 1966171168
  %v5188 = vunpack.c.0.s8 %v5187
  %v5189 = vlaneseq
  %v5190 = vshrl.u32 %v5189, 7
  %v5191 = vsub.s32 %v5188, %v5190
  %v5192 = vrot.slane %v5185, %v5191
  %v5194 = vunpack.c.l.s4 1966171168
  %v5195 = vunpack.c.0.s8 %v5194
  %v5196 = vlaneseq
  %v5197 = vshrl.u32 %v5196, 7
  %v5198 = vsub.s32 %v5195, %v5197
  %v5199 = vrot.slane %v4003, %v5198
  %v5201 = vunpack.c.l.s4 1966171168
  %v5202 = vunpack.c.0.s8 %v5201
  %v5203 = vlaneseq
  %v5204 = vshrl.u32 %v5203, 7
  %v5205 = vsub.s32 %v5202, %v5204
  %v5206 = vrot.slane %v5199, %v5205
  %v5208 = vunpack.c.l.s4 1966171168
  %v5209 = vunpack.c.0.s8 %v5208
  %v5210 = vlaneseq
  %v5211 = vshrl.u32 %v5210, 7
  %v5212 = vsub.s32 %v5209, %v5211
  %v5213 = vrot.slane %v4004, %v5212
  %v5215 = vunpack.c.l.s4 1966171168
  %v5216 = vunpack.c.0.s8 %v5215
  %v5217 = vlaneseq
  %v5218 = vshrl.u32 %v5217, 7
  %v5219 = vsub.s32 %v5216, %v5218
  %v5220 = vrot.slane %v5213, %v5219
  %v5222 = vunpack.c.l.s4 1966171168
  %v5223 = vunpack.c.0.s8 %v5222
  %v5224 = vlaneseq
  %v5225 = vshrl.u32 %v5224, 7
  %v5226 = vsub.s32 %v5223, %v5225
  %v5227 = vrot.slane %v4019, %v5226
  %v5229 = vunpack.c.l.s4 1966171168
  %v5230 = vunpack.c.0.s8 %v5229
  %v5231 = vlaneseq
  %v5232 = vshrl.u32 %v5231, 7
  %v5233 = vsub.s32 %v5230, %v5232
  %v5234 = vrot.slane %v5227, %v5233
  %v5236 = vunpack.c.l.s4 1966171168
  %v5237 = vunpack.c.0.s8 %v5236
  %v5238 = vlaneseq
  %v5239 = vshrl.u32 %v5238, 7
  %v5240 = vsub.s32 %v5237, %v5239
  %v5241 = vrot.slane %v4026, %v5240
  %v5243 = vunpack.c.l.s4 1966171168
  %v5244 = vunpack.c.0.s8 %v5243
  %v5245 = vlaneseq
  %v5246 = vshrl.u32 %v5245, 7
  %v5247 = vsub.s32 %v5244, %v5246
  %v5248 = vrot.slane %v5241, %v5247
  %v5250 = vunpack.c.l.s4 1966171168
  %v5251 = vunpack.c.0.s8 %v5250
  %v5252 = vlaneseq
  %v5253 = vshrl.u32 %v5252, 7
  %v5254 = vsub.s32 %v5251, %v5253
  %v5255 = vrot.slane %v4027, %v5254
  %v5257 = vunpack.c.l.s4 1966171168
  %v5258 = vunpack.c.0.s8 %v5257
  %v5259 = vlaneseq
  %v5260 = vshrl.u32 %v5259, 7
  %v5261 = vsub.s32 %v5258, %v5260
  %v5262 = vrot.slane %v5255, %v5261
  %v5264 = vunpack.c.l.s4 1966171168
  %v5265 = vunpack.c.0.s8 %v5264
  %v5266 = vlaneseq
  %v5267 = vshrl.u32 %v5266, 7
  %v5268 = vsub.s32 %v5265, %v5267
  %v5269 = vrot.slane %v4028, %v5268
  %v5271 = vunpack.c.l.s4 1966171168
  %v5272 = vunpack.c.0.s8 %v5271
  %v5273 = vlaneseq
  %v5274 = vshrl.u32 %v5273, 7
  %v5275 = vsub.s32 %v5272, %v5274
  %v5276 = vrot.slane %v5269, %v5275
  %v5278 = vunpack.c.l.s4 1966171168
  %v5279 = vunpack.c.0.s8 %v5278
  %v5280 = vlaneseq
  %v5281 = vshrl.u32 %v5280, 7
  %v5282 = vsub.s32 %v5279, %v5281
  %v5283 = vrot.slane %v4043, %v5282
  %v5285 = vunpack.c.l.s4 1966171168
  %v5286 = vunpack.c.0.s8 %v5285
  %v5287 = vlaneseq
  %v5288 = vshrl.u32 %v5287, 7
  %v5289 = vsub.s32 %v5286, %v5288
  %v5290 = vrot.slane %v5283, %v5289
  %v5292 = vunpack.c.l.s4 1966171168
  %v5293 = vunpack.c.0.s8 %v5292
  %v5294 = vlaneseq
  %v5295 = vshrl.u32 %v5294, 7
  %v5296 = vsub.s32 %v5293, %v5295
  %v5297 = vrot.slane %v4050, %v5296
  %v5299 = vunpack.c.l.s4 1966171168
  %v5300 = vunpack.c.0.s8 %v5299
  %v5301 = vlaneseq
  %v5302 = vshrl.u32 %v5301, 7
  %v5303 = vsub.s32 %v5300, %v5302
  %v5304 = vrot.slane %v5297, %v5303
  %v5306 = vunpack.c.l.s4 1966171168
  %v5307 = vunpack.c.0.s8 %v5306
  %v5308 = vlaneseq
  %v5309 = vshrl.u32 %v5308, 7
  %v5310 = vsub.s32 %v5307, %v5309
  %v5311 = vrot.slane %v4051, %v5310
  %v5313 = vunpack.c.l.s4 1966171168
  %v5314 = vunpack.c.0.s8 %v5313
  %v5315 = vlaneseq
  %v5316 = vshrl.u32 %v5315, 7
  %v5317 = vsub.s32 %v5314, %v5316
  %v5318 = vrot.slane %v5311, %v5317
  %v5320 = vunpack.c.l.s4 1966171168
  %v5321 = vunpack.c.0.s8 %v5320
  %v5322 = vlaneseq
  %v5323 = vshrl.u32 %v5322, 7
  %v5324 = vsub.s32 %v5321, %v5323
  %v5325 = vrot.slane %v4052, %v5324
  %v5327 = vunpack.c.l.s4 1966171168
  %v5328 = vunpack.c.0.s8 %v5327
  %v5329 = vlaneseq
  %v5330 = vshrl.u32 %v5329, 7
  %v5331 = vsub.s32 %v5328, %v5330
  %v5332 = vrot.slane %v5325, %v5331
  %v5334 = vunpack.c.l.s4 1966171168
  %v5335 = vunpack.c.0.s8 %v5334
  %v5336 = vlaneseq
  %v5337 = vshrl.u32 %v5336, 7
  %v5338 = vsub.s32 %v5335, %v5337
  %v5339 = vrot.slane %v4067, %v5338
  %v5341 = vunpack.c.l.s4 1966171168
  %v5342 = vunpack.c.0.s8 %v5341
  %v5343 = vlaneseq
  %v5344 = vshrl.u32 %v5343, 7
  %v5345 = vsub.s32 %v5342, %v5344
  %v5346 = vrot.slane %v5339, %v5345
  %v5348 = vunpack.c.l.s4 1966171168
  %v5349 = vunpack.c.0.s8 %v5348
  %v5350 = vlaneseq
  %v5351 = vshrl.u32 %v5350, 7
  %v5352 = vsub.s32 %v5349, %v5351
  %v5353 = vrot.slane %v4074, %v5352
  %v5355 = vunpack.c.l.s4 1966171168
  %v5356 = vunpack.c.0.s8 %v5355
  %v5357 = vlaneseq
  %v5358 = vshrl.u32 %v5357, 7
  %v5359 = vsub.s32 %v5356, %v5358
  %v5360 = vrot.slane %v5353, %v5359
  %v5362 = vunpack.c.l.s4 1966171168
  %v5363 = vunpack.c.0.s8 %v5362
  %v5364 = vlaneseq
  %v5365 = vshrl.u32 %v5364, 7
  %v5366 = vsub.s32 %v5363, %v5365
  %v5367 = vrot.slane %v4075, %v5366
  %v5369 = vunpack.c.l.s4 1966171168
  %v5370 = vunpack.c.0.s8 %v5369
  %v5371 = vlaneseq
  %v5372 = vshrl.u32 %v5371, 7
  %v5373 = vsub.s32 %v5370, %v5372
  %v5374 = vrot.slane %v5367, %v5373
  %v5376 = vunpack.c.l.s4 1966171168
  %v5377 = vunpack.c.0.s8 %v5376
  %v5378 = vlaneseq
  %v5379 = vshrl.u32 %v5378, 7
  %v5380 = vsub.s32 %v5377, %v5379
  %v5381 = vrot.slane %v4076, %v5380
  %v5383 = vunpack.c.l.s4 1966171168
  %v5384 = vunpack.c.0.s8 %v5383
  %v5385 = vlaneseq
  %v5386 = vshrl.u32 %v5385, 7
  %v5387 = vsub.s32 %v5384, %v5386
  %v5388 = vrot.slane %v5381, %v5387
  %v5390 = vunpack.c.l.s4 1966171168
  %v5391 = vunpack.c.0.s8 %v5390
  %v5392 = vlaneseq
  %v5393 = vshrl.u32 %v5392, 7
  %v5394 = vsub.s32 %v5391, %v5393
  %v5395 = vrot.slane %v4091, %v5394
  %v5397 = vunpack.c.l.s4 1966171168
  %v5398 = vunpack.c.0.s8 %v5397
  %v5399 = vlaneseq
  %v5400 = vshrl.u32 %v5399, 7
  %v5401 = vsub.s32 %v5398, %v5400
  %v5402 = vrot.slane %v5395, %v5401
  %v5404 = vunpack.c.l.s4 1966171168
  %v5405 = vunpack.c.0.s8 %v5404
  %v5406 = vlaneseq
  %v5407 = vshrl.u32 %v5406, 7
  %v5408 = vsub.s32 %v5405, %v5407
  %v5409 = vrot.slane %v4098, %v5408
  %v5411 = vunpack.c.l.s4 1966171168
  %v5412 = vunpack.c.0.s8 %v5411
  %v5413 = vlaneseq
  %v5414 = vshrl.u32 %v5413, 7
  %v5415 = vsub.s32 %v5412, %v5414
  %v5416 = vrot.slane %v5409, %v5415
  %v5418 = vunpack.c.l.s4 1966171168
  %v5419 = vunpack.c.0.s8 %v5418
  %v5420 = vlaneseq
  %v5421 = vshrl.u32 %v5420, 7
  %v5422 = vsub.s32 %v5419, %v5421
  %v5423 = vrot.slane %v4099, %v5422
  %v5425 = vunpack.c.l.s4 1966171168
  %v5426 = vunpack.c.0.s8 %v5425
  %v5427 = vlaneseq
  %v5428 = vshrl.u32 %v5427, 7
  %v5429 = vsub.s32 %v5426, %v5428
  %v5430 = vrot.slane %v5423, %v5429
  %v5432 = vunpack.c.l.s4 1966171168
  %v5433 = vunpack.c.0.s8 %v5432
  %v5434 = vlaneseq
  %v5435 = vshrl.u32 %v5434, 7
  %v5436 = vsub.s32 %v5433, %v5435
  %v5437 = vrot.slane %v4100, %v5436
  %v5439 = vunpack.c.l.s4 1966171168
  %v5440 = vunpack.c.0.s8 %v5439
  %v5441 = vlaneseq
  %v5442 = vshrl.u32 %v5441, 7
  %v5443 = vsub.s32 %v5440, %v5442
  %v5444 = vrot.slane %v5437, %v5443
  %v5446 = vunpack.c.l.s4 1966171168
  %v5447 = vunpack.c.0.s8 %v5446
  %v5448 = vlaneseq
  %v5449 = vshrl.u32 %v5448, 7
  %v5450 = vsub.s32 %v5447, %v5449
  %v5451 = vrot.slane %v4115, %v5450
  %v5453 = vunpack.c.l.s4 1966171168
  %v5454 = vunpack.c.0.s8 %v5453
  %v5455 = vlaneseq
  %v5456 = vshrl.u32 %v5455, 7
  %v5457 = vsub.s32 %v5454, %v5456
  %v5458 = vrot.slane %v5451, %v5457
  %v5460 = vunpack.c.l.s4 1966171168
  %v5461 = vunpack.c.0.s8 %v5460
  %v5462 = vlaneseq
  %v5463 = vshrl.u32 %v5462, 7
  %v5464 = vsub.s32 %v5461, %v5463
  %v5465 = vrot.slane %v4122, %v5464
  %v5467 = vunpack.c.l.s4 1966171168
  %v5468 = vunpack.c.0.s8 %v5467
  %v5469 = vlaneseq
  %v5470 = vshrl.u32 %v5469, 7
  %v5471 = vsub.s32 %v5468, %v5470
  %v5472 = vrot.slane %v5465, %v5471
  %v5474 = vunpack.c.l.s4 1966171168
  %v5475 = vunpack.c.0.s8 %v5474
  %v5476 = vlaneseq
  %v5477 = vshrl.u32 %v5476, 7
  %v5478 = vsub.s32 %v5475, %v5477
  %v5479 = vrot.slane %v4123, %v5478
  %v5481 = vunpack.c.l.s4 1966171168
  %v5482 = vunpack.c.0.s8 %v5481
  %v5483 = vlaneseq
  %v5484 = vshrl.u32 %v5483, 7
  %v5485 = vsub.s32 %v5482, %v5484
  %v5486 = vrot.slane %v5479, %v5485
  %v5488 = vunpack.c.l.s4 1966171168
  %v5489 = vunpack.c.0.s8 %v5488
  %v5490 = vlaneseq
  %v5491 = vshrl.u32 %v5490, 7
  %v5492 = vsub.s32 %v5489, %v5491
  %v5493 = vrot.slane %v4124, %v5492
  %v5495 = vunpack.c.l.s4 1966171168
  %v5496 = vunpack.c.0.s8 %v5495
  %v5497 = vlaneseq
  %v5498 = vshrl.u32 %v5497, 7
  %v5499 = vsub.s32 %v5496, %v5498
  %v5500 = vrot.slane %v5493, %v5499
  %v5502 = vunpack.c.l.s4 1966171168
  %v5503 = vunpack.c.0.s8 %v5502
  %v5504 = vlaneseq
  %v5505 = vshrl.u32 %v5504, 7
  %v5506 = vsub.s32 %v5503, %v5505
  %v5507 = vrot.slane %v4139, %v5506
  %v5509 = vunpack.c.l.s4 1966171168
  %v5510 = vunpack.c.0.s8 %v5509
  %v5511 = vlaneseq
  %v5512 = vshrl.u32 %v5511, 7
  %v5513 = vsub.s32 %v5510, %v5512
  %v5514 = vrot.slane %v5507, %v5513
  %v5516 = vunpack.c.l.s4 1966171168
  %v5517 = vunpack.c.0.s8 %v5516
  %v5518 = vlaneseq
  %v5519 = vshrl.u32 %v5518, 7
  %v5520 = vsub.s32 %v5517, %v5519
  %v5521 = vrot.slane %v4146, %v5520
  %v5523 = vunpack.c.l.s4 1966171168
  %v5524 = vunpack.c.0.s8 %v5523
  %v5525 = vlaneseq
  %v5526 = vshrl.u32 %v5525, 7
  %v5527 = vsub.s32 %v5524, %v5526
  %v5528 = vrot.slane %v5521, %v5527
  %v5530 = vunpack.c.l.s4 1966171168
  %v5531 = vunpack.c.0.s8 %v5530
  %v5532 = vlaneseq
  %v5533 = vshrl.u32 %v5532, 7
  %v5534 = vsub.s32 %v5531, %v5533
  %v5535 = vrot.slane %v4147, %v5534
  %v5537 = vunpack.c.l.s4 1966171168
  %v5538 = vunpack.c.0.s8 %v5537
  %v5539 = vlaneseq
  %v5540 = vshrl.u32 %v5539, 7
  %v5541 = vsub.s32 %v5538, %v5540
  %v5542 = vrot.slane %v5535, %v5541
  %v5544 = vunpack.c.l.s4 1966171168
  %v5545 = vunpack.c.0.s8 %v5544
  %v5546 = vlaneseq
  %v5547 = vshrl.u32 %v5546, 7
  %v5548 = vsub.s32 %v5545, %v5547
  %v5549 = vrot.slane %v4148, %v5548
  %v5551 = vunpack.c.l.s4 1966171168
  %v5552 = vunpack.c.0.s8 %v5551
  %v5553 = vlaneseq
  %v5554 = vshrl.u32 %v5553, 7
  %v5555 = vsub.s32 %v5552, %v5554
  %v5556 = vrot.slane %v5549, %v5555
  %v5558 = vunpack.c.l.s4 1966171168
  %v5559 = vunpack.c.0.s8 %v5558
  %v5560 = vlaneseq
  %v5561 = vshrl.u32 %v5560, 7
  %v5562 = vsub.s32 %v5559, %v5561
  %v5563 = vrot.slane %v4163, %v5562
  %v5565 = vunpack.c.l.s4 1966171168
  %v5566 = vunpack.c.0.s8 %v5565
  %v5567 = vlaneseq
  %v5568 = vshrl.u32 %v5567, 7
  %v5569 = vsub.s32 %v5566, %v5568
  %v5570 = vrot.slane %v5563, %v5569
  %v5572 = vunpack.c.l.s4 1966171168
  %v5573 = vunpack.c.0.s8 %v5572
  %v5574 = vlaneseq
  %v5575 = vshrl.u32 %v5574, 7
  %v5576 = vsub.s32 %v5573, %v5575
  %v5577 = vrot.slane %v4170, %v5576
  %v5579 = vunpack.c.l.s4 1966171168
  %v5580 = vunpack.c.0.s8 %v5579
  %v5581 = vlaneseq
  %v5582 = vshrl.u32 %v5581, 7
  %v5583 = vsub.s32 %v5580, %v5582
  %v5584 = vrot.slane %v5577, %v5583
  %v5586 = vunpack.c.l.s4 1966171168
  %v5587 = vunpack.c.0.s8 %v5586
  %v5588 = vlaneseq
  %v5589 = vshrl.u32 %v5588, 7
  %v5590 = vsub.s32 %v5587, %v5589
  %v5591 = vrot.slane %v4171, %v5590
  %v5593 = vunpack.c.l.s4 1966171168
  %v5594 = vunpack.c.0.s8 %v5593
  %v5595 = vlaneseq
  %v5596 = vshrl.u32 %v5595, 7
  %v5597 = vsub.s32 %v5594, %v5596
  %v5598 = vrot.slane %v5591, %v5597
  %v5600 = vunpack.c.l.s4 1966171168
  %v5601 = vunpack.c.0.s8 %v5600
  %v5602 = vlaneseq
  %v5603 = vshrl.u32 %v5602, 7
  %v5604 = vsub.s32 %v5601, %v5603
  %v5605 = vrot.slane %v4172, %v5604
  %v5607 = vunpack.c.l.s4 1966171168
  %v5608 = vunpack.c.0.s8 %v5607
  %v5609 = vlaneseq
  %v5610 = vshrl.u32 %v5609, 7
  %v5611 = vsub.s32 %v5608, %v5610
  %v5612 = vrot.slane %v5605, %v5611
  %v5614 = vunpack.c.l.s4 1966171168
  %v5615 = vunpack.c.0.s8 %v5614
  %v5616 = vlaneseq
  %v5617 = vshrl.u32 %v5616, 7
  %v5618 = vsub.s32 %v5615, %v5617
  %v5619 = vrot.slane %v4187, %v5618
  %v5621 = vunpack.c.l.s4 1966171168
  %v5622 = vunpack.c.0.s8 %v5621
  %v5623 = vlaneseq
  %v5624 = vshrl.u32 %v5623, 7
  %v5625 = vsub.s32 %v5622, %v5624
  %v5626 = vrot.slane %v5619, %v5625
  %v5628 = vunpack.c.l.s4 1966171168
  %v5629 = vunpack.c.0.s8 %v5628
  %v5630 = vlaneseq
  %v5631 = vshrl.u32 %v5630, 7
  %v5632 = vsub.s32 %v5629, %v5631
  %v5633 = vrot.slane %v4194, %v5632
  %v5635 = vunpack.c.l.s4 1966171168
  %v5636 = vunpack.c.0.s8 %v5635
  %v5637 = vlaneseq
  %v5638 = vshrl.u32 %v5637, 7
  %v5639 = vsub.s32 %v5636, %v5638
  %v5640 = vrot.slane %v5633, %v5639
  %v5642 = vunpack.c.l.s4 1966171168
  %v5643 = vunpack.c.0.s8 %v5642
  %v5644 = vlaneseq
  %v5645 = vshrl.u32 %v5644, 7
  %v5646 = vsub.s32 %v5643, %v5645
  %v5647 = vrot.slane %v4195, %v5646
  %v5649 = vunpack.c.l.s4 1966171168
  %v5650 = vunpack.c.0.s8 %v5649
  %v5651 = vlaneseq
  %v5652 = vshrl.u32 %v5651, 7
  %v5653 = vsub.s32 %v5650, %v5652
  %v5654 = vrot.slane %v5647, %v5653
  %v5656 = vunpack.c.l.s4 1966171168
  %v5657 = vunpack.c.0.s8 %v5656
  %v5658 = vlaneseq
  %v5659 = vshrl.u32 %v5658, 7
  %v5660 = vsub.s32 %v5657, %v5659
  %v5661 = vrot.slane %v4196, %v5660
  %v5663 = vunpack.c.l.s4 1966171168
  %v5664 = vunpack.c.0.s8 %v5663
  %v5665 = vlaneseq
  %v5666 = vshrl.u32 %v5665, 7
  %v5667 = vsub.s32 %v5664, %v5666
  %v5668 = vrot.slane %v5661, %v5667
  %v5670 = vunpack.c.l.s4 1966171168
  %v5671 = vunpack.c.0.s8 %v5670
  %v5672 = vlaneseq
  %v5673 = vshrl.u32 %v5672, 7
  %v5674 = vsub.s32 %v5671, %v5673
  %v5675 = vrot.slane %v4211, %v5674
  %v5677 = vunpack.c.l.s4 1966171168
  %v5678 = vunpack.c.0.s8 %v5677
  %v5679 = vlaneseq
  %v5680 = vshrl.u32 %v5679, 7
  %v5681 = vsub.s32 %v5678, %v5680
  %v5682 = vrot.slane %v5675, %v5681
  %v5684 = vunpack.c.l.s4 1966171168
  %v5685 = vunpack.c.0.s8 %v5684
  %v5686 = vlaneseq
  %v5687 = vshrl.u32 %v5686, 7
  %v5688 = vsub.s32 %v5685, %v5687
  %v5689 = vrot.slane %v4218, %v5688
  %v5691 = vunpack.c.l.s4 1966171168
  %v5692 = vunpack.c.0.s8 %v5691
  %v5693 = vlaneseq
  %v5694 = vshrl.u32 %v5693, 7
  %v5695 = vsub.s32 %v5692, %v5694
  %v5696 = vrot.slane %v5689, %v5695
  %v5698 = vunpack.c.l.s4 1966171168
  %v5699 = vunpack.c.0.s8 %v5698
  %v5700 = vlaneseq
  %v5701 = vshrl.u32 %v5700, 7
  %v5702 = vsub.s32 %v5699, %v5701
  %v5703 = vrot.slane %v4219, %v5702
  %v5705 = vunpack.c.l.s4 1966171168
  %v5706 = vunpack.c.0.s8 %v5705
  %v5707 = vlaneseq
  %v5708 = vshrl.u32 %v5707, 7
  %v5709 = vsub.s32 %v5706, %v5708
  %v5710 = vrot.slane %v5703, %v5709
  %v5712 = vunpack.c.l.s4 1966171168
  %v5713 = vunpack.c.0.s8 %v5712
  %v5714 = vlaneseq
  %v5715 = vshrl.u32 %v5714, 7
  %v5716 = vsub.s32 %v5713, %v5715
  %v5717 = vrot.slane %v4220, %v5716
  %v5719 = vunpack.c.l.s4 1966171168
  %v5720 = vunpack.c.0.s8 %v5719
  %v5721 = vlaneseq
  %v5722 = vshrl.u32 %v5721, 7
  %v5723 = vsub.s32 %v5720, %v5722
  %v5724 = vrot.slane %v5717, %v5723
  %v5726 = vunpack.c.l.s4 1966171168
  %v5727 = vunpack.c.0.s8 %v5726
  %v5728 = vlaneseq
  %v5729 = vshrl.u32 %v5728, 7
  %v5730 = vsub.s32 %v5727, %v5729
  %v5731 = vrot.slane %v4235, %v5730
  %v5733 = vunpack.c.l.s4 1966171168
  %v5734 = vunpack.c.0.s8 %v5733
  %v5735 = vlaneseq
  %v5736 = vshrl.u32 %v5735, 7
  %v5737 = vsub.s32 %v5734, %v5736
  %v5738 = vrot.slane %v5731, %v5737
  %v5740 = vunpack.c.l.s4 1966171168
  %v5741 = vunpack.c.0.s8 %v5740
  %v5742 = vlaneseq
  %v5743 = vshrl.u32 %v5742, 7
  %v5744 = vsub.s32 %v5741, %v5743
  %v5745 = vrot.slane %v4242, %v5744
  %v5747 = vunpack.c.l.s4 1966171168
  %v5748 = vunpack.c.0.s8 %v5747
  %v5749 = vlaneseq
  %v5750 = vshrl.u32 %v5749, 7
  %v5751 = vsub.s32 %v5748, %v5750
  %v5752 = vrot.slane %v5745, %v5751
  %v5754 = vunpack.c.l.s4 1966171168
  %v5755 = vunpack.c.0.s8 %v5754
  %v5756 = vlaneseq
  %v5757 = vshrl.u32 %v5756, 7
  %v5758 = vsub.s32 %v5755, %v5757
  %v5759 = vrot.slane %v4243, %v5758
  %v5761 = vunpack.c.l.s4 1966171168
  %v5762 = vunpack.c.0.s8 %v5761
  %v5763 = vlaneseq
  %v5764 = vshrl.u32 %v5763, 7
  %v5765 = vsub.s32 %v5762, %v5764
  %v5766 = vrot.slane %v5759, %v5765
  %v5768 = vunpack.c.l.s4 1966171168
  %v5769 = vunpack.c.0.s8 %v5768
  %v5770 = vlaneseq
  %v5771 = vshrl.u32 %v5770, 7
  %v5772 = vsub.s32 %v5769, %v5771
  %v5773 = vrot.slane %v4244, %v5772
  %v5775 = vunpack.c.l.s4 1966171168
  %v5776 = vunpack.c.0.s8 %v5775
  %v5777 = vlaneseq
  %v5778 = vshrl.u32 %v5777, 7
  %v5779 = vsub.s32 %v5776, %v5778
  %v5780 = vrot.slane %v5773, %v5779
  %v5782 = vunpack.c.l.s4 1966171168
  %v5783 = vunpack.c.0.s8 %v5782
  %v5784 = vlaneseq
  %v5785 = vshrl.u32 %v5784, 7
  %v5786 = vsub.s32 %v5783, %v5785
  %v5787 = vrot.slane %v4259, %v5786
  %v5789 = vunpack.c.l.s4 1966171168
  %v5790 = vunpack.c.0.s8 %v5789
  %v5791 = vlaneseq
  %v5792 = vshrl.u32 %v5791, 7
  %v5793 = vsub.s32 %v5790, %v5792
  %v5794 = vrot.slane %v5787, %v5793
  %v5796 = vunpack.c.l.s4 1966171168
  %v5797 = vunpack.c.0.s8 %v5796
  %v5798 = vlaneseq
  %v5799 = vshrl.u32 %v5798, 7
  %v5800 = vsub.s32 %v5797, %v5799
  %v5801 = vrot.slane %v4266, %v5800
  %v5803 = vunpack.c.l.s4 1966171168
  %v5804 = vunpack.c.0.s8 %v5803
  %v5805 = vlaneseq
  %v5806 = vshrl.u32 %v5805, 7
  %v5807 = vsub.s32 %v5804, %v5806
  %v5808 = vrot.slane %v5801, %v5807
  %v5810 = vunpack.c.l.s4 1966171168
  %v5811 = vunpack.c.0.s8 %v5810
  %v5812 = vlaneseq
  %v5813 = vshrl.u32 %v5812, 7
  %v5814 = vsub.s32 %v5811, %v5813
  %v5815 = vrot.slane %v4267, %v5814
  %v5817 = vunpack.c.l.s4 1966171168
  %v5818 = vunpack.c.0.s8 %v5817
  %v5819 = vlaneseq
  %v5820 = vshrl.u32 %v5819, 7
  %v5821 = vsub.s32 %v5818, %v5820
  %v5822 = vrot.slane %v5815, %v5821
  %v5824 = vunpack.c.l.s4 1966171168
  %v5825 = vunpack.c.0.s8 %v5824
  %v5826 = vlaneseq
  %v5827 = vshrl.u32 %v5826, 7
  %v5828 = vsub.s32 %v5825, %v5827
  %v5829 = vrot.slane %v4268, %v5828
  %v5831 = vunpack.c.l.s4 1966171168
  %v5832 = vunpack.c.0.s8 %v5831
  %v5833 = vlaneseq
  %v5834 = vshrl.u32 %v5833, 7
  %v5835 = vsub.s32 %v5832, %v5834
  %v5836 = vrot.slane %v5829, %v5835
  %v5838 = vunpack.c.l.s4 1966171168
  %v5839 = vunpack.c.0.s8 %v5838
  %v5840 = vlaneseq
  %v5841 = vshrl.u32 %v5840, 7
  %v5842 = vsub.s32 %v5839, %v5841
  %v5843 = vrot.slane %v4283, %v5842
  %v5845 = vunpack.c.l.s4 1966171168
  %v5846 = vunpack.c.0.s8 %v5845
  %v5847 = vlaneseq
  %v5848 = vshrl.u32 %v5847, 7
  %v5849 = vsub.s32 %v5846, %v5848
  %v5850 = vrot.slane %v5843, %v5849
  %v5852 = vunpack.c.l.s4 1966171168
  %v5853 = vunpack.c.0.s8 %v5852
  %v5854 = vlaneseq
  %v5855 = vshrl.u32 %v5854, 7
  %v5856 = vsub.s32 %v5853, %v5855
  %v5857 = vrot.slane %v4290, %v5856
  %v5859 = vunpack.c.l.s4 1966171168
  %v5860 = vunpack.c.0.s8 %v5859
  %v5861 = vlaneseq
  %v5862 = vshrl.u32 %v5861, 7
  %v5863 = vsub.s32 %v5860, %v5862
  %v5864 = vrot.slane %v5857, %v5863
  %v5866 = vunpack.c.l.s4 1966171168
  %v5867 = vunpack.c.0.s8 %v5866
  %v5868 = vlaneseq
  %v5869 = vshrl.u32 %v5868, 7
  %v5870 = vsub.s32 %v5867, %v5869
  %v5871 = vrot.slane %v4291, %v5870
  %v5873 = vunpack.c.l.s4 1966171168
  %v5874 = vunpack.c.0.s8 %v5873
  %v5875 = vlaneseq
  %v5876 = vshrl.u32 %v5875, 7
  %v5877 = vsub.s32 %v5874, %v5876
  %v5878 = vrot.slane %v5871, %v5877
  %v5880 = vunpack.c.l.s4 1966171168
  %v5881 = vunpack.c.0.s8 %v5880
  %v5882 = vlaneseq
  %v5883 = vshrl.u32 %v5882, 7
  %v5884 = vsub.s32 %v5881, %v5883
  %v5885 = vrot.slane %v4292, %v5884
  %v5887 = vunpack.c.l.s4 1966171168
  %v5888 = vunpack.c.0.s8 %v5887
  %v5889 = vlaneseq
  %v5890 = vshrl.u32 %v5889, 7
  %v5891 = vsub.s32 %v5888, %v5890
  %v5892 = vrot.slane %v5885, %v5891
  %v5894 = vunpack.c.l.s4 1966171168
  %v5895 = vunpack.c.0.s8 %v5894
  %v5896 = vlaneseq
  %v5897 = vshrl.u32 %v5896, 7
  %v5898 = vsub.s32 %v5895, %v5897
  %v5899 = vrot.slane %v4307, %v5898
  %v5901 = vunpack.c.l.s4 1966171168
  %v5902 = vunpack.c.0.s8 %v5901
  %v5903 = vlaneseq
  %v5904 = vshrl.u32 %v5903, 7
  %v5905 = vsub.s32 %v5902, %v5904
  %v5906 = vrot.slane %v5899, %v5905
  %v5908 = vunpack.c.l.s4 1966171168
  %v5909 = vunpack.c.0.s8 %v5908
  %v5910 = vlaneseq
  %v5911 = vshrl.u32 %v5910, 7
  %v5912 = vsub.s32 %v5909, %v5911
  %v5913 = vrot.slane %v4314, %v5912
  %v5915 = vunpack.c.l.s4 1966171168
  %v5916 = vunpack.c.0.s8 %v5915
  %v5917 = vlaneseq
  %v5918 = vshrl.u32 %v5917, 7
  %v5919 = vsub.s32 %v5916, %v5918
  %v5920 = vrot.slane %v5913, %v5919
  %v5922 = vunpack.c.l.s4 1966171168
  %v5923 = vunpack.c.0.s8 %v5922
  %v5924 = vlaneseq
  %v5925 = vshrl.u32 %v5924, 7
  %v5926 = vsub.s32 %v5923, %v5925
  %v5927 = vrot.slane %v4315, %v5926
  %v5929 = vunpack.c.l.s4 1966171168
  %v5930 = vunpack.c.0.s8 %v5929
  %v5931 = vlaneseq
  %v5932 = vshrl.u32 %v5931, 7
  %v5933 = vsub.s32 %v5930, %v5932
  %v5934 = vrot.slane %v5927, %v5933
  %v5936 = vunpack.c.l.s4 1966171168
  %v5937 = vunpack.c.0.s8 %v5936
  %v5938 = vlaneseq
  %v5939 = vshrl.u32 %v5938, 7
  %v5940 = vsub.s32 %v5937, %v5939
  %v5941 = vrot.slane %v4316, %v5940
  %v5943 = vunpack.c.l.s4 1966171168
  %v5944 = vunpack.c.0.s8 %v5943
  %v5945 = vlaneseq
  %v5946 = vshrl.u32 %v5945, 7
  %v5947 = vsub.s32 %v5944, %v5946
  %v5948 = vrot.slane %v5941, %v5947
  %v5950 = vunpack.c.l.s4 1966171168
  %v5951 = vunpack.c.0.s8 %v5950
  %v5952 = vlaneseq
  %v5953 = vshrl.u32 %v5952, 7
  %v5954 = vsub.s32 %v5951, %v5953
  %v5955 = vrot.slane %v4331, %v5954
  %v5957 = vunpack.c.l.s4 1966171168
  %v5958 = vunpack.c.0.s8 %v5957
  %v5959 = vlaneseq
  %v5960 = vshrl.u32 %v5959, 7
  %v5961 = vsub.s32 %v5958, %v5960
  %v5962 = vrot.slane %v5955, %v5961
  %v5964 = vunpack.c.l.s4 1966171168
  %v5965 = vunpack.c.0.s8 %v5964
  %v5966 = vlaneseq
  %v5967 = vshrl.u32 %v5966, 7
  %v5968 = vsub.s32 %v5965, %v5967
  %v5969 = vrot.slane %v4338, %v5968
  %v5971 = vunpack.c.l.s4 1966171168
  %v5972 = vunpack.c.0.s8 %v5971
  %v5973 = vlaneseq
  %v5974 = vshrl.u32 %v5973, 7
  %v5975 = vsub.s32 %v5972, %v5974
  %v5976 = vrot.slane %v5969, %v5975
  %v5978 = vunpack.c.l.s4 1966171168
  %v5979 = vunpack.c.0.s8 %v5978
  %v5980 = vlaneseq
  %v5981 = vshrl.u32 %v5980, 7
  %v5982 = vsub.s32 %v5979, %v5981
  %v5983 = vrot.slane %v4339, %v5982
  %v5985 = vunpack.c.l.s4 1966171168
  %v5986 = vunpack.c.0.s8 %v5985
  %v5987 = vlaneseq
  %v5988 = vshrl.u32 %v5987, 7
  %v5989 = vsub.s32 %v5986, %v5988
  %v5990 = vrot.slane %v5983, %v5989
  %v5992 = vunpack.c.l.s4 1966171168
  %v5993 = vunpack.c.0.s8 %v5992
  %v5994 = vlaneseq
  %v5995 = vshrl.u32 %v5994, 7
  %v5996 = vsub.s32 %v5993, %v5995
  %v5997 = vrot.slane %v4340, %v5996
  %v5999 = vunpack.c.l.s4 1966171168
  %v6000 = vunpack.c.0.s8 %v5999
  %v6001 = vlaneseq
  %v6002 = vshrl.u32 %v6001, 7
  %v6003 = vsub.s32 %v6000, %v6002
  %v6004 = vrot.slane %v5997, %v6003
  %v6006 = vunpack.c.l.s4 1966171168
  %v6007 = vunpack.c.0.s8 %v6006
  %v6008 = vlaneseq
  %v6009 = vshrl.u32 %v6008, 7
  %v6010 = vsub.s32 %v6007, %v6009
  %v6011 = vrot.slane %v4355, %v6010
  %v6013 = vunpack.c.l.s4 1966171168
  %v6014 = vunpack.c.0.s8 %v6013
  %v6015 = vlaneseq
  %v6016 = vshrl.u32 %v6015, 7
  %v6017 = vsub.s32 %v6014, %v6016
  %v6018 = vrot.slane %v6011, %v6017
  %v6020 = vunpack.c.l.s4 1966171168
  %v6021 = vunpack.c.0.s8 %v6020
  %v6022 = vlaneseq
  %v6023 = vshrl.u32 %v6022, 7
  %v6024 = vsub.s32 %v6021, %v6023
  %v6025 = vrot.slane %v4362, %v6024
  %v6027 = vunpack.c.l.s4 1966171168
  %v6028 = vunpack.c.0.s8 %v6027
  %v6029 = vlaneseq
  %v6030 = vshrl.u32 %v6029, 7
  %v6031 = vsub.s32 %v6028, %v6030
  %v6032 = vrot.slane %v6025, %v6031
  %v6034 = vunpack.c.l.s4 1966171168
  %v6035 = vunpack.c.0.s8 %v6034
  %v6036 = vlaneseq
  %v6037 = vshrl.u32 %v6036, 7
  %v6038 = vsub.s32 %v6035, %v6037
  %v6039 = vrot.slane %v4363, %v6038
  %v6041 = vunpack.c.l.s4 1966171168
  %v6042 = vunpack.c.0.s8 %v6041
  %v6043 = vlaneseq
  %v6044 = vshrl.u32 %v6043, 7
  %v6045 = vsub.s32 %v6042, %v6044
  %v6046 = vrot.slane %v6039, %v6045
  %v6048 = vunpack.c.l.s4 1966171168
  %v6049 = vunpack.c.0.s8 %v6048
  %v6050 = vlaneseq
  %v6051 = vshrl.u32 %v6050, 7
  %v6052 = vsub.s32 %v6049, %v6051
  %v6053 = vrot.slane %v4364, %v6052
  %v6055 = vunpack.c.l.s4 1966171168
  %v6056 = vunpack.c.0.s8 %v6055
  %v6057 = vlaneseq
  %v6058 = vshrl.u32 %v6057, 7
  %v6059 = vsub.s32 %v6056, %v6058
  %v6060 = vrot.slane %v6053, %v6059
  %v6062 = vunpack.c.l.s4 1966171168
  %v6063 = vunpack.c.0.s8 %v6062
  %v6064 = vlaneseq
  %v6065 = vshrl.u32 %v6064, 7
  %v6066 = vsub.s32 %v6063, %v6065
  %v6067 = vrot.slane %v4379, %v6066
  %v6069 = vunpack.c.l.s4 1966171168
  %v6070 = vunpack.c.0.s8 %v6069
  %v6071 = vlaneseq
  %v6072 = vshrl.u32 %v6071, 7
  %v6073 = vsub.s32 %v6070, %v6072
  %v6074 = vrot.slane %v6067, %v6073
  %v6076 = vunpack.c.l.s4 1966171168
  %v6077 = vunpack.c.0.s8 %v6076
  %v6078 = vlaneseq
  %v6079 = vshrl.u32 %v6078, 7
  %v6080 = vsub.s32 %v6077, %v6079
  %v6081 = vrot.slane %v4386, %v6080
  %v6083 = vunpack.c.l.s4 1966171168
  %v6084 = vunpack.c.0.s8 %v6083
  %v6085 = vlaneseq
  %v6086 = vshrl.u32 %v6085, 7
  %v6087 = vsub.s32 %v6084, %v6086
  %v6088 = vrot.slane %v6081, %v6087
  %v6090 = vunpack.c.l.s4 1966171168
  %v6091 = vunpack.c.0.s8 %v6090
  %v6092 = vlaneseq
  %v6093 = vshrl.u32 %v6092, 7
  %v6094 = vsub.s32 %v6091, %v6093
  %v6095 = vrot.slane %v4387, %v6094
  %v6097 = vunpack.c.l.s4 1966171168
  %v6098 = vunpack.c.0.s8 %v6097
  %v6099 = vlaneseq
  %v6100 = vshrl.u32 %v6099, 7
  %v6101 = vsub.s32 %v6098, %v6100
  %v6102 = vrot.slane %v6095, %v6101
  %v6104 = vunpack.c.l.s4 1966171168
  %v6105 = vunpack.c.0.s8 %v6104
  %v6106 = vlaneseq
  %v6107 = vshrl.u32 %v6106, 7
  %v6108 = vsub.s32 %v6105, %v6107
  %v6109 = vrot.slane %v4388, %v6108
  %v6111 = vunpack.c.l.s4 1966171168
  %v6112 = vunpack.c.0.s8 %v6111
  %v6113 = vlaneseq
  %v6114 = vshrl.u32 %v6113, 7
  %v6115 = vsub.s32 %v6112, %v6114
  %v6116 = vrot.slane %v6109, %v6115
  %v6118 = vunpack.c.l.s4 1966171168
  %v6119 = vunpack.c.0.s8 %v6118
  %v6120 = vlaneseq
  %v6121 = vshrl.u32 %v6120, 7
  %v6122 = vsub.s32 %v6119, %v6121
  %v6123 = vrot.slane %v4403, %v6122
  %v6125 = vunpack.c.l.s4 1966171168
  %v6126 = vunpack.c.0.s8 %v6125
  %v6127 = vlaneseq
  %v6128 = vshrl.u32 %v6127, 7
  %v6129 = vsub.s32 %v6126, %v6128
  %v6130 = vrot.slane %v6123, %v6129
  %v6132 = vunpack.c.l.s4 1966171168
  %v6133 = vunpack.c.0.s8 %v6132
  %v6134 = vlaneseq
  %v6135 = vshrl.u32 %v6134, 7
  %v6136 = vsub.s32 %v6133, %v6135
  %v6137 = vrot.slane %v4410, %v6136
  %v6139 = vunpack.c.l.s4 1966171168
  %v6140 = vunpack.c.0.s8 %v6139
  %v6141 = vlaneseq
  %v6142 = vshrl.u32 %v6141, 7
  %v6143 = vsub.s32 %v6140, %v6142
  %v6144 = vrot.slane %v6137, %v6143
  %v6146 = vunpack.c.l.s4 1966171168
  %v6147 = vunpack.c.0.s8 %v6146
  %v6148 = vlaneseq
  %v6149 = vshrl.u32 %v6148, 7
  %v6150 = vsub.s32 %v6147, %v6149
  %v6151 = vrot.slane %v4411, %v6150
  %v6153 = vunpack.c.l.s4 1966171168
  %v6154 = vunpack.c.0.s8 %v6153
  %v6155 = vlaneseq
  %v6156 = vshrl.u32 %v6155, 7
  %v6157 = vsub.s32 %v6154, %v6156
  %v6158 = vrot.slane %v6151, %v6157
  %v6160 = vunpack.c.l.s4 1966171168
  %v6161 = vunpack.c.0.s8 %v6160
  %v6162 = vlaneseq
  %v6163 = vshrl.u32 %v6162, 7
  %v6164 = vsub.s32 %v6161, %v6163
  %v6165 = vrot.slane %v4412, %v6164
  %v6167 = vunpack.c.l.s4 1966171168
  %v6168 = vunpack.c.0.s8 %v6167
  %v6169 = vlaneseq
  %v6170 = vshrl.u32 %v6169, 7
  %v6171 = vsub.s32 %v6168, %v6170
  %v6172 = vrot.slane %v6165, %v6171
  %v6174 = vunpack.c.l.s4 1966171168
  %v6175 = vunpack.c.0.s8 %v6174
  %v6176 = vlaneseq
  %v6177 = vshrl.u32 %v6176, 7
  %v6178 = vsub.s32 %v6175, %v6177
  %v6179 = vrot.slane %v4427, %v6178
  %v6181 = vunpack.c.l.s4 1966171168
  %v6182 = vunpack.c.0.s8 %v6181
  %v6183 = vlaneseq
  %v6184 = vshrl.u32 %v6183, 7
  %v6185 = vsub.s32 %v6182, %v6184
  %v6186 = vrot.slane %v6179, %v6185
  %v6188 = vunpack.c.l.s4 1966171168
  %v6189 = vunpack.c.0.s8 %v6188
  %v6190 = vlaneseq
  %v6191 = vshrl.u32 %v6190, 7
  %v6192 = vsub.s32 %v6189, %v6191
  %v6193 = vrot.slane %v4434, %v6192
  %v6195 = vunpack.c.l.s4 1966171168
  %v6196 = vunpack.c.0.s8 %v6195
  %v6197 = vlaneseq
  %v6198 = vshrl.u32 %v6197, 7
  %v6199 = vsub.s32 %v6196, %v6198
  %v6200 = vrot.slane %v6193, %v6199
  %v6202 = vunpack.c.l.s4 1966171168
  %v6203 = vunpack.c.0.s8 %v6202
  %v6204 = vlaneseq
  %v6205 = vshrl.u32 %v6204, 7
  %v6206 = vsub.s32 %v6203, %v6205
  %v6207 = vrot.slane %v4435, %v6206
  %v6209 = vunpack.c.l.s4 1966171168
  %v6210 = vunpack.c.0.s8 %v6209
  %v6211 = vlaneseq
  %v6212 = vshrl.u32 %v6211, 7
  %v6213 = vsub.s32 %v6210, %v6212
  %v6214 = vrot.slane %v6207, %v6213
  %v6216 = vunpack.c.l.s4 1966171168
  %v6217 = vunpack.c.0.s8 %v6216
  %v6218 = vlaneseq
  %v6219 = vshrl.u32 %v6218, 7
  %v6220 = vsub.s32 %v6217, %v6219
  %v6221 = vrot.slane %v4436, %v6220
  %v6223 = vunpack.c.l.s4 1966171168
  %v6224 = vunpack.c.0.s8 %v6223
  %v6225 = vlaneseq
  %v6226 = vshrl.u32 %v6225, 7
  %v6227 = vsub.s32 %v6224, %v6226
  %v6228 = vrot.slane %v6221, %v6227
  %v6229 = vunpack.c.l.b16 %v4450
  %v6230 = vunpack.c.l.b16 %v4464
  %v6231 = vunpack.c.l.b16 %v4478
  %v6232 = vunpack.c.l.b16 %v4492
  %v6233 = vunpack.c.l.b16 %v4506
  %v6234 = vunpack.c.l.b16 %v4520
  %v6235 = vunpack.c.l.b16 %v4534
  %v6236 = vunpack.c.l.b16 %v4548
  %v6237 = vunpack.c.l.b16 %v4562
  %v6238 = vunpack.c.l.b16 %v4576
  %v6239 = vunpack.c.l.b16 %v4590
  %v6240 = vunpack.c.l.b16 %v4604
  %v6241 = vunpack.c.l.b16 %v4618
  %v6242 = vunpack.c.l.b16 %v4632
  %v6243 = vunpack.c.l.b16 %v4646
  %v6244 = vunpack.c.l.b16 %v4660
  %v6245 = vunpack.c.l.b16 %v4674
  %v6246 = vunpack.c.l.b16 %v4688
  %v6247 = vunpack.c.l.b16 %v4702
  %v6248 = vunpack.c.l.b16 %v4716
  %v6249 = vunpack.c.l.b16 %v4730
  %v6250 = vunpack.c.l.b16 %v4744
  %v6251 = vunpack.c.l.b16 %v4758
  %v6252 = vunpack.c.l.b16 %v4772
  %v6253 = vunpack.c.l.b16 %v4786
  %v6254 = vunpack.c.l.b16 %v4800
  %v6255 = vunpack.c.l.b16 %v4814
  %v6256 = vunpack.c.l.b16 %v4828
  %v6257 = vunpack.c.l.b16 %v4842
  %v6258 = vunpack.c.l.b16 %v4856
  %v6259 = vunpack.c.l.b16 %v4870
  %v6260 = vunpack.c.l.b16 %v4884
  %v6261 = vunpack.c.l.b16 %v4898
  %v6262 = vunpack.c.l.b16 %v4912
  %v6263 = vunpack.c.l.b16 %v4926
  %v6264 = vunpack.c.l.b16 %v4940
  %v6265 = vunpack.c.l.b16 %v4954
  %v6266 = vunpack.c.l.b16 %v4968
  %v6267 = vunpack.c.l.b16 %v4982
  %v6268 = vunpack.c.l.b16 %v4996
  %v6269 = vunpack.c.l.b16 %v5010
  %v6270 = vunpack.c.l.b16 %v5024
  %v6271 = vunpack.c.l.b16 %v5038
  %v6272 = vunpack.c.l.b16 %v5052
  %v6273 = vunpack.c.l.b16 %v5066
  %v6274 = vunpack.c.l.b16 %v5080
  %v6275 = vunpack.c.l.b16 %v5094
  %v6276 = vunpack.c.l.b16 %v5108
  %v6277 = vunpack.c.l.b16 %v5122
  %v6278 = vunpack.c.l.b16 %v5136
  %v6279 = vunpack.c.l.b16 %v5150
  %v6280 = vunpack.c.l.b16 %v5164
  %v6281 = vunpack.c.l.b16 %v5178
  %v6282 = vunpack.c.l.b16 %v5192
  %v6283 = vunpack.c.l.b16 %v5206
  %v6284 = vunpack.c.l.b16 %v5220
  %v6285 = vunpack.c.l.b16 %v5234
  %v6286 = vunpack.c.l.b16 %v5248
  %v6287 = vunpack.c.l.b16 %v5262
  %v6288 = vunpack.c.l.b16 %v5276
  %v6289 = vunpack.c.l.b16 %v5290
  %v6290 = vunpack.c.l.b16 %v5304
  %v6291 = vunpack.c.l.b16 %v5318
  %v6292 = vunpack.c.l.b16 %v5332
  %v6293 = vunpack.c.l.b16 %v5346
  %v6294 = vunpack.c.l.b16 %v5360
  %v6295 = vunpack.c.l.b16 %v5374
  %v6296 = vunpack.c.l.b16 %v5388
  %v6297 = vunpack.c.l.b16 %v5402
  %v6298 = vunpack.c.l.b16 %v5416
  %v6299 = vunpack.c.l.b16 %v5430
  %v6300 = vunpack.c.l.b16 %v5444
  %v6301 = vunpack.c.l.b16 %v5458
  %v6302 = vunpack.c.l.b16 %v5472
  %v6303 = vunpack.c.l.b16 %v5486
  %v6304 = vunpack.c.l.b16 %v5500
  %v6305 = vunpack.c.l.b16 %v5514
  %v6306 = vunpack.c.l.b16 %v5528
  %v6307 = vunpack.c.l.b16 %v5542
  %v6308 = vunpack.c.l.b16 %v5556
  %v6309 = vunpack.c.l.b16 %v5570
  %v6310 = vunpack.c.l.b16 %v5584
  %v6311 = vunpack.c.l.b16 %v5598
  %v6312 = vunpack.c.l.b16 %v5612
  %v6313 = vunpack.c.l.b16 %v5626
  %v6314 = vunpack.c.l.b16 %v5640
  %v6315 = vunpack.c.l.b16 %v5654
  %v6316 = vunpack.c.l.b16 %v5668
  %v6317 = vunpack.c.l.b16 %v5682
  %v6318 = vunpack.c.l.b16 %v5696
  %v6319 = vunpack.c.l.b16 %v5710
  %v6320 = vunpack.c.l.b16 %v5724
  %v6321 = vunpack.c.l.b16 %v5738
  %v6322 = vunpack.c.l.b16 %v5752
  %v6323 = vunpack.c.l.b16 %v5766
  %v6324 = vunpack.c.l.b16 %v5780
  %v6325 = vunpack.c.l.b16 %v5794
  %v6326 = vunpack.c.l.b16 %v5808
  %v6327 = vunpack.c.l.b16 %v5822
  %v6328 = vunpack.c.l.b16 %v5836
  %v6329 = vunpack.c.l.b16 %v5850
  %v6330 = vunpack.c.l.b16 %v5864
  %v6331 = vunpack.c.l.b16 %v5878
  %v6332 = vunpack.c.l.b16 %v5892
  %v6333 = vunpack.c.l.b16 %v5906
  %v6334 = vunpack.c.l.b16 %v5920
  %v6335 = vunpack.c.l.b16 %v5934
  %v6336 = vunpack.c.l.b16 %v5948
  %v6337 = vunpack.c.l.b16 %v5962
  %v6338 = vunpack.c.l.b16 %v5976
  %v6339 = vunpack.c.l.b16 %v5990
  %v6340 = vunpack.c.l.b16 %v6004
  %v6341 = vunpack.c.l.b16 %v6018
  %v6342 = vunpack.c.l.b16 %v6032
  %v6343 = vunpack.c.l.b16 %v6046
  %v6344 = vunpack.c.l.b16 %v6060
  %v6345 = vunpack.c.l.b16 %v6074
  %v6346 = vunpack.c.l.b16 %v6088
  %v6347 = vunpack.c.l.b16 %v6102
  %v6348 = vunpack.c.l.b16 %v6116
  %v6349 = vunpack.c.l.b16 %v6130
  %v6350 = vunpack.c.l.b16 %v6144
  %v6351 = vunpack.c.l.b16 %v6158
  %v6352 = vunpack.c.l.b16 %v6172
  %v6353 = vunpack.c.l.b16 %v6186
  %v6354 = vunpack.c.l.b16 %v6200
  %v6355 = vunpack.c.l.b16 %v6214
  %v6356 = vunpack.c.l.b16 %v6228
  %v6357 = vrot.slane %v6230, 7
  %v6358 = vsel %vm2815, %v6357, %v6229
  %v6359 = vrot.slane %v6231, 6
  %v6360 = vsel %vm2818, %v6359, %v6358
  %v6361 = vrot.slane %v6232, 5
  %v6362 = vsel %vm2821, %v6361, %v6360
  %v6363 = vrot.slane %v6233, 4
  %v6364 = vsel %vm2824, %v6363, %v6362
  %v6365 = vrot.slane %v6234, 3
  %v6366 = vsel %vm2827, %v6365, %v6364
  %v6367 = vrot.slane %v6235, 2
  %v6368 = vsel %vm2830, %v6367, %v6366
  %v6369 = vrot.slane %v6236, 1
  %v6370 = vsel %vm2833, %v6369, %v6368
  %v6371 = vrot.slane %v6238, 7
  %v6372 = vsel %vm2815, %v6371, %v6237
  %v6373 = vrot.slane %v6239, 6
  %v6374 = vsel %vm2818, %v6373, %v6372
  %v6375 = vrot.slane %v6240, 5
  %v6376 = vsel %vm2821, %v6375, %v6374
  %v6377 = vrot.slane %v6241, 4
  %v6378 = vsel %vm2824, %v6377, %v6376
  %v6379 = vrot.slane %v6242, 3
  %v6380 = vsel %vm2827, %v6379, %v6378
  %v6381 = vrot.slane %v6243, 2
  %v6382 = vsel %vm2830, %v6381, %v6380
  %v6383 = vrot.slane %v6244, 1
  %v6384 = vsel %vm2833, %v6383, %v6382
  %v6385 = vrot.slane %v6246, 7
  %v6386 = vsel %vm2815, %v6385, %v6245
  %v6387 = vrot.slane %v6247, 6
  %v6388 = vsel %vm2818, %v6387, %v6386
  %v6389 = vrot.slane %v6248, 5
  %v6390 = vsel %vm2821, %v6389, %v6388
  %v6391 = vrot.slane %v6249, 4
  %v6392 = vsel %vm2824, %v6391, %v6390
  %v6393 = vrot.slane %v6250, 3
  %v6394 = vsel %vm2827, %v6393, %v6392
  %v6395 = vrot.slane %v6251, 2
  %v6396 = vsel %vm2830, %v6395, %v6394
  %v6397 = vrot.slane %v6252, 1
  %v6398 = vsel %vm2833, %v6397, %v6396
  %v6399 = vrot.slane %v6254, 7
  %v6400 = vsel %vm2815, %v6399, %v6253
  %v6401 = vrot.slane %v6255, 6
  %v6402 = vsel %vm2818, %v6401, %v6400
  %v6403 = vrot.slane %v6256, 5
  %v6404 = vsel %vm2821, %v6403, %v6402
  %v6405 = vrot.slane %v6257, 4
  %v6406 = vsel %vm2824, %v6405, %v6404
  %v6407 = vrot.slane %v6258, 3
  %v6408 = vsel %vm2827, %v6407, %v6406
  %v6409 = vrot.slane %v6259, 2
  %v6410 = vsel %vm2830, %v6409, %v6408
  %v6411 = vrot.slane %v6260, 1
  %v6412 = vsel %vm2833, %v6411, %v6410
  %v6413 = vrot.slane %v6262, 7
  %v6414 = vsel %vm2815, %v6413, %v6261
  %v6415 = vrot.slane %v6263, 6
  %v6416 = vsel %vm2818, %v6415, %v6414
  %v6417 = vrot.slane %v6264, 5
  %v6418 = vsel %vm2821, %v6417, %v6416
  %v6419 = vrot.slane %v6265, 4
  %v6420 = vsel %vm2824, %v6419, %v6418
  %v6421 = vrot.slane %v6266, 3
  %v6422 = vsel %vm2827, %v6421, %v6420
  %v6423 = vrot.slane %v6267, 2
  %v6424 = vsel %vm2830, %v6423, %v6422
  %v6425 = vrot.slane %v6268, 1
  %v6426 = vsel %vm2833, %v6425, %v6424
  %v6427 = vrot.slane %v6270, 7
  %v6428 = vsel %vm2815, %v6427, %v6269
  %v6429 = vrot.slane %v6271, 6
  %v6430 = vsel %vm2818, %v6429, %v6428
  %v6431 = vrot.slane %v6272, 5
  %v6432 = vsel %vm2821, %v6431, %v6430
  %v6433 = vrot.slane %v6273, 4
  %v6434 = vsel %vm2824, %v6433, %v6432
  %v6435 = vrot.slane %v6274, 3
  %v6436 = vsel %vm2827, %v6435, %v6434
  %v6437 = vrot.slane %v6275, 2
  %v6438 = vsel %vm2830, %v6437, %v6436
  %v6439 = vrot.slane %v6276, 1
  %v6440 = vsel %vm2833, %v6439, %v6438
  %v6441 = vrot.slane %v6278, 7
  %v6442 = vsel %vm2815, %v6441, %v6277
  %v6443 = vrot.slane %v6279, 6
  %v6444 = vsel %vm2818, %v6443, %v6442
  %v6445 = vrot.slane %v6280, 5
  %v6446 = vsel %vm2821, %v6445, %v6444
  %v6447 = vrot.slane %v6281, 4
  %v6448 = vsel %vm2824, %v6447, %v6446
  %v6449 = vrot.slane %v6282, 3
  %v6450 = vsel %vm2827, %v6449, %v6448
  %v6451 = vrot.slane %v6283, 2
  %v6452 = vsel %vm2830, %v6451, %v6450
  %v6453 = vrot.slane %v6284, 1
  %v6454 = vsel %vm2833, %v6453, %v6452
  %v6455 = vrot.slane %v6286, 7
  %v6456 = vsel %vm2815, %v6455, %v6285
  %v6457 = vrot.slane %v6287, 6
  %v6458 = vsel %vm2818, %v6457, %v6456
  %v6459 = vrot.slane %v6288, 5
  %v6460 = vsel %vm2821, %v6459, %v6458
  %v6461 = vrot.slane %v6289, 4
  %v6462 = vsel %vm2824, %v6461, %v6460
  %v6463 = vrot.slane %v6290, 3
  %v6464 = vsel %vm2827, %v6463, %v6462
  %v6465 = vrot.slane %v6291, 2
  %v6466 = vsel %vm2830, %v6465, %v6464
  %v6467 = vrot.slane %v6292, 1
  %v6468 = vsel %vm2833, %v6467, %v6466
  %v6469 = vrot.slane %v6294, 7
  %v6470 = vsel %vm2815, %v6469, %v6293
  %v6471 = vrot.slane %v6295, 6
  %v6472 = vsel %vm2818, %v6471, %v6470
  %v6473 = vrot.slane %v6296, 5
  %v6474 = vsel %vm2821, %v6473, %v6472
  %v6475 = vrot.slane %v6297, 4
  %v6476 = vsel %vm2824, %v6475, %v6474
  %v6477 = vrot.slane %v6298, 3
  %v6478 = vsel %vm2827, %v6477, %v6476
  %v6479 = vrot.slane %v6299, 2
  %v6480 = vsel %vm2830, %v6479, %v6478
  %v6481 = vrot.slane %v6300, 1
  %v6482 = vsel %vm2833, %v6481, %v6480
  %v6483 = vrot.slane %v6302, 7
  %v6484 = vsel %vm2815, %v6483, %v6301
  %v6485 = vrot.slane %v6303, 6
  %v6486 = vsel %vm2818, %v6485, %v6484
  %v6487 = vrot.slane %v6304, 5
  %v6488 = vsel %vm2821, %v6487, %v6486
  %v6489 = vrot.slane %v6305, 4
  %v6490 = vsel %vm2824, %v6489, %v6488
  %v6491 = vrot.slane %v6306, 3
  %v6492 = vsel %vm2827, %v6491, %v6490
  %v6493 = vrot.slane %v6307, 2
  %v6494 = vsel %vm2830, %v6493, %v6492
  %v6495 = vrot.slane %v6308, 1
  %v6496 = vsel %vm2833, %v6495, %v6494
  %v6497 = vrot.slane %v6310, 7
  %v6498 = vsel %vm2815, %v6497, %v6309
  %v6499 = vrot.slane %v6311, 6
  %v6500 = vsel %vm2818, %v6499, %v6498
  %v6501 = vrot.slane %v6312, 5
  %v6502 = vsel %vm2821, %v6501, %v6500
  %v6503 = vrot.slane %v6313, 4
  %v6504 = vsel %vm2824, %v6503, %v6502
  %v6505 = vrot.slane %v6314, 3
  %v6506 = vsel %vm2827, %v6505, %v6504
  %v6507 = vrot.slane %v6315, 2
  %v6508 = vsel %vm2830, %v6507, %v6506
  %v6509 = vrot.slane %v6316, 1
  %v6510 = vsel %vm2833, %v6509, %v6508
  %v6511 = vrot.slane %v6318, 7
  %v6512 = vsel %vm2815, %v6511, %v6317
  %v6513 = vrot.slane %v6319, 6
  %v6514 = vsel %vm2818, %v6513, %v6512
  %v6515 = vrot.slane %v6320, 5
  %v6516 = vsel %vm2821, %v6515, %v6514
  %v6517 = vrot.slane %v6321, 4
  %v6518 = vsel %vm2824, %v6517, %v6516
  %v6519 = vrot.slane %v6322, 3
  %v6520 = vsel %vm2827, %v6519, %v6518
  %v6521 = vrot.slane %v6323, 2
  %v6522 = vsel %vm2830, %v6521, %v6520
  %v6523 = vrot.slane %v6324, 1
  %v6524 = vsel %vm2833, %v6523, %v6522
  %v6525 = vrot.slane %v6326, 7
  %v6526 = vsel %vm2815, %v6525, %v6325
  %v6527 = vrot.slane %v6327, 6
  %v6528 = vsel %vm2818, %v6527, %v6526
  %v6529 = vrot.slane %v6328, 5
  %v6530 = vsel %vm2821, %v6529, %v6528
  %v6531 = vrot.slane %v6329, 4
  %v6532 = vsel %vm2824, %v6531, %v6530
  %v6533 = vrot.slane %v6330, 3
  %v6534 = vsel %vm2827, %v6533, %v6532
  %v6535 = vrot.slane %v6331, 2
  %v6536 = vsel %vm2830, %v6535, %v6534
  %v6537 = vrot.slane %v6332, 1
  %v6538 = vsel %vm2833, %v6537, %v6536
  %v6539 = vrot.slane %v6334, 7
  %v6540 = vsel %vm2815, %v6539, %v6333
  %v6541 = vrot.slane %v6335, 6
  %v6542 = vsel %vm2818, %v6541, %v6540
  %v6543 = vrot.slane %v6336, 5
  %v6544 = vsel %vm2821, %v6543, %v6542
  %v6545 = vrot.slane %v6337, 4
  %v6546 = vsel %vm2824, %v6545, %v6544
  %v6547 = vrot.slane %v6338, 3
  %v6548 = vsel %vm2827, %v6547, %v6546
  %v6549 = vrot.slane %v6339, 2
  %v6550 = vsel %vm2830, %v6549, %v6548
  %v6551 = vrot.slane %v6340, 1
  %v6552 = vsel %vm2833, %v6551, %v6550
  %v6553 = vrot.slane %v6342, 7
  %v6554 = vsel %vm2815, %v6553, %v6341
  %v6555 = vrot.slane %v6343, 6
  %v6556 = vsel %vm2818, %v6555, %v6554
  %v6557 = vrot.slane %v6344, 5
  %v6558 = vsel %vm2821, %v6557, %v6556
  %v6559 = vrot.slane %v6345, 4
  %v6560 = vsel %vm2824, %v6559, %v6558
  %v6561 = vrot.slane %v6346, 3
  %v6562 = vsel %vm2827, %v6561, %v6560
  %v6563 = vrot.slane %v6347, 2
  %v6564 = vsel %vm2830, %v6563, %v6562
  %v6565 = vrot.slane %v6348, 1
  %v6566 = vsel %vm2833, %v6565, %v6564
  %v6567 = vrot.slane %v6350, 7
  %v6568 = vsel %vm2815, %v6567, %v6349
  %v6569 = vrot.slane %v6351, 6
  %v6570 = vsel %vm2818, %v6569, %v6568
  %v6571 = vrot.slane %v6352, 5
  %v6572 = vsel %vm2821, %v6571, %v6570
  %v6573 = vrot.slane %v6353, 4
  %v6574 = vsel %vm2824, %v6573, %v6572
  %v6575 = vrot.slane %v6354, 3
  %v6576 = vsel %vm2827, %v6575, %v6574
  %v6577 = vrot.slane %v6355, 2
  %v6578 = vsel %vm2830, %v6577, %v6576
  %v6579 = vrot.slane %v6356, 1
  %v6580 = vsel %vm2833, %v6579, %v6578
  %v6581 = vpack.c.b16 %v6370, %v6370
  %v6582 = vpack.c.b16 %v6384, %v6384
  %v6583 = vpack.c.b16 %v6398, %v6398
  %v6584 = vpack.c.b16 %v6412, %v6412
  %v6585 = vpack.c.b16 %v6426, %v6426
  %v6586 = vpack.c.b16 %v6440, %v6440
  %v6587 = vpack.c.b16 %v6454, %v6454
  %v6588 = vpack.c.b16 %v6468, %v6468
  %v6589 = vpack.c.b16 %v6482, %v6482
  %v6590 = vpack.c.b16 %v6496, %v6496
  %v6591 = vpack.c.b16 %v6510, %v6510
  %v6592 = vpack.c.b16 %v6524, %v6524
  %v6593 = vpack.c.b16 %v6538, %v6538
  %v6594 = vpack.c.b16 %v6552, %v6552
  %v6595 = vpack.c.b16 %v6566, %v6566
  %v6596 = vpack.c.b16 %v6580, %v6580
  %v6598 = vshrl.u32 %v6581, 16
  %v6600 = vrot.slane %v6598, 7
  %v6601 = vshll.u32 %v6581, 16
  %v6603 = vor.u32 %v6600, %v6601
  %v6605 = vshrl.u32 %v6582, 16
  %v6607 = vrot.slane %v6605, 7
  %v6608 = vshll.u32 %v6582, 16
  %v6610 = vor.u32 %v6607, %v6608
  %v6612 = vshrl.u32 %v6583, 16
  %v6614 = vrot.slane %v6612, 7
  %v6615 = vshll.u32 %v6583, 16
  %v6617 = vor.u32 %v6614, %v6615
  %v6619 = vshrl.u32 %v6584, 16
  %v6621 = vrot.slane %v6619, 7
  %v6622 = vshll.u32 %v6584, 16
  %v6624 = vor.u32 %v6621, %v6622
  %v6626 = vshrl.u32 %v6585, 16
  %v6628 = vrot.slane %v6626, 7
  %v6629 = vshll.u32 %v6585, 16
  %v6631 = vor.u32 %v6628, %v6629
  %v6633 = vshrl.u32 %v6586, 16
  %v6635 = vrot.slane %v6633, 7
  %v6636 = vshll.u32 %v6586, 16
  %v6638 = vor.u32 %v6635, %v6636
  %v6640 = vshrl.u32 %v6587, 16
  %v6642 = vrot.slane %v6640, 7
  %v6643 = vshll.u32 %v6587, 16
  %v6645 = vor.u32 %v6642, %v6643
  %v6647 = vshrl.u32 %v6588, 16
  %v6649 = vrot.slane %v6647, 7
  %v6650 = vshll.u32 %v6588, 16
  %v6652 = vor.u32 %v6649, %v6650
  %v6654 = vshrl.u32 %v6589, 16
  %v6656 = vrot.slane %v6654, 7
  %v6657 = vshll.u32 %v6589, 16
  %v6659 = vor.u32 %v6656, %v6657
  %v6661 = vshrl.u32 %v6590, 16
  %v6663 = vrot.slane %v6661, 7
  %v6664 = vshll.u32 %v6590, 16
  %v6666 = vor.u32 %v6663, %v6664
  %v6668 = vshrl.u32 %v6591, 16
  %v6670 = vrot.slane %v6668, 7
  %v6671 = vshll.u32 %v6591, 16
  %v6673 = vor.u32 %v6670, %v6671
  %v6675 = vshrl.u32 %v6592, 16
  %v6677 = vrot.slane %v6675, 7
  %v6678 = vshll.u32 %v6592, 16
  %v6680 = vor.u32 %v6677, %v6678
  %v6682 = vshrl.u32 %v6593, 16
  %v6684 = vrot.slane %v6682, 7
  %v6685 = vshll.u32 %v6593, 16
  %v6687 = vor.u32 %v6684, %v6685
  %v6689 = vshrl.u32 %v6594, 16
  %v6691 = vrot.slane %v6689, 7
  %v6692 = vshll.u32 %v6594, 16
  %v6694 = vor.u32 %v6691, %v6692
  %v6696 = vshrl.u32 %v6595, 16
  %v6698 = vrot.slane %v6696, 7
  %v6699 = vshll.u32 %v6595, 16
  %v6701 = vor.u32 %v6698, %v6699
  %v6703 = vshrl.u32 %v6596, 16
  %v6705 = vrot.slane %v6703, 7
  %v6706 = vshll.u32 %v6596, 16
  %v6708 = vor.u32 %v6705, %v6706
  %v6725 = vsel %vm3199, 0, %v6603
  %v6726 = vsel %vm3199, 0, %v6610
  %v6727 = vsel %vm3199, 0, %v6617
  %v6728 = vsel %vm3199, 0, %v6624
  %v6729 = vsel %vm3199, 0, %v6631
  %v6730 = vsel %vm3199, 0, %v6638
  %v6731 = vsel %vm3199, 0, %v6645
  %v6732 = vsel %vm3199, 0, %v6652
  %v6733 = vsel %vm3199, 0, %v6659
  %v6734 = vsel %vm3199, 0, %v6666
  %v6735 = vsel %vm3199, 0, %v6673
  %v6736 = vsel %vm3199, 0, %v6680
  %v6737 = vsel %vm3199, 0, %v6687
  %v6738 = vsel %vm3199, 0, %v6694
  %v6739 = vsel %vm3199, 0, %v6701
  %v6740 = vsel %vm3199, 0, %v6708
  %v6741 = vsel %vm3219, %v6725, 0
  %v6742 = vsel %vm3219, %v6726, 0
  %v6743 = vsel %vm3219, %v6727, 0
  %v6744 = vsel %vm3219, %v6728, 0
  %v6745 = vsel %vm3219, %v6729, 0
  %v6746 = vsel %vm3219, %v6730, 0
  %v6747 = vsel %vm3219, %v6731, 0
  %v6748 = vsel %vm3219, %v6732, 0
  %v6749 = vsel %vm3219, %v6733, 0
  %v6750 = vsel %vm3219, %v6734, 0
  %v6751 = vsel %vm3219, %v6735, 0
  %v6752 = vsel %vm3219, %v6736, 0
  %v6753 = vsel %vm3219, %v6737, 0
  %v6754 = vsel %vm3219, %v6738, 0
  %v6755 = vsel %vm3219, %v6739, 0
  %v6756 = vsel %vm3219, %v6740, 0
  %v6757 = vrot.slane %v6229, 1
  %v6758 = vsel %vm2815, %v6230, %v6757
  %v6759 = vrot.slane %v6231, 7
  %v6760 = vsel %vm2818, %v6759, %v6758
  %v6761 = vrot.slane %v6232, 6
  %v6762 = vsel %vm2821, %v6761, %v6760
  %v6763 = vrot.slane %v6233, 5
  %v6764 = vsel %vm2824, %v6763, %v6762
  %v6765 = vrot.slane %v6234, 4
  %v6766 = vsel %vm2827, %v6765, %v6764
  %v6767 = vrot.slane %v6235, 3
  %v6768 = vsel %vm2830, %v6767, %v6766
  %v6769 = vrot.slane %v6236, 2
  %v6770 = vsel %vm2833, %v6769, %v6768
  %v6771 = vrot.slane %v6237, 1
  %v6772 = vsel %vm2815, %v6238, %v6771
  %v6773 = vrot.slane %v6239, 7
  %v6774 = vsel %vm2818, %v6773, %v6772
  %v6775 = vrot.slane %v6240, 6
  %v6776 = vsel %vm2821, %v6775, %v6774
  %v6777 = vrot.slane %v6241, 5
  %v6778 = vsel %vm2824, %v6777, %v6776
  %v6779 = vrot.slane %v6242, 4
  %v6780 = vsel %vm2827, %v6779, %v6778
  %v6781 = vrot.slane %v6243, 3
  %v6782 = vsel %vm2830, %v6781, %v6780
  %v6783 = vrot.slane %v6244, 2
  %v6784 = vsel %vm2833, %v6783, %v6782
  %v6785 = vrot.slane %v6245, 1
  %v6786 = vsel %vm2815, %v6246, %v6785
  %v6787 = vrot.slane %v6247, 7
  %v6788 = vsel %vm2818, %v6787, %v6786
  %v6789 = vrot.slane %v6248, 6
  %v6790 = vsel %vm2821, %v6789, %v6788
  %v6791 = vrot.slane %v6249, 5
  %v6792 = vsel %vm2824, %v6791, %v6790
  %v6793 = vrot.slane %v6250, 4
  %v6794 = vsel %vm2827, %v6793, %v6792
  %v6795 = vrot.slane %v6251, 3
  %v6796 = vsel %vm2830, %v6795, %v6794
  %v6797 = vrot.slane %v6252, 2
  %v6798 = vsel %vm2833, %v6797, %v6796
  %v6799 = vrot.slane %v6253, 1
  %v6800 = vsel %vm2815, %v6254, %v6799
  %v6801 = vrot.slane %v6255, 7
  %v6802 = vsel %vm2818, %v6801, %v6800
  %v6803 = vrot.slane %v6256, 6
  %v6804 = vsel %vm2821, %v6803, %v6802
  %v6805 = vrot.slane %v6257, 5
  %v6806 = vsel %vm2824, %v6805, %v6804
  %v6807 = vrot.slane %v6258, 4
  %v6808 = vsel %vm2827, %v6807, %v6806
  %v6809 = vrot.slane %v6259, 3
  %v6810 = vsel %vm2830, %v6809, %v6808
  %v6811 = vrot.slane %v6260, 2
  %v6812 = vsel %vm2833, %v6811, %v6810
  %v6813 = vrot.slane %v6261, 1
  %v6814 = vsel %vm2815, %v6262, %v6813
  %v6815 = vrot.slane %v6263, 7
  %v6816 = vsel %vm2818, %v6815, %v6814
  %v6817 = vrot.slane %v6264, 6
  %v6818 = vsel %vm2821, %v6817, %v6816
  %v6819 = vrot.slane %v6265, 5
  %v6820 = vsel %vm2824, %v6819, %v6818
  %v6821 = vrot.slane %v6266, 4
  %v6822 = vsel %vm2827, %v6821, %v6820
  %v6823 = vrot.slane %v6267, 3
  %v6824 = vsel %vm2830, %v6823, %v6822
  %v6825 = vrot.slane %v6268, 2
  %v6826 = vsel %vm2833, %v6825, %v6824
  %v6827 = vrot.slane %v6269, 1
  %v6828 = vsel %vm2815, %v6270, %v6827
  %v6829 = vrot.slane %v6271, 7
  %v6830 = vsel %vm2818, %v6829, %v6828
  %v6831 = vrot.slane %v6272, 6
  %v6832 = vsel %vm2821, %v6831, %v6830
  %v6833 = vrot.slane %v6273, 5
  %v6834 = vsel %vm2824, %v6833, %v6832
  %v6835 = vrot.slane %v6274, 4
  %v6836 = vsel %vm2827, %v6835, %v6834
  %v6837 = vrot.slane %v6275, 3
  %v6838 = vsel %vm2830, %v6837, %v6836
  %v6839 = vrot.slane %v6276, 2
  %v6840 = vsel %vm2833, %v6839, %v6838
  %v6841 = vrot.slane %v6277, 1
  %v6842 = vsel %vm2815, %v6278, %v6841
  %v6843 = vrot.slane %v6279, 7
  %v6844 = vsel %vm2818, %v6843, %v6842
  %v6845 = vrot.slane %v6280, 6
  %v6846 = vsel %vm2821, %v6845, %v6844
  %v6847 = vrot.slane %v6281, 5
  %v6848 = vsel %vm2824, %v6847, %v6846
  %v6849 = vrot.slane %v6282, 4
  %v6850 = vsel %vm2827, %v6849, %v6848
  %v6851 = vrot.slane %v6283, 3
  %v6852 = vsel %vm2830, %v6851, %v6850
  %v6853 = vrot.slane %v6284, 2
  %v6854 = vsel %vm2833, %v6853, %v6852
  %v6855 = vrot.slane %v6285, 1
  %v6856 = vsel %vm2815, %v6286, %v6855
  %v6857 = vrot.slane %v6287, 7
  %v6858 = vsel %vm2818, %v6857, %v6856
  %v6859 = vrot.slane %v6288, 6
  %v6860 = vsel %vm2821, %v6859, %v6858
  %v6861 = vrot.slane %v6289, 5
  %v6862 = vsel %vm2824, %v6861, %v6860
  %v6863 = vrot.slane %v6290, 4
  %v6864 = vsel %vm2827, %v6863, %v6862
  %v6865 = vrot.slane %v6291, 3
  %v6866 = vsel %vm2830, %v6865, %v6864
  %v6867 = vrot.slane %v6292, 2
  %v6868 = vsel %vm2833, %v6867, %v6866
  %v6869 = vrot.slane %v6293, 1
  %v6870 = vsel %vm2815, %v6294, %v6869
  %v6871 = vrot.slane %v6295, 7
  %v6872 = vsel %vm2818, %v6871, %v6870
  %v6873 = vrot.slane %v6296, 6
  %v6874 = vsel %vm2821, %v6873, %v6872
  %v6875 = vrot.slane %v6297, 5
  %v6876 = vsel %vm2824, %v6875, %v6874
  %v6877 = vrot.slane %v6298, 4
  %v6878 = vsel %vm2827, %v6877, %v6876
  %v6879 = vrot.slane %v6299, 3
  %v6880 = vsel %vm2830, %v6879, %v6878
  %v6881 = vrot.slane %v6300, 2
  %v6882 = vsel %vm2833, %v6881, %v6880
  %v6883 = vrot.slane %v6301, 1
  %v6884 = vsel %vm2815, %v6302, %v6883
  %v6885 = vrot.slane %v6303, 7
  %v6886 = vsel %vm2818, %v6885, %v6884
  %v6887 = vrot.slane %v6304, 6
  %v6888 = vsel %vm2821, %v6887, %v6886
  %v6889 = vrot.slane %v6305, 5
  %v6890 = vsel %vm2824, %v6889, %v6888
  %v6891 = vrot.slane %v6306, 4
  %v6892 = vsel %vm2827, %v6891, %v6890
  %v6893 = vrot.slane %v6307, 3
  %v6894 = vsel %vm2830, %v6893, %v6892
  %v6895 = vrot.slane %v6308, 2
  %v6896 = vsel %vm2833, %v6895, %v6894
  %v6897 = vrot.slane %v6309, 1
  %v6898 = vsel %vm2815, %v6310, %v6897
  %v6899 = vrot.slane %v6311, 7
  %v6900 = vsel %vm2818, %v6899, %v6898
  %v6901 = vrot.slane %v6312, 6
  %v6902 = vsel %vm2821, %v6901, %v6900
  %v6903 = vrot.slane %v6313, 5
  %v6904 = vsel %vm2824, %v6903, %v6902
  %v6905 = vrot.slane %v6314, 4
  %v6906 = vsel %vm2827, %v6905, %v6904
  %v6907 = vrot.slane %v6315, 3
  %v6908 = vsel %vm2830, %v6907, %v6906
  %v6909 = vrot.slane %v6316, 2
  %v6910 = vsel %vm2833, %v6909, %v6908
  %v6911 = vrot.slane %v6317, 1
  %v6912 = vsel %vm2815, %v6318, %v6911
  %v6913 = vrot.slane %v6319, 7
  %v6914 = vsel %vm2818, %v6913, %v6912
  %v6915 = vrot.slane %v6320, 6
  %v6916 = vsel %vm2821, %v6915, %v6914
  %v6917 = vrot.slane %v6321, 5
  %v6918 = vsel %vm2824, %v6917, %v6916
  %v6919 = vrot.slane %v6322, 4
  %v6920 = vsel %vm2827, %v6919, %v6918
  %v6921 = vrot.slane %v6323, 3
  %v6922 = vsel %vm2830, %v6921, %v6920
  %v6923 = vrot.slane %v6324, 2
  %v6924 = vsel %vm2833, %v6923, %v6922
  %v6925 = vrot.slane %v6325, 1
  %v6926 = vsel %vm2815, %v6326, %v6925
  %v6927 = vrot.slane %v6327, 7
  %v6928 = vsel %vm2818, %v6927, %v6926
  %v6929 = vrot.slane %v6328, 6
  %v6930 = vsel %vm2821, %v6929, %v6928
  %v6931 = vrot.slane %v6329, 5
  %v6932 = vsel %vm2824, %v6931, %v6930
  %v6933 = vrot.slane %v6330, 4
  %v6934 = vsel %vm2827, %v6933, %v6932
  %v6935 = vrot.slane %v6331, 3
  %v6936 = vsel %vm2830, %v6935, %v6934
  %v6937 = vrot.slane %v6332, 2
  %v6938 = vsel %vm2833, %v6937, %v6936
  %v6939 = vrot.slane %v6333, 1
  %v6940 = vsel %vm2815, %v6334, %v6939
  %v6941 = vrot.slane %v6335, 7
  %v6942 = vsel %vm2818, %v6941, %v6940
  %v6943 = vrot.slane %v6336, 6
  %v6944 = vsel %vm2821, %v6943, %v6942
  %v6945 = vrot.slane %v6337, 5
  %v6946 = vsel %vm2824, %v6945, %v6944
  %v6947 = vrot.slane %v6338, 4
  %v6948 = vsel %vm2827, %v6947, %v6946
  %v6949 = vrot.slane %v6339, 3
  %v6950 = vsel %vm2830, %v6949, %v6948
  %v6951 = vrot.slane %v6340, 2
  %v6952 = vsel %vm2833, %v6951, %v6950
  %v6953 = vrot.slane %v6341, 1
  %v6954 = vsel %vm2815, %v6342, %v6953
  %v6955 = vrot.slane %v6343, 7
  %v6956 = vsel %vm2818, %v6955, %v6954
  %v6957 = vrot.slane %v6344, 6
  %v6958 = vsel %vm2821, %v6957, %v6956
  %v6959 = vrot.slane %v6345, 5
  %v6960 = vsel %vm2824, %v6959, %v6958
  %v6961 = vrot.slane %v6346, 4
  %v6962 = vsel %vm2827, %v6961, %v6960
  %v6963 = vrot.slane %v6347, 3
  %v6964 = vsel %vm2830, %v6963, %v6962
  %v6965 = vrot.slane %v6348, 2
  %v6966 = vsel %vm2833, %v6965, %v6964
  %v6967 = vrot.slane %v6349, 1
  %v6968 = vsel %vm2815, %v6350, %v6967
  %v6969 = vrot.slane %v6351, 7
  %v6970 = vsel %vm2818, %v6969, %v6968
  %v6971 = vrot.slane %v6352, 6
  %v6972 = vsel %vm2821, %v6971, %v6970
  %v6973 = vrot.slane %v6353, 5
  %v6974 = vsel %vm2824, %v6973, %v6972
  %v6975 = vrot.slane %v6354, 4
  %v6976 = vsel %vm2827, %v6975, %v6974
  %v6977 = vrot.slane %v6355, 3
  %v6978 = vsel %vm2830, %v6977, %v6976
  %v6979 = vrot.slane %v6356, 2
  %v6980 = vsel %vm2833, %v6979, %v6978
  %v6981 = vpack.c.b16 %v6770, %v6770
  %v6982 = vpack.c.b16 %v6784, %v6784
  %v6983 = vpack.c.b16 %v6798, %v6798
  %v6984 = vpack.c.b16 %v6812, %v6812
  %v6985 = vpack.c.b16 %v6826, %v6826
  %v6986 = vpack.c.b16 %v6840, %v6840
  %v6987 = vpack.c.b16 %v6854, %v6854
  %v6988 = vpack.c.b16 %v6868, %v6868
  %v6989 = vpack.c.b16 %v6882, %v6882
  %v6990 = vpack.c.b16 %v6896, %v6896
  %v6991 = vpack.c.b16 %v6910, %v6910
  %v6992 = vpack.c.b16 %v6924, %v6924
  %v6993 = vpack.c.b16 %v6938, %v6938
  %v6994 = vpack.c.b16 %v6952, %v6952
  %v6995 = vpack.c.b16 %v6966, %v6966
  %v6996 = vpack.c.b16 %v6980, %v6980
  %v6998 = vshrl.u32 %v6981, 16
  %v7000 = vrot.slane %v6998, 7
  %v7001 = vshll.u32 %v6981, 16
  %v7003 = vor.u32 %v7000, %v7001
  %v7005 = vshrl.u32 %v6982, 16
  %v7007 = vrot.slane %v7005, 7
  %v7008 = vshll.u32 %v6982, 16
  %v7010 = vor.u32 %v7007, %v7008
  %v7012 = vshrl.u32 %v6983, 16
  %v7014 = vrot.slane %v7012, 7
  %v7015 = vshll.u32 %v6983, 16
  %v7017 = vor.u32 %v7014, %v7015
  %v7019 = vshrl.u32 %v6984, 16
  %v7021 = vrot.slane %v7019, 7
  %v7022 = vshll.u32 %v6984, 16
  %v7024 = vor.u32 %v7021, %v7022
  %v7026 = vshrl.u32 %v6985, 16
  %v7028 = vrot.slane %v7026, 7
  %v7029 = vshll.u32 %v6985, 16
  %v7031 = vor.u32 %v7028, %v7029
  %v7033 = vshrl.u32 %v6986, 16
  %v7035 = vrot.slane %v7033, 7
  %v7036 = vshll.u32 %v6986, 16
  %v7038 = vor.u32 %v7035, %v7036
  %v7040 = vshrl.u32 %v6987, 16
  %v7042 = vrot.slane %v7040, 7
  %v7043 = vshll.u32 %v6987, 16
  %v7045 = vor.u32 %v7042, %v7043
  %v7047 = vshrl.u32 %v6988, 16
  %v7049 = vrot.slane %v7047, 7
  %v7050 = vshll.u32 %v6988, 16
  %v7052 = vor.u32 %v7049, %v7050
  %v7054 = vshrl.u32 %v6989, 16
  %v7056 = vrot.slane %v7054, 7
  %v7057 = vshll.u32 %v6989, 16
  %v7059 = vor.u32 %v7056, %v7057
  %v7061 = vshrl.u32 %v6990, 16
  %v7063 = vrot.slane %v7061, 7
  %v7064 = vshll.u32 %v6990, 16
  %v7066 = vor.u32 %v7063, %v7064
  %v7068 = vshrl.u32 %v6991, 16
  %v7070 = vrot.slane %v7068, 7
  %v7071 = vshll.u32 %v6991, 16
  %v7073 = vor.u32 %v7070, %v7071
  %v7075 = vshrl.u32 %v6992, 16
  %v7077 = vrot.slane %v7075, 7
  %v7078 = vshll.u32 %v6992, 16
  %v7080 = vor.u32 %v7077, %v7078
  %v7082 = vshrl.u32 %v6993, 16
  %v7084 = vrot.slane %v7082, 7
  %v7085 = vshll.u32 %v6993, 16
  %v7087 = vor.u32 %v7084, %v7085
  %v7089 = vshrl.u32 %v6994, 16
  %v7091 = vrot.slane %v7089, 7
  %v7092 = vshll.u32 %v6994, 16
  %v7094 = vor.u32 %v7091, %v7092
  %v7096 = vshrl.u32 %v6995, 16
  %v7098 = vrot.slane %v7096, 7
  %v7099 = vshll.u32 %v6995, 16
  %v7101 = vor.u32 %v7098, %v7099
  %v7103 = vshrl.u32 %v6996, 16
  %v7105 = vrot.slane %v7103, 7
  %v7106 = vshll.u32 %v6996, 16
  %v7108 = vor.u32 %v7105, %v7106
  %v7125 = vsel %vm3199, 0, %v7003
  %v7126 = vsel %vm3199, 0, %v7010
  %v7127 = vsel %vm3199, 0, %v7017
  %v7128 = vsel %vm3199, 0, %v7024
  %v7129 = vsel %vm3199, 0, %v7031
  %v7130 = vsel %vm3199, 0, %v7038
  %v7131 = vsel %vm3199, 0, %v7045
  %v7132 = vsel %vm3199, 0, %v7052
  %v7133 = vsel %vm3199, 0, %v7059
  %v7134 = vsel %vm3199, 0, %v7066
  %v7135 = vsel %vm3199, 0, %v7073
  %v7136 = vsel %vm3199, 0, %v7080
  %v7137 = vsel %vm3199, 0, %v7087
  %v7138 = vsel %vm3199, 0, %v7094
  %v7139 = vsel %vm3199, 0, %v7101
  %v7140 = vsel %vm3199, 0, %v7108
  %v7141 = vsel %vm3219, %v7125, 0
  %v7142 = vsel %vm3219, %v7126, 0
  %v7143 = vsel %vm3219, %v7127, 0
  %v7144 = vsel %vm3219, %v7128, 0
  %v7145 = vsel %vm3219, %v7129, 0
  %v7146 = vsel %vm3219, %v7130, 0
  %v7147 = vsel %vm3219, %v7131, 0
  %v7148 = vsel %vm3219, %v7132, 0
  %v7149 = vsel %vm3219, %v7133, 0
  %v7150 = vsel %vm3219, %v7134, 0
  %v7151 = vsel %vm3219, %v7135, 0
  %v7152 = vsel %vm3219, %v7136, 0
  %v7153 = vsel %vm3219, %v7137, 0
  %v7154 = vsel %vm3219, %v7138, 0
  %v7155 = vsel %vm3219, %v7139, 0
  %v7156 = vsel %vm3219, %v7140, 0
  %v7158 = vshrl.u32 %v3228, 16
  %v7160 = vshll.u32 %v3228, 16
  %v7162 = vrot.slane %v7160, 1
  %v7163 = vor.u32 %v7158, %v7162
  %v7165 = vshrl.u32 %v6741, 16
  %v7167 = vshll.u32 %v6741, 16
  %v7169 = vrot.slane %v7167, 1
  %v7170 = vor.u32 %v7165, %v7169
  %v7172 = vshrl.u32 %v6742, 16
  %v7174 = vshll.u32 %v6742, 16
  %v7176 = vrot.slane %v7174, 1
  %v7177 = vor.u32 %v7172, %v7176
  %v7179 = vshrl.u32 %v6743, 16
  %v7181 = vshll.u32 %v6743, 16
  %v7183 = vrot.slane %v7181, 1
  %v7184 = vor.u32 %v7179, %v7183
  %v7186 = vshrl.u32 %v6744, 16
  %v7188 = vshll.u32 %v6744, 16
  %v7190 = vrot.slane %v7188, 1
  %v7191 = vor.u32 %v7186, %v7190
  %v7193 = vshrl.u32 %v6745, 16
  %v7195 = vshll.u32 %v6745, 16
  %v7197 = vrot.slane %v7195, 1
  %v7198 = vor.u32 %v7193, %v7197
  %v7200 = vshrl.u32 %v6746, 16
  %v7202 = vshll.u32 %v6746, 16
  %v7204 = vrot.slane %v7202, 1
  %v7205 = vor.u32 %v7200, %v7204
  %v7207 = vshrl.u32 %v6747, 16
  %v7209 = vshll.u32 %v6747, 16
  %v7211 = vrot.slane %v7209, 1
  %v7212 = vor.u32 %v7207, %v7211
  %v7214 = vshrl.u32 %v6749, 16
  %v7216 = vshll.u32 %v6749, 16
  %v7218 = vrot.slane %v7216, 1
  %v7219 = vor.u32 %v7214, %v7218
  %v7221 = vshrl.u32 %v6750, 16
  %v7223 = vshll.u32 %v6750, 16
  %v7225 = vrot.slane %v7223, 1
  %v7226 = vor.u32 %v7221, %v7225
  %v7228 = vshrl.u32 %v6751, 16
  %v7230 = vshll.u32 %v6751, 16
  %v7232 = vrot.slane %v7230, 1
  %v7233 = vor.u32 %v7228, %v7232
  %v7235 = vshrl.u32 %v6752, 16
  %v7237 = vshll.u32 %v6752, 16
  %v7239 = vrot.slane %v7237, 1
  %v7240 = vor.u32 %v7235, %v7239
  %v7242 = vshrl.u32 %v6753, 16
  %v7244 = vshll.u32 %v6753, 16
  %v7246 = vrot.slane %v7244, 1
  %v7247 = vor.u32 %v7242, %v7246
  %v7249 = vshrl.u32 %v6754, 16
  %v7251 = vshll.u32 %v6754, 16
  %v7253 = vrot.slane %v7251, 1
  %v7254 = vor.u32 %v7249, %v7253
  %v7256 = vshrl.u32 %v6755, 16
  %v7258 = vshll.u32 %v6755, 16
  %v7260 = vrot.slane %v7258, 1
  %v7261 = vor.u32 %v7256, %v7260
  %7262 = vrot.lane.b32.xlu0 %v7163, 64
  %v7263 = vpop.permute.xlu0 %7262
  %7264 = vrot.lane.b32.xlu0 %v7170, 64
  %v7265 = vpop.permute.xlu0 %7264
  %7266 = vrot.lane.b32.xlu0 %v7177, 64
  %v7267 = vpop.permute.xlu0 %7266
  %7268 = vrot.lane.b32.xlu0 %v7184, 64
  %v7269 = vpop.permute.xlu0 %7268
  %7270 = vrot.lane.b32.xlu0 %v7191, 64
  %v7271 = vpop.permute.xlu0 %7270
  %7272 = vrot.lane.b32.xlu0 %v7198, 64
  %v7273 = vpop.permute.xlu0 %7272
  %7274 = vrot.lane.b32.xlu0 %v7205, 64
  %v7275 = vpop.permute.xlu0 %7274
  %7276 = vrot.lane.b32.xlu0 %v7212, 64
  %v7277 = vpop.permute.xlu0 %7276
  %7278 = vrot.lane.b32.xlu0 %v7219, 64
  %v7279 = vpop.permute.xlu0 %7278
  %7280 = vrot.lane.b32.xlu0 %v7226, 64
  %v7281 = vpop.permute.xlu0 %7280
  %7282 = vrot.lane.b32.xlu0 %v7233, 64
  %v7283 = vpop.permute.xlu0 %7282
  %7284 = vrot.lane.b32.xlu0 %v7240, 64
  %v7285 = vpop.permute.xlu0 %7284
  %7286 = vrot.lane.b32.xlu0 %v7247, 64
  %v7287 = vpop.permute.xlu0 %7286
  %7288 = vrot.lane.b32.xlu0 %v7254, 64
  %v7289 = vpop.permute.xlu0 %7288
  %7290 = vrot.lane.b32.xlu0 %v7261, 64
  %v7291 = vpop.permute.xlu0 %7290
  %v7293 = vshrl.u32 %v7141, 16
  %v7295 = vshll.u32 %v7141, 16
  %v7297 = vrot.slane %v7295, 1
  %v7298 = vor.u32 %v7293, %v7297
  %v7300 = vshrl.u32 %v7142, 16
  %v7302 = vshll.u32 %v7142, 16
  %v7304 = vrot.slane %v7302, 1
  %v7305 = vor.u32 %v7300, %v7304
  %v7307 = vshrl.u32 %v7143, 16
  %v7309 = vshll.u32 %v7143, 16
  %v7311 = vrot.slane %v7309, 1
  %v7312 = vor.u32 %v7307, %v7311
  %v7314 = vshrl.u32 %v7144, 16
  %v7316 = vshll.u32 %v7144, 16
  %v7318 = vrot.slane %v7316, 1
  %v7319 = vor.u32 %v7314, %v7318
  %v7321 = vshrl.u32 %v7145, 16
  %v7323 = vshll.u32 %v7145, 16
  %v7325 = vrot.slane %v7323, 1
  %v7326 = vor.u32 %v7321, %v7325
  %v7328 = vshrl.u32 %v7146, 16
  %v7330 = vshll.u32 %v7146, 16
  %v7332 = vrot.slane %v7330, 1
  %v7333 = vor.u32 %v7328, %v7332
  %v7335 = vshrl.u32 %v7147, 16
  %v7337 = vshll.u32 %v7147, 16
  %v7339 = vrot.slane %v7337, 1
  %v7340 = vor.u32 %v7335, %v7339
  %v7342 = vshrl.u32 %v7149, 16
  %v7344 = vshll.u32 %v7149, 16
  %v7346 = vrot.slane %v7344, 1
  %v7347 = vor.u32 %v7342, %v7346
  %v7349 = vshrl.u32 %v7150, 16
  %v7351 = vshll.u32 %v7150, 16
  %v7353 = vrot.slane %v7351, 1
  %v7354 = vor.u32 %v7349, %v7353
  %v7356 = vshrl.u32 %v7151, 16
  %v7358 = vshll.u32 %v7151, 16
  %v7360 = vrot.slane %v7358, 1
  %v7361 = vor.u32 %v7356, %v7360
  %v7363 = vshrl.u32 %v7152, 16
  %v7365 = vshll.u32 %v7152, 16
  %v7367 = vrot.slane %v7365, 1
  %v7368 = vor.u32 %v7363, %v7367
  %v7370 = vshrl.u32 %v7153, 16
  %v7372 = vshll.u32 %v7153, 16
  %v7374 = vrot.slane %v7372, 1
  %v7375 = vor.u32 %v7370, %v7374
  %v7377 = vshrl.u32 %v7154, 16
  %v7379 = vshll.u32 %v7154, 16
  %v7381 = vrot.slane %v7379, 1
  %v7382 = vor.u32 %v7377, %v7381
  %v7384 = vshrl.u32 %v7155, 16
  %v7386 = vshll.u32 %v7155, 16
  %v7388 = vrot.slane %v7386, 1
  %v7389 = vor.u32 %v7384, %v7388
  %v7405 = vrot.slane %v3228, 1
  %v7406 = vrot.slane %v6741, 1
  %v7407 = vrot.slane %v6742, 1
  %v7408 = vrot.slane %v6743, 1
  %v7409 = vrot.slane %v6744, 1
  %v7410 = vrot.slane %v6745, 1
  %v7411 = vrot.slane %v6746, 1
  %v7412 = vrot.slane %v6747, 1
  %v7413 = vrot.slane %v6749, 1
  %v7414 = vrot.slane %v6750, 1
  %v7415 = vrot.slane %v6751, 1
  %v7416 = vrot.slane %v6752, 1
  %v7417 = vrot.slane %v6753, 1
  %v7418 = vrot.slane %v6754, 1
  %v7419 = vrot.slane %v6755, 1
  %7420 = vrot.lane.b32.xlu0 %v7405, 64
  %v7421 = vpop.permute.xlu0 %7420
  %7422 = vrot.lane.b32.xlu0 %v7406, 64
  %v7423 = vpop.permute.xlu0 %7422
  %7424 = vrot.lane.b32.xlu0 %v7407, 64
  %v7425 = vpop.permute.xlu0 %7424
  %7426 = vrot.lane.b32.xlu0 %v7408, 64
  %v7427 = vpop.permute.xlu0 %7426
  %7428 = vrot.lane.b32.xlu0 %v7409, 64
  %v7429 = vpop.permute.xlu0 %7428
  %7430 = vrot.lane.b32.xlu0 %v7410, 64
  %v7431 = vpop.permute.xlu0 %7430
  %7432 = vrot.lane.b32.xlu0 %v7411, 64
  %v7433 = vpop.permute.xlu0 %7432
  %7434 = vrot.lane.b32.xlu0 %v7412, 64
  %v7435 = vpop.permute.xlu0 %7434
  %7436 = vrot.lane.b32.xlu0 %v7413, 64
  %v7437 = vpop.permute.xlu0 %7436
  %7438 = vrot.lane.b32.xlu0 %v7414, 64
  %v7439 = vpop.permute.xlu0 %7438
  %7440 = vrot.lane.b32.xlu0 %v7415, 64
  %v7441 = vpop.permute.xlu0 %7440
  %7442 = vrot.lane.b32.xlu0 %v7416, 64
  %v7443 = vpop.permute.xlu0 %7442
  %7444 = vrot.lane.b32.xlu0 %v7417, 64
  %v7445 = vpop.permute.xlu0 %7444
  %7446 = vrot.lane.b32.xlu0 %v7418, 64
  %v7447 = vpop.permute.xlu0 %7446
  %7448 = vrot.lane.b32.xlu0 %v7419, 64
  %v7449 = vpop.permute.xlu0 %7448
  %v7451 = vshrl.u32 %v3220, 16
  %v7453 = vshll.u32 %v3220, 16
  %v7455 = vrot.slane %v7453, 1
  %v7456 = vor.u32 %v7451, %v7455
  %v7458 = vshrl.u32 %v3221, 16
  %v7460 = vshll.u32 %v3221, 16
  %v7462 = vrot.slane %v7460, 1
  %v7463 = vor.u32 %v7458, %v7462
  %v7465 = vshrl.u32 %v3222, 16
  %v7467 = vshll.u32 %v3222, 16
  %v7469 = vrot.slane %v7467, 1
  %v7470 = vor.u32 %v7465, %v7469
  %v7472 = vshrl.u32 %v3223, 16
  %v7474 = vshll.u32 %v3223, 16
  %v7476 = vrot.slane %v7474, 1
  %v7477 = vor.u32 %v7472, %v7476
  %v7479 = vshrl.u32 %v3224, 16
  %v7481 = vshll.u32 %v3224, 16
  %v7483 = vrot.slane %v7481, 1
  %v7484 = vor.u32 %v7479, %v7483
  %v7486 = vshrl.u32 %v3225, 16
  %v7488 = vshll.u32 %v3225, 16
  %v7490 = vrot.slane %v7488, 1
  %v7491 = vor.u32 %v7486, %v7490
  %v7493 = vshrl.u32 %v3226, 16
  %v7495 = vshll.u32 %v3226, 16
  %v7497 = vrot.slane %v7495, 1
  %v7498 = vor.u32 %v7493, %v7497
  %v7500 = vshrl.u32 %v3227, 16
  %v7502 = vshll.u32 %v3227, 16
  %v7504 = vrot.slane %v7502, 1
  %v7505 = vor.u32 %v7500, %v7504
  %v7507 = vshrl.u32 %v3229, 16
  %v7509 = vshll.u32 %v3229, 16
  %v7511 = vrot.slane %v7509, 1
  %v7512 = vor.u32 %v7507, %v7511
  %v7514 = vshrl.u32 %v3230, 16
  %v7516 = vshll.u32 %v3230, 16
  %v7518 = vrot.slane %v7516, 1
  %v7519 = vor.u32 %v7514, %v7518
  %v7521 = vshrl.u32 %v3231, 16
  %v7523 = vshll.u32 %v3231, 16
  %v7525 = vrot.slane %v7523, 1
  %v7526 = vor.u32 %v7521, %v7525
  %v7528 = vshrl.u32 %v3232, 16
  %v7530 = vshll.u32 %v3232, 16
  %v7532 = vrot.slane %v7530, 1
  %v7533 = vor.u32 %v7528, %v7532
  %v7535 = vshrl.u32 %v3233, 16
  %v7537 = vshll.u32 %v3233, 16
  %v7539 = vrot.slane %v7537, 1
  %v7540 = vor.u32 %v7535, %v7539
  %v7542 = vshrl.u32 %v3234, 16
  %v7544 = vshll.u32 %v3234, 16
  %v7546 = vrot.slane %v7544, 1
  %v7547 = vor.u32 %v7542, %v7546
  %v7549 = vshrl.u32 %v3235, 16
  %v7551 = vshll.u32 %v3235, 16
  %v7553 = vrot.slane %v7551, 1
  %v7554 = vor.u32 %v7549, %v7553
  %v7556 = vshrl.u32 %v3236, 16
  %v7558 = vshll.u32 %v3236, 16
  %v7560 = vrot.slane %v7558, 1
  %v7561 = vor.u32 %v7556, %v7560
  %7562 = vrot.lane.b32.xlu0 %v7456, 64
  %v7563 = vpop.permute.xlu0 %7562
  %7564 = vrot.lane.b32.xlu0 %v7463, 64
  %v7565 = vpop.permute.xlu0 %7564
  %7566 = vrot.lane.b32.xlu0 %v7470, 64
  %v7567 = vpop.permute.xlu0 %7566
  %7568 = vrot.lane.b32.xlu0 %v7477, 64
  %v7569 = vpop.permute.xlu0 %7568
  %7570 = vrot.lane.b32.xlu0 %v7484, 64
  %v7571 = vpop.permute.xlu0 %7570
  %7572 = vrot.lane.b32.xlu0 %v7491, 64
  %v7573 = vpop.permute.xlu0 %7572
  %7574 = vrot.lane.b32.xlu0 %v7498, 64
  %v7575 = vpop.permute.xlu0 %7574
  %7576 = vrot.lane.b32.xlu0 %v7505, 64
  %v7577 = vpop.permute.xlu0 %7576
  %7578 = vrot.lane.b32.xlu0 %v7512, 64
  %v7579 = vpop.permute.xlu0 %7578
  %7580 = vrot.lane.b32.xlu0 %v7519, 64
  %v7581 = vpop.permute.xlu0 %7580
  %7582 = vrot.lane.b32.xlu0 %v7526, 64
  %v7583 = vpop.permute.xlu0 %7582
  %7584 = vrot.lane.b32.xlu0 %v7533, 64
  %v7585 = vpop.permute.xlu0 %7584
  %7586 = vrot.lane.b32.xlu0 %v7540, 64
  %v7587 = vpop.permute.xlu0 %7586
  %7588 = vrot.lane.b32.xlu0 %v7547, 64
  %v7589 = vpop.permute.xlu0 %7588
  %7590 = vrot.lane.b32.xlu0 %v7554, 64
  %v7591 = vpop.permute.xlu0 %7590
  %7592 = vrot.lane.b32.xlu0 %v7561, 64
  %v7593 = vpop.permute.xlu0 %7592
  %v7595 = vshrl.u32 %v3621, 16
  %v7597 = vshll.u32 %v3621, 16
  %v7599 = vrot.slane %v7597, 1
  %v7600 = vor.u32 %v7595, %v7599
  %v7602 = vshrl.u32 %v3622, 16
  %v7604 = vshll.u32 %v3622, 16
  %v7606 = vrot.slane %v7604, 1
  %v7607 = vor.u32 %v7602, %v7606
  %v7609 = vshrl.u32 %v3623, 16
  %v7611 = vshll.u32 %v3623, 16
  %v7613 = vrot.slane %v7611, 1
  %v7614 = vor.u32 %v7609, %v7613
  %v7616 = vshrl.u32 %v3624, 16
  %v7618 = vshll.u32 %v3624, 16
  %v7620 = vrot.slane %v7618, 1
  %v7621 = vor.u32 %v7616, %v7620
  %v7623 = vshrl.u32 %v3625, 16
  %v7625 = vshll.u32 %v3625, 16
  %v7627 = vrot.slane %v7625, 1
  %v7628 = vor.u32 %v7623, %v7627
  %v7630 = vshrl.u32 %v3626, 16
  %v7632 = vshll.u32 %v3626, 16
  %v7634 = vrot.slane %v7632, 1
  %v7635 = vor.u32 %v7630, %v7634
  %v7637 = vshrl.u32 %v3627, 16
  %v7639 = vshll.u32 %v3627, 16
  %v7641 = vrot.slane %v7639, 1
  %v7642 = vor.u32 %v7637, %v7641
  %v7644 = vshrl.u32 %v3628, 16
  %v7646 = vshll.u32 %v3628, 16
  %v7648 = vrot.slane %v7646, 1
  %v7649 = vor.u32 %v7644, %v7648
  %v7651 = vshrl.u32 %v3629, 16
  %v7653 = vshll.u32 %v3629, 16
  %v7655 = vrot.slane %v7653, 1
  %v7656 = vor.u32 %v7651, %v7655
  %v7658 = vshrl.u32 %v3630, 16
  %v7660 = vshll.u32 %v3630, 16
  %v7662 = vrot.slane %v7660, 1
  %v7663 = vor.u32 %v7658, %v7662
  %v7665 = vshrl.u32 %v3631, 16
  %v7667 = vshll.u32 %v3631, 16
  %v7669 = vrot.slane %v7667, 1
  %v7670 = vor.u32 %v7665, %v7669
  %v7672 = vshrl.u32 %v3632, 16
  %v7674 = vshll.u32 %v3632, 16
  %v7676 = vrot.slane %v7674, 1
  %v7677 = vor.u32 %v7672, %v7676
  %v7679 = vshrl.u32 %v3633, 16
  %v7681 = vshll.u32 %v3633, 16
  %v7683 = vrot.slane %v7681, 1
  %v7684 = vor.u32 %v7679, %v7683
  %v7686 = vshrl.u32 %v3634, 16
  %v7688 = vshll.u32 %v3634, 16
  %v7690 = vrot.slane %v7688, 1
  %v7691 = vor.u32 %v7686, %v7690
  %v7693 = vshrl.u32 %v3635, 16
  %v7695 = vshll.u32 %v3635, 16
  %v7697 = vrot.slane %v7695, 1
  %v7698 = vor.u32 %v7693, %v7697
  %v7700 = vshrl.u32 %v3636, 16
  %v7702 = vshll.u32 %v3636, 16
  %v7704 = vrot.slane %v7702, 1
  %v7705 = vor.u32 %v7700, %v7704
  %v7722 = vrot.slane %v3220, 1
  %v7723 = vrot.slane %v3221, 1
  %v7724 = vrot.slane %v3222, 1
  %v7725 = vrot.slane %v3223, 1
  %v7726 = vrot.slane %v3224, 1
  %v7727 = vrot.slane %v3225, 1
  %v7728 = vrot.slane %v3226, 1
  %v7729 = vrot.slane %v3227, 1
  %v7730 = vrot.slane %v3229, 1
  %v7731 = vrot.slane %v3230, 1
  %v7732 = vrot.slane %v3231, 1
  %v7733 = vrot.slane %v3232, 1
  %v7734 = vrot.slane %v3233, 1
  %v7735 = vrot.slane %v3234, 1
  %v7736 = vrot.slane %v3235, 1
  %v7737 = vrot.slane %v3236, 1
  %7738 = vrot.lane.b32.xlu0 %v7722, 64
  %v7739 = vpop.permute.xlu0 %7738
  %7740 = vrot.lane.b32.xlu0 %v7723, 64
  %v7741 = vpop.permute.xlu0 %7740
  %7742 = vrot.lane.b32.xlu0 %v7724, 64
  %v7743 = vpop.permute.xlu0 %7742
  %7744 = vrot.lane.b32.xlu0 %v7725, 64
  %v7745 = vpop.permute.xlu0 %7744
  %7746 = vrot.lane.b32.xlu0 %v7726, 64
  %v7747 = vpop.permute.xlu0 %7746
  %7748 = vrot.lane.b32.xlu0 %v7727, 64
  %v7749 = vpop.permute.xlu0 %7748
  %7750 = vrot.lane.b32.xlu0 %v7728, 64
  %v7751 = vpop.permute.xlu0 %7750
  %7752 = vrot.lane.b32.xlu0 %v7729, 64
  %v7753 = vpop.permute.xlu0 %7752
  %7754 = vrot.lane.b32.xlu0 %v7730, 64
  %v7755 = vpop.permute.xlu0 %7754
  %7756 = vrot.lane.b32.xlu0 %v7731, 64
  %v7757 = vpop.permute.xlu0 %7756
  %7758 = vrot.lane.b32.xlu0 %v7732, 64
  %v7759 = vpop.permute.xlu0 %7758
  %7760 = vrot.lane.b32.xlu0 %v7733, 64
  %v7761 = vpop.permute.xlu0 %7760
  %7762 = vrot.lane.b32.xlu0 %v7734, 64
  %v7763 = vpop.permute.xlu0 %7762
  %7764 = vrot.lane.b32.xlu0 %v7735, 64
  %v7765 = vpop.permute.xlu0 %7764
  %7766 = vrot.lane.b32.xlu0 %v7736, 64
  %v7767 = vpop.permute.xlu0 %7766
  %7768 = vrot.lane.b32.xlu0 %v7737, 64
  %v7769 = vpop.permute.xlu0 %7768
  %v7771 = vshrl.u32 %v6748, 16
  %v7773 = vshll.u32 %v6748, 16
  %v7775 = vrot.slane %v7773, 1
  %v7776 = vor.u32 %v7771, %v7775
  %v7778 = vshrl.u32 %v6756, 16
  %v7780 = vshll.u32 %v6756, 16
  %v7782 = vrot.slane %v7780, 1
  %v7783 = vor.u32 %v7778, %v7782
  %7784 = vrot.lane.b32.xlu0 %v7776, 64
  %v7785 = vpop.permute.xlu0 %7784
  %7786 = vrot.lane.b32.xlu0 %v7783, 64
  %v7787 = vpop.permute.xlu0 %7786
  %v7789 = vshrl.u32 %v7148, 16
  %v7791 = vshll.u32 %v7148, 16
  %v7793 = vrot.slane %v7791, 1
  %v7794 = vor.u32 %v7789, %v7793
  %v7796 = vshrl.u32 %v7156, 16
  %v7798 = vshll.u32 %v7156, 16
  %v7800 = vrot.slane %v7798, 1
  %v7801 = vor.u32 %v7796, %v7800
  %v7804 = vrot.slane %v6748, 1
  %v7805 = vrot.slane %v6756, 1
  %7806 = vrot.lane.b32.xlu0 %v7804, 64
  %v7807 = vpop.permute.xlu0 %7806
  %7808 = vrot.lane.b32.xlu0 %v7805, 64
  %v7809 = vpop.permute.xlu0 %7808
  %vm7810 = vcmask 523264
  %v7812 = vsel %vm7810, %v3228, %v7263
  %v7814 = vsel %vm7810, %v7141, %v7265
  %v7816 = vsel %vm7810, %v7142, %v7267
  %v7818 = vsel %vm7810, %v7143, %v7269
  %v7820 = vsel %vm7810, %v7144, %v7271
  %v7822 = vsel %vm7810, %v7145, %v7273
  %v7824 = vsel %vm7810, %v7146, %v7275
  %v7826 = vsel %vm7810, %v7147, %v7277
  %v7828 = vsel %vm7810, %v7149, %v7279
  %v7830 = vsel %vm7810, %v7150, %v7281
  %v7832 = vsel %vm7810, %v7151, %v7283
  %v7834 = vsel %vm7810, %v7152, %v7285
  %v7836 = vsel %vm7810, %v7153, %v7287
  %v7838 = vsel %vm7810, %v7154, %v7289
  %v7840 = vsel %vm7810, %v7155, %v7291
  %v7843 = vsel %vm7810, %v7163, %v7421
  %v7846 = vsel %vm7810, %v7298, %v7423
  %v7849 = vsel %vm7810, %v7305, %v7425
  %v7852 = vsel %vm7810, %v7312, %v7427
  %v7855 = vsel %vm7810, %v7319, %v7429
  %v7858 = vsel %vm7810, %v7326, %v7431
  %v7861 = vsel %vm7810, %v7333, %v7433
  %v7864 = vsel %vm7810, %v7340, %v7435
  %v7867 = vsel %vm7810, %v7347, %v7437
  %v7870 = vsel %vm7810, %v7354, %v7439
  %v7873 = vsel %vm7810, %v7361, %v7441
  %v7876 = vsel %vm7810, %v7368, %v7443
  %v7879 = vsel %vm7810, %v7375, %v7445
  %v7882 = vsel %vm7810, %v7382, %v7447
  %v7885 = vsel %vm7810, %v7389, %v7449
  %v7887 = vsel %vm7810, %v3621, %v7563
  %v7889 = vsel %vm7810, %v3622, %v7565
  %v7891 = vsel %vm7810, %v3623, %v7567
  %v7893 = vsel %vm7810, %v3624, %v7569
  %v7895 = vsel %vm7810, %v3625, %v7571
  %v7897 = vsel %vm7810, %v3626, %v7573
  %v7899 = vsel %vm7810, %v3627, %v7575
  %v7901 = vsel %vm7810, %v3628, %v7577
  %v7903 = vsel %vm7810, %v3629, %v7579
  %v7905 = vsel %vm7810, %v3630, %v7581
  %v7907 = vsel %vm7810, %v3631, %v7583
  %v7909 = vsel %vm7810, %v3632, %v7585
  %v7911 = vsel %vm7810, %v3633, %v7587
  %v7913 = vsel %vm7810, %v3634, %v7589
  %v7915 = vsel %vm7810, %v3635, %v7591
  %v7917 = vsel %vm7810, %v3636, %v7593
  %v7920 = vsel %vm7810, %v7600, %v7739
  %v7923 = vsel %vm7810, %v7607, %v7741
  %v7926 = vsel %vm7810, %v7614, %v7743
  %v7929 = vsel %vm7810, %v7621, %v7745
  %v7932 = vsel %vm7810, %v7628, %v7747
  %v7935 = vsel %vm7810, %v7635, %v7749
  %v7938 = vsel %vm7810, %v7642, %v7751
  %v7941 = vsel %vm7810, %v7649, %v7753
  %v7944 = vsel %vm7810, %v7656, %v7755
  %v7947 = vsel %vm7810, %v7663, %v7757
  %v7950 = vsel %vm7810, %v7670, %v7759
  %v7953 = vsel %vm7810, %v7677, %v7761
  %v7956 = vsel %vm7810, %v7684, %v7763
  %v7959 = vsel %vm7810, %v7691, %v7765
  %v7962 = vsel %vm7810, %v7698, %v7767
  %v7965 = vsel %vm7810, %v7705, %v7769
  %v7967 = vsel %vm7810, %v7148, %v7785
  %v7969 = vsel %vm7810, %v7156, %v7787
  %v7972 = vsel %vm7810, %v7794, %v7807
  %v7975 = vsel %vm7810, %v7801, %v7809
  %v8042 = vunpack.c.l.b16 %v7812
  %v8043 = vunpack.c.l.b16 %v7843
  %v8044 = vunpack.c.l.b16 %v7887
  %v8045 = vunpack.c.l.b16 %v7920
  %v8046 = vunpack.c.l.b16 %v7814
  %v8047 = vunpack.c.l.b16 %v7846
  %v8048 = vunpack.c.l.b16 %v7889
  %v8049 = vunpack.c.l.b16 %v7923
  %v8050 = vunpack.c.l.b16 %v7816
  %v8051 = vunpack.c.l.b16 %v7849
  %v8052 = vunpack.c.l.b16 %v7891
  %v8053 = vunpack.c.l.b16 %v7926
  %v8054 = vunpack.c.l.b16 %v7818
  %v8055 = vunpack.c.l.b16 %v7852
  %v8056 = vunpack.c.l.b16 %v7893
  %v8057 = vunpack.c.l.b16 %v7929
  %v8058 = vunpack.c.l.b16 %v7820
  %v8059 = vunpack.c.l.b16 %v7855
  %v8060 = vunpack.c.l.b16 %v7895
  %v8061 = vunpack.c.l.b16 %v7932
  %v8062 = vunpack.c.l.b16 %v7822
  %v8063 = vunpack.c.l.b16 %v7858
  %v8064 = vunpack.c.l.b16 %v7897
  %v8065 = vunpack.c.l.b16 %v7935
  %v8066 = vunpack.c.l.b16 %v7824
  %v8067 = vunpack.c.l.b16 %v7861
  %v8068 = vunpack.c.l.b16 %v7899
  %v8069 = vunpack.c.l.b16 %v7938
  %v8070 = vunpack.c.l.b16 %v7826
  %v8071 = vunpack.c.l.b16 %v7864
  %v8072 = vunpack.c.l.b16 %v7901
  %v8073 = vunpack.c.l.b16 %v7941
  %v8074 = vunpack.c.l.b16 %v7967
  %v8075 = vunpack.c.l.b16 %v7972
  %v8076 = vunpack.c.l.b16 %v7903
  %v8077 = vunpack.c.l.b16 %v7944
  %v8078 = vunpack.c.l.b16 %v7828
  %v8079 = vunpack.c.l.b16 %v7867
  %v8080 = vunpack.c.l.b16 %v7905
  %v8081 = vunpack.c.l.b16 %v7947
  %v8082 = vunpack.c.l.b16 %v7830
  %v8083 = vunpack.c.l.b16 %v7870
  %v8084 = vunpack.c.l.b16 %v7907
  %v8085 = vunpack.c.l.b16 %v7950
  %v8086 = vunpack.c.l.b16 %v7832
  %v8087 = vunpack.c.l.b16 %v7873
  %v8088 = vunpack.c.l.b16 %v7909
  %v8089 = vunpack.c.l.b16 %v7953
  %v8090 = vunpack.c.l.b16 %v7834
  %v8091 = vunpack.c.l.b16 %v7876
  %v8092 = vunpack.c.l.b16 %v7911
  %v8093 = vunpack.c.l.b16 %v7956
  %v8094 = vunpack.c.l.b16 %v7836
  %v8095 = vunpack.c.l.b16 %v7879
  %v8096 = vunpack.c.l.b16 %v7913
  %v8097 = vunpack.c.l.b16 %v7959
  %v8098 = vunpack.c.l.b16 %v7838
  %v8099 = vunpack.c.l.b16 %v7882
  %v8100 = vunpack.c.l.b16 %v7915
  %v8101 = vunpack.c.l.b16 %v7962
  %v8102 = vunpack.c.l.b16 %v7840
  %v8103 = vunpack.c.l.b16 %v7885
  %v8104 = vunpack.c.l.b16 %v7917
  %v8105 = vunpack.c.l.b16 %v7965
  %v8106 = vunpack.c.l.b16 %v7969
  %v8107 = vunpack.c.l.b16 %v7975
  %v8108 = vld [vmem:[%s1] sm:$0xf]
  %v8109 = vld [vmem:[%s1 + $0x4] sm:$0xf]
  %v8110 = vld [vmem:[%s1 + $0x8] sm:$0xf]
  %v8111 = vld [vmem:[%s1 + $0xc] sm:$0xf]
  %v8112 = vld [vmem:[%s1 + $0x10] sm:$0xf]
  %v8113 = vld [vmem:[%s1 + $0x14] sm:$0xf]
  %v8114 = vld [vmem:[%s1 + $0x18] sm:$0xf]
  %v8115 = vld [vmem:[%s1 + $0x1c] sm:$0xf]
  %v8116 = vld [vmem:[%s1 + $0x20] sm:$0xf]
  %v8117 = vld [vmem:[%s1 + $0x24] sm:$0xf]
  %v8118 = vld [vmem:[%s1 + $0x28] sm:$0xf]
  %v8119 = vld [vmem:[%s1 + $0x2c] sm:$0xf]
  %v8120 = vld [vmem:[%s1 + $0x30] sm:$0xf]
  %v8121 = vld [vmem:[%s1 + $0x34] sm:$0xf]
  %v8122 = vld [vmem:[%s1 + $0x38] sm:$0xf]
  %v8123 = vld [vmem:[%s1 + $0x3c] sm:$0xf]
  %v8124 = vld [vmem:[%s1 + $0x40] sm:$0xf]
  %v8125 = vld [vmem:[%s1 + $0x44] sm:$0xf]
  %v8126 = vld [vmem:[%s1 + $0x48] sm:$0xf]
  %v8127 = vld [vmem:[%s1 + $0x4c] sm:$0xf]
  %v8128 = vld [vmem:[%s1 + $0x50] sm:$0xf]
  %v8129 = vld [vmem:[%s1 + $0x54] sm:$0xf]
  %v8130 = vld [vmem:[%s1 + $0x58] sm:$0xf]
  %v8131 = vld [vmem:[%s1 + $0x5c] sm:$0xf]
  %v8132 = vld [vmem:[%s1 + $0x60] sm:$0xf]
  %v8133 = vld [vmem:[%s1 + $0x64] sm:$0xf]
  %v8134 = vld [vmem:[%s1 + $0x68] sm:$0xf]
  %v8135 = vld [vmem:[%s1 + $0x6c] sm:$0xf]
  %v8136 = vld [vmem:[%s1 + $0x70] sm:$0xf]
  %v8137 = vld [vmem:[%s1 + $0x74] sm:$0xf]
  %v8138 = vld [vmem:[%s1 + $0x78] sm:$0xf]
  %v8139 = vld [vmem:[%s1 + $0x7c] sm:$0xf]
  %v8140 = vld [vmem:[%s1 + $0x80] sm:$0xf]
  %v8141 = vld [vmem:[%s1 + $0x84] sm:$0xf]
  %v8142 = vld [vmem:[%s1 + $0x88] sm:$0xf]
  %v8143 = vld [vmem:[%s1 + $0x8c] sm:$0xf]
  %v8144 = vld [vmem:[%s1 + $0x90] sm:$0xf]
  %v8145 = vld [vmem:[%s1 + $0x94] sm:$0xf]
  %v8146 = vld [vmem:[%s1 + $0x98] sm:$0xf]
  %v8147 = vld [vmem:[%s1 + $0x9c] sm:$0xf]
  %v8148 = vld [vmem:[%s1 + $0xa0] sm:$0xf]
  %v8149 = vld [vmem:[%s1 + $0xa4] sm:$0xf]
  %v8150 = vld [vmem:[%s1 + $0xa8] sm:$0xf]
  %v8151 = vld [vmem:[%s1 + $0xac] sm:$0xf]
  %v8152 = vld [vmem:[%s1 + $0xb0] sm:$0xf]
  %v8153 = vld [vmem:[%s1 + $0xb4] sm:$0xf]
  %v8154 = vld [vmem:[%s1 + $0xb8] sm:$0xf]
  %v8155 = vld [vmem:[%s1 + $0xbc] sm:$0xf]
  %v8156 = vld [vmem:[%s1 + $0xc0] sm:$0xf]
  %v8157 = vld [vmem:[%s1 + $0xc4] sm:$0xf]
  %v8158 = vld [vmem:[%s1 + $0xc8] sm:$0xf]
  %v8159 = vld [vmem:[%s1 + $0xcc] sm:$0xf]
  %v8160 = vld [vmem:[%s1 + $0xd0] sm:$0xf]
  %v8161 = vld [vmem:[%s1 + $0xd4] sm:$0xf]
  %v8162 = vld [vmem:[%s1 + $0xd8] sm:$0xf]
  %v8163 = vld [vmem:[%s1 + $0xdc] sm:$0xf]
  %v8164 = vld [vmem:[%s1 + $0xe0] sm:$0xf]
  %v8165 = vld [vmem:[%s1 + $0xe4] sm:$0xf]
  %v8166 = vld [vmem:[%s1 + $0xe8] sm:$0xf]
  %v8167 = vld [vmem:[%s1 + $0xec] sm:$0xf]
  %v8168 = vld [vmem:[%s1 + $0xf0] sm:$0xf]
  %v8169 = vld [vmem:[%s1 + $0xf4] sm:$0xf]
  %v8170 = vld [vmem:[%s1 + $0xf8] sm:$0xf]
  %v8171 = vld [vmem:[%s1 + $0xfc] sm:$0xf]
  %v8172 = vld [vmem:[%s1 + $0x100] sm:$0xf]
  %v8173 = vld [vmem:[%s1 + $0x104] sm:$0xf]
  %v8174 = vld [vmem:[%s1 + $0x108] sm:$0xf]
  %v8175 = vld [vmem:[%s1 + $0x10c] sm:$0xf]
  %v8176 = vld [vmem:[%s1 + $0x110] sm:$0xf]
  %v8177 = vld [vmem:[%s1 + $0x114] sm:$0xf]
  %v8178 = vld [vmem:[%s1 + $0x118] sm:$0xf]
  %v8179 = vld [vmem:[%s1 + $0x11c] sm:$0xf]
  %v8180 = vld [vmem:[%s1 + $0x120] sm:$0xf]
  %v8181 = vld [vmem:[%s1 + $0x124] sm:$0xf]
  %v8182 = vld [vmem:[%s1 + $0x128] sm:$0xf]
  %v8183 = vld [vmem:[%s1 + $0x12c] sm:$0xf]
  %v8184 = vld [vmem:[%s1 + $0x130] sm:$0xf]
  %v8185 = vld [vmem:[%s1 + $0x134] sm:$0xf]
  %v8186 = vld [vmem:[%s1 + $0x138] sm:$0xf]
  %v8187 = vld [vmem:[%s1 + $0x13c] sm:$0xf]
  %v8188 = vld [vmem:[%s1 + $0x140] sm:$0xf]
  %v8189 = vld [vmem:[%s1 + $0x144] sm:$0xf]
  %v8190 = vld [vmem:[%s1 + $0x148] sm:$0xf]
  %v8191 = vld [vmem:[%s1 + $0x14c] sm:$0xf]
  %v8192 = vld [vmem:[%s1 + $0x150] sm:$0xf]
  %v8193 = vld [vmem:[%s1 + $0x154] sm:$0xf]
  %v8194 = vld [vmem:[%s1 + $0x158] sm:$0xf]
  %v8195 = vld [vmem:[%s1 + $0x15c] sm:$0xf]
  %v8196 = vld [vmem:[%s1 + $0x160] sm:$0xf]
  %v8197 = vld [vmem:[%s1 + $0x164] sm:$0xf]
  %v8198 = vld [vmem:[%s1 + $0x168] sm:$0xf]
  %v8199 = vld [vmem:[%s1 + $0x16c] sm:$0xf]
  %v8200 = vld [vmem:[%s1 + $0x170] sm:$0xf]
  %v8201 = vld [vmem:[%s1 + $0x174] sm:$0xf]
  %v8202 = vld [vmem:[%s1 + $0x178] sm:$0xf]
  %v8203 = vld [vmem:[%s1 + $0x17c] sm:$0xf]
  %v8204 = vld [vmem:[%s1 + $0x180] sm:$0xf]
  %v8205 = vld [vmem:[%s1 + $0x184] sm:$0xf]
  %v8206 = vld [vmem:[%s1 + $0x188] sm:$0xf]
  %v8207 = vld [vmem:[%s1 + $0x18c] sm:$0xf]
  %v8208 = vld [vmem:[%s1 + $0x190] sm:$0xf]
  %v8209 = vld [vmem:[%s1 + $0x194] sm:$0xf]
  %v8210 = vld [vmem:[%s1 + $0x198] sm:$0xf]
  %v8211 = vld [vmem:[%s1 + $0x19c] sm:$0xf]
  %v8212 = vld [vmem:[%s1 + $0x1a0] sm:$0xf]
  %v8213 = vld [vmem:[%s1 + $0x1a4] sm:$0xf]
  %v8214 = vld [vmem:[%s1 + $0x1a8] sm:$0xf]
  %v8215 = vld [vmem:[%s1 + $0x1ac] sm:$0xf]
  %v8216 = vld [vmem:[%s1 + $0x1b0] sm:$0xf]
  %v8217 = vld [vmem:[%s1 + $0x1b4] sm:$0xf]
  %v8218 = vld [vmem:[%s1 + $0x1b8] sm:$0xf]
  %v8219 = vld [vmem:[%s1 + $0x1bc] sm:$0xf]
  %v8220 = vld [vmem:[%s1 + $0x1c0] sm:$0xf]
  %v8221 = vld [vmem:[%s1 + $0x1c4] sm:$0xf]
  %v8222 = vld [vmem:[%s1 + $0x1c8] sm:$0xf]
  %v8223 = vld [vmem:[%s1 + $0x1cc] sm:$0xf]
  %v8224 = vld [vmem:[%s1 + $0x1d0] sm:$0xf]
  %v8225 = vld [vmem:[%s1 + $0x1d4] sm:$0xf]
  %v8226 = vld [vmem:[%s1 + $0x1d8] sm:$0xf]
  %v8227 = vld [vmem:[%s1 + $0x1dc] sm:$0xf]
  %v8228 = vld [vmem:[%s1 + $0x1e0] sm:$0xf]
  %v8229 = vld [vmem:[%s1 + $0x1e4] sm:$0xf]
  %v8230 = vld [vmem:[%s1 + $0x1e8] sm:$0xf]
  %v8231 = vld [vmem:[%s1 + $0x1ec] sm:$0xf]
  %v8232 = vld [vmem:[%s1 + $0x1f0] sm:$0xf]
  %v8233 = vld [vmem:[%s1 + $0x1f4] sm:$0xf]
  %v8234 = vld [vmem:[%s1 + $0x1f8] sm:$0xf]
  %v8235 = vld [vmem:[%s1 + $0x1fc] sm:$0xf]
  %v8236 = vpack.c.b16 %v8046, %v8042
  %v8237 = vpack.c.b16 %v8047, %v8043
  %v8238 = vpack.c.b16 %v8048, %v8044
  %v8239 = vpack.c.b16 %v8049, %v8045
  %v8240 = vpack.c.b16 %v8050, %v8046
  %v8241 = vpack.c.b16 %v8051, %v8047
  %v8242 = vpack.c.b16 %v8052, %v8048
  %v8243 = vpack.c.b16 %v8053, %v8049
  %v8244 = vpack.c.b16 %v8054, %v8050
  %v8245 = vpack.c.b16 %v8055, %v8051
  %v8246 = vpack.c.b16 %v8056, %v8052
  %v8247 = vpack.c.b16 %v8057, %v8053
  %v8248 = vpack.c.b16 %v8058, %v8054
  %v8249 = vpack.c.b16 %v8059, %v8055
  %v8250 = vpack.c.b16 %v8060, %v8056
  %v8251 = vpack.c.b16 %v8061, %v8057
  %v8252 = vpack.c.b16 %v8062, %v8058
  %v8253 = vpack.c.b16 %v8063, %v8059
  %v8254 = vpack.c.b16 %v8064, %v8060
  %v8255 = vpack.c.b16 %v8065, %v8061
  %v8256 = vpack.c.b16 %v8066, %v8062
  %v8257 = vpack.c.b16 %v8067, %v8063
  %v8258 = vpack.c.b16 %v8068, %v8064
  %v8259 = vpack.c.b16 %v8069, %v8065
  %v8260 = vpack.c.b16 %v8070, %v8066
  %v8261 = vpack.c.b16 %v8071, %v8067
  %v8262 = vpack.c.b16 %v8072, %v8068
  %v8263 = vpack.c.b16 %v8073, %v8069
  %v8264 = vpack.c.b16 %v8074, %v8070
  %v8265 = vpack.c.b16 %v8075, %v8071
  %v8266 = vpack.c.b16 %v8042, %v8072
  %v8267 = vpack.c.b16 %v8043, %v8073
  %v8268 = vpack.c.b16 %v8078, %v8042
  %v8269 = vpack.c.b16 %v8079, %v8043
  %v8270 = vpack.c.b16 %v8080, %v8076
  %v8271 = vpack.c.b16 %v8081, %v8077
  %v8272 = vpack.c.b16 %v8082, %v8078
  %v8273 = vpack.c.b16 %v8083, %v8079
  %v8274 = vpack.c.b16 %v8084, %v8080
  %v8275 = vpack.c.b16 %v8085, %v8081
  %v8276 = vpack.c.b16 %v8086, %v8082
  %v8277 = vpack.c.b16 %v8087, %v8083
  %v8278 = vpack.c.b16 %v8088, %v8084
  %v8279 = vpack.c.b16 %v8089, %v8085
  %v8280 = vpack.c.b16 %v8090, %v8086
  %v8281 = vpack.c.b16 %v8091, %v8087
  %v8282 = vpack.c.b16 %v8092, %v8088
  %v8283 = vpack.c.b16 %v8093, %v8089
  %v8284 = vpack.c.b16 %v8094, %v8090
  %v8285 = vpack.c.b16 %v8095, %v8091
  %v8286 = vpack.c.b16 %v8096, %v8092
  %v8287 = vpack.c.b16 %v8097, %v8093
  %v8288 = vpack.c.b16 %v8098, %v8094
  %v8289 = vpack.c.b16 %v8099, %v8095
  %v8290 = vpack.c.b16 %v8100, %v8096
  %v8291 = vpack.c.b16 %v8101, %v8097
  %v8292 = vpack.c.b16 %v8102, %v8098
  %v8293 = vpack.c.b16 %v8103, %v8099
  %v8294 = vpack.c.b16 %v8104, %v8100
  %v8295 = vpack.c.b16 %v8105, %v8101
  %v8296 = vpack.c.b16 %v8106, %v8102
  %v8297 = vpack.c.b16 %v8107, %v8103
  %v8298 = vpack.c.b16 %v8042, %v8104
  %v8299 = vpack.c.b16 %v8043, %v8105
  %v8492 = vunpack.c.l.b16 %v8108
  %v8493 = vunpack.c.l.b16 %v8109
  %v8494 = vunpack.c.l.b16 %v8110
  %v8495 = vunpack.c.l.b16 %v8111
  %v8496 = vunpack.c.l.b16 %v8112
  %v8497 = vunpack.c.l.b16 %v8113
  %v8498 = vunpack.c.l.b16 %v8114
  %v8499 = vunpack.c.l.b16 %v8115
  %v8500 = vunpack.c.l.b16 %v8116
  %v8501 = vunpack.c.l.b16 %v8117
  %v8502 = vunpack.c.l.b16 %v8118
  %v8503 = vunpack.c.l.b16 %v8119
  %v8504 = vunpack.c.l.b16 %v8120
  %v8505 = vunpack.c.l.b16 %v8121
  %v8506 = vunpack.c.l.b16 %v8122
  %v8507 = vunpack.c.l.b16 %v8123
  %v8508 = vunpack.c.l.b16 %v8124
  %v8509 = vunpack.c.l.b16 %v8125
  %v8510 = vunpack.c.l.b16 %v8126
  %v8511 = vunpack.c.l.b16 %v8127
  %v8512 = vunpack.c.l.b16 %v8128
  %v8513 = vunpack.c.l.b16 %v8129
  %v8514 = vunpack.c.l.b16 %v8130
  %v8515 = vunpack.c.l.b16 %v8131
  %v8516 = vunpack.c.l.b16 %v8132
  %v8517 = vunpack.c.l.b16 %v8133
  %v8518 = vunpack.c.l.b16 %v8134
  %v8519 = vunpack.c.l.b16 %v8135
  %v8520 = vunpack.c.l.b16 %v8136
  %v8521 = vunpack.c.l.b16 %v8137
  %v8522 = vunpack.c.l.b16 %v8138
  %v8523 = vunpack.c.l.b16 %v8139
  %v8524 = vunpack.c.l.b16 %v8140
  %v8525 = vunpack.c.l.b16 %v8141
  %v8526 = vunpack.c.l.b16 %v8142
  %v8527 = vunpack.c.l.b16 %v8143
  %v8528 = vunpack.c.l.b16 %v8144
  %v8529 = vunpack.c.l.b16 %v8145
  %v8530 = vunpack.c.l.b16 %v8146
  %v8531 = vunpack.c.l.b16 %v8147
  %v8532 = vunpack.c.l.b16 %v8148
  %v8533 = vunpack.c.l.b16 %v8149
  %v8534 = vunpack.c.l.b16 %v8150
  %v8535 = vunpack.c.l.b16 %v8151
  %v8536 = vunpack.c.l.b16 %v8152
  %v8537 = vunpack.c.l.b16 %v8153
  %v8538 = vunpack.c.l.b16 %v8154
  %v8539 = vunpack.c.l.b16 %v8155
  %v8540 = vunpack.c.l.b16 %v8156
  %v8541 = vunpack.c.l.b16 %v8157
  %v8542 = vunpack.c.l.b16 %v8158
  %v8543 = vunpack.c.l.b16 %v8159
  %v8544 = vunpack.c.l.b16 %v8160
  %v8545 = vunpack.c.l.b16 %v8161
  %v8546 = vunpack.c.l.b16 %v8162
  %v8547 = vunpack.c.l.b16 %v8163
  %v8548 = vunpack.c.l.b16 %v8164
  %v8549 = vunpack.c.l.b16 %v8165
  %v8550 = vunpack.c.l.b16 %v8166
  %v8551 = vunpack.c.l.b16 %v8167
  %v8552 = vunpack.c.l.b16 %v8168
  %v8553 = vunpack.c.l.b16 %v8169
  %v8554 = vunpack.c.l.b16 %v8170
  %v8555 = vunpack.c.l.b16 %v8171
  %v8556 = vunpack.c.l.b16 %v8172
  %v8557 = vunpack.c.l.b16 %v8173
  %v8558 = vunpack.c.l.b16 %v8174
  %v8559 = vunpack.c.l.b16 %v8175
  %v8560 = vunpack.c.l.b16 %v8176
  %v8561 = vunpack.c.l.b16 %v8177
  %v8562 = vunpack.c.l.b16 %v8178
  %v8563 = vunpack.c.l.b16 %v8179
  %v8564 = vunpack.c.l.b16 %v8180
  %v8565 = vunpack.c.l.b16 %v8181
  %v8566 = vunpack.c.l.b16 %v8182
  %v8567 = vunpack.c.l.b16 %v8183
  %v8568 = vunpack.c.l.b16 %v8184
  %v8569 = vunpack.c.l.b16 %v8185
  %v8570 = vunpack.c.l.b16 %v8186
  %v8571 = vunpack.c.l.b16 %v8187
  %v8572 = vunpack.c.l.b16 %v8188
  %v8573 = vunpack.c.l.b16 %v8189
  %v8574 = vunpack.c.l.b16 %v8190
  %v8575 = vunpack.c.l.b16 %v8191
  %v8576 = vunpack.c.l.b16 %v8192
  %v8577 = vunpack.c.l.b16 %v8193
  %v8578 = vunpack.c.l.b16 %v8194
  %v8579 = vunpack.c.l.b16 %v8195
  %v8580 = vunpack.c.l.b16 %v8196
  %v8581 = vunpack.c.l.b16 %v8197
  %v8582 = vunpack.c.l.b16 %v8198
  %v8583 = vunpack.c.l.b16 %v8199
  %v8584 = vunpack.c.l.b16 %v8200
  %v8585 = vunpack.c.l.b16 %v8201
  %v8586 = vunpack.c.l.b16 %v8202
  %v8587 = vunpack.c.l.b16 %v8203
  %v8588 = vunpack.c.l.b16 %v8204
  %v8589 = vunpack.c.l.b16 %v8205
  %v8590 = vunpack.c.l.b16 %v8206
  %v8591 = vunpack.c.l.b16 %v8207
  %v8592 = vunpack.c.l.b16 %v8208
  %v8593 = vunpack.c.l.b16 %v8209
  %v8594 = vunpack.c.l.b16 %v8210
  %v8595 = vunpack.c.l.b16 %v8211
  %v8596 = vunpack.c.l.b16 %v8212
  %v8597 = vunpack.c.l.b16 %v8213
  %v8598 = vunpack.c.l.b16 %v8214
  %v8599 = vunpack.c.l.b16 %v8215
  %v8600 = vunpack.c.l.b16 %v8216
  %v8601 = vunpack.c.l.b16 %v8217
  %v8602 = vunpack.c.l.b16 %v8218
  %v8603 = vunpack.c.l.b16 %v8219
  %v8604 = vunpack.c.l.b16 %v8220
  %v8605 = vunpack.c.l.b16 %v8221
  %v8606 = vunpack.c.l.b16 %v8222
  %v8607 = vunpack.c.l.b16 %v8223
  %v8608 = vunpack.c.l.b16 %v8224
  %v8609 = vunpack.c.l.b16 %v8225
  %v8610 = vunpack.c.l.b16 %v8226
  %v8611 = vunpack.c.l.b16 %v8227
  %v8612 = vunpack.c.l.b16 %v8228
  %v8613 = vunpack.c.l.b16 %v8229
  %v8614 = vunpack.c.l.b16 %v8230
  %v8615 = vunpack.c.l.b16 %v8231
  %v8616 = vunpack.c.l.b16 %v8232
  %v8617 = vunpack.c.l.b16 %v8233
  %v8618 = vunpack.c.l.b16 %v8234
  %v8619 = vunpack.c.l.b16 %v8235
  %v8620 = vpack.c.b16 %v8493, %v8492
  %v8621 = vpack.c.b16 %v8495, %v8494
  %v8622 = vpack.c.b16 %v8497, %v8496
  %v8623 = vpack.c.b16 %v8499, %v8498
  %v8624 = vpack.c.b16 %v8501, %v8500
  %v8625 = vpack.c.b16 %v8503, %v8502
  %v8626 = vpack.c.b16 %v8505, %v8504
  %v8627 = vpack.c.b16 %v8507, %v8506
  %v8628 = vpack.c.b16 %v8509, %v8508
  %v8629 = vpack.c.b16 %v8511, %v8510
  %v8630 = vpack.c.b16 %v8513, %v8512
  %v8631 = vpack.c.b16 %v8515, %v8514
  %v8632 = vpack.c.b16 %v8517, %v8516
  %v8633 = vpack.c.b16 %v8519, %v8518
  %v8634 = vpack.c.b16 %v8521, %v8520
  %v8635 = vpack.c.b16 %v8523, %v8522
  %v8636 = vpack.c.b16 %v8525, %v8524
  %v8637 = vpack.c.b16 %v8527, %v8526
  %v8638 = vpack.c.b16 %v8529, %v8528
  %v8639 = vpack.c.b16 %v8531, %v8530
  %v8640 = vpack.c.b16 %v8533, %v8532
  %v8641 = vpack.c.b16 %v8535, %v8534
  %v8642 = vpack.c.b16 %v8537, %v8536
  %v8643 = vpack.c.b16 %v8539, %v8538
  %v8644 = vpack.c.b16 %v8541, %v8540
  %v8645 = vpack.c.b16 %v8543, %v8542
  %v8646 = vpack.c.b16 %v8545, %v8544
  %v8647 = vpack.c.b16 %v8547, %v8546
  %v8648 = vpack.c.b16 %v8549, %v8548
  %v8649 = vpack.c.b16 %v8551, %v8550
  %v8650 = vpack.c.b16 %v8553, %v8552
  %v8651 = vpack.c.b16 %v8555, %v8554
  %v8652 = vpack.c.b16 %v8557, %v8556
  %v8653 = vpack.c.b16 %v8559, %v8558
  %v8654 = vpack.c.b16 %v8561, %v8560
  %v8655 = vpack.c.b16 %v8563, %v8562
  %v8656 = vpack.c.b16 %v8565, %v8564
  %v8657 = vpack.c.b16 %v8567, %v8566
  %v8658 = vpack.c.b16 %v8569, %v8568
  %v8659 = vpack.c.b16 %v8571, %v8570
  %v8660 = vpack.c.b16 %v8573, %v8572
  %v8661 = vpack.c.b16 %v8575, %v8574
  %v8662 = vpack.c.b16 %v8577, %v8576
  %v8663 = vpack.c.b16 %v8579, %v8578
  %v8664 = vpack.c.b16 %v8581, %v8580
  %v8665 = vpack.c.b16 %v8583, %v8582
  %v8666 = vpack.c.b16 %v8585, %v8584
  %v8667 = vpack.c.b16 %v8587, %v8586
  %v8668 = vpack.c.b16 %v8589, %v8588
  %v8669 = vpack.c.b16 %v8591, %v8590
  %v8670 = vpack.c.b16 %v8593, %v8592
  %v8671 = vpack.c.b16 %v8595, %v8594
  %v8672 = vpack.c.b16 %v8597, %v8596
  %v8673 = vpack.c.b16 %v8599, %v8598
  %v8674 = vpack.c.b16 %v8601, %v8600
  %v8675 = vpack.c.b16 %v8603, %v8602
  %v8676 = vpack.c.b16 %v8605, %v8604
  %v8677 = vpack.c.b16 %v8607, %v8606
  %v8678 = vpack.c.b16 %v8609, %v8608
  %v8679 = vpack.c.b16 %v8611, %v8610
  %v8680 = vpack.c.b16 %v8613, %v8612
  %v8681 = vpack.c.b16 %v8615, %v8614
  %v8682 = vpack.c.b16 %v8617, %v8616
  %v8683 = vpack.c.b16 %v8619, %v8618
  %8748 = vmatprep.subr.bf16.mxu0 0
  %8749 = vmatpush1.bf16.msra.mxu0 %v8627
  %8750 = vmatprep.subr.bf16.mxu0 0
  %8751 = vmatpush1.bf16.msra.mxu0 %v8626
  %8752 = vmatprep.subr.bf16.mxu0 0
  %8753 = vmatpush1.bf16.msra.mxu0 %v8625
  %8754 = vmatprep.subr.bf16.mxu0 0
  %8755 = vmatpush1.bf16.msra.mxu0 %v8624
  %8756 = vmatprep.subr.bf16.mxu0 0
  %8757 = vmatpush1.bf16.msra.mxu0 %v8623
  %8758 = vmatprep.subr.bf16.mxu0 0
  %8759 = vmatpush1.bf16.msra.mxu0 %v8622
  %8760 = vmatprep.subr.bf16.mxu0 0
  %8761 = vmatpush1.bf16.msra.mxu0 %v8621
  %8762 = vmatprep.subr.bf16.mxu0 0
  %8763 = vmatpush1.bf16.msra.mxu0 %v8620
  %8764 = vmatprep.subr.bf16.mxu0 0
  %8765 = vmatpush2.bf16.msra.mxu0 %v8635
  %8766 = vmatprep.subr.bf16.mxu0 0
  %8767 = vmatpush2.bf16.msra.mxu0 %v8634
  %8768 = vmatprep.subr.bf16.mxu0 0
  %8769 = vmatpush2.bf16.msra.mxu0 %v8633
  %8770 = vmatprep.subr.bf16.mxu0 0
  %8771 = vmatpush2.bf16.msra.mxu0 %v8632
  %8772 = vmatprep.subr.bf16.mxu0 0
  %8773 = vmatpush2.bf16.msra.mxu0 %v8631
  %8774 = vmatprep.subr.bf16.mxu0 0
  %8775 = vmatpush2.bf16.msra.mxu0 %v8630
  %8776 = vmatprep.subr.bf16.mxu0 0
  %8777 = vmatpush2.bf16.msra.mxu0 %v8629
  %8778 = vmatprep.subr.bf16.mxu0 0
  %8779 = vmatpush2.bf16.msra.mxu0 %v8628
  %8780 = vmatprep.mubr.bf16.mxu0 %v8237
  %8781 = vmatmul.mubr.bf16.gmra.mxu0 %v8236
  %v8782 = vpop.f32.mrf.mxu0
  %v8783 = vadd.f32 0.0, %v8782
  %v8784 = vpop.f32.mrf.mxu0
  %v8785 = vpop.f32.mrf.mxu0
  %v8786 = vadd.f32 0.0, %v8785
  %v8787 = vpop.f32.mrf.mxu0
  %8788 = vmatprep.mubr.bf16.mxu0 %v8245
  %8789 = vmatmul.mubr.bf16.gmra.mxu0 %v8244
  %v8790 = vpop.f32.mrf.mxu0
  %v8791 = vadd.f32 0.0, %v8790
  %v8792 = vpop.f32.mrf.mxu0
  %v8793 = vpop.f32.mrf.mxu0
  %v8794 = vadd.f32 0.0, %v8793
  %v8795 = vpop.f32.mrf.mxu0
  %8796 = vmatprep.mubr.bf16.mxu0 %v8253
  %8797 = vmatmul.mubr.bf16.gmra.mxu0 %v8252
  %v8798 = vpop.f32.mrf.mxu0
  %v8799 = vadd.f32 0.0, %v8798
  %v8800 = vpop.f32.mrf.mxu0
  %v8801 = vpop.f32.mrf.mxu0
  %v8802 = vadd.f32 0.0, %v8801
  %v8803 = vpop.f32.mrf.mxu0
  %8804 = vmatprep.mubr.bf16.mxu0 %v8261
  %8805 = vmatmul.mubr.bf16.gmra.mxu0 %v8260
  %v8806 = vpop.f32.mrf.mxu0
  %v8807 = vadd.f32 0.0, %v8806
  %v8808 = vpop.f32.mrf.mxu0
  %v8809 = vpop.f32.mrf.mxu0
  %v8810 = vadd.f32 0.0, %v8809
  %v8811 = vpop.f32.mrf.mxu0
  %8812 = vmatprep.mubr.bf16.mxu0 %v8269
  %8813 = vmatmul.mubr.bf16.gmra.mxu0 %v8268
  %v8814 = vpop.f32.mrf.mxu0
  %v8815 = vadd.f32 0.0, %v8814
  %v8816 = vpop.f32.mrf.mxu0
  %v8817 = vpop.f32.mrf.mxu0
  %v8818 = vadd.f32 0.0, %v8817
  %v8819 = vpop.f32.mrf.mxu0
  %8820 = vmatprep.mubr.bf16.mxu0 %v8277
  %8821 = vmatmul.mubr.bf16.gmra.mxu0 %v8276
  %v8822 = vpop.f32.mrf.mxu0
  %v8823 = vadd.f32 0.0, %v8822
  %v8824 = vpop.f32.mrf.mxu0
  %v8825 = vpop.f32.mrf.mxu0
  %v8826 = vadd.f32 0.0, %v8825
  %v8827 = vpop.f32.mrf.mxu0
  %8828 = vmatprep.mubr.bf16.mxu0 %v8285
  %8829 = vmatmul.mubr.bf16.gmra.mxu0 %v8284
  %v8830 = vpop.f32.mrf.mxu0
  %v8831 = vadd.f32 0.0, %v8830
  %v8832 = vpop.f32.mrf.mxu0
  %v8833 = vpop.f32.mrf.mxu0
  %v8834 = vadd.f32 0.0, %v8833
  %v8835 = vpop.f32.mrf.mxu0
  %8836 = vmatprep.mubr.bf16.mxu0 %v8293
  %8837 = vmatmul.mubr.bf16.gmra.mxu0 %v8292
  %v8838 = vpop.f32.mrf.mxu0
  %v8839 = vadd.f32 0.0, %v8838
  %v8840 = vpop.f32.mrf.mxu0
  %v8841 = vpop.f32.mrf.mxu0
  %v8842 = vadd.f32 0.0, %v8841
  %v8843 = vpop.f32.mrf.mxu0
  %8844 = vdwg.mxu0
  %8845 = vmatprep.subr.bf16.mxu0 0
  %8846 = vmatpush1.bf16.msra.mxu0 %v8643
  %8847 = vmatprep.subr.bf16.mxu0 0
  %8848 = vmatpush1.bf16.msra.mxu0 %v8642
  %8849 = vmatprep.subr.bf16.mxu0 0
  %8850 = vmatpush1.bf16.msra.mxu0 %v8641
  %8851 = vmatprep.subr.bf16.mxu0 0
  %8852 = vmatpush1.bf16.msra.mxu0 %v8640
  %8853 = vmatprep.subr.bf16.mxu0 0
  %8854 = vmatpush1.bf16.msra.mxu0 %v8639
  %8855 = vmatprep.subr.bf16.mxu0 0
  %8856 = vmatpush1.bf16.msra.mxu0 %v8638
  %8857 = vmatprep.subr.bf16.mxu0 0
  %8858 = vmatpush1.bf16.msra.mxu0 %v8637
  %8859 = vmatprep.subr.bf16.mxu0 0
  %8860 = vmatpush1.bf16.msra.mxu0 %v8636
  %8861 = vmatprep.subr.bf16.mxu0 0
  %8862 = vmatpush2.bf16.msra.mxu0 %v8651
  %8863 = vmatprep.subr.bf16.mxu0 0
  %8864 = vmatpush2.bf16.msra.mxu0 %v8650
  %8865 = vmatprep.subr.bf16.mxu0 0
  %8866 = vmatpush2.bf16.msra.mxu0 %v8649
  %8867 = vmatprep.subr.bf16.mxu0 0
  %8868 = vmatpush2.bf16.msra.mxu0 %v8648
  %8869 = vmatprep.subr.bf16.mxu0 0
  %8870 = vmatpush2.bf16.msra.mxu0 %v8647
  %8871 = vmatprep.subr.bf16.mxu0 0
  %8872 = vmatpush2.bf16.msra.mxu0 %v8646
  %8873 = vmatprep.subr.bf16.mxu0 0
  %8874 = vmatpush2.bf16.msra.mxu0 %v8645
  %8875 = vmatprep.subr.bf16.mxu0 0
  %8876 = vmatpush2.bf16.msra.mxu0 %v8644
  %8877 = vmatprep.mubr.bf16.mxu0 %v8239
  %8878 = vmatmul.mubr.bf16.gmra.mxu0 %v8238
  %v8879 = vpop.f32.mrf.mxu0
  %v8880 = vadd.f32 %v8783, %v8879
  %v8881 = vpop.f32.mrf.mxu0
  %v8882 = vpop.f32.mrf.mxu0
  %v8883 = vadd.f32 %v8786, %v8882
  %v8884 = vpop.f32.mrf.mxu0
  %8885 = vmatprep.mubr.bf16.mxu0 %v8247
  %8886 = vmatmul.mubr.bf16.gmra.mxu0 %v8246
  %v8887 = vpop.f32.mrf.mxu0
  %v8888 = vadd.f32 %v8791, %v8887
  %v8889 = vpop.f32.mrf.mxu0
  %v8890 = vpop.f32.mrf.mxu0
  %v8891 = vadd.f32 %v8794, %v8890
  %v8892 = vpop.f32.mrf.mxu0
  %8893 = vmatprep.mubr.bf16.mxu0 %v8255
  %8894 = vmatmul.mubr.bf16.gmra.mxu0 %v8254
  %v8895 = vpop.f32.mrf.mxu0
  %v8896 = vadd.f32 %v8799, %v8895
  %v8897 = vpop.f32.mrf.mxu0
  %v8898 = vpop.f32.mrf.mxu0
  %v8899 = vadd.f32 %v8802, %v8898
  %v8900 = vpop.f32.mrf.mxu0
  %8901 = vmatprep.mubr.bf16.mxu0 %v8263
  %8902 = vmatmul.mubr.bf16.gmra.mxu0 %v8262
  %v8903 = vpop.f32.mrf.mxu0
  %v8904 = vadd.f32 %v8807, %v8903
  %v8905 = vpop.f32.mrf.mxu0
  %v8906 = vpop.f32.mrf.mxu0
  %v8907 = vadd.f32 %v8810, %v8906
  %v8908 = vpop.f32.mrf.mxu0
  %8909 = vmatprep.mubr.bf16.mxu0 %v8271
  %8910 = vmatmul.mubr.bf16.gmra.mxu0 %v8270
  %v8911 = vpop.f32.mrf.mxu0
  %v8912 = vadd.f32 %v8815, %v8911
  %v8913 = vpop.f32.mrf.mxu0
  %v8914 = vpop.f32.mrf.mxu0
  %v8915 = vadd.f32 %v8818, %v8914
  %v8916 = vpop.f32.mrf.mxu0
  %8917 = vmatprep.mubr.bf16.mxu0 %v8279
  %8918 = vmatmul.mubr.bf16.gmra.mxu0 %v8278
  %v8919 = vpop.f32.mrf.mxu0
  %v8920 = vadd.f32 %v8823, %v8919
  %v8921 = vpop.f32.mrf.mxu0
  %v8922 = vpop.f32.mrf.mxu0
  %v8923 = vadd.f32 %v8826, %v8922
  %v8924 = vpop.f32.mrf.mxu0
  %8925 = vmatprep.mubr.bf16.mxu0 %v8287
  %8926 = vmatmul.mubr.bf16.gmra.mxu0 %v8286
  %v8927 = vpop.f32.mrf.mxu0
  %v8928 = vadd.f32 %v8831, %v8927
  %v8929 = vpop.f32.mrf.mxu0
  %v8930 = vpop.f32.mrf.mxu0
  %v8931 = vadd.f32 %v8834, %v8930
  %v8932 = vpop.f32.mrf.mxu0
  %8933 = vmatprep.mubr.bf16.mxu0 %v8295
  %8934 = vmatmul.mubr.bf16.gmra.mxu0 %v8294
  %v8935 = vpop.f32.mrf.mxu0
  %v8936 = vadd.f32 %v8839, %v8935
  %v8937 = vpop.f32.mrf.mxu0
  %v8938 = vpop.f32.mrf.mxu0
  %v8939 = vadd.f32 %v8842, %v8938
  %v8940 = vpop.f32.mrf.mxu0
  %8941 = vdwg.mxu0
  %8942 = vmatprep.subr.bf16.mxu0 0
  %8943 = vmatpush1.bf16.msra.mxu0 %v8659
  %8944 = vmatprep.subr.bf16.mxu0 0
  %8945 = vmatpush1.bf16.msra.mxu0 %v8658
  %8946 = vmatprep.subr.bf16.mxu0 0
  %8947 = vmatpush1.bf16.msra.mxu0 %v8657
  %8948 = vmatprep.subr.bf16.mxu0 0
  %8949 = vmatpush1.bf16.msra.mxu0 %v8656
  %8950 = vmatprep.subr.bf16.mxu0 0
  %8951 = vmatpush1.bf16.msra.mxu0 %v8655
  %8952 = vmatprep.subr.bf16.mxu0 0
  %8953 = vmatpush1.bf16.msra.mxu0 %v8654
  %8954 = vmatprep.subr.bf16.mxu0 0
  %8955 = vmatpush1.bf16.msra.mxu0 %v8653
  %8956 = vmatprep.subr.bf16.mxu0 0
  %8957 = vmatpush1.bf16.msra.mxu0 %v8652
  %8958 = vmatprep.subr.bf16.mxu0 0
  %8959 = vmatpush2.bf16.msra.mxu0 %v8667
  %8960 = vmatprep.subr.bf16.mxu0 0
  %8961 = vmatpush2.bf16.msra.mxu0 %v8666
  %8962 = vmatprep.subr.bf16.mxu0 0
  %8963 = vmatpush2.bf16.msra.mxu0 %v8665
  %8964 = vmatprep.subr.bf16.mxu0 0
  %8965 = vmatpush2.bf16.msra.mxu0 %v8664
  %8966 = vmatprep.subr.bf16.mxu0 0
  %8967 = vmatpush2.bf16.msra.mxu0 %v8663
  %8968 = vmatprep.subr.bf16.mxu0 0
  %8969 = vmatpush2.bf16.msra.mxu0 %v8662
  %8970 = vmatprep.subr.bf16.mxu0 0
  %8971 = vmatpush2.bf16.msra.mxu0 %v8661
  %8972 = vmatprep.subr.bf16.mxu0 0
  %8973 = vmatpush2.bf16.msra.mxu0 %v8660
  %8974 = vmatprep.mubr.bf16.mxu0 %v8241
  %8975 = vmatmul.mubr.bf16.gmra.mxu0 %v8240
  %v8976 = vpop.f32.mrf.mxu0
  %v8977 = vadd.f32 %v8880, %v8976
  %v8978 = vpop.f32.mrf.mxu0
  %v8979 = vpop.f32.mrf.mxu0
  %v8980 = vadd.f32 %v8883, %v8979
  %v8981 = vpop.f32.mrf.mxu0
  %8982 = vmatprep.mubr.bf16.mxu0 %v8249
  %8983 = vmatmul.mubr.bf16.gmra.mxu0 %v8248
  %v8984 = vpop.f32.mrf.mxu0
  %v8985 = vadd.f32 %v8888, %v8984
  %v8986 = vpop.f32.mrf.mxu0
  %v8987 = vpop.f32.mrf.mxu0
  %v8988 = vadd.f32 %v8891, %v8987
  %v8989 = vpop.f32.mrf.mxu0
  %8990 = vmatprep.mubr.bf16.mxu0 %v8257
  %8991 = vmatmul.mubr.bf16.gmra.mxu0 %v8256
  %v8992 = vpop.f32.mrf.mxu0
  %v8993 = vadd.f32 %v8896, %v8992
  %v8994 = vpop.f32.mrf.mxu0
  %v8995 = vpop.f32.mrf.mxu0
  %v8996 = vadd.f32 %v8899, %v8995
  %v8997 = vpop.f32.mrf.mxu0
  %8998 = vmatprep.mubr.bf16.mxu0 %v8265
  %8999 = vmatmul.mubr.bf16.gmra.mxu0 %v8264
  %v9000 = vpop.f32.mrf.mxu0
  %v9001 = vadd.f32 %v8904, %v9000
  %v9002 = vpop.f32.mrf.mxu0
  %v9003 = vpop.f32.mrf.mxu0
  %v9004 = vadd.f32 %v8907, %v9003
  %v9005 = vpop.f32.mrf.mxu0
  %9006 = vmatprep.mubr.bf16.mxu0 %v8273
  %9007 = vmatmul.mubr.bf16.gmra.mxu0 %v8272
  %v9008 = vpop.f32.mrf.mxu0
  %v9009 = vadd.f32 %v8912, %v9008
  %v9010 = vpop.f32.mrf.mxu0
  %v9011 = vpop.f32.mrf.mxu0
  %v9012 = vadd.f32 %v8915, %v9011
  %v9013 = vpop.f32.mrf.mxu0
  %9014 = vmatprep.mubr.bf16.mxu0 %v8281
  %9015 = vmatmul.mubr.bf16.gmra.mxu0 %v8280
  %v9016 = vpop.f32.mrf.mxu0
  %v9017 = vadd.f32 %v8920, %v9016
  %v9018 = vpop.f32.mrf.mxu0
  %v9019 = vpop.f32.mrf.mxu0
  %v9020 = vadd.f32 %v8923, %v9019
  %v9021 = vpop.f32.mrf.mxu0
  %9022 = vmatprep.mubr.bf16.mxu0 %v8289
  %9023 = vmatmul.mubr.bf16.gmra.mxu0 %v8288
  %v9024 = vpop.f32.mrf.mxu0
  %v9025 = vadd.f32 %v8928, %v9024
  %v9026 = vpop.f32.mrf.mxu0
  %v9027 = vpop.f32.mrf.mxu0
  %v9028 = vadd.f32 %v8931, %v9027
  %v9029 = vpop.f32.mrf.mxu0
  %9030 = vmatprep.mubr.bf16.mxu0 %v8297
  %9031 = vmatmul.mubr.bf16.gmra.mxu0 %v8296
  %v9032 = vpop.f32.mrf.mxu0
  %v9033 = vadd.f32 %v8936, %v9032
  %v9034 = vpop.f32.mrf.mxu0
  %v9035 = vpop.f32.mrf.mxu0
  %v9036 = vadd.f32 %v8939, %v9035
  %v9037 = vpop.f32.mrf.mxu0
  %9038 = vdwg.mxu0
  %9039 = vmatprep.subr.bf16.mxu0 0
  %9040 = vmatpush1.bf16.msra.mxu0 %v8675
  %9041 = vmatprep.subr.bf16.mxu0 0
  %9042 = vmatpush1.bf16.msra.mxu0 %v8674
  %9043 = vmatprep.subr.bf16.mxu0 0
  %9044 = vmatpush1.bf16.msra.mxu0 %v8673
  %9045 = vmatprep.subr.bf16.mxu0 0
  %9046 = vmatpush1.bf16.msra.mxu0 %v8672
  %9047 = vmatprep.subr.bf16.mxu0 0
  %9048 = vmatpush1.bf16.msra.mxu0 %v8671
  %9049 = vmatprep.subr.bf16.mxu0 0
  %9050 = vmatpush1.bf16.msra.mxu0 %v8670
  %9051 = vmatprep.subr.bf16.mxu0 0
  %9052 = vmatpush1.bf16.msra.mxu0 %v8669
  %9053 = vmatprep.subr.bf16.mxu0 0
  %9054 = vmatpush1.bf16.msra.mxu0 %v8668
  %9055 = vmatprep.subr.bf16.mxu0 0
  %9056 = vmatpush2.bf16.msra.mxu0 %v8683
  %9057 = vmatprep.subr.bf16.mxu0 0
  %9058 = vmatpush2.bf16.msra.mxu0 %v8682
  %9059 = vmatprep.subr.bf16.mxu0 0
  %9060 = vmatpush2.bf16.msra.mxu0 %v8681
  %9061 = vmatprep.subr.bf16.mxu0 0
  %9062 = vmatpush2.bf16.msra.mxu0 %v8680
  %9063 = vmatprep.subr.bf16.mxu0 0
  %9064 = vmatpush2.bf16.msra.mxu0 %v8679
  %9065 = vmatprep.subr.bf16.mxu0 0
  %9066 = vmatpush2.bf16.msra.mxu0 %v8678
  %9067 = vmatprep.subr.bf16.mxu0 0
  %9068 = vmatpush2.bf16.msra.mxu0 %v8677
  %9069 = vmatprep.subr.bf16.mxu0 0
  %9070 = vmatpush2.bf16.msra.mxu0 %v8676
  %9071 = vmatprep.mubr.bf16.mxu0 %v8243
  %9072 = vmatmul.mubr.bf16.gmra.mxu0 %v8242
  %v9073 = vpop.f32.mrf.mxu0
  %v9074 = vadd.f32 %v8977, %v9073
  %v9075 = vpop.f32.mrf.mxu0
  %v9076 = vpop.f32.mrf.mxu0
  %v9077 = vadd.f32 %v8980, %v9076
  %v9078 = vpop.f32.mrf.mxu0
  %9079 = vmatprep.mubr.bf16.mxu0 %v8251
  %9080 = vmatmul.mubr.bf16.gmra.mxu0 %v8250
  %v9081 = vpop.f32.mrf.mxu0
  %v9082 = vadd.f32 %v8985, %v9081
  %v9083 = vpop.f32.mrf.mxu0
  %v9084 = vpop.f32.mrf.mxu0
  %v9085 = vadd.f32 %v8988, %v9084
  %v9086 = vpop.f32.mrf.mxu0
  %9087 = vmatprep.mubr.bf16.mxu0 %v8259
  %9088 = vmatmul.mubr.bf16.gmra.mxu0 %v8258
  %v9089 = vpop.f32.mrf.mxu0
  %v9090 = vadd.f32 %v8993, %v9089
  %v9091 = vpop.f32.mrf.mxu0
  %v9092 = vpop.f32.mrf.mxu0
  %v9093 = vadd.f32 %v8996, %v9092
  %v9094 = vpop.f32.mrf.mxu0
  %9095 = vmatprep.mubr.bf16.mxu0 %v8267
  %9096 = vmatmul.mubr.bf16.gmra.mxu0 %v8266
  %v9097 = vpop.f32.mrf.mxu0
  %v9098 = vadd.f32 %v9001, %v9097
  %v9099 = vpop.f32.mrf.mxu0
  %v9100 = vpop.f32.mrf.mxu0
  %v9101 = vadd.f32 %v9004, %v9100
  %v9102 = vpop.f32.mrf.mxu0
  %9103 = vmatprep.mubr.bf16.mxu0 %v8275
  %9104 = vmatmul.mubr.bf16.gmra.mxu0 %v8274
  %v9105 = vpop.f32.mrf.mxu0
  %v9106 = vadd.f32 %v9009, %v9105
  %v9107 = vpop.f32.mrf.mxu0
  %v9108 = vpop.f32.mrf.mxu0
  %v9109 = vadd.f32 %v9012, %v9108
  %v9110 = vpop.f32.mrf.mxu0
  %9111 = vmatprep.mubr.bf16.mxu0 %v8283
  %9112 = vmatmul.mubr.bf16.gmra.mxu0 %v8282
  %v9113 = vpop.f32.mrf.mxu0
  %v9114 = vadd.f32 %v9017, %v9113
  %v9115 = vpop.f32.mrf.mxu0
  %v9116 = vpop.f32.mrf.mxu0
  %v9117 = vadd.f32 %v9020, %v9116
  %v9118 = vpop.f32.mrf.mxu0
  %9119 = vmatprep.mubr.bf16.mxu0 %v8291
  %9120 = vmatmul.mubr.bf16.gmra.mxu0 %v8290
  %v9121 = vpop.f32.mrf.mxu0
  %v9122 = vadd.f32 %v9025, %v9121
  %v9123 = vpop.f32.mrf.mxu0
  %v9124 = vpop.f32.mrf.mxu0
  %v9125 = vadd.f32 %v9028, %v9124
  %v9126 = vpop.f32.mrf.mxu0
  %9127 = vmatprep.mubr.bf16.mxu0 %v8299
  %9128 = vmatmul.mubr.bf16.gmra.mxu0 %v8298
  %v9129 = vpop.f32.mrf.mxu0
  %v9130 = vadd.f32 %v9033, %v9129
  %v9131 = vpop.f32.mrf.mxu0
  %v9132 = vpop.f32.mrf.mxu0
  %v9133 = vadd.f32 %v9036, %v9132
  %v9134 = vpop.f32.mrf.mxu0
  %9135 = vdwg.mxu0
  %vm9136 = vcmp.ge.f32.partialorder %v9074, 0.0
  %vm9137 = vcmp.ge.f32.partialorder %v9077, 0.0
  %vm9138 = vcmp.ge.f32.partialorder %v9082, 0.0
  %vm9139 = vcmp.ge.f32.partialorder %v9085, 0.0
  %vm9140 = vcmp.ge.f32.partialorder %v9090, 0.0
  %vm9141 = vcmp.ge.f32.partialorder %v9093, 0.0
  %vm9142 = vcmp.ge.f32.partialorder %v9098, 0.0
  %vm9143 = vcmp.ge.f32.partialorder %v9101, 0.0
  %vm9144 = vcmp.ge.f32.partialorder %v9106, 0.0
  %vm9145 = vcmp.ge.f32.partialorder %v9109, 0.0
  %vm9146 = vcmp.ge.f32.partialorder %v9114, 0.0
  %vm9147 = vcmp.ge.f32.partialorder %v9117, 0.0
  %vm9148 = vcmp.ge.f32.partialorder %v9122, 0.0
  %vm9149 = vcmp.ge.f32.partialorder %v9125, 0.0
  %vm9150 = vcmp.ge.f32.partialorder %v9130, 0.0
  %vm9151 = vcmp.ge.f32.partialorder %v9133, 0.0
  %v9152 = vmul.f32 %v9074, 0.2
  %v9153 = vmul.f32 %v9077, 0.2
  %v9154 = vmul.f32 %v9082, 0.2
  %v9155 = vmul.f32 %v9085, 0.2
  %v9156 = vmul.f32 %v9090, 0.2
  %v9157 = vmul.f32 %v9093, 0.2
  %v9158 = vmul.f32 %v9098, 0.2
  %v9159 = vmul.f32 %v9101, 0.2
  %v9160 = vmul.f32 %v9106, 0.2
  %v9161 = vmul.f32 %v9109, 0.2
  %v9162 = vmul.f32 %v9114, 0.2
  %v9163 = vmul.f32 %v9117, 0.2
  %v9164 = vmul.f32 %v9122, 0.2
  %v9165 = vmul.f32 %v9125, 0.2
  %v9166 = vmul.f32 %v9130, 0.2
  %v9167 = vmul.f32 %v9133, 0.2
  %v9168 = vsel %vm9136, %v9074, %v9152
  %v9169 = vsel %vm9137, %v9077, %v9153
  %v9170 = vsel %vm9138, %v9082, %v9154
  %v9171 = vsel %vm9139, %v9085, %v9155
  %v9172 = vsel %vm9140, %v9090, %v9156
  %v9173 = vsel %vm9141, %v9093, %v9157
  %v9174 = vsel %vm9142, %v9098, %v9158
  %v9175 = vsel %vm9143, %v9101, %v9159
  %v9176 = vsel %vm9144, %v9106, %v9160
  %v9177 = vsel %vm9145, %v9109, %v9161
  %v9178 = vsel %vm9146, %v9114, %v9162
  %v9179 = vsel %vm9147, %v9117, %v9163
  %v9180 = vsel %vm9148, %v9122, %v9164
  %v9181 = vsel %vm9149, %v9125, %v9165
  %v9182 = vsel %vm9150, %v9130, %v9166
  %v9183 = vsel %vm9151, %v9133, %v9167
  %v9184 = vld [vmem:[%s2] sm:$0x1]
  %v9185 = vld [vmem:[%s3] sm:$0x1]
  %v9186 = vadd.f32 %v9168, %v9169
  %v9187 = vadd.f32 %v9186, %v9170
  %v9188 = vadd.f32 %v9187, %v9171
  %v9189 = vadd.f32 %v9188, %v9172
  %v9190 = vadd.f32 %v9189, %v9173
  %v9191 = vadd.f32 %v9190, %v9174
  %v9192 = vadd.f32 %v9191, %v9175
  %v9193 = vadd.f32 %v9192, %v9176
  %v9194 = vadd.f32 %v9193, %v9177
  %v9195 = vadd.f32 %v9194, %v9178
  %v9196 = vadd.f32 %v9195, %v9179
  %v9197 = vadd.f32 %v9196, %v9180
  %v9198 = vadd.f32 %v9197, %v9181
  %v9199 = vadd.f32 %v9198, %v9182
  %v9200 = vadd.f32 %v9199, %v9183
  %v9201 = vrot.slane %v9200, 4
  %v9202 = vadd.f32 %v9200, %v9201
  %v9203 = vrot.slane %v9202, 2
  %v9204 = vadd.f32 %v9202, %v9203
  %v9205 = vrot.slane %v9204, 1
  %v9206 = vadd.f32 %v9204, %v9205
  %v9207 = vrcp.pop 128.0
  %v9208 = vmul.f32 %v9206, %v9207
  %v9209 = vsub.f32 %v9168, %v9208
  %v9210 = vsub.f32 %v9169, %v9208
  %v9211 = vsub.f32 %v9170, %v9208
  %v9212 = vsub.f32 %v9171, %v9208
  %v9213 = vsub.f32 %v9172, %v9208
  %v9214 = vsub.f32 %v9173, %v9208
  %v9215 = vsub.f32 %v9174, %v9208
  %v9216 = vsub.f32 %v9175, %v9208
  %v9217 = vsub.f32 %v9176, %v9208
  %v9218 = vsub.f32 %v9177, %v9208
  %v9219 = vsub.f32 %v9178, %v9208
  %v9220 = vsub.f32 %v9179, %v9208
  %v9221 = vsub.f32 %v9180, %v9208
  %v9222 = vsub.f32 %v9181, %v9208
  %v9223 = vsub.f32 %v9182, %v9208
  %v9224 = vsub.f32 %v9183, %v9208
  %v9225 = vmul.f32 %v9209, %v9209
  %v9226 = vmul.f32 %v9210, %v9210
  %v9227 = vmul.f32 %v9211, %v9211
  %v9228 = vmul.f32 %v9212, %v9212
  %v9229 = vmul.f32 %v9213, %v9213
  %v9230 = vmul.f32 %v9214, %v9214
  %v9231 = vmul.f32 %v9215, %v9215
  %v9232 = vmul.f32 %v9216, %v9216
  %v9233 = vmul.f32 %v9217, %v9217
  %v9234 = vmul.f32 %v9218, %v9218
  %v9235 = vmul.f32 %v9219, %v9219
  %v9236 = vmul.f32 %v9220, %v9220
  %v9237 = vmul.f32 %v9221, %v9221
  %v9238 = vmul.f32 %v9222, %v9222
  %v9239 = vmul.f32 %v9223, %v9223
  %v9240 = vmul.f32 %v9224, %v9224
  %v9241 = vadd.f32 %v9225, %v9226
  %v9242 = vadd.f32 %v9241, %v9227
  %v9243 = vadd.f32 %v9242, %v9228
  %v9244 = vadd.f32 %v9243, %v9229
  %v9245 = vadd.f32 %v9244, %v9230
  %v9246 = vadd.f32 %v9245, %v9231
  %v9247 = vadd.f32 %v9246, %v9232
  %v9248 = vadd.f32 %v9247, %v9233
  %v9249 = vadd.f32 %v9248, %v9234
  %v9250 = vadd.f32 %v9249, %v9235
  %v9251 = vadd.f32 %v9250, %v9236
  %v9252 = vadd.f32 %v9251, %v9237
  %v9253 = vadd.f32 %v9252, %v9238
  %v9254 = vadd.f32 %v9253, %v9239
  %v9255 = vadd.f32 %v9254, %v9240
  %v9256 = vrot.slane %v9255, 4
  %v9257 = vadd.f32 %v9255, %v9256
  %v9258 = vrot.slane %v9257, 2
  %v9259 = vadd.f32 %v9257, %v9258
  %v9260 = vrot.slane %v9259, 1
  %v9261 = vadd.f32 %v9259, %v9260
  %v9262 = vmul.f32 %v9261, %v9207
  %v9263 = vadd.f32 %v9262, 1e-05
  %v9264 = vrsqrt.pop %v9263
  %v9265 = vmul.f32 %v9209, %v9264
  %v9266 = vmul.f32 %v9210, %v9264
  %v9267 = vmul.f32 %v9211, %v9264
  %v9268 = vmul.f32 %v9212, %v9264
  %v9269 = vmul.f32 %v9213, %v9264
  %v9270 = vmul.f32 %v9214, %v9264
  %v9271 = vmul.f32 %v9215, %v9264
  %v9272 = vmul.f32 %v9216, %v9264
  %v9273 = vmul.f32 %v9217, %v9264
  %v9274 = vmul.f32 %v9218, %v9264
  %v9275 = vmul.f32 %v9219, %v9264
  %v9276 = vmul.f32 %v9220, %v9264
  %v9277 = vmul.f32 %v9221, %v9264
  %v9278 = vmul.f32 %v9222, %v9264
  %v9279 = vmul.f32 %v9223, %v9264
  %v9280 = vmul.f32 %v9224, %v9264
  %v9282 = vlaneseq
  %v9283 = vshrl.u32 %v9282, 7
  %v9284 = vsub.s32 0, %v9283
  %v9285 = vrot.slane %v9184, %v9284
  %v9287 = vmul.f32 %v9265, %v9285
  %v9288 = vmul.f32 %v9266, %v9285
  %v9289 = vmul.f32 %v9267, %v9285
  %v9290 = vmul.f32 %v9268, %v9285
  %v9291 = vmul.f32 %v9269, %v9285
  %v9292 = vmul.f32 %v9270, %v9285
  %v9293 = vmul.f32 %v9271, %v9285
  %v9294 = vmul.f32 %v9272, %v9285
  %v9295 = vmul.f32 %v9273, %v9285
  %v9296 = vmul.f32 %v9274, %v9285
  %v9297 = vmul.f32 %v9275, %v9285
  %v9298 = vmul.f32 %v9276, %v9285
  %v9299 = vmul.f32 %v9277, %v9285
  %v9300 = vmul.f32 %v9278, %v9285
  %v9301 = vmul.f32 %v9279, %v9285
  %v9302 = vmul.f32 %v9280, %v9285
  %v9304 = vlaneseq
  %v9305 = vshrl.u32 %v9304, 7
  %v9306 = vsub.s32 0, %v9305
  %v9307 = vrot.slane %v9185, %v9306
  %v9309 = vadd.f32 %v9287, %v9307
  %v9310 = vadd.f32 %v9288, %v9307
  %v9311 = vadd.f32 %v9289, %v9307
  %v9312 = vadd.f32 %v9290, %v9307
  %v9313 = vadd.f32 %v9291, %v9307
  %v9314 = vadd.f32 %v9292, %v9307
  %v9315 = vadd.f32 %v9293, %v9307
  %v9316 = vadd.f32 %v9294, %v9307
  %v9317 = vadd.f32 %v9295, %v9307
  %v9318 = vadd.f32 %v9296, %v9307
  %v9319 = vadd.f32 %v9297, %v9307
  %v9320 = vadd.f32 %v9298, %v9307
  %v9321 = vadd.f32 %v9299, %v9307
  %v9322 = vadd.f32 %v9300, %v9307
  %v9323 = vadd.f32 %v9301, %v9307
  %v9324 = vadd.f32 %v9302, %v9307
  %v9325 = vpack.c.bf16 %v9310, %v9309
  %v9326 = vpack.c.bf16 %v9312, %v9311
  %v9327 = vpack.c.bf16 %v9314, %v9313
  %v9328 = vpack.c.bf16 %v9316, %v9315
  %v9329 = vpack.c.bf16 %v9318, %v9317
  %v9330 = vpack.c.bf16 %v9320, %v9319
  %v9331 = vpack.c.bf16 %v9322, %v9321
  %v9332 = vpack.c.bf16 %v9324, %v9323
  %v9341 = vunpack.c.l.b16 %v9325
  %v9342 = vunpack.c.h.b16 %v9325
  %v9343 = vunpack.c.l.b16 %v9326
  %v9344 = vunpack.c.h.b16 %v9326
  %v9345 = vunpack.c.l.b16 %v9327
  %v9346 = vunpack.c.h.b16 %v9327
  %v9347 = vunpack.c.l.b16 %v9328
  %v9348 = vunpack.c.h.b16 %v9328
  %v9349 = vunpack.c.l.b16 %v9329
  %v9350 = vunpack.c.h.b16 %v9329
  %v9351 = vunpack.c.l.b16 %v9330
  %v9352 = vunpack.c.h.b16 %v9330
  %v9353 = vunpack.c.l.b16 %v9331
  %v9354 = vunpack.c.h.b16 %v9331
  %v9355 = vunpack.c.l.b16 %v9332
  %v9356 = vunpack.c.h.b16 %v9332
  %v9357 = vpack.c.b16 %v9341, %v9341
  %v9358 = vpack.c.b16 %v9342, %v9342
  %v9359 = vpack.c.b16 %v9343, %v9343
  %v9360 = vpack.c.b16 %v9344, %v9344
  %v9361 = vpack.c.b16 %v9345, %v9345
  %v9362 = vpack.c.b16 %v9346, %v9346
  %v9363 = vpack.c.b16 %v9347, %v9347
  %v9364 = vpack.c.b16 %v9348, %v9348
  %v9365 = vpack.c.b16 %v9349, %v9349
  %v9366 = vpack.c.b16 %v9350, %v9350
  %v9367 = vpack.c.b16 %v9351, %v9351
  %v9368 = vpack.c.b16 %v9352, %v9352
  %v9369 = vpack.c.b16 %v9353, %v9353
  %v9370 = vpack.c.b16 %v9354, %v9354
  %v9371 = vpack.c.b16 %v9355, %v9355
  %v9372 = vpack.c.b16 %v9356, %v9356
  %v9374 = vunpack.c.l.s4 1966171168
  %v9375 = vunpack.c.0.s8 %v9374
  %v9376 = vlaneseq
  %v9377 = vshrl.u32 %v9376, 7
  %v9378 = vsub.s32 %v9375, %v9377
  %v9379 = vrot.slane %v9357, %v9378
  %v9380 = vcombine.high %v9379, %v9379
  %v9382 = vunpack.c.l.s4 1966171168
  %v9383 = vunpack.c.0.s8 %v9382
  %v9384 = vlaneseq
  %v9385 = vshrl.u32 %v9384, 7
  %v9386 = vsub.s32 %v9383, %v9385
  %v9387 = vrot.slane %v9379, %v9386
  %v9389 = vunpack.c.l.s4 1966171168
  %v9390 = vunpack.c.0.s8 %v9389
  %v9391 = vlaneseq
  %v9392 = vshrl.u32 %v9391, 7
  %v9393 = vsub.s32 %v9390, %v9392
  %v9394 = vrot.slane %v9380, %v9393
  %v9395 = vcombine.high %v9387, %v9387
  %v9396 = vcombine.high %v9394, %v9394
  %v9398 = vunpack.c.l.s4 1966171168
  %v9399 = vunpack.c.0.s8 %v9398
  %v9400 = vlaneseq
  %v9401 = vshrl.u32 %v9400, 7
  %v9402 = vsub.s32 %v9399, %v9401
  %v9403 = vrot.slane %v9359, %v9402
  %v9404 = vcombine.high %v9403, %v9403
  %v9406 = vunpack.c.l.s4 1966171168
  %v9407 = vunpack.c.0.s8 %v9406
  %v9408 = vlaneseq
  %v9409 = vshrl.u32 %v9408, 7
  %v9410 = vsub.s32 %v9407, %v9409
  %v9411 = vrot.slane %v9403, %v9410
  %v9413 = vunpack.c.l.s4 1966171168
  %v9414 = vunpack.c.0.s8 %v9413
  %v9415 = vlaneseq
  %v9416 = vshrl.u32 %v9415, 7
  %v9417 = vsub.s32 %v9414, %v9416
  %v9418 = vrot.slane %v9404, %v9417
  %v9419 = vcombine.high %v9411, %v9411
  %v9420 = vcombine.high %v9418, %v9418
  %v9422 = vunpack.c.l.s4 1966171168
  %v9423 = vunpack.c.0.s8 %v9422
  %v9424 = vlaneseq
  %v9425 = vshrl.u32 %v9424, 7
  %v9426 = vsub.s32 %v9423, %v9425
  %v9427 = vrot.slane %v9361, %v9426
  %v9428 = vcombine.high %v9427, %v9427
  %v9430 = vunpack.c.l.s4 1966171168
  %v9431 = vunpack.c.0.s8 %v9430
  %v9432 = vlaneseq
  %v9433 = vshrl.u32 %v9432, 7
  %v9434 = vsub.s32 %v9431, %v9433
  %v9435 = vrot.slane %v9427, %v9434
  %v9437 = vunpack.c.l.s4 1966171168
  %v9438 = vunpack.c.0.s8 %v9437
  %v9439 = vlaneseq
  %v9440 = vshrl.u32 %v9439, 7
  %v9441 = vsub.s32 %v9438, %v9440
  %v9442 = vrot.slane %v9428, %v9441
  %v9443 = vcombine.high %v9435, %v9435
  %v9444 = vcombine.high %v9442, %v9442
  %v9446 = vunpack.c.l.s4 1966171168
  %v9447 = vunpack.c.0.s8 %v9446
  %v9448 = vlaneseq
  %v9449 = vshrl.u32 %v9448, 7
  %v9450 = vsub.s32 %v9447, %v9449
  %v9451 = vrot.slane %v9363, %v9450
  %v9452 = vcombine.high %v9451, %v9451
  %v9454 = vunpack.c.l.s4 1966171168
  %v9455 = vunpack.c.0.s8 %v9454
  %v9456 = vlaneseq
  %v9457 = vshrl.u32 %v9456, 7
  %v9458 = vsub.s32 %v9455, %v9457
  %v9459 = vrot.slane %v9451, %v9458
  %v9461 = vunpack.c.l.s4 1966171168
  %v9462 = vunpack.c.0.s8 %v9461
  %v9463 = vlaneseq
  %v9464 = vshrl.u32 %v9463, 7
  %v9465 = vsub.s32 %v9462, %v9464
  %v9466 = vrot.slane %v9452, %v9465
  %v9467 = vcombine.high %v9459, %v9459
  %v9468 = vcombine.high %v9466, %v9466
  %v9470 = vunpack.c.l.s4 1966171168
  %v9471 = vunpack.c.0.s8 %v9470
  %v9472 = vlaneseq
  %v9473 = vshrl.u32 %v9472, 7
  %v9474 = vsub.s32 %v9471, %v9473
  %v9475 = vrot.slane %v9365, %v9474
  %v9476 = vcombine.high %v9475, %v9475
  %v9478 = vunpack.c.l.s4 1966171168
  %v9479 = vunpack.c.0.s8 %v9478
  %v9480 = vlaneseq
  %v9481 = vshrl.u32 %v9480, 7
  %v9482 = vsub.s32 %v9479, %v9481
  %v9483 = vrot.slane %v9475, %v9482
  %v9485 = vunpack.c.l.s4 1966171168
  %v9486 = vunpack.c.0.s8 %v9485
  %v9487 = vlaneseq
  %v9488 = vshrl.u32 %v9487, 7
  %v9489 = vsub.s32 %v9486, %v9488
  %v9490 = vrot.slane %v9476, %v9489
  %v9491 = vcombine.high %v9483, %v9483
  %v9492 = vcombine.high %v9490, %v9490
  %v9494 = vunpack.c.l.s4 1966171168
  %v9495 = vunpack.c.0.s8 %v9494
  %v9496 = vlaneseq
  %v9497 = vshrl.u32 %v9496, 7
  %v9498 = vsub.s32 %v9495, %v9497
  %v9499 = vrot.slane %v9367, %v9498
  %v9500 = vcombine.high %v9499, %v9499
  %v9502 = vunpack.c.l.s4 1966171168
  %v9503 = vunpack.c.0.s8 %v9502
  %v9504 = vlaneseq
  %v9505 = vshrl.u32 %v9504, 7
  %v9506 = vsub.s32 %v9503, %v9505
  %v9507 = vrot.slane %v9499, %v9506
  %v9509 = vunpack.c.l.s4 1966171168
  %v9510 = vunpack.c.0.s8 %v9509
  %v9511 = vlaneseq
  %v9512 = vshrl.u32 %v9511, 7
  %v9513 = vsub.s32 %v9510, %v9512
  %v9514 = vrot.slane %v9500, %v9513
  %v9515 = vcombine.high %v9507, %v9507
  %v9516 = vcombine.high %v9514, %v9514
  %v9518 = vunpack.c.l.s4 1966171168
  %v9519 = vunpack.c.0.s8 %v9518
  %v9520 = vlaneseq
  %v9521 = vshrl.u32 %v9520, 7
  %v9522 = vsub.s32 %v9519, %v9521
  %v9523 = vrot.slane %v9369, %v9522
  %v9524 = vcombine.high %v9523, %v9523
  %v9526 = vunpack.c.l.s4 1966171168
  %v9527 = vunpack.c.0.s8 %v9526
  %v9528 = vlaneseq
  %v9529 = vshrl.u32 %v9528, 7
  %v9530 = vsub.s32 %v9527, %v9529
  %v9531 = vrot.slane %v9523, %v9530
  %v9533 = vunpack.c.l.s4 1966171168
  %v9534 = vunpack.c.0.s8 %v9533
  %v9535 = vlaneseq
  %v9536 = vshrl.u32 %v9535, 7
  %v9537 = vsub.s32 %v9534, %v9536
  %v9538 = vrot.slane %v9524, %v9537
  %v9539 = vcombine.high %v9531, %v9531
  %v9540 = vcombine.high %v9538, %v9538
  %v9542 = vunpack.c.l.s4 1966171168
  %v9543 = vunpack.c.0.s8 %v9542
  %v9544 = vlaneseq
  %v9545 = vshrl.u32 %v9544, 7
  %v9546 = vsub.s32 %v9543, %v9545
  %v9547 = vrot.slane %v9371, %v9546
  %v9548 = vcombine.high %v9547, %v9547
  %v9550 = vunpack.c.l.s4 1966171168
  %v9551 = vunpack.c.0.s8 %v9550
  %v9552 = vlaneseq
  %v9553 = vshrl.u32 %v9552, 7
  %v9554 = vsub.s32 %v9551, %v9553
  %v9555 = vrot.slane %v9547, %v9554
  %v9557 = vunpack.c.l.s4 1966171168
  %v9558 = vunpack.c.0.s8 %v9557
  %v9559 = vlaneseq
  %v9560 = vshrl.u32 %v9559, 7
  %v9561 = vsub.s32 %v9558, %v9560
  %v9562 = vrot.slane %v9548, %v9561
  %v9563 = vcombine.high %v9555, %v9555
  %v9564 = vcombine.high %v9562, %v9562
  %v9566 = vunpack.c.l.s4 1966171168
  %v9567 = vunpack.c.0.s8 %v9566
  %v9568 = vlaneseq
  %v9569 = vshrl.u32 %v9568, 7
  %v9570 = vsub.s32 %v9567, %v9569
  %v9571 = vrot.slane %v9387, %v9570
  %v9573 = vunpack.c.l.s4 1966171168
  %v9574 = vunpack.c.0.s8 %v9573
  %v9575 = vlaneseq
  %v9576 = vshrl.u32 %v9575, 7
  %v9577 = vsub.s32 %v9574, %v9576
  %v9578 = vrot.slane %v9571, %v9577
  %v9580 = vunpack.c.l.s4 1966171168
  %v9581 = vunpack.c.0.s8 %v9580
  %v9582 = vlaneseq
  %v9583 = vshrl.u32 %v9582, 7
  %v9584 = vsub.s32 %v9581, %v9583
  %v9585 = vrot.slane %v9394, %v9584
  %v9587 = vunpack.c.l.s4 1966171168
  %v9588 = vunpack.c.0.s8 %v9587
  %v9589 = vlaneseq
  %v9590 = vshrl.u32 %v9589, 7
  %v9591 = vsub.s32 %v9588, %v9590
  %v9592 = vrot.slane %v9585, %v9591
  %v9594 = vunpack.c.l.s4 1966171168
  %v9595 = vunpack.c.0.s8 %v9594
  %v9596 = vlaneseq
  %v9597 = vshrl.u32 %v9596, 7
  %v9598 = vsub.s32 %v9595, %v9597
  %v9599 = vrot.slane %v9395, %v9598
  %v9601 = vunpack.c.l.s4 1966171168
  %v9602 = vunpack.c.0.s8 %v9601
  %v9603 = vlaneseq
  %v9604 = vshrl.u32 %v9603, 7
  %v9605 = vsub.s32 %v9602, %v9604
  %v9606 = vrot.slane %v9599, %v9605
  %v9608 = vunpack.c.l.s4 1966171168
  %v9609 = vunpack.c.0.s8 %v9608
  %v9610 = vlaneseq
  %v9611 = vshrl.u32 %v9610, 7
  %v9612 = vsub.s32 %v9609, %v9611
  %v9613 = vrot.slane %v9396, %v9612
  %v9615 = vunpack.c.l.s4 1966171168
  %v9616 = vunpack.c.0.s8 %v9615
  %v9617 = vlaneseq
  %v9618 = vshrl.u32 %v9617, 7
  %v9619 = vsub.s32 %v9616, %v9618
  %v9620 = vrot.slane %v9613, %v9619
  %v9622 = vunpack.c.l.s4 1966171168
  %v9623 = vunpack.c.0.s8 %v9622
  %v9624 = vlaneseq
  %v9625 = vshrl.u32 %v9624, 7
  %v9626 = vsub.s32 %v9623, %v9625
  %v9627 = vrot.slane %v9411, %v9626
  %v9629 = vunpack.c.l.s4 1966171168
  %v9630 = vunpack.c.0.s8 %v9629
  %v9631 = vlaneseq
  %v9632 = vshrl.u32 %v9631, 7
  %v9633 = vsub.s32 %v9630, %v9632
  %v9634 = vrot.slane %v9627, %v9633
  %v9636 = vunpack.c.l.s4 1966171168
  %v9637 = vunpack.c.0.s8 %v9636
  %v9638 = vlaneseq
  %v9639 = vshrl.u32 %v9638, 7
  %v9640 = vsub.s32 %v9637, %v9639
  %v9641 = vrot.slane %v9418, %v9640
  %v9643 = vunpack.c.l.s4 1966171168
  %v9644 = vunpack.c.0.s8 %v9643
  %v9645 = vlaneseq
  %v9646 = vshrl.u32 %v9645, 7
  %v9647 = vsub.s32 %v9644, %v9646
  %v9648 = vrot.slane %v9641, %v9647
  %v9650 = vunpack.c.l.s4 1966171168
  %v9651 = vunpack.c.0.s8 %v9650
  %v9652 = vlaneseq
  %v9653 = vshrl.u32 %v9652, 7
  %v9654 = vsub.s32 %v9651, %v9653
  %v9655 = vrot.slane %v9419, %v9654
  %v9657 = vunpack.c.l.s4 1966171168
  %v9658 = vunpack.c.0.s8 %v9657
  %v9659 = vlaneseq
  %v9660 = vshrl.u32 %v9659, 7
  %v9661 = vsub.s32 %v9658, %v9660
  %v9662 = vrot.slane %v9655, %v9661
  %v9664 = vunpack.c.l.s4 1966171168
  %v9665 = vunpack.c.0.s8 %v9664
  %v9666 = vlaneseq
  %v9667 = vshrl.u32 %v9666, 7
  %v9668 = vsub.s32 %v9665, %v9667
  %v9669 = vrot.slane %v9420, %v9668
  %v9671 = vunpack.c.l.s4 1966171168
  %v9672 = vunpack.c.0.s8 %v9671
  %v9673 = vlaneseq
  %v9674 = vshrl.u32 %v9673, 7
  %v9675 = vsub.s32 %v9672, %v9674
  %v9676 = vrot.slane %v9669, %v9675
  %v9678 = vunpack.c.l.s4 1966171168
  %v9679 = vunpack.c.0.s8 %v9678
  %v9680 = vlaneseq
  %v9681 = vshrl.u32 %v9680, 7
  %v9682 = vsub.s32 %v9679, %v9681
  %v9683 = vrot.slane %v9435, %v9682
  %v9685 = vunpack.c.l.s4 1966171168
  %v9686 = vunpack.c.0.s8 %v9685
  %v9687 = vlaneseq
  %v9688 = vshrl.u32 %v9687, 7
  %v9689 = vsub.s32 %v9686, %v9688
  %v9690 = vrot.slane %v9683, %v9689
  %v9692 = vunpack.c.l.s4 1966171168
  %v9693 = vunpack.c.0.s8 %v9692
  %v9694 = vlaneseq
  %v9695 = vshrl.u32 %v9694, 7
  %v9696 = vsub.s32 %v9693, %v9695
  %v9697 = vrot.slane %v9442, %v9696
  %v9699 = vunpack.c.l.s4 1966171168
  %v9700 = vunpack.c.0.s8 %v9699
  %v9701 = vlaneseq
  %v9702 = vshrl.u32 %v9701, 7
  %v9703 = vsub.s32 %v9700, %v9702
  %v9704 = vrot.slane %v9697, %v9703
  %v9706 = vunpack.c.l.s4 1966171168
  %v9707 = vunpack.c.0.s8 %v9706
  %v9708 = vlaneseq
  %v9709 = vshrl.u32 %v9708, 7
  %v9710 = vsub.s32 %v9707, %v9709
  %v9711 = vrot.slane %v9443, %v9710
  %v9713 = vunpack.c.l.s4 1966171168
  %v9714 = vunpack.c.0.s8 %v9713
  %v9715 = vlaneseq
  %v9716 = vshrl.u32 %v9715, 7
  %v9717 = vsub.s32 %v9714, %v9716
  %v9718 = vrot.slane %v9711, %v9717
  %v9720 = vunpack.c.l.s4 1966171168
  %v9721 = vunpack.c.0.s8 %v9720
  %v9722 = vlaneseq
  %v9723 = vshrl.u32 %v9722, 7
  %v9724 = vsub.s32 %v9721, %v9723
  %v9725 = vrot.slane %v9444, %v9724
  %v9727 = vunpack.c.l.s4 1966171168
  %v9728 = vunpack.c.0.s8 %v9727
  %v9729 = vlaneseq
  %v9730 = vshrl.u32 %v9729, 7
  %v9731 = vsub.s32 %v9728, %v9730
  %v9732 = vrot.slane %v9725, %v9731
  %v9734 = vunpack.c.l.s4 1966171168
  %v9735 = vunpack.c.0.s8 %v9734
  %v9736 = vlaneseq
  %v9737 = vshrl.u32 %v9736, 7
  %v9738 = vsub.s32 %v9735, %v9737
  %v9739 = vrot.slane %v9459, %v9738
  %v9741 = vunpack.c.l.s4 1966171168
  %v9742 = vunpack.c.0.s8 %v9741
  %v9743 = vlaneseq
  %v9744 = vshrl.u32 %v9743, 7
  %v9745 = vsub.s32 %v9742, %v9744
  %v9746 = vrot.slane %v9739, %v9745
  %v9748 = vunpack.c.l.s4 1966171168
  %v9749 = vunpack.c.0.s8 %v9748
  %v9750 = vlaneseq
  %v9751 = vshrl.u32 %v9750, 7
  %v9752 = vsub.s32 %v9749, %v9751
  %v9753 = vrot.slane %v9466, %v9752
  %v9755 = vunpack.c.l.s4 1966171168
  %v9756 = vunpack.c.0.s8 %v9755
  %v9757 = vlaneseq
  %v9758 = vshrl.u32 %v9757, 7
  %v9759 = vsub.s32 %v9756, %v9758
  %v9760 = vrot.slane %v9753, %v9759
  %v9762 = vunpack.c.l.s4 1966171168
  %v9763 = vunpack.c.0.s8 %v9762
  %v9764 = vlaneseq
  %v9765 = vshrl.u32 %v9764, 7
  %v9766 = vsub.s32 %v9763, %v9765
  %v9767 = vrot.slane %v9467, %v9766
  %v9769 = vunpack.c.l.s4 1966171168
  %v9770 = vunpack.c.0.s8 %v9769
  %v9771 = vlaneseq
  %v9772 = vshrl.u32 %v9771, 7
  %v9773 = vsub.s32 %v9770, %v9772
  %v9774 = vrot.slane %v9767, %v9773
  %v9776 = vunpack.c.l.s4 1966171168
  %v9777 = vunpack.c.0.s8 %v9776
  %v9778 = vlaneseq
  %v9779 = vshrl.u32 %v9778, 7
  %v9780 = vsub.s32 %v9777, %v9779
  %v9781 = vrot.slane %v9468, %v9780
  %v9783 = vunpack.c.l.s4 1966171168
  %v9784 = vunpack.c.0.s8 %v9783
  %v9785 = vlaneseq
  %v9786 = vshrl.u32 %v9785, 7
  %v9787 = vsub.s32 %v9784, %v9786
  %v9788 = vrot.slane %v9781, %v9787
  %v9790 = vunpack.c.l.s4 1966171168
  %v9791 = vunpack.c.0.s8 %v9790
  %v9792 = vlaneseq
  %v9793 = vshrl.u32 %v9792, 7
  %v9794 = vsub.s32 %v9791, %v9793
  %v9795 = vrot.slane %v9483, %v9794
  %v9797 = vunpack.c.l.s4 1966171168
  %v9798 = vunpack.c.0.s8 %v9797
  %v9799 = vlaneseq
  %v9800 = vshrl.u32 %v9799, 7
  %v9801 = vsub.s32 %v9798, %v9800
  %v9802 = vrot.slane %v9795, %v9801
  %v9804 = vunpack.c.l.s4 1966171168
  %v9805 = vunpack.c.0.s8 %v9804
  %v9806 = vlaneseq
  %v9807 = vshrl.u32 %v9806, 7
  %v9808 = vsub.s32 %v9805, %v9807
  %v9809 = vrot.slane %v9490, %v9808
  %v9811 = vunpack.c.l.s4 1966171168
  %v9812 = vunpack.c.0.s8 %v9811
  %v9813 = vlaneseq
  %v9814 = vshrl.u32 %v9813, 7
  %v9815 = vsub.s32 %v9812, %v9814
  %v9816 = vrot.slane %v9809, %v9815
  %v9818 = vunpack.c.l.s4 1966171168
  %v9819 = vunpack.c.0.s8 %v9818
  %v9820 = vlaneseq
  %v9821 = vshrl.u32 %v9820, 7
  %v9822 = vsub.s32 %v9819, %v9821
  %v9823 = vrot.slane %v9491, %v9822
  %v9825 = vunpack.c.l.s4 1966171168
  %v9826 = vunpack.c.0.s8 %v9825
  %v9827 = vlaneseq
  %v9828 = vshrl.u32 %v9827, 7
  %v9829 = vsub.s32 %v9826, %v9828
  %v9830 = vrot.slane %v9823, %v9829
  %v9832 = vunpack.c.l.s4 1966171168
  %v9833 = vunpack.c.0.s8 %v9832
  %v9834 = vlaneseq
  %v9835 = vshrl.u32 %v9834, 7
  %v9836 = vsub.s32 %v9833, %v9835
  %v9837 = vrot.slane %v9492, %v9836
  %v9839 = vunpack.c.l.s4 1966171168
  %v9840 = vunpack.c.0.s8 %v9839
  %v9841 = vlaneseq
  %v9842 = vshrl.u32 %v9841, 7
  %v9843 = vsub.s32 %v9840, %v9842
  %v9844 = vrot.slane %v9837, %v9843
  %v9846 = vunpack.c.l.s4 1966171168
  %v9847 = vunpack.c.0.s8 %v9846
  %v9848 = vlaneseq
  %v9849 = vshrl.u32 %v9848, 7
  %v9850 = vsub.s32 %v9847, %v9849
  %v9851 = vrot.slane %v9507, %v9850
  %v9853 = vunpack.c.l.s4 1966171168
  %v9854 = vunpack.c.0.s8 %v9853
  %v9855 = vlaneseq
  %v9856 = vshrl.u32 %v9855, 7
  %v9857 = vsub.s32 %v9854, %v9856
  %v9858 = vrot.slane %v9851, %v9857
  %v9860 = vunpack.c.l.s4 1966171168
  %v9861 = vunpack.c.0.s8 %v9860
  %v9862 = vlaneseq
  %v9863 = vshrl.u32 %v9862, 7
  %v9864 = vsub.s32 %v9861, %v9863
  %v9865 = vrot.slane %v9514, %v9864
  %v9867 = vunpack.c.l.s4 1966171168
  %v9868 = vunpack.c.0.s8 %v9867
  %v9869 = vlaneseq
  %v9870 = vshrl.u32 %v9869, 7
  %v9871 = vsub.s32 %v9868, %v9870
  %v9872 = vrot.slane %v9865, %v9871
  %v9874 = vunpack.c.l.s4 1966171168
  %v9875 = vunpack.c.0.s8 %v9874
  %v9876 = vlaneseq
  %v9877 = vshrl.u32 %v9876, 7
  %v9878 = vsub.s32 %v9875, %v9877
  %v9879 = vrot.slane %v9515, %v9878
  %v9881 = vunpack.c.l.s4 1966171168
  %v9882 = vunpack.c.0.s8 %v9881
  %v9883 = vlaneseq
  %v9884 = vshrl.u32 %v9883, 7
  %v9885 = vsub.s32 %v9882, %v9884
  %v9886 = vrot.slane %v9879, %v9885
  %v9888 = vunpack.c.l.s4 1966171168
  %v9889 = vunpack.c.0.s8 %v9888
  %v9890 = vlaneseq
  %v9891 = vshrl.u32 %v9890, 7
  %v9892 = vsub.s32 %v9889, %v9891
  %v9893 = vrot.slane %v9516, %v9892
  %v9895 = vunpack.c.l.s4 1966171168
  %v9896 = vunpack.c.0.s8 %v9895
  %v9897 = vlaneseq
  %v9898 = vshrl.u32 %v9897, 7
  %v9899 = vsub.s32 %v9896, %v9898
  %v9900 = vrot.slane %v9893, %v9899
  %v9902 = vunpack.c.l.s4 1966171168
  %v9903 = vunpack.c.0.s8 %v9902
  %v9904 = vlaneseq
  %v9905 = vshrl.u32 %v9904, 7
  %v9906 = vsub.s32 %v9903, %v9905
  %v9907 = vrot.slane %v9531, %v9906
  %v9909 = vunpack.c.l.s4 1966171168
  %v9910 = vunpack.c.0.s8 %v9909
  %v9911 = vlaneseq
  %v9912 = vshrl.u32 %v9911, 7
  %v9913 = vsub.s32 %v9910, %v9912
  %v9914 = vrot.slane %v9907, %v9913
  %v9916 = vunpack.c.l.s4 1966171168
  %v9917 = vunpack.c.0.s8 %v9916
  %v9918 = vlaneseq
  %v9919 = vshrl.u32 %v9918, 7
  %v9920 = vsub.s32 %v9917, %v9919
  %v9921 = vrot.slane %v9538, %v9920
  %v9923 = vunpack.c.l.s4 1966171168
  %v9924 = vunpack.c.0.s8 %v9923
  %v9925 = vlaneseq
  %v9926 = vshrl.u32 %v9925, 7
  %v9927 = vsub.s32 %v9924, %v9926
  %v9928 = vrot.slane %v9921, %v9927
  %v9930 = vunpack.c.l.s4 1966171168
  %v9931 = vunpack.c.0.s8 %v9930
  %v9932 = vlaneseq
  %v9933 = vshrl.u32 %v9932, 7
  %v9934 = vsub.s32 %v9931, %v9933
  %v9935 = vrot.slane %v9539, %v9934
  %v9937 = vunpack.c.l.s4 1966171168
  %v9938 = vunpack.c.0.s8 %v9937
  %v9939 = vlaneseq
  %v9940 = vshrl.u32 %v9939, 7
  %v9941 = vsub.s32 %v9938, %v9940
  %v9942 = vrot.slane %v9935, %v9941
  %v9944 = vunpack.c.l.s4 1966171168
  %v9945 = vunpack.c.0.s8 %v9944
  %v9946 = vlaneseq
  %v9947 = vshrl.u32 %v9946, 7
  %v9948 = vsub.s32 %v9945, %v9947
  %v9949 = vrot.slane %v9540, %v9948
  %v9951 = vunpack.c.l.s4 1966171168
  %v9952 = vunpack.c.0.s8 %v9951
  %v9953 = vlaneseq
  %v9954 = vshrl.u32 %v9953, 7
  %v9955 = vsub.s32 %v9952, %v9954
  %v9956 = vrot.slane %v9949, %v9955
  %v9958 = vunpack.c.l.s4 1966171168
  %v9959 = vunpack.c.0.s8 %v9958
  %v9960 = vlaneseq
  %v9961 = vshrl.u32 %v9960, 7
  %v9962 = vsub.s32 %v9959, %v9961
  %v9963 = vrot.slane %v9555, %v9962
  %v9965 = vunpack.c.l.s4 1966171168
  %v9966 = vunpack.c.0.s8 %v9965
  %v9967 = vlaneseq
  %v9968 = vshrl.u32 %v9967, 7
  %v9969 = vsub.s32 %v9966, %v9968
  %v9970 = vrot.slane %v9963, %v9969
  %v9972 = vunpack.c.l.s4 1966171168
  %v9973 = vunpack.c.0.s8 %v9972
  %v9974 = vlaneseq
  %v9975 = vshrl.u32 %v9974, 7
  %v9976 = vsub.s32 %v9973, %v9975
  %v9977 = vrot.slane %v9562, %v9976
  %v9979 = vunpack.c.l.s4 1966171168
  %v9980 = vunpack.c.0.s8 %v9979
  %v9981 = vlaneseq
  %v9982 = vshrl.u32 %v9981, 7
  %v9983 = vsub.s32 %v9980, %v9982
  %v9984 = vrot.slane %v9977, %v9983
  %v9986 = vunpack.c.l.s4 1966171168
  %v9987 = vunpack.c.0.s8 %v9986
  %v9988 = vlaneseq
  %v9989 = vshrl.u32 %v9988, 7
  %v9990 = vsub.s32 %v9987, %v9989
  %v9991 = vrot.slane %v9563, %v9990
  %v9993 = vunpack.c.l.s4 1966171168
  %v9994 = vunpack.c.0.s8 %v9993
  %v9995 = vlaneseq
  %v9996 = vshrl.u32 %v9995, 7
  %v9997 = vsub.s32 %v9994, %v9996
  %v9998 = vrot.slane %v9991, %v9997
  %v10000 = vunpack.c.l.s4 1966171168
  %v10001 = vunpack.c.0.s8 %v10000
  %v10002 = vlaneseq
  %v10003 = vshrl.u32 %v10002, 7
  %v10004 = vsub.s32 %v10001, %v10003
  %v10005 = vrot.slane %v9564, %v10004
  %v10007 = vunpack.c.l.s4 1966171168
  %v10008 = vunpack.c.0.s8 %v10007
  %v10009 = vlaneseq
  %v10010 = vshrl.u32 %v10009, 7
  %v10011 = vsub.s32 %v10008, %v10010
  %v10012 = vrot.slane %v10005, %v10011
  %v10013 = vunpack.c.l.b16 %v9578
  %v10014 = vunpack.c.l.b16 %v9592
  %v10015 = vunpack.c.l.b16 %v9606
  %v10016 = vunpack.c.l.b16 %v9620
  %v10017 = vunpack.c.l.b16 %v9634
  %v10018 = vunpack.c.l.b16 %v9648
  %v10019 = vunpack.c.l.b16 %v9662
  %v10020 = vunpack.c.l.b16 %v9676
  %v10021 = vunpack.c.l.b16 %v9690
  %v10022 = vunpack.c.l.b16 %v9704
  %v10023 = vunpack.c.l.b16 %v9718
  %v10024 = vunpack.c.l.b16 %v9732
  %v10025 = vunpack.c.l.b16 %v9746
  %v10026 = vunpack.c.l.b16 %v9760
  %v10027 = vunpack.c.l.b16 %v9774
  %v10028 = vunpack.c.l.b16 %v9788
  %v10029 = vunpack.c.l.b16 %v9802
  %v10030 = vunpack.c.l.b16 %v9816
  %v10031 = vunpack.c.l.b16 %v9830
  %v10032 = vunpack.c.l.b16 %v9844
  %v10033 = vunpack.c.l.b16 %v9858
  %v10034 = vunpack.c.l.b16 %v9872
  %v10035 = vunpack.c.l.b16 %v9886
  %v10036 = vunpack.c.l.b16 %v9900
  %v10037 = vunpack.c.l.b16 %v9914
  %v10038 = vunpack.c.l.b16 %v9928
  %v10039 = vunpack.c.l.b16 %v9942
  %v10040 = vunpack.c.l.b16 %v9956
  %v10041 = vunpack.c.l.b16 %v9970
  %v10042 = vunpack.c.l.b16 %v9984
  %v10043 = vunpack.c.l.b16 %v9998
  %v10044 = vunpack.c.l.b16 %v10012
  %v10045 = vrot.slane %v10014, 7
  %v10046 = vsel %vm2815, %v10045, %v10013
  %v10047 = vrot.slane %v10015, 6
  %v10048 = vsel %vm2818, %v10047, %v10046
  %v10049 = vrot.slane %v10016, 5
  %v10050 = vsel %vm2821, %v10049, %v10048
  %v10051 = vrot.slane %v10018, 7
  %v10052 = vsel %vm2815, %v10051, %v10017
  %v10053 = vrot.slane %v10019, 6
  %v10054 = vsel %vm2818, %v10053, %v10052
  %v10055 = vrot.slane %v10020, 5
  %v10056 = vsel %vm2821, %v10055, %v10054
  %v10057 = vrot.slane %v10022, 7
  %v10058 = vsel %vm2815, %v10057, %v10021
  %v10059 = vrot.slane %v10023, 6
  %v10060 = vsel %vm2818, %v10059, %v10058
  %v10061 = vrot.slane %v10024, 5
  %v10062 = vsel %vm2821, %v10061, %v10060
  %v10063 = vrot.slane %v10026, 7
  %v10064 = vsel %vm2815, %v10063, %v10025
  %v10065 = vrot.slane %v10027, 6
  %v10066 = vsel %vm2818, %v10065, %v10064
  %v10067 = vrot.slane %v10028, 5
  %v10068 = vsel %vm2821, %v10067, %v10066
  %v10069 = vrot.slane %v10030, 7
  %v10070 = vsel %vm2815, %v10069, %v10029
  %v10071 = vrot.slane %v10031, 6
  %v10072 = vsel %vm2818, %v10071, %v10070
  %v10073 = vrot.slane %v10032, 5
  %v10074 = vsel %vm2821, %v10073, %v10072
  %v10075 = vrot.slane %v10034, 7
  %v10076 = vsel %vm2815, %v10075, %v10033
  %v10077 = vrot.slane %v10035, 6
  %v10078 = vsel %vm2818, %v10077, %v10076
  %v10079 = vrot.slane %v10036, 5
  %v10080 = vsel %vm2821, %v10079, %v10078
  %v10081 = vrot.slane %v10038, 7
  %v10082 = vsel %vm2815, %v10081, %v10037
  %v10083 = vrot.slane %v10039, 6
  %v10084 = vsel %vm2818, %v10083, %v10082
  %v10085 = vrot.slane %v10040, 5
  %v10086 = vsel %vm2821, %v10085, %v10084
  %v10087 = vrot.slane %v10042, 7
  %v10088 = vsel %vm2815, %v10087, %v10041
  %v10089 = vrot.slane %v10043, 6
  %v10090 = vsel %vm2818, %v10089, %v10088
  %v10091 = vrot.slane %v10044, 5
  %v10092 = vsel %vm2821, %v10091, %v10090
  %v10093 = vpack.c.b16 %v10050, %v10050
  %v10094 = vpack.c.b16 %v10056, %v10056
  %v10095 = vpack.c.b16 %v10062, %v10062
  %v10096 = vpack.c.b16 %v10068, %v10068
  %v10097 = vpack.c.b16 %v10074, %v10074
  %v10098 = vpack.c.b16 %v10080, %v10080
  %v10099 = vpack.c.b16 %v10086, %v10086
  %v10100 = vpack.c.b16 %v10092, %v10092
  %v10102 = vshrl.u32 %v10093, 16
  %v10104 = vrot.slane %v10102, 7
  %v10105 = vshll.u32 %v10093, 16
  %v10107 = vor.u32 %v10104, %v10105
  %v10109 = vshrl.u32 %v10094, 16
  %v10111 = vrot.slane %v10109, 7
  %v10112 = vshll.u32 %v10094, 16
  %v10114 = vor.u32 %v10111, %v10112
  %v10116 = vshrl.u32 %v10095, 16
  %v10118 = vrot.slane %v10116, 7
  %v10119 = vshll.u32 %v10095, 16
  %v10121 = vor.u32 %v10118, %v10119
  %v10123 = vshrl.u32 %v10096, 16
  %v10125 = vrot.slane %v10123, 7
  %v10126 = vshll.u32 %v10096, 16
  %v10128 = vor.u32 %v10125, %v10126
  %v10130 = vshrl.u32 %v10097, 16
  %v10132 = vrot.slane %v10130, 7
  %v10133 = vshll.u32 %v10097, 16
  %v10135 = vor.u32 %v10132, %v10133
  %v10137 = vshrl.u32 %v10098, 16
  %v10139 = vrot.slane %v10137, 7
  %v10140 = vshll.u32 %v10098, 16
  %v10142 = vor.u32 %v10139, %v10140
  %v10144 = vshrl.u32 %v10099, 16
  %v10146 = vrot.slane %v10144, 7
  %v10147 = vshll.u32 %v10099, 16
  %v10149 = vor.u32 %v10146, %v10147
  %v10151 = vshrl.u32 %v10100, 16
  %v10153 = vrot.slane %v10151, 7
  %v10154 = vshll.u32 %v10100, 16
  %v10156 = vor.u32 %v10153, %v10154
  %v10165 = vsel %vm3199, 0, %v10107
  %v10166 = vsel %vm3199, 0, %v10114
  %v10167 = vsel %vm3199, 0, %v10121
  %v10168 = vsel %vm3199, 0, %v10128
  %v10169 = vsel %vm3199, 0, %v10135
  %v10170 = vsel %vm3199, 0, %v10142
  %v10171 = vsel %vm3199, 0, %v10149
  %v10172 = vsel %vm3199, 0, %v10156
  %vm10173 = vcmask 1042432
  %vm10174 = vsmask.f32 2304
  %vm10175 = vmand %vm10173, %vm10174
  %v10176 = vsel %vm10175, %v10165, 0
  %v10177 = vsel %vm10175, %v10166, 0
  %v10178 = vsel %vm10175, %v10167, 0
  %v10179 = vsel %vm10175, %v10168, 0
  %v10180 = vsel %vm10175, %v3208, 0
  %v10181 = vsel %vm10175, %v10169, 0
  %v10182 = vsel %vm10175, %v10170, 0
  %v10183 = vsel %vm10175, %v10171, 0
  %v10184 = vsel %vm10175, %v10172, 0
  %v10185 = vrot.slane %v10013, 1
  %v10186 = vsel %vm2815, %v10014, %v10185
  %v10187 = vrot.slane %v10015, 7
  %v10188 = vsel %vm2818, %v10187, %v10186
  %v10189 = vrot.slane %v10016, 6
  %v10190 = vsel %vm2821, %v10189, %v10188
  %v10191 = vrot.slane %v10017, 1
  %v10192 = vsel %vm2815, %v10018, %v10191
  %v10193 = vrot.slane %v10019, 7
  %v10194 = vsel %vm2818, %v10193, %v10192
  %v10195 = vrot.slane %v10020, 6
  %v10196 = vsel %vm2821, %v10195, %v10194
  %v10197 = vrot.slane %v10021, 1
  %v10198 = vsel %vm2815, %v10022, %v10197
  %v10199 = vrot.slane %v10023, 7
  %v10200 = vsel %vm2818, %v10199, %v10198
  %v10201 = vrot.slane %v10024, 6
  %v10202 = vsel %vm2821, %v10201, %v10200
  %v10203 = vrot.slane %v10025, 1
  %v10204 = vsel %vm2815, %v10026, %v10203
  %v10205 = vrot.slane %v10027, 7
  %v10206 = vsel %vm2818, %v10205, %v10204
  %v10207 = vrot.slane %v10028, 6
  %v10208 = vsel %vm2821, %v10207, %v10206
  %v10209 = vrot.slane %v10029, 1
  %v10210 = vsel %vm2815, %v10030, %v10209
  %v10211 = vrot.slane %v10031, 7
  %v10212 = vsel %vm2818, %v10211, %v10210
  %v10213 = vrot.slane %v10032, 6
  %v10214 = vsel %vm2821, %v10213, %v10212
  %v10215 = vrot.slane %v10033, 1
  %v10216 = vsel %vm2815, %v10034, %v10215
  %v10217 = vrot.slane %v10035, 7
  %v10218 = vsel %vm2818, %v10217, %v10216
  %v10219 = vrot.slane %v10036, 6
  %v10220 = vsel %vm2821, %v10219, %v10218
  %v10221 = vrot.slane %v10037, 1
  %v10222 = vsel %vm2815, %v10038, %v10221
  %v10223 = vrot.slane %v10039, 7
  %v10224 = vsel %vm2818, %v10223, %v10222
  %v10225 = vrot.slane %v10040, 6
  %v10226 = vsel %vm2821, %v10225, %v10224
  %v10227 = vrot.slane %v10041, 1
  %v10228 = vsel %vm2815, %v10042, %v10227
  %v10229 = vrot.slane %v10043, 7
  %v10230 = vsel %vm2818, %v10229, %v10228
  %v10231 = vrot.slane %v10044, 6
  %v10232 = vsel %vm2821, %v10231, %v10230
  %v10233 = vpack.c.b16 %v10190, %v10190
  %v10234 = vpack.c.b16 %v10196, %v10196
  %v10235 = vpack.c.b16 %v10202, %v10202
  %v10236 = vpack.c.b16 %v10208, %v10208
  %v10237 = vpack.c.b16 %v10214, %v10214
  %v10238 = vpack.c.b16 %v10220, %v10220
  %v10239 = vpack.c.b16 %v10226, %v10226
  %v10240 = vpack.c.b16 %v10232, %v10232
  %v10242 = vshrl.u32 %v10233, 16
  %v10244 = vrot.slane %v10242, 7
  %v10245 = vshll.u32 %v10233, 16
  %v10247 = vor.u32 %v10244, %v10245
  %v10249 = vshrl.u32 %v10234, 16
  %v10251 = vrot.slane %v10249, 7
  %v10252 = vshll.u32 %v10234, 16
  %v10254 = vor.u32 %v10251, %v10252
  %v10256 = vshrl.u32 %v10235, 16
  %v10258 = vrot.slane %v10256, 7
  %v10259 = vshll.u32 %v10235, 16
  %v10261 = vor.u32 %v10258, %v10259
  %v10263 = vshrl.u32 %v10236, 16
  %v10265 = vrot.slane %v10263, 7
  %v10266 = vshll.u32 %v10236, 16
  %v10268 = vor.u32 %v10265, %v10266
  %v10270 = vshrl.u32 %v10237, 16
  %v10272 = vrot.slane %v10270, 7
  %v10273 = vshll.u32 %v10237, 16
  %v10275 = vor.u32 %v10272, %v10273
  %v10277 = vshrl.u32 %v10238, 16
  %v10279 = vrot.slane %v10277, 7
  %v10280 = vshll.u32 %v10238, 16
  %v10282 = vor.u32 %v10279, %v10280
  %v10284 = vshrl.u32 %v10239, 16
  %v10286 = vrot.slane %v10284, 7
  %v10287 = vshll.u32 %v10239, 16
  %v10289 = vor.u32 %v10286, %v10287
  %v10291 = vshrl.u32 %v10240, 16
  %v10293 = vrot.slane %v10291, 7
  %v10294 = vshll.u32 %v10240, 16
  %v10296 = vor.u32 %v10293, %v10294
  %v10305 = vsel %vm3199, 0, %v10247
  %v10306 = vsel %vm3199, 0, %v10254
  %v10307 = vsel %vm3199, 0, %v10261
  %v10308 = vsel %vm3199, 0, %v10268
  %v10309 = vsel %vm3199, 0, %v10275
  %v10310 = vsel %vm3199, 0, %v10282
  %v10311 = vsel %vm3199, 0, %v10289
  %v10312 = vsel %vm3199, 0, %v10296
  %v10313 = vsel %vm10175, %v10305, 0
  %v10314 = vsel %vm10175, %v10306, 0
  %v10315 = vsel %vm10175, %v10307, 0
  %v10316 = vsel %vm10175, %v10308, 0
  %v10317 = vsel %vm10175, %v10309, 0
  %v10318 = vsel %vm10175, %v10310, 0
  %v10319 = vsel %vm10175, %v10311, 0
  %v10320 = vsel %vm10175, %v10312, 0
  %v10322 = vunpack.c.l.s4 1966171168
  %v10323 = vunpack.c.0.s8 %v10322
  %v10324 = vlaneseq
  %v10325 = vshrl.u32 %v10324, 7
  %v10326 = vsub.s32 %v10323, %v10325
  %v10327 = vrot.slane %v9358, %v10326
  %v10328 = vcombine.high %v10327, %v10327
  %v10330 = vunpack.c.l.s4 1966171168
  %v10331 = vunpack.c.0.s8 %v10330
  %v10332 = vlaneseq
  %v10333 = vshrl.u32 %v10332, 7
  %v10334 = vsub.s32 %v10331, %v10333
  %v10335 = vrot.slane %v10327, %v10334
  %v10337 = vunpack.c.l.s4 1966171168
  %v10338 = vunpack.c.0.s8 %v10337
  %v10339 = vlaneseq
  %v10340 = vshrl.u32 %v10339, 7
  %v10341 = vsub.s32 %v10338, %v10340
  %v10342 = vrot.slane %v10328, %v10341
  %v10343 = vcombine.high %v10335, %v10335
  %v10344 = vcombine.high %v10342, %v10342
  %v10346 = vunpack.c.l.s4 1966171168
  %v10347 = vunpack.c.0.s8 %v10346
  %v10348 = vlaneseq
  %v10349 = vshrl.u32 %v10348, 7
  %v10350 = vsub.s32 %v10347, %v10349
  %v10351 = vrot.slane %v9360, %v10350
  %v10352 = vcombine.high %v10351, %v10351
  %v10354 = vunpack.c.l.s4 1966171168
  %v10355 = vunpack.c.0.s8 %v10354
  %v10356 = vlaneseq
  %v10357 = vshrl.u32 %v10356, 7
  %v10358 = vsub.s32 %v10355, %v10357
  %v10359 = vrot.slane %v10351, %v10358
  %v10361 = vunpack.c.l.s4 1966171168
  %v10362 = vunpack.c.0.s8 %v10361
  %v10363 = vlaneseq
  %v10364 = vshrl.u32 %v10363, 7
  %v10365 = vsub.s32 %v10362, %v10364
  %v10366 = vrot.slane %v10352, %v10365
  %v10367 = vcombine.high %v10359, %v10359
  %v10368 = vcombine.high %v10366, %v10366
  %v10370 = vunpack.c.l.s4 1966171168
  %v10371 = vunpack.c.0.s8 %v10370
  %v10372 = vlaneseq
  %v10373 = vshrl.u32 %v10372, 7
  %v10374 = vsub.s32 %v10371, %v10373
  %v10375 = vrot.slane %v9362, %v10374
  %v10376 = vcombine.high %v10375, %v10375
  %v10378 = vunpack.c.l.s4 1966171168
  %v10379 = vunpack.c.0.s8 %v10378
  %v10380 = vlaneseq
  %v10381 = vshrl.u32 %v10380, 7
  %v10382 = vsub.s32 %v10379, %v10381
  %v10383 = vrot.slane %v10375, %v10382
  %v10385 = vunpack.c.l.s4 1966171168
  %v10386 = vunpack.c.0.s8 %v10385
  %v10387 = vlaneseq
  %v10388 = vshrl.u32 %v10387, 7
  %v10389 = vsub.s32 %v10386, %v10388
  %v10390 = vrot.slane %v10376, %v10389
  %v10391 = vcombine.high %v10383, %v10383
  %v10392 = vcombine.high %v10390, %v10390
  %v10394 = vunpack.c.l.s4 1966171168
  %v10395 = vunpack.c.0.s8 %v10394
  %v10396 = vlaneseq
  %v10397 = vshrl.u32 %v10396, 7
  %v10398 = vsub.s32 %v10395, %v10397
  %v10399 = vrot.slane %v9364, %v10398
  %v10400 = vcombine.high %v10399, %v10399
  %v10402 = vunpack.c.l.s4 1966171168
  %v10403 = vunpack.c.0.s8 %v10402
  %v10404 = vlaneseq
  %v10405 = vshrl.u32 %v10404, 7
  %v10406 = vsub.s32 %v10403, %v10405
  %v10407 = vrot.slane %v10399, %v10406
  %v10409 = vunpack.c.l.s4 1966171168
  %v10410 = vunpack.c.0.s8 %v10409
  %v10411 = vlaneseq
  %v10412 = vshrl.u32 %v10411, 7
  %v10413 = vsub.s32 %v10410, %v10412
  %v10414 = vrot.slane %v10400, %v10413
  %v10415 = vcombine.high %v10407, %v10407
  %v10416 = vcombine.high %v10414, %v10414
  %v10418 = vunpack.c.l.s4 1966171168
  %v10419 = vunpack.c.0.s8 %v10418
  %v10420 = vlaneseq
  %v10421 = vshrl.u32 %v10420, 7
  %v10422 = vsub.s32 %v10419, %v10421
  %v10423 = vrot.slane %v9366, %v10422
  %v10424 = vcombine.high %v10423, %v10423
  %v10426 = vunpack.c.l.s4 1966171168
  %v10427 = vunpack.c.0.s8 %v10426
  %v10428 = vlaneseq
  %v10429 = vshrl.u32 %v10428, 7
  %v10430 = vsub.s32 %v10427, %v10429
  %v10431 = vrot.slane %v10423, %v10430
  %v10433 = vunpack.c.l.s4 1966171168
  %v10434 = vunpack.c.0.s8 %v10433
  %v10435 = vlaneseq
  %v10436 = vshrl.u32 %v10435, 7
  %v10437 = vsub.s32 %v10434, %v10436
  %v10438 = vrot.slane %v10424, %v10437
  %v10439 = vcombine.high %v10431, %v10431
  %v10440 = vcombine.high %v10438, %v10438
  %v10442 = vunpack.c.l.s4 1966171168
  %v10443 = vunpack.c.0.s8 %v10442
  %v10444 = vlaneseq
  %v10445 = vshrl.u32 %v10444, 7
  %v10446 = vsub.s32 %v10443, %v10445
  %v10447 = vrot.slane %v9368, %v10446
  %v10448 = vcombine.high %v10447, %v10447
  %v10450 = vunpack.c.l.s4 1966171168
  %v10451 = vunpack.c.0.s8 %v10450
  %v10452 = vlaneseq
  %v10453 = vshrl.u32 %v10452, 7
  %v10454 = vsub.s32 %v10451, %v10453
  %v10455 = vrot.slane %v10447, %v10454
  %v10457 = vunpack.c.l.s4 1966171168
  %v10458 = vunpack.c.0.s8 %v10457
  %v10459 = vlaneseq
  %v10460 = vshrl.u32 %v10459, 7
  %v10461 = vsub.s32 %v10458, %v10460
  %v10462 = vrot.slane %v10448, %v10461
  %v10463 = vcombine.high %v10455, %v10455
  %v10464 = vcombine.high %v10462, %v10462
  %v10466 = vunpack.c.l.s4 1966171168
  %v10467 = vunpack.c.0.s8 %v10466
  %v10468 = vlaneseq
  %v10469 = vshrl.u32 %v10468, 7
  %v10470 = vsub.s32 %v10467, %v10469
  %v10471 = vrot.slane %v9370, %v10470
  %v10472 = vcombine.high %v10471, %v10471
  %v10474 = vunpack.c.l.s4 1966171168
  %v10475 = vunpack.c.0.s8 %v10474
  %v10476 = vlaneseq
  %v10477 = vshrl.u32 %v10476, 7
  %v10478 = vsub.s32 %v10475, %v10477
  %v10479 = vrot.slane %v10471, %v10478
  %v10481 = vunpack.c.l.s4 1966171168
  %v10482 = vunpack.c.0.s8 %v10481
  %v10483 = vlaneseq
  %v10484 = vshrl.u32 %v10483, 7
  %v10485 = vsub.s32 %v10482, %v10484
  %v10486 = vrot.slane %v10472, %v10485
  %v10487 = vcombine.high %v10479, %v10479
  %v10488 = vcombine.high %v10486, %v10486
  %v10490 = vunpack.c.l.s4 1966171168
  %v10491 = vunpack.c.0.s8 %v10490
  %v10492 = vlaneseq
  %v10493 = vshrl.u32 %v10492, 7
  %v10494 = vsub.s32 %v10491, %v10493
  %v10495 = vrot.slane %v9372, %v10494
  %v10496 = vcombine.high %v10495, %v10495
  %v10498 = vunpack.c.l.s4 1966171168
  %v10499 = vunpack.c.0.s8 %v10498
  %v10500 = vlaneseq
  %v10501 = vshrl.u32 %v10500, 7
  %v10502 = vsub.s32 %v10499, %v10501
  %v10503 = vrot.slane %v10495, %v10502
  %v10505 = vunpack.c.l.s4 1966171168
  %v10506 = vunpack.c.0.s8 %v10505
  %v10507 = vlaneseq
  %v10508 = vshrl.u32 %v10507, 7
  %v10509 = vsub.s32 %v10506, %v10508
  %v10510 = vrot.slane %v10496, %v10509
  %v10511 = vcombine.high %v10503, %v10503
  %v10512 = vcombine.high %v10510, %v10510
  %v10514 = vunpack.c.l.s4 1966171168
  %v10515 = vunpack.c.0.s8 %v10514
  %v10516 = vlaneseq
  %v10517 = vshrl.u32 %v10516, 7
  %v10518 = vsub.s32 %v10515, %v10517
  %v10519 = vrot.slane %v10335, %v10518
  %v10521 = vunpack.c.l.s4 1966171168
  %v10522 = vunpack.c.0.s8 %v10521
  %v10523 = vlaneseq
  %v10524 = vshrl.u32 %v10523, 7
  %v10525 = vsub.s32 %v10522, %v10524
  %v10526 = vrot.slane %v10519, %v10525
  %v10528 = vunpack.c.l.s4 1966171168
  %v10529 = vunpack.c.0.s8 %v10528
  %v10530 = vlaneseq
  %v10531 = vshrl.u32 %v10530, 7
  %v10532 = vsub.s32 %v10529, %v10531
  %v10533 = vrot.slane %v10342, %v10532
  %v10535 = vunpack.c.l.s4 1966171168
  %v10536 = vunpack.c.0.s8 %v10535
  %v10537 = vlaneseq
  %v10538 = vshrl.u32 %v10537, 7
  %v10539 = vsub.s32 %v10536, %v10538
  %v10540 = vrot.slane %v10533, %v10539
  %v10542 = vunpack.c.l.s4 1966171168
  %v10543 = vunpack.c.0.s8 %v10542
  %v10544 = vlaneseq
  %v10545 = vshrl.u32 %v10544, 7
  %v10546 = vsub.s32 %v10543, %v10545
  %v10547 = vrot.slane %v10343, %v10546
  %v10549 = vunpack.c.l.s4 1966171168
  %v10550 = vunpack.c.0.s8 %v10549
  %v10551 = vlaneseq
  %v10552 = vshrl.u32 %v10551, 7
  %v10553 = vsub.s32 %v10550, %v10552
  %v10554 = vrot.slane %v10547, %v10553
  %v10556 = vunpack.c.l.s4 1966171168
  %v10557 = vunpack.c.0.s8 %v10556
  %v10558 = vlaneseq
  %v10559 = vshrl.u32 %v10558, 7
  %v10560 = vsub.s32 %v10557, %v10559
  %v10561 = vrot.slane %v10344, %v10560
  %v10563 = vunpack.c.l.s4 1966171168
  %v10564 = vunpack.c.0.s8 %v10563
  %v10565 = vlaneseq
  %v10566 = vshrl.u32 %v10565, 7
  %v10567 = vsub.s32 %v10564, %v10566
  %v10568 = vrot.slane %v10561, %v10567
  %v10570 = vunpack.c.l.s4 1966171168
  %v10571 = vunpack.c.0.s8 %v10570
  %v10572 = vlaneseq
  %v10573 = vshrl.u32 %v10572, 7
  %v10574 = vsub.s32 %v10571, %v10573
  %v10575 = vrot.slane %v10359, %v10574
  %v10577 = vunpack.c.l.s4 1966171168
  %v10578 = vunpack.c.0.s8 %v10577
  %v10579 = vlaneseq
  %v10580 = vshrl.u32 %v10579, 7
  %v10581 = vsub.s32 %v10578, %v10580
  %v10582 = vrot.slane %v10575, %v10581
  %v10584 = vunpack.c.l.s4 1966171168
  %v10585 = vunpack.c.0.s8 %v10584
  %v10586 = vlaneseq
  %v10587 = vshrl.u32 %v10586, 7
  %v10588 = vsub.s32 %v10585, %v10587
  %v10589 = vrot.slane %v10366, %v10588
  %v10591 = vunpack.c.l.s4 1966171168
  %v10592 = vunpack.c.0.s8 %v10591
  %v10593 = vlaneseq
  %v10594 = vshrl.u32 %v10593, 7
  %v10595 = vsub.s32 %v10592, %v10594
  %v10596 = vrot.slane %v10589, %v10595
  %v10598 = vunpack.c.l.s4 1966171168
  %v10599 = vunpack.c.0.s8 %v10598
  %v10600 = vlaneseq
  %v10601 = vshrl.u32 %v10600, 7
  %v10602 = vsub.s32 %v10599, %v10601
  %v10603 = vrot.slane %v10367, %v10602
  %v10605 = vunpack.c.l.s4 1966171168
  %v10606 = vunpack.c.0.s8 %v10605
  %v10607 = vlaneseq
  %v10608 = vshrl.u32 %v10607, 7
  %v10609 = vsub.s32 %v10606, %v10608
  %v10610 = vrot.slane %v10603, %v10609
  %v10612 = vunpack.c.l.s4 1966171168
  %v10613 = vunpack.c.0.s8 %v10612
  %v10614 = vlaneseq
  %v10615 = vshrl.u32 %v10614, 7
  %v10616 = vsub.s32 %v10613, %v10615
  %v10617 = vrot.slane %v10368, %v10616
  %v10619 = vunpack.c.l.s4 1966171168
  %v10620 = vunpack.c.0.s8 %v10619
  %v10621 = vlaneseq
  %v10622 = vshrl.u32 %v10621, 7
  %v10623 = vsub.s32 %v10620, %v10622
  %v10624 = vrot.slane %v10617, %v10623
  %v10626 = vunpack.c.l.s4 1966171168
  %v10627 = vunpack.c.0.s8 %v10626
  %v10628 = vlaneseq
  %v10629 = vshrl.u32 %v10628, 7
  %v10630 = vsub.s32 %v10627, %v10629
  %v10631 = vrot.slane %v10383, %v10630
  %v10633 = vunpack.c.l.s4 1966171168
  %v10634 = vunpack.c.0.s8 %v10633
  %v10635 = vlaneseq
  %v10636 = vshrl.u32 %v10635, 7
  %v10637 = vsub.s32 %v10634, %v10636
  %v10638 = vrot.slane %v10631, %v10637
  %v10640 = vunpack.c.l.s4 1966171168
  %v10641 = vunpack.c.0.s8 %v10640
  %v10642 = vlaneseq
  %v10643 = vshrl.u32 %v10642, 7
  %v10644 = vsub.s32 %v10641, %v10643
  %v10645 = vrot.slane %v10390, %v10644
  %v10647 = vunpack.c.l.s4 1966171168
  %v10648 = vunpack.c.0.s8 %v10647
  %v10649 = vlaneseq
  %v10650 = vshrl.u32 %v10649, 7
  %v10651 = vsub.s32 %v10648, %v10650
  %v10652 = vrot.slane %v10645, %v10651
  %v10654 = vunpack.c.l.s4 1966171168
  %v10655 = vunpack.c.0.s8 %v10654
  %v10656 = vlaneseq
  %v10657 = vshrl.u32 %v10656, 7
  %v10658 = vsub.s32 %v10655, %v10657
  %v10659 = vrot.slane %v10391, %v10658
  %v10661 = vunpack.c.l.s4 1966171168
  %v10662 = vunpack.c.0.s8 %v10661
  %v10663 = vlaneseq
  %v10664 = vshrl.u32 %v10663, 7
  %v10665 = vsub.s32 %v10662, %v10664
  %v10666 = vrot.slane %v10659, %v10665
  %v10668 = vunpack.c.l.s4 1966171168
  %v10669 = vunpack.c.0.s8 %v10668
  %v10670 = vlaneseq
  %v10671 = vshrl.u32 %v10670, 7
  %v10672 = vsub.s32 %v10669, %v10671
  %v10673 = vrot.slane %v10392, %v10672
  %v10675 = vunpack.c.l.s4 1966171168
  %v10676 = vunpack.c.0.s8 %v10675
  %v10677 = vlaneseq
  %v10678 = vshrl.u32 %v10677, 7
  %v10679 = vsub.s32 %v10676, %v10678
  %v10680 = vrot.slane %v10673, %v10679
  %v10682 = vunpack.c.l.s4 1966171168
  %v10683 = vunpack.c.0.s8 %v10682
  %v10684 = vlaneseq
  %v10685 = vshrl.u32 %v10684, 7
  %v10686 = vsub.s32 %v10683, %v10685
  %v10687 = vrot.slane %v10407, %v10686
  %v10689 = vunpack.c.l.s4 1966171168
  %v10690 = vunpack.c.0.s8 %v10689
  %v10691 = vlaneseq
  %v10692 = vshrl.u32 %v10691, 7
  %v10693 = vsub.s32 %v10690, %v10692
  %v10694 = vrot.slane %v10687, %v10693
  %v10696 = vunpack.c.l.s4 1966171168
  %v10697 = vunpack.c.0.s8 %v10696
  %v10698 = vlaneseq
  %v10699 = vshrl.u32 %v10698, 7
  %v10700 = vsub.s32 %v10697, %v10699
  %v10701 = vrot.slane %v10414, %v10700
  %v10703 = vunpack.c.l.s4 1966171168
  %v10704 = vunpack.c.0.s8 %v10703
  %v10705 = vlaneseq
  %v10706 = vshrl.u32 %v10705, 7
  %v10707 = vsub.s32 %v10704, %v10706
  %v10708 = vrot.slane %v10701, %v10707
  %v10710 = vunpack.c.l.s4 1966171168
  %v10711 = vunpack.c.0.s8 %v10710
  %v10712 = vlaneseq
  %v10713 = vshrl.u32 %v10712, 7
  %v10714 = vsub.s32 %v10711, %v10713
  %v10715 = vrot.slane %v10415, %v10714
  %v10717 = vunpack.c.l.s4 1966171168
  %v10718 = vunpack.c.0.s8 %v10717
  %v10719 = vlaneseq
  %v10720 = vshrl.u32 %v10719, 7
  %v10721 = vsub.s32 %v10718, %v10720
  %v10722 = vrot.slane %v10715, %v10721
  %v10724 = vunpack.c.l.s4 1966171168
  %v10725 = vunpack.c.0.s8 %v10724
  %v10726 = vlaneseq
  %v10727 = vshrl.u32 %v10726, 7
  %v10728 = vsub.s32 %v10725, %v10727
  %v10729 = vrot.slane %v10416, %v10728
  %v10731 = vunpack.c.l.s4 1966171168
  %v10732 = vunpack.c.0.s8 %v10731
  %v10733 = vlaneseq
  %v10734 = vshrl.u32 %v10733, 7
  %v10735 = vsub.s32 %v10732, %v10734
  %v10736 = vrot.slane %v10729, %v10735
  %v10738 = vunpack.c.l.s4 1966171168
  %v10739 = vunpack.c.0.s8 %v10738
  %v10740 = vlaneseq
  %v10741 = vshrl.u32 %v10740, 7
  %v10742 = vsub.s32 %v10739, %v10741
  %v10743 = vrot.slane %v10431, %v10742
  %v10745 = vunpack.c.l.s4 1966171168
  %v10746 = vunpack.c.0.s8 %v10745
  %v10747 = vlaneseq
  %v10748 = vshrl.u32 %v10747, 7
  %v10749 = vsub.s32 %v10746, %v10748
  %v10750 = vrot.slane %v10743, %v10749
  %v10752 = vunpack.c.l.s4 1966171168
  %v10753 = vunpack.c.0.s8 %v10752
  %v10754 = vlaneseq
  %v10755 = vshrl.u32 %v10754, 7
  %v10756 = vsub.s32 %v10753, %v10755
  %v10757 = vrot.slane %v10438, %v10756
  %v10759 = vunpack.c.l.s4 1966171168
  %v10760 = vunpack.c.0.s8 %v10759
  %v10761 = vlaneseq
  %v10762 = vshrl.u32 %v10761, 7
  %v10763 = vsub.s32 %v10760, %v10762
  %v10764 = vrot.slane %v10757, %v10763
  %v10766 = vunpack.c.l.s4 1966171168
  %v10767 = vunpack.c.0.s8 %v10766
  %v10768 = vlaneseq
  %v10769 = vshrl.u32 %v10768, 7
  %v10770 = vsub.s32 %v10767, %v10769
  %v10771 = vrot.slane %v10439, %v10770
  %v10773 = vunpack.c.l.s4 1966171168
  %v10774 = vunpack.c.0.s8 %v10773
  %v10775 = vlaneseq
  %v10776 = vshrl.u32 %v10775, 7
  %v10777 = vsub.s32 %v10774, %v10776
  %v10778 = vrot.slane %v10771, %v10777
  %v10780 = vunpack.c.l.s4 1966171168
  %v10781 = vunpack.c.0.s8 %v10780
  %v10782 = vlaneseq
  %v10783 = vshrl.u32 %v10782, 7
  %v10784 = vsub.s32 %v10781, %v10783
  %v10785 = vrot.slane %v10440, %v10784
  %v10787 = vunpack.c.l.s4 1966171168
  %v10788 = vunpack.c.0.s8 %v10787
  %v10789 = vlaneseq
  %v10790 = vshrl.u32 %v10789, 7
  %v10791 = vsub.s32 %v10788, %v10790
  %v10792 = vrot.slane %v10785, %v10791
  %v10794 = vunpack.c.l.s4 1966171168
  %v10795 = vunpack.c.0.s8 %v10794
  %v10796 = vlaneseq
  %v10797 = vshrl.u32 %v10796, 7
  %v10798 = vsub.s32 %v10795, %v10797
  %v10799 = vrot.slane %v10455, %v10798
  %v10801 = vunpack.c.l.s4 1966171168
  %v10802 = vunpack.c.0.s8 %v10801
  %v10803 = vlaneseq
  %v10804 = vshrl.u32 %v10803, 7
  %v10805 = vsub.s32 %v10802, %v10804
  %v10806 = vrot.slane %v10799, %v10805
  %v10808 = vunpack.c.l.s4 1966171168
  %v10809 = vunpack.c.0.s8 %v10808
  %v10810 = vlaneseq
  %v10811 = vshrl.u32 %v10810, 7
  %v10812 = vsub.s32 %v10809, %v10811
  %v10813 = vrot.slane %v10462, %v10812
  %v10815 = vunpack.c.l.s4 1966171168
  %v10816 = vunpack.c.0.s8 %v10815
  %v10817 = vlaneseq
  %v10818 = vshrl.u32 %v10817, 7
  %v10819 = vsub.s32 %v10816, %v10818
  %v10820 = vrot.slane %v10813, %v10819
  %v10822 = vunpack.c.l.s4 1966171168
  %v10823 = vunpack.c.0.s8 %v10822
  %v10824 = vlaneseq
  %v10825 = vshrl.u32 %v10824, 7
  %v10826 = vsub.s32 %v10823, %v10825
  %v10827 = vrot.slane %v10463, %v10826
  %v10829 = vunpack.c.l.s4 1966171168
  %v10830 = vunpack.c.0.s8 %v10829
  %v10831 = vlaneseq
  %v10832 = vshrl.u32 %v10831, 7
  %v10833 = vsub.s32 %v10830, %v10832
  %v10834 = vrot.slane %v10827, %v10833
  %v10836 = vunpack.c.l.s4 1966171168
  %v10837 = vunpack.c.0.s8 %v10836
  %v10838 = vlaneseq
  %v10839 = vshrl.u32 %v10838, 7
  %v10840 = vsub.s32 %v10837, %v10839
  %v10841 = vrot.slane %v10464, %v10840
  %v10843 = vunpack.c.l.s4 1966171168
  %v10844 = vunpack.c.0.s8 %v10843
  %v10845 = vlaneseq
  %v10846 = vshrl.u32 %v10845, 7
  %v10847 = vsub.s32 %v10844, %v10846
  %v10848 = vrot.slane %v10841, %v10847
  %v10850 = vunpack.c.l.s4 1966171168
  %v10851 = vunpack.c.0.s8 %v10850
  %v10852 = vlaneseq
  %v10853 = vshrl.u32 %v10852, 7
  %v10854 = vsub.s32 %v10851, %v10853
  %v10855 = vrot.slane %v10479, %v10854
  %v10857 = vunpack.c.l.s4 1966171168
  %v10858 = vunpack.c.0.s8 %v10857
  %v10859 = vlaneseq
  %v10860 = vshrl.u32 %v10859, 7
  %v10861 = vsub.s32 %v10858, %v10860
  %v10862 = vrot.slane %v10855, %v10861
  %v10864 = vunpack.c.l.s4 1966171168
  %v10865 = vunpack.c.0.s8 %v10864
  %v10866 = vlaneseq
  %v10867 = vshrl.u32 %v10866, 7
  %v10868 = vsub.s32 %v10865, %v10867
  %v10869 = vrot.slane %v10486, %v10868
  %v10871 = vunpack.c.l.s4 1966171168
  %v10872 = vunpack.c.0.s8 %v10871
  %v10873 = vlaneseq
  %v10874 = vshrl.u32 %v10873, 7
  %v10875 = vsub.s32 %v10872, %v10874
  %v10876 = vrot.slane %v10869, %v10875
  %v10878 = vunpack.c.l.s4 1966171168
  %v10879 = vunpack.c.0.s8 %v10878
  %v10880 = vlaneseq
  %v10881 = vshrl.u32 %v10880, 7
  %v10882 = vsub.s32 %v10879, %v10881
  %v10883 = vrot.slane %v10487, %v10882
  %v10885 = vunpack.c.l.s4 1966171168
  %v10886 = vunpack.c.0.s8 %v10885
  %v10887 = vlaneseq
  %v10888 = vshrl.u32 %v10887, 7
  %v10889 = vsub.s32 %v10886, %v10888
  %v10890 = vrot.slane %v10883, %v10889
  %v10892 = vunpack.c.l.s4 1966171168
  %v10893 = vunpack.c.0.s8 %v10892
  %v10894 = vlaneseq
  %v10895 = vshrl.u32 %v10894, 7
  %v10896 = vsub.s32 %v10893, %v10895
  %v10897 = vrot.slane %v10488, %v10896
  %v10899 = vunpack.c.l.s4 1966171168
  %v10900 = vunpack.c.0.s8 %v10899
  %v10901 = vlaneseq
  %v10902 = vshrl.u32 %v10901, 7
  %v10903 = vsub.s32 %v10900, %v10902
  %v10904 = vrot.slane %v10897, %v10903
  %v10906 = vunpack.c.l.s4 1966171168
  %v10907 = vunpack.c.0.s8 %v10906
  %v10908 = vlaneseq
  %v10909 = vshrl.u32 %v10908, 7
  %v10910 = vsub.s32 %v10907, %v10909
  %v10911 = vrot.slane %v10503, %v10910
  %v10913 = vunpack.c.l.s4 1966171168
  %v10914 = vunpack.c.0.s8 %v10913
  %v10915 = vlaneseq
  %v10916 = vshrl.u32 %v10915, 7
  %v10917 = vsub.s32 %v10914, %v10916
  %v10918 = vrot.slane %v10911, %v10917
  %v10920 = vunpack.c.l.s4 1966171168
  %v10921 = vunpack.c.0.s8 %v10920
  %v10922 = vlaneseq
  %v10923 = vshrl.u32 %v10922, 7
  %v10924 = vsub.s32 %v10921, %v10923
  %v10925 = vrot.slane %v10510, %v10924
  %v10927 = vunpack.c.l.s4 1966171168
  %v10928 = vunpack.c.0.s8 %v10927
  %v10929 = vlaneseq
  %v10930 = vshrl.u32 %v10929, 7
  %v10931 = vsub.s32 %v10928, %v10930
  %v10932 = vrot.slane %v10925, %v10931
  %v10934 = vunpack.c.l.s4 1966171168
  %v10935 = vunpack.c.0.s8 %v10934
  %v10936 = vlaneseq
  %v10937 = vshrl.u32 %v10936, 7
  %v10938 = vsub.s32 %v10935, %v10937
  %v10939 = vrot.slane %v10511, %v10938
  %v10941 = vunpack.c.l.s4 1966171168
  %v10942 = vunpack.c.0.s8 %v10941
  %v10943 = vlaneseq
  %v10944 = vshrl.u32 %v10943, 7
  %v10945 = vsub.s32 %v10942, %v10944
  %v10946 = vrot.slane %v10939, %v10945
  %v10948 = vunpack.c.l.s4 1966171168
  %v10949 = vunpack.c.0.s8 %v10948
  %v10950 = vlaneseq
  %v10951 = vshrl.u32 %v10950, 7
  %v10952 = vsub.s32 %v10949, %v10951
  %v10953 = vrot.slane %v10512, %v10952
  %v10955 = vunpack.c.l.s4 1966171168
  %v10956 = vunpack.c.0.s8 %v10955
  %v10957 = vlaneseq
  %v10958 = vshrl.u32 %v10957, 7
  %v10959 = vsub.s32 %v10956, %v10958
  %v10960 = vrot.slane %v10953, %v10959
  %v10961 = vunpack.c.l.b16 %v10526
  %v10962 = vunpack.c.l.b16 %v10540
  %v10963 = vunpack.c.l.b16 %v10554
  %v10964 = vunpack.c.l.b16 %v10568
  %v10965 = vunpack.c.l.b16 %v10582
  %v10966 = vunpack.c.l.b16 %v10596
  %v10967 = vunpack.c.l.b16 %v10610
  %v10968 = vunpack.c.l.b16 %v10624
  %v10969 = vunpack.c.l.b16 %v10638
  %v10970 = vunpack.c.l.b16 %v10652
  %v10971 = vunpack.c.l.b16 %v10666
  %v10972 = vunpack.c.l.b16 %v10680
  %v10973 = vunpack.c.l.b16 %v10694
  %v10974 = vunpack.c.l.b16 %v10708
  %v10975 = vunpack.c.l.b16 %v10722
  %v10976 = vunpack.c.l.b16 %v10736
  %v10977 = vunpack.c.l.b16 %v10750
  %v10978 = vunpack.c.l.b16 %v10764
  %v10979 = vunpack.c.l.b16 %v10778
  %v10980 = vunpack.c.l.b16 %v10792
  %v10981 = vunpack.c.l.b16 %v10806
  %v10982 = vunpack.c.l.b16 %v10820
  %v10983 = vunpack.c.l.b16 %v10834
  %v10984 = vunpack.c.l.b16 %v10848
  %v10985 = vunpack.c.l.b16 %v10862
  %v10986 = vunpack.c.l.b16 %v10876
  %v10987 = vunpack.c.l.b16 %v10890
  %v10988 = vunpack.c.l.b16 %v10904
  %v10989 = vunpack.c.l.b16 %v10918
  %v10990 = vunpack.c.l.b16 %v10932
  %v10991 = vunpack.c.l.b16 %v10946
  %v10992 = vunpack.c.l.b16 %v10960
  %v10993 = vrot.slane %v10962, 7
  %v10994 = vsel %vm2815, %v10993, %v10961
  %v10995 = vrot.slane %v10963, 6
  %v10996 = vsel %vm2818, %v10995, %v10994
  %v10997 = vrot.slane %v10964, 5
  %v10998 = vsel %vm2821, %v10997, %v10996
  %v10999 = vrot.slane %v10966, 7
  %v11000 = vsel %vm2815, %v10999, %v10965
  %v11001 = vrot.slane %v10967, 6
  %v11002 = vsel %vm2818, %v11001, %v11000
  %v11003 = vrot.slane %v10968, 5
  %v11004 = vsel %vm2821, %v11003, %v11002
  %v11005 = vrot.slane %v10970, 7
  %v11006 = vsel %vm2815, %v11005, %v10969
  %v11007 = vrot.slane %v10971, 6
  %v11008 = vsel %vm2818, %v11007, %v11006
  %v11009 = vrot.slane %v10972, 5
  %v11010 = vsel %vm2821, %v11009, %v11008
  %v11011 = vrot.slane %v10974, 7
  %v11012 = vsel %vm2815, %v11011, %v10973
  %v11013 = vrot.slane %v10975, 6
  %v11014 = vsel %vm2818, %v11013, %v11012
  %v11015 = vrot.slane %v10976, 5
  %v11016 = vsel %vm2821, %v11015, %v11014
  %v11017 = vrot.slane %v10978, 7
  %v11018 = vsel %vm2815, %v11017, %v10977
  %v11019 = vrot.slane %v10979, 6
  %v11020 = vsel %vm2818, %v11019, %v11018
  %v11021 = vrot.slane %v10980, 5
  %v11022 = vsel %vm2821, %v11021, %v11020
  %v11023 = vrot.slane %v10982, 7
  %v11024 = vsel %vm2815, %v11023, %v10981
  %v11025 = vrot.slane %v10983, 6
  %v11026 = vsel %vm2818, %v11025, %v11024
  %v11027 = vrot.slane %v10984, 5
  %v11028 = vsel %vm2821, %v11027, %v11026
  %v11029 = vrot.slane %v10986, 7
  %v11030 = vsel %vm2815, %v11029, %v10985
  %v11031 = vrot.slane %v10987, 6
  %v11032 = vsel %vm2818, %v11031, %v11030
  %v11033 = vrot.slane %v10988, 5
  %v11034 = vsel %vm2821, %v11033, %v11032
  %v11035 = vrot.slane %v10990, 7
  %v11036 = vsel %vm2815, %v11035, %v10989
  %v11037 = vrot.slane %v10991, 6
  %v11038 = vsel %vm2818, %v11037, %v11036
  %v11039 = vrot.slane %v10992, 5
  %v11040 = vsel %vm2821, %v11039, %v11038
  %v11041 = vpack.c.b16 %v10998, %v10998
  %v11042 = vpack.c.b16 %v11004, %v11004
  %v11043 = vpack.c.b16 %v11010, %v11010
  %v11044 = vpack.c.b16 %v11016, %v11016
  %v11045 = vpack.c.b16 %v11022, %v11022
  %v11046 = vpack.c.b16 %v11028, %v11028
  %v11047 = vpack.c.b16 %v11034, %v11034
  %v11048 = vpack.c.b16 %v11040, %v11040
  %v11050 = vshrl.u32 %v11041, 16
  %v11052 = vrot.slane %v11050, 7
  %v11053 = vshll.u32 %v11041, 16
  %v11055 = vor.u32 %v11052, %v11053
  %v11057 = vshrl.u32 %v11042, 16
  %v11059 = vrot.slane %v11057, 7
  %v11060 = vshll.u32 %v11042, 16
  %v11062 = vor.u32 %v11059, %v11060
  %v11064 = vshrl.u32 %v11043, 16
  %v11066 = vrot.slane %v11064, 7
  %v11067 = vshll.u32 %v11043, 16
  %v11069 = vor.u32 %v11066, %v11067
  %v11071 = vshrl.u32 %v11044, 16
  %v11073 = vrot.slane %v11071, 7
  %v11074 = vshll.u32 %v11044, 16
  %v11076 = vor.u32 %v11073, %v11074
  %v11078 = vshrl.u32 %v11045, 16
  %v11080 = vrot.slane %v11078, 7
  %v11081 = vshll.u32 %v11045, 16
  %v11083 = vor.u32 %v11080, %v11081
  %v11085 = vshrl.u32 %v11046, 16
  %v11087 = vrot.slane %v11085, 7
  %v11088 = vshll.u32 %v11046, 16
  %v11090 = vor.u32 %v11087, %v11088
  %v11092 = vshrl.u32 %v11047, 16
  %v11094 = vrot.slane %v11092, 7
  %v11095 = vshll.u32 %v11047, 16
  %v11097 = vor.u32 %v11094, %v11095
  %v11099 = vshrl.u32 %v11048, 16
  %v11101 = vrot.slane %v11099, 7
  %v11102 = vshll.u32 %v11048, 16
  %v11104 = vor.u32 %v11101, %v11102
  %v11113 = vsel %vm3199, 0, %v11055
  %v11114 = vsel %vm3199, 0, %v11062
  %v11115 = vsel %vm3199, 0, %v11069
  %v11116 = vsel %vm3199, 0, %v11076
  %v11117 = vsel %vm3199, 0, %v11083
  %v11118 = vsel %vm3199, 0, %v11090
  %v11119 = vsel %vm3199, 0, %v11097
  %v11120 = vsel %vm3199, 0, %v11104
  %v11121 = vsel %vm10175, %v11113, 0
  %v11122 = vsel %vm10175, %v11114, 0
  %v11123 = vsel %vm10175, %v11115, 0
  %v11124 = vsel %vm10175, %v11116, 0
  %v11125 = vsel %vm10175, %v11117, 0
  %v11126 = vsel %vm10175, %v11118, 0
  %v11127 = vsel %vm10175, %v11119, 0
  %v11128 = vsel %vm10175, %v11120, 0
  %v11129 = vrot.slane %v10961, 1
  %v11130 = vsel %vm2815, %v10962, %v11129
  %v11131 = vrot.slane %v10963, 7
  %v11132 = vsel %vm2818, %v11131, %v11130
  %v11133 = vrot.slane %v10964, 6
  %v11134 = vsel %vm2821, %v11133, %v11132
  %v11135 = vrot.slane %v10965, 1
  %v11136 = vsel %vm2815, %v10966, %v11135
  %v11137 = vrot.slane %v10967, 7
  %v11138 = vsel %vm2818, %v11137, %v11136
  %v11139 = vrot.slane %v10968, 6
  %v11140 = vsel %vm2821, %v11139, %v11138
  %v11141 = vrot.slane %v10969, 1
  %v11142 = vsel %vm2815, %v10970, %v11141
  %v11143 = vrot.slane %v10971, 7
  %v11144 = vsel %vm2818, %v11143, %v11142
  %v11145 = vrot.slane %v10972, 6
  %v11146 = vsel %vm2821, %v11145, %v11144
  %v11147 = vrot.slane %v10973, 1
  %v11148 = vsel %vm2815, %v10974, %v11147
  %v11149 = vrot.slane %v10975, 7
  %v11150 = vsel %vm2818, %v11149, %v11148
  %v11151 = vrot.slane %v10976, 6
  %v11152 = vsel %vm2821, %v11151, %v11150
  %v11153 = vrot.slane %v10977, 1
  %v11154 = vsel %vm2815, %v10978, %v11153
  %v11155 = vrot.slane %v10979, 7
  %v11156 = vsel %vm2818, %v11155, %v11154
  %v11157 = vrot.slane %v10980, 6
  %v11158 = vsel %vm2821, %v11157, %v11156
  %v11159 = vrot.slane %v10981, 1
  %v11160 = vsel %vm2815, %v10982, %v11159
  %v11161 = vrot.slane %v10983, 7
  %v11162 = vsel %vm2818, %v11161, %v11160
  %v11163 = vrot.slane %v10984, 6
  %v11164 = vsel %vm2821, %v11163, %v11162
  %v11165 = vrot.slane %v10985, 1
  %v11166 = vsel %vm2815, %v10986, %v11165
  %v11167 = vrot.slane %v10987, 7
  %v11168 = vsel %vm2818, %v11167, %v11166
  %v11169 = vrot.slane %v10988, 6
  %v11170 = vsel %vm2821, %v11169, %v11168
  %v11171 = vrot.slane %v10989, 1
  %v11172 = vsel %vm2815, %v10990, %v11171
  %v11173 = vrot.slane %v10991, 7
  %v11174 = vsel %vm2818, %v11173, %v11172
  %v11175 = vrot.slane %v10992, 6
  %v11176 = vsel %vm2821, %v11175, %v11174
  %v11177 = vpack.c.b16 %v11134, %v11134
  %v11178 = vpack.c.b16 %v11140, %v11140
  %v11179 = vpack.c.b16 %v11146, %v11146
  %v11180 = vpack.c.b16 %v11152, %v11152
  %v11181 = vpack.c.b16 %v11158, %v11158
  %v11182 = vpack.c.b16 %v11164, %v11164
  %v11183 = vpack.c.b16 %v11170, %v11170
  %v11184 = vpack.c.b16 %v11176, %v11176
  %v11186 = vshrl.u32 %v11177, 16
  %v11188 = vrot.slane %v11186, 7
  %v11189 = vshll.u32 %v11177, 16
  %v11191 = vor.u32 %v11188, %v11189
  %v11193 = vshrl.u32 %v11178, 16
  %v11195 = vrot.slane %v11193, 7
  %v11196 = vshll.u32 %v11178, 16
  %v11198 = vor.u32 %v11195, %v11196
  %v11200 = vshrl.u32 %v11179, 16
  %v11202 = vrot.slane %v11200, 7
  %v11203 = vshll.u32 %v11179, 16
  %v11205 = vor.u32 %v11202, %v11203
  %v11207 = vshrl.u32 %v11180, 16
  %v11209 = vrot.slane %v11207, 7
  %v11210 = vshll.u32 %v11180, 16
  %v11212 = vor.u32 %v11209, %v11210
  %v11214 = vshrl.u32 %v11181, 16
  %v11216 = vrot.slane %v11214, 7
  %v11217 = vshll.u32 %v11181, 16
  %v11219 = vor.u32 %v11216, %v11217
  %v11221 = vshrl.u32 %v11182, 16
  %v11223 = vrot.slane %v11221, 7
  %v11224 = vshll.u32 %v11182, 16
  %v11226 = vor.u32 %v11223, %v11224
  %v11228 = vshrl.u32 %v11183, 16
  %v11230 = vrot.slane %v11228, 7
  %v11231 = vshll.u32 %v11183, 16
  %v11233 = vor.u32 %v11230, %v11231
  %v11235 = vshrl.u32 %v11184, 16
  %v11237 = vrot.slane %v11235, 7
  %v11238 = vshll.u32 %v11184, 16
  %v11240 = vor.u32 %v11237, %v11238
  %v11249 = vsel %vm3199, 0, %v11191
  %v11250 = vsel %vm3199, 0, %v11198
  %v11251 = vsel %vm3199, 0, %v11205
  %v11252 = vsel %vm3199, 0, %v11212
  %v11253 = vsel %vm3199, 0, %v11219
  %v11254 = vsel %vm3199, 0, %v11226
  %v11255 = vsel %vm3199, 0, %v11233
  %v11256 = vsel %vm3199, 0, %v11240
  %v11257 = vsel %vm10175, %v11249, 0
  %v11258 = vsel %vm10175, %v11250, 0
  %v11259 = vsel %vm10175, %v11251, 0
  %v11260 = vsel %vm10175, %v11252, 0
  %v11261 = vsel %vm10175, %v11253, 0
  %v11262 = vsel %vm10175, %v11254, 0
  %v11263 = vsel %vm10175, %v11255, 0
  %v11264 = vsel %vm10175, %v11256, 0
  %v11266 = vshrl.u32 %v10180, 16
  %v11268 = vshll.u32 %v10180, 16
  %v11270 = vrot.slane %v11268, 1
  %v11271 = vor.u32 %v11266, %v11270
  %v11273 = vshrl.u32 %v11121, 16
  %v11275 = vshll.u32 %v11121, 16
  %v11277 = vrot.slane %v11275, 1
  %v11278 = vor.u32 %v11273, %v11277
  %v11280 = vshrl.u32 %v11122, 16
  %v11282 = vshll.u32 %v11122, 16
  %v11284 = vrot.slane %v11282, 1
  %v11285 = vor.u32 %v11280, %v11284
  %v11287 = vshrl.u32 %v11123, 16
  %v11289 = vshll.u32 %v11123, 16
  %v11291 = vrot.slane %v11289, 1
  %v11292 = vor.u32 %v11287, %v11291
  %v11294 = vshrl.u32 %v11125, 16
  %v11296 = vshll.u32 %v11125, 16
  %v11298 = vrot.slane %v11296, 1
  %v11299 = vor.u32 %v11294, %v11298
  %v11301 = vshrl.u32 %v11126, 16
  %v11303 = vshll.u32 %v11126, 16
  %v11305 = vrot.slane %v11303, 1
  %v11306 = vor.u32 %v11301, %v11305
  %v11308 = vshrl.u32 %v11127, 16
  %v11310 = vshll.u32 %v11127, 16
  %v11312 = vrot.slane %v11310, 1
  %v11313 = vor.u32 %v11308, %v11312
  %v11315 = vshrl.u32 %v11257, 16
  %v11317 = vshll.u32 %v11257, 16
  %v11319 = vrot.slane %v11317, 1
  %v11320 = vor.u32 %v11315, %v11319
  %v11322 = vshrl.u32 %v11258, 16
  %v11324 = vshll.u32 %v11258, 16
  %v11326 = vrot.slane %v11324, 1
  %v11327 = vor.u32 %v11322, %v11326
  %v11329 = vshrl.u32 %v11259, 16
  %v11331 = vshll.u32 %v11259, 16
  %v11333 = vrot.slane %v11331, 1
  %v11334 = vor.u32 %v11329, %v11333
  %v11336 = vshrl.u32 %v11261, 16
  %v11338 = vshll.u32 %v11261, 16
  %v11340 = vrot.slane %v11338, 1
  %v11341 = vor.u32 %v11336, %v11340
  %v11343 = vshrl.u32 %v11262, 16
  %v11345 = vshll.u32 %v11262, 16
  %v11347 = vrot.slane %v11345, 1
  %v11348 = vor.u32 %v11343, %v11347
  %v11350 = vshrl.u32 %v11263, 16
  %v11352 = vshll.u32 %v11263, 16
  %v11354 = vrot.slane %v11352, 1
  %v11355 = vor.u32 %v11350, %v11354
  %v11363 = vrot.slane %v10180, 1
  %v11364 = vrot.slane %v11121, 1
  %v11365 = vrot.slane %v11122, 1
  %v11366 = vrot.slane %v11123, 1
  %v11367 = vrot.slane %v11125, 1
  %v11368 = vrot.slane %v11126, 1
  %v11369 = vrot.slane %v11127, 1
  %v11371 = vshrl.u32 %v10176, 16
  %v11373 = vshll.u32 %v10176, 16
  %v11375 = vrot.slane %v11373, 1
  %v11376 = vor.u32 %v11371, %v11375
  %v11378 = vshrl.u32 %v10177, 16
  %v11380 = vshll.u32 %v10177, 16
  %v11382 = vrot.slane %v11380, 1
  %v11383 = vor.u32 %v11378, %v11382
  %v11385 = vshrl.u32 %v10178, 16
  %v11387 = vshll.u32 %v10178, 16
  %v11389 = vrot.slane %v11387, 1
  %v11390 = vor.u32 %v11385, %v11389
  %v11392 = vshrl.u32 %v10179, 16
  %v11394 = vshll.u32 %v10179, 16
  %v11396 = vrot.slane %v11394, 1
  %v11397 = vor.u32 %v11392, %v11396
  %v11399 = vshrl.u32 %v10181, 16
  %v11401 = vshll.u32 %v10181, 16
  %v11403 = vrot.slane %v11401, 1
  %v11404 = vor.u32 %v11399, %v11403
  %v11406 = vshrl.u32 %v10182, 16
  %v11408 = vshll.u32 %v10182, 16
  %v11410 = vrot.slane %v11408, 1
  %v11411 = vor.u32 %v11406, %v11410
  %v11413 = vshrl.u32 %v10183, 16
  %v11415 = vshll.u32 %v10183, 16
  %v11417 = vrot.slane %v11415, 1
  %v11418 = vor.u32 %v11413, %v11417
  %v11420 = vshrl.u32 %v10184, 16
  %v11422 = vshll.u32 %v10184, 16
  %v11424 = vrot.slane %v11422, 1
  %v11425 = vor.u32 %v11420, %v11424
  %v11427 = vshrl.u32 %v10313, 16
  %v11429 = vshll.u32 %v10313, 16
  %v11431 = vrot.slane %v11429, 1
  %v11432 = vor.u32 %v11427, %v11431
  %v11434 = vshrl.u32 %v10314, 16
  %v11436 = vshll.u32 %v10314, 16
  %v11438 = vrot.slane %v11436, 1
  %v11439 = vor.u32 %v11434, %v11438
  %v11441 = vshrl.u32 %v10315, 16
  %v11443 = vshll.u32 %v10315, 16
  %v11445 = vrot.slane %v11443, 1
  %v11446 = vor.u32 %v11441, %v11445
  %v11448 = vshrl.u32 %v10316, 16
  %v11450 = vshll.u32 %v10316, 16
  %v11452 = vrot.slane %v11450, 1
  %v11453 = vor.u32 %v11448, %v11452
  %v11455 = vshrl.u32 %v10317, 16
  %v11457 = vshll.u32 %v10317, 16
  %v11459 = vrot.slane %v11457, 1
  %v11460 = vor.u32 %v11455, %v11459
  %v11462 = vshrl.u32 %v10318, 16
  %v11464 = vshll.u32 %v10318, 16
  %v11466 = vrot.slane %v11464, 1
  %v11467 = vor.u32 %v11462, %v11466
  %v11469 = vshrl.u32 %v10319, 16
  %v11471 = vshll.u32 %v10319, 16
  %v11473 = vrot.slane %v11471, 1
  %v11474 = vor.u32 %v11469, %v11473
  %v11476 = vshrl.u32 %v10320, 16
  %v11478 = vshll.u32 %v10320, 16
  %v11480 = vrot.slane %v11478, 1
  %v11481 = vor.u32 %v11476, %v11480
  %v11490 = vrot.slane %v10176, 1
  %v11491 = vrot.slane %v10177, 1
  %v11492 = vrot.slane %v10178, 1
  %v11493 = vrot.slane %v10179, 1
  %v11494 = vrot.slane %v10181, 1
  %v11495 = vrot.slane %v10182, 1
  %v11496 = vrot.slane %v10183, 1
  %v11497 = vrot.slane %v10184, 1
  %v11499 = vshrl.u32 %v11124, 16
  %v11501 = vshll.u32 %v11124, 16
  %v11503 = vrot.slane %v11501, 1
  %v11504 = vor.u32 %v11499, %v11503
  %v11506 = vshrl.u32 %v11128, 16
  %v11508 = vshll.u32 %v11128, 16
  %v11510 = vrot.slane %v11508, 1
  %v11511 = vor.u32 %v11506, %v11510
  %v11513 = vshrl.u32 %v11260, 16
  %v11515 = vshll.u32 %v11260, 16
  %v11517 = vrot.slane %v11515, 1
  %v11518 = vor.u32 %v11513, %v11517
  %v11520 = vshrl.u32 %v11264, 16
  %v11522 = vshll.u32 %v11264, 16
  %v11524 = vrot.slane %v11522, 1
  %v11525 = vor.u32 %v11520, %v11524
  %v11528 = vrot.slane %v11124, 1
  %v11529 = vrot.slane %v11128, 1
  %v11546 = vcombine.low %v10180, %v11271
  %v11547 = vcombine.low %v11271, %v11363
  %v11549 = vunpack.c.l.s4 1983009808
  %v11550 = vunpack.c.0.s8 %v11549
  %v11551 = vlaneseq
  %v11552 = vshrl.u32 %v11551, 7
  %v11553 = vsub.s32 %v11550, %v11552
  %v11554 = vrot.slane %v11546, %v11553
  %v11556 = vunpack.c.l.s4 1983009808
  %v11557 = vunpack.c.0.s8 %v11556
  %v11558 = vlaneseq
  %v11559 = vshrl.u32 %v11558, 7
  %v11560 = vsub.s32 %v11557, %v11559
  %v11561 = vrot.slane %v11547, %v11560
  %v11562 = vcombine.low %v11554, %v11561
  %v11563 = vcombine.low %v10313, %v11376
  %v11564 = vcombine.low %v11432, %v11490
  %v11566 = vunpack.c.l.s4 1983009808
  %v11567 = vunpack.c.0.s8 %v11566
  %v11568 = vlaneseq
  %v11569 = vshrl.u32 %v11568, 7
  %v11570 = vsub.s32 %v11567, %v11569
  %v11571 = vrot.slane %v11563, %v11570
  %v11573 = vunpack.c.l.s4 1983009808
  %v11574 = vunpack.c.0.s8 %v11573
  %v11575 = vlaneseq
  %v11576 = vshrl.u32 %v11575, 7
  %v11577 = vsub.s32 %v11574, %v11576
  %v11578 = vrot.slane %v11564, %v11577
  %v11579 = vcombine.low %v11571, %v11578
  %v11580 = vcombine.low %v11257, %v11278
  %v11581 = vcombine.low %v11320, %v11364
  %v11583 = vunpack.c.l.s4 1983009808
  %v11584 = vunpack.c.0.s8 %v11583
  %v11585 = vlaneseq
  %v11586 = vshrl.u32 %v11585, 7
  %v11587 = vsub.s32 %v11584, %v11586
  %v11588 = vrot.slane %v11580, %v11587
  %v11590 = vunpack.c.l.s4 1983009808
  %v11591 = vunpack.c.0.s8 %v11590
  %v11592 = vlaneseq
  %v11593 = vshrl.u32 %v11592, 7
  %v11594 = vsub.s32 %v11591, %v11593
  %v11595 = vrot.slane %v11581, %v11594
  %v11596 = vcombine.low %v11588, %v11595
  %v11597 = vcombine.low %v10314, %v11383
  %v11598 = vcombine.low %v11439, %v11491
  %v11600 = vunpack.c.l.s4 1983009808
  %v11601 = vunpack.c.0.s8 %v11600
  %v11602 = vlaneseq
  %v11603 = vshrl.u32 %v11602, 7
  %v11604 = vsub.s32 %v11601, %v11603
  %v11605 = vrot.slane %v11597, %v11604
  %v11607 = vunpack.c.l.s4 1983009808
  %v11608 = vunpack.c.0.s8 %v11607
  %v11609 = vlaneseq
  %v11610 = vshrl.u32 %v11609, 7
  %v11611 = vsub.s32 %v11608, %v11610
  %v11612 = vrot.slane %v11598, %v11611
  %v11613 = vcombine.low %v11605, %v11612
  %v11614 = vcombine.low %v11258, %v11285
  %v11615 = vcombine.low %v11327, %v11365
  %v11617 = vunpack.c.l.s4 1983009808
  %v11618 = vunpack.c.0.s8 %v11617
  %v11619 = vlaneseq
  %v11620 = vshrl.u32 %v11619, 7
  %v11621 = vsub.s32 %v11618, %v11620
  %v11622 = vrot.slane %v11614, %v11621
  %v11624 = vunpack.c.l.s4 1983009808
  %v11625 = vunpack.c.0.s8 %v11624
  %v11626 = vlaneseq
  %v11627 = vshrl.u32 %v11626, 7
  %v11628 = vsub.s32 %v11625, %v11627
  %v11629 = vrot.slane %v11615, %v11628
  %v11630 = vcombine.low %v11622, %v11629
  %v11631 = vcombine.low %v10315, %v11390
  %v11632 = vcombine.low %v11446, %v11492
  %v11634 = vunpack.c.l.s4 1983009808
  %v11635 = vunpack.c.0.s8 %v11634
  %v11636 = vlaneseq
  %v11637 = vshrl.u32 %v11636, 7
  %v11638 = vsub.s32 %v11635, %v11637
  %v11639 = vrot.slane %v11631, %v11638
  %v11641 = vunpack.c.l.s4 1983009808
  %v11642 = vunpack.c.0.s8 %v11641
  %v11643 = vlaneseq
  %v11644 = vshrl.u32 %v11643, 7
  %v11645 = vsub.s32 %v11642, %v11644
  %v11646 = vrot.slane %v11632, %v11645
  %v11647 = vcombine.low %v11639, %v11646
  %v11648 = vcombine.low %v11259, %v11292
  %v11649 = vcombine.low %v11334, %v11366
  %v11651 = vunpack.c.l.s4 1983009808
  %v11652 = vunpack.c.0.s8 %v11651
  %v11653 = vlaneseq
  %v11654 = vshrl.u32 %v11653, 7
  %v11655 = vsub.s32 %v11652, %v11654
  %v11656 = vrot.slane %v11648, %v11655
  %v11658 = vunpack.c.l.s4 1983009808
  %v11659 = vunpack.c.0.s8 %v11658
  %v11660 = vlaneseq
  %v11661 = vshrl.u32 %v11660, 7
  %v11662 = vsub.s32 %v11659, %v11661
  %v11663 = vrot.slane %v11649, %v11662
  %v11664 = vcombine.low %v11656, %v11663
  %v11665 = vcombine.low %v10316, %v11397
  %v11666 = vcombine.low %v11453, %v11493
  %v11668 = vunpack.c.l.s4 1983009808
  %v11669 = vunpack.c.0.s8 %v11668
  %v11670 = vlaneseq
  %v11671 = vshrl.u32 %v11670, 7
  %v11672 = vsub.s32 %v11669, %v11671
  %v11673 = vrot.slane %v11665, %v11672
  %v11675 = vunpack.c.l.s4 1983009808
  %v11676 = vunpack.c.0.s8 %v11675
  %v11677 = vlaneseq
  %v11678 = vshrl.u32 %v11677, 7
  %v11679 = vsub.s32 %v11676, %v11678
  %v11680 = vrot.slane %v11666, %v11679
  %v11681 = vcombine.low %v11673, %v11680
  %v11682 = vcombine.low %v11260, %v11504
  %v11683 = vcombine.low %v11518, %v11528
  %v11685 = vunpack.c.l.s4 1983009808
  %v11686 = vunpack.c.0.s8 %v11685
  %v11687 = vlaneseq
  %v11688 = vshrl.u32 %v11687, 7
  %v11689 = vsub.s32 %v11686, %v11688
  %v11690 = vrot.slane %v11682, %v11689
  %v11692 = vunpack.c.l.s4 1983009808
  %v11693 = vunpack.c.0.s8 %v11692
  %v11694 = vlaneseq
  %v11695 = vshrl.u32 %v11694, 7
  %v11696 = vsub.s32 %v11693, %v11695
  %v11697 = vrot.slane %v11683, %v11696
  %v11698 = vcombine.low %v11690, %v11697
  %v11699 = vcombine.low %v10317, %v11404
  %v11700 = vcombine.low %v11460, %v11494
  %v11702 = vunpack.c.l.s4 1983009808
  %v11703 = vunpack.c.0.s8 %v11702
  %v11704 = vlaneseq
  %v11705 = vshrl.u32 %v11704, 7
  %v11706 = vsub.s32 %v11703, %v11705
  %v11707 = vrot.slane %v11699, %v11706
  %v11709 = vunpack.c.l.s4 1983009808
  %v11710 = vunpack.c.0.s8 %v11709
  %v11711 = vlaneseq
  %v11712 = vshrl.u32 %v11711, 7
  %v11713 = vsub.s32 %v11710, %v11712
  %v11714 = vrot.slane %v11700, %v11713
  %v11715 = vcombine.low %v11707, %v11714
  %v11716 = vcombine.low %v11261, %v11299
  %v11717 = vcombine.low %v11341, %v11367
  %v11719 = vunpack.c.l.s4 1983009808
  %v11720 = vunpack.c.0.s8 %v11719
  %v11721 = vlaneseq
  %v11722 = vshrl.u32 %v11721, 7
  %v11723 = vsub.s32 %v11720, %v11722
  %v11724 = vrot.slane %v11716, %v11723
  %v11726 = vunpack.c.l.s4 1983009808
  %v11727 = vunpack.c.0.s8 %v11726
  %v11728 = vlaneseq
  %v11729 = vshrl.u32 %v11728, 7
  %v11730 = vsub.s32 %v11727, %v11729
  %v11731 = vrot.slane %v11717, %v11730
  %v11732 = vcombine.low %v11724, %v11731
  %v11733 = vcombine.low %v10318, %v11411
  %v11734 = vcombine.low %v11467, %v11495
  %v11736 = vunpack.c.l.s4 1983009808
  %v11737 = vunpack.c.0.s8 %v11736
  %v11738 = vlaneseq
  %v11739 = vshrl.u32 %v11738, 7
  %v11740 = vsub.s32 %v11737, %v11739
  %v11741 = vrot.slane %v11733, %v11740
  %v11743 = vunpack.c.l.s4 1983009808
  %v11744 = vunpack.c.0.s8 %v11743
  %v11745 = vlaneseq
  %v11746 = vshrl.u32 %v11745, 7
  %v11747 = vsub.s32 %v11744, %v11746
  %v11748 = vrot.slane %v11734, %v11747
  %v11749 = vcombine.low %v11741, %v11748
  %v11750 = vcombine.low %v11262, %v11306
  %v11751 = vcombine.low %v11348, %v11368
  %v11753 = vunpack.c.l.s4 1983009808
  %v11754 = vunpack.c.0.s8 %v11753
  %v11755 = vlaneseq
  %v11756 = vshrl.u32 %v11755, 7
  %v11757 = vsub.s32 %v11754, %v11756
  %v11758 = vrot.slane %v11750, %v11757
  %v11760 = vunpack.c.l.s4 1983009808
  %v11761 = vunpack.c.0.s8 %v11760
  %v11762 = vlaneseq
  %v11763 = vshrl.u32 %v11762, 7
  %v11764 = vsub.s32 %v11761, %v11763
  %v11765 = vrot.slane %v11751, %v11764
  %v11766 = vcombine.low %v11758, %v11765
  %v11767 = vcombine.low %v10319, %v11418
  %v11768 = vcombine.low %v11474, %v11496
  %v11770 = vunpack.c.l.s4 1983009808
  %v11771 = vunpack.c.0.s8 %v11770
  %v11772 = vlaneseq
  %v11773 = vshrl.u32 %v11772, 7
  %v11774 = vsub.s32 %v11771, %v11773
  %v11775 = vrot.slane %v11767, %v11774
  %v11777 = vunpack.c.l.s4 1983009808
  %v11778 = vunpack.c.0.s8 %v11777
  %v11779 = vlaneseq
  %v11780 = vshrl.u32 %v11779, 7
  %v11781 = vsub.s32 %v11778, %v11780
  %v11782 = vrot.slane %v11768, %v11781
  %v11783 = vcombine.low %v11775, %v11782
  %v11784 = vcombine.low %v11263, %v11313
  %v11785 = vcombine.low %v11355, %v11369
  %v11787 = vunpack.c.l.s4 1983009808
  %v11788 = vunpack.c.0.s8 %v11787
  %v11789 = vlaneseq
  %v11790 = vshrl.u32 %v11789, 7
  %v11791 = vsub.s32 %v11788, %v11790
  %v11792 = vrot.slane %v11784, %v11791
  %v11794 = vunpack.c.l.s4 1983009808
  %v11795 = vunpack.c.0.s8 %v11794
  %v11796 = vlaneseq
  %v11797 = vshrl.u32 %v11796, 7
  %v11798 = vsub.s32 %v11795, %v11797
  %v11799 = vrot.slane %v11785, %v11798
  %v11800 = vcombine.low %v11792, %v11799
  %v11801 = vcombine.low %v10320, %v11425
  %v11802 = vcombine.low %v11481, %v11497
  %v11804 = vunpack.c.l.s4 1983009808
  %v11805 = vunpack.c.0.s8 %v11804
  %v11806 = vlaneseq
  %v11807 = vshrl.u32 %v11806, 7
  %v11808 = vsub.s32 %v11805, %v11807
  %v11809 = vrot.slane %v11801, %v11808
  %v11811 = vunpack.c.l.s4 1983009808
  %v11812 = vunpack.c.0.s8 %v11811
  %v11813 = vlaneseq
  %v11814 = vshrl.u32 %v11813, 7
  %v11815 = vsub.s32 %v11812, %v11814
  %v11816 = vrot.slane %v11802, %v11815
  %v11817 = vcombine.low %v11809, %v11816
  %v11818 = vcombine.low %v11264, %v11511
  %v11819 = vcombine.low %v11525, %v11529
  %v11821 = vunpack.c.l.s4 1983009808
  %v11822 = vunpack.c.0.s8 %v11821
  %v11823 = vlaneseq
  %v11824 = vshrl.u32 %v11823, 7
  %v11825 = vsub.s32 %v11822, %v11824
  %v11826 = vrot.slane %v11818, %v11825
  %v11828 = vunpack.c.l.s4 1983009808
  %v11829 = vunpack.c.0.s8 %v11828
  %v11830 = vlaneseq
  %v11831 = vshrl.u32 %v11830, 7
  %v11832 = vsub.s32 %v11829, %v11831
  %v11833 = vrot.slane %v11819, %v11832
  %v11834 = vcombine.low %v11826, %v11833
  %v11835 = vld [vmem:[%s4] sm:$0xff]
  %v11836 = vld [vmem:[%s4 + $0x8] sm:$0xff]
  %v11837 = vld [vmem:[%s4 + $0x10] sm:$0xff]
  %v11838 = vld [vmem:[%s4 + $0x18] sm:$0xff]
  %v11839 = vld [vmem:[%s4 + $0x20] sm:$0xff]
  %v11840 = vld [vmem:[%s4 + $0x28] sm:$0xff]
  %v11841 = vld [vmem:[%s4 + $0x30] sm:$0xff]
  %v11842 = vld [vmem:[%s4 + $0x38] sm:$0xff]
  %v11843 = vld [vmem:[%s4 + $0x40] sm:$0xff]
  %v11844 = vld [vmem:[%s4 + $0x48] sm:$0xff]
  %v11845 = vld [vmem:[%s4 + $0x50] sm:$0xff]
  %v11846 = vld [vmem:[%s4 + $0x58] sm:$0xff]
  %v11847 = vld [vmem:[%s4 + $0x60] sm:$0xff]
  %v11848 = vld [vmem:[%s4 + $0x68] sm:$0xff]
  %v11849 = vld [vmem:[%s4 + $0x70] sm:$0xff]
  %v11850 = vld [vmem:[%s4 + $0x78] sm:$0xff]
  %v11851 = vld [vmem:[%s4 + $0x80] sm:$0xff]
  %v11852 = vld [vmem:[%s4 + $0x88] sm:$0xff]
  %v11853 = vld [vmem:[%s4 + $0x90] sm:$0xff]
  %v11854 = vld [vmem:[%s4 + $0x98] sm:$0xff]
  %v11855 = vld [vmem:[%s4 + $0xa0] sm:$0xff]
  %v11856 = vld [vmem:[%s4 + $0xa8] sm:$0xff]
  %v11857 = vld [vmem:[%s4 + $0xb0] sm:$0xff]
  %v11858 = vld [vmem:[%s4 + $0xb8] sm:$0xff]
  %v11859 = vld [vmem:[%s4 + $0xc0] sm:$0xff]
  %v11860 = vld [vmem:[%s4 + $0xc8] sm:$0xff]
  %v11861 = vld [vmem:[%s4 + $0xd0] sm:$0xff]
  %v11862 = vld [vmem:[%s4 + $0xd8] sm:$0xff]
  %v11863 = vld [vmem:[%s4 + $0xe0] sm:$0xff]
  %v11864 = vld [vmem:[%s4 + $0xe8] sm:$0xff]
  %v11865 = vld [vmem:[%s4 + $0xf0] sm:$0xff]
  %v11866 = vld [vmem:[%s4 + $0xf8] sm:$0xff]
  %v11867 = vld [vmem:[%s4 + $0x100] sm:$0xff]
  %v11868 = vld [vmem:[%s4 + $0x108] sm:$0xff]
  %v11869 = vld [vmem:[%s4 + $0x110] sm:$0xff]
  %v11870 = vld [vmem:[%s4 + $0x118] sm:$0xff]
  %v11871 = vld [vmem:[%s4 + $0x120] sm:$0xff]
  %v11872 = vld [vmem:[%s4 + $0x128] sm:$0xff]
  %v11873 = vld [vmem:[%s4 + $0x130] sm:$0xff]
  %v11874 = vld [vmem:[%s4 + $0x138] sm:$0xff]
  %v11875 = vld [vmem:[%s4 + $0x140] sm:$0xff]
  %v11876 = vld [vmem:[%s4 + $0x148] sm:$0xff]
  %v11877 = vld [vmem:[%s4 + $0x150] sm:$0xff]
  %v11878 = vld [vmem:[%s4 + $0x158] sm:$0xff]
  %v11879 = vld [vmem:[%s4 + $0x160] sm:$0xff]
  %v11880 = vld [vmem:[%s4 + $0x168] sm:$0xff]
  %v11881 = vld [vmem:[%s4 + $0x170] sm:$0xff]
  %v11882 = vld [vmem:[%s4 + $0x178] sm:$0xff]
  %v11883 = vld [vmem:[%s4 + $0x180] sm:$0xff]
  %v11884 = vld [vmem:[%s4 + $0x188] sm:$0xff]
  %v11885 = vld [vmem:[%s4 + $0x190] sm:$0xff]
  %v11886 = vld [vmem:[%s4 + $0x198] sm:$0xff]
  %v11887 = vld [vmem:[%s4 + $0x1a0] sm:$0xff]
  %v11888 = vld [vmem:[%s4 + $0x1a8] sm:$0xff]
  %v11889 = vld [vmem:[%s4 + $0x1b0] sm:$0xff]
  %v11890 = vld [vmem:[%s4 + $0x1b8] sm:$0xff]
  %v11891 = vld [vmem:[%s4 + $0x1c0] sm:$0xff]
  %v11892 = vld [vmem:[%s4 + $0x1c8] sm:$0xff]
  %v11893 = vld [vmem:[%s4 + $0x1d0] sm:$0xff]
  %v11894 = vld [vmem:[%s4 + $0x1d8] sm:$0xff]
  %v11895 = vld [vmem:[%s4 + $0x1e0] sm:$0xff]
  %v11896 = vld [vmem:[%s4 + $0x1e8] sm:$0xff]
  %v11897 = vld [vmem:[%s4 + $0x1f0] sm:$0xff]
  %v11898 = vld [vmem:[%s4 + $0x1f8] sm:$0xff]
  %v11899 = vld [vmem:[%s4 + $0x200] sm:$0xff]
  %v11900 = vld [vmem:[%s4 + $0x208] sm:$0xff]
  %v11901 = vld [vmem:[%s4 + $0x210] sm:$0xff]
  %v11902 = vld [vmem:[%s4 + $0x218] sm:$0xff]
  %v11903 = vld [vmem:[%s4 + $0x220] sm:$0xff]
  %v11904 = vld [vmem:[%s4 + $0x228] sm:$0xff]
  %v11905 = vld [vmem:[%s4 + $0x230] sm:$0xff]
  %v11906 = vld [vmem:[%s4 + $0x238] sm:$0xff]
  %v11907 = vld [vmem:[%s4 + $0x240] sm:$0xff]
  %v11908 = vld [vmem:[%s4 + $0x248] sm:$0xff]
  %v11909 = vld [vmem:[%s4 + $0x250] sm:$0xff]
  %v11910 = vld [vmem:[%s4 + $0x258] sm:$0xff]
  %v11911 = vld [vmem:[%s4 + $0x260] sm:$0xff]
  %v11912 = vld [vmem:[%s4 + $0x268] sm:$0xff]
  %v11913 = vld [vmem:[%s4 + $0x270] sm:$0xff]
  %v11914 = vld [vmem:[%s4 + $0x278] sm:$0xff]
  %v11915 = vld [vmem:[%s4 + $0x280] sm:$0xff]
  %v11916 = vld [vmem:[%s4 + $0x288] sm:$0xff]
  %v11917 = vld [vmem:[%s4 + $0x290] sm:$0xff]
  %v11918 = vld [vmem:[%s4 + $0x298] sm:$0xff]
  %v11919 = vld [vmem:[%s4 + $0x2a0] sm:$0xff]
  %v11920 = vld [vmem:[%s4 + $0x2a8] sm:$0xff]
  %v11921 = vld [vmem:[%s4 + $0x2b0] sm:$0xff]
  %v11922 = vld [vmem:[%s4 + $0x2b8] sm:$0xff]
  %v11923 = vld [vmem:[%s4 + $0x2c0] sm:$0xff]
  %v11924 = vld [vmem:[%s4 + $0x2c8] sm:$0xff]
  %v11925 = vld [vmem:[%s4 + $0x2d0] sm:$0xff]
  %v11926 = vld [vmem:[%s4 + $0x2d8] sm:$0xff]
  %v11927 = vld [vmem:[%s4 + $0x2e0] sm:$0xff]
  %v11928 = vld [vmem:[%s4 + $0x2e8] sm:$0xff]
  %v11929 = vld [vmem:[%s4 + $0x2f0] sm:$0xff]
  %v11930 = vld [vmem:[%s4 + $0x2f8] sm:$0xff]
  %v11931 = vld [vmem:[%s4 + $0x300] sm:$0xff]
  %v11932 = vld [vmem:[%s4 + $0x308] sm:$0xff]
  %v11933 = vld [vmem:[%s4 + $0x310] sm:$0xff]
  %v11934 = vld [vmem:[%s4 + $0x318] sm:$0xff]
  %v11935 = vld [vmem:[%s4 + $0x320] sm:$0xff]
  %v11936 = vld [vmem:[%s4 + $0x328] sm:$0xff]
  %v11937 = vld [vmem:[%s4 + $0x330] sm:$0xff]
  %v11938 = vld [vmem:[%s4 + $0x338] sm:$0xff]
  %v11939 = vld [vmem:[%s4 + $0x340] sm:$0xff]
  %v11940 = vld [vmem:[%s4 + $0x348] sm:$0xff]
  %v11941 = vld [vmem:[%s4 + $0x350] sm:$0xff]
  %v11942 = vld [vmem:[%s4 + $0x358] sm:$0xff]
  %v11943 = vld [vmem:[%s4 + $0x360] sm:$0xff]
  %v11944 = vld [vmem:[%s4 + $0x368] sm:$0xff]
  %v11945 = vld [vmem:[%s4 + $0x370] sm:$0xff]
  %v11946 = vld [vmem:[%s4 + $0x378] sm:$0xff]
  %v11947 = vld [vmem:[%s4 + $0x380] sm:$0xff]
  %v11948 = vld [vmem:[%s4 + $0x388] sm:$0xff]
  %v11949 = vld [vmem:[%s4 + $0x390] sm:$0xff]
  %v11950 = vld [vmem:[%s4 + $0x398] sm:$0xff]
  %v11951 = vld [vmem:[%s4 + $0x3a0] sm:$0xff]
  %v11952 = vld [vmem:[%s4 + $0x3a8] sm:$0xff]
  %v11953 = vld [vmem:[%s4 + $0x3b0] sm:$0xff]
  %v11954 = vld [vmem:[%s4 + $0x3b8] sm:$0xff]
  %v11955 = vld [vmem:[%s4 + $0x3c0] sm:$0xff]
  %v11956 = vld [vmem:[%s4 + $0x3c8] sm:$0xff]
  %v11957 = vld [vmem:[%s4 + $0x3d0] sm:$0xff]
  %v11958 = vld [vmem:[%s4 + $0x3d8] sm:$0xff]
  %v11959 = vld [vmem:[%s4 + $0x3e0] sm:$0xff]
  %v11960 = vld [vmem:[%s4 + $0x3e8] sm:$0xff]
  %v11961 = vld [vmem:[%s4 + $0x3f0] sm:$0xff]
  %v11962 = vld [vmem:[%s4 + $0x3f8] sm:$0xff]
  %v11963 = vld [vmem:[%s4 + $0x400] sm:$0xff]
  %v11964 = vld [vmem:[%s4 + $0x408] sm:$0xff]
  %v11965 = vld [vmem:[%s4 + $0x410] sm:$0xff]
  %v11966 = vld [vmem:[%s4 + $0x418] sm:$0xff]
  %v11967 = vld [vmem:[%s4 + $0x420] sm:$0xff]
  %v11968 = vld [vmem:[%s4 + $0x428] sm:$0xff]
  %v11969 = vld [vmem:[%s4 + $0x430] sm:$0xff]
  %v11970 = vld [vmem:[%s4 + $0x438] sm:$0xff]
  %v11971 = vld [vmem:[%s4 + $0x440] sm:$0xff]
  %v11972 = vld [vmem:[%s4 + $0x448] sm:$0xff]
  %v11973 = vld [vmem:[%s4 + $0x450] sm:$0xff]
  %v11974 = vld [vmem:[%s4 + $0x458] sm:$0xff]
  %v11975 = vld [vmem:[%s4 + $0x460] sm:$0xff]
  %v11976 = vld [vmem:[%s4 + $0x468] sm:$0xff]
  %v11977 = vld [vmem:[%s4 + $0x470] sm:$0xff]
  %v11978 = vld [vmem:[%s4 + $0x478] sm:$0xff]
  %v11979 = vld [vmem:[%s4 + $0x480] sm:$0xff]
  %v11980 = vld [vmem:[%s4 + $0x488] sm:$0xff]
  %v11981 = vld [vmem:[%s4 + $0x490] sm:$0xff]
  %v11982 = vld [vmem:[%s4 + $0x498] sm:$0xff]
  %v11983 = vld [vmem:[%s4 + $0x4a0] sm:$0xff]
  %v11984 = vld [vmem:[%s4 + $0x4a8] sm:$0xff]
  %v11985 = vld [vmem:[%s4 + $0x4b0] sm:$0xff]
  %v11986 = vld [vmem:[%s4 + $0x4b8] sm:$0xff]
  %v11987 = vld [vmem:[%s4 + $0x4c0] sm:$0xff]
  %v11988 = vld [vmem:[%s4 + $0x4c8] sm:$0xff]
  %v11989 = vld [vmem:[%s4 + $0x4d0] sm:$0xff]
  %v11990 = vld [vmem:[%s4 + $0x4d8] sm:$0xff]
  %v11991 = vld [vmem:[%s4 + $0x4e0] sm:$0xff]
  %v11992 = vld [vmem:[%s4 + $0x4e8] sm:$0xff]
  %v11993 = vld [vmem:[%s4 + $0x4f0] sm:$0xff]
  %v11994 = vld [vmem:[%s4 + $0x4f8] sm:$0xff]
  %v11995 = vld [vmem:[%s4 + $0x500] sm:$0xff]
  %v11996 = vld [vmem:[%s4 + $0x508] sm:$0xff]
  %v11997 = vld [vmem:[%s4 + $0x510] sm:$0xff]
  %v11998 = vld [vmem:[%s4 + $0x518] sm:$0xff]
  %v11999 = vld [vmem:[%s4 + $0x520] sm:$0xff]
  %v12000 = vld [vmem:[%s4 + $0x528] sm:$0xff]
  %v12001 = vld [vmem:[%s4 + $0x530] sm:$0xff]
  %v12002 = vld [vmem:[%s4 + $0x538] sm:$0xff]
  %v12003 = vld [vmem:[%s4 + $0x540] sm:$0xff]
  %v12004 = vld [vmem:[%s4 + $0x548] sm:$0xff]
  %v12005 = vld [vmem:[%s4 + $0x550] sm:$0xff]
  %v12006 = vld [vmem:[%s4 + $0x558] sm:$0xff]
  %v12007 = vld [vmem:[%s4 + $0x560] sm:$0xff]
  %v12008 = vld [vmem:[%s4 + $0x568] sm:$0xff]
  %v12009 = vld [vmem:[%s4 + $0x570] sm:$0xff]
  %v12010 = vld [vmem:[%s4 + $0x578] sm:$0xff]
  %v12011 = vld [vmem:[%s4 + $0x580] sm:$0xff]
  %v12012 = vld [vmem:[%s4 + $0x588] sm:$0xff]
  %v12013 = vld [vmem:[%s4 + $0x590] sm:$0xff]
  %v12014 = vld [vmem:[%s4 + $0x598] sm:$0xff]
  %v12015 = vld [vmem:[%s4 + $0x5a0] sm:$0xff]
  %v12016 = vld [vmem:[%s4 + $0x5a8] sm:$0xff]
  %v12017 = vld [vmem:[%s4 + $0x5b0] sm:$0xff]
  %v12018 = vld [vmem:[%s4 + $0x5b8] sm:$0xff]
  %v12019 = vld [vmem:[%s4 + $0x5c0] sm:$0xff]
  %v12020 = vld [vmem:[%s4 + $0x5c8] sm:$0xff]
  %v12021 = vld [vmem:[%s4 + $0x5d0] sm:$0xff]
  %v12022 = vld [vmem:[%s4 + $0x5d8] sm:$0xff]
  %v12023 = vld [vmem:[%s4 + $0x5e0] sm:$0xff]
  %v12024 = vld [vmem:[%s4 + $0x5e8] sm:$0xff]
  %v12025 = vld [vmem:[%s4 + $0x5f0] sm:$0xff]
  %v12026 = vld [vmem:[%s4 + $0x5f8] sm:$0xff]
  %v12027 = vld [vmem:[%s4 + $0x600] sm:$0xff]
  %v12028 = vld [vmem:[%s4 + $0x608] sm:$0xff]
  %v12029 = vld [vmem:[%s4 + $0x610] sm:$0xff]
  %v12030 = vld [vmem:[%s4 + $0x618] sm:$0xff]
  %v12031 = vld [vmem:[%s4 + $0x620] sm:$0xff]
  %v12032 = vld [vmem:[%s4 + $0x628] sm:$0xff]
  %v12033 = vld [vmem:[%s4 + $0x630] sm:$0xff]
  %v12034 = vld [vmem:[%s4 + $0x638] sm:$0xff]
  %v12035 = vld [vmem:[%s4 + $0x640] sm:$0xff]
  %v12036 = vld [vmem:[%s4 + $0x648] sm:$0xff]
  %v12037 = vld [vmem:[%s4 + $0x650] sm:$0xff]
  %v12038 = vld [vmem:[%s4 + $0x658] sm:$0xff]
  %v12039 = vld [vmem:[%s4 + $0x660] sm:$0xff]
  %v12040 = vld [vmem:[%s4 + $0x668] sm:$0xff]
  %v12041 = vld [vmem:[%s4 + $0x670] sm:$0xff]
  %v12042 = vld [vmem:[%s4 + $0x678] sm:$0xff]
  %v12043 = vld [vmem:[%s4 + $0x680] sm:$0xff]
  %v12044 = vld [vmem:[%s4 + $0x688] sm:$0xff]
  %v12045 = vld [vmem:[%s4 + $0x690] sm:$0xff]
  %v12046 = vld [vmem:[%s4 + $0x698] sm:$0xff]
  %v12047 = vld [vmem:[%s4 + $0x6a0] sm:$0xff]
  %v12048 = vld [vmem:[%s4 + $0x6a8] sm:$0xff]
  %v12049 = vld [vmem:[%s4 + $0x6b0] sm:$0xff]
  %v12050 = vld [vmem:[%s4 + $0x6b8] sm:$0xff]
  %v12051 = vld [vmem:[%s4 + $0x6c0] sm:$0xff]
  %v12052 = vld [vmem:[%s4 + $0x6c8] sm:$0xff]
  %v12053 = vld [vmem:[%s4 + $0x6d0] sm:$0xff]
  %v12054 = vld [vmem:[%s4 + $0x6d8] sm:$0xff]
  %v12055 = vld [vmem:[%s4 + $0x6e0] sm:$0xff]
  %v12056 = vld [vmem:[%s4 + $0x6e8] sm:$0xff]
  %v12057 = vld [vmem:[%s4 + $0x6f0] sm:$0xff]
  %v12058 = vld [vmem:[%s4 + $0x6f8] sm:$0xff]
  %v12059 = vld [vmem:[%s4 + $0x700] sm:$0xff]
  %v12060 = vld [vmem:[%s4 + $0x708] sm:$0xff]
  %v12061 = vld [vmem:[%s4 + $0x710] sm:$0xff]
  %v12062 = vld [vmem:[%s4 + $0x718] sm:$0xff]
  %v12063 = vld [vmem:[%s4 + $0x720] sm:$0xff]
  %v12064 = vld [vmem:[%s4 + $0x728] sm:$0xff]
  %v12065 = vld [vmem:[%s4 + $0x730] sm:$0xff]
  %v12066 = vld [vmem:[%s4 + $0x738] sm:$0xff]
  %v12067 = vld [vmem:[%s4 + $0x740] sm:$0xff]
  %v12068 = vld [vmem:[%s4 + $0x748] sm:$0xff]
  %v12069 = vld [vmem:[%s4 + $0x750] sm:$0xff]
  %v12070 = vld [vmem:[%s4 + $0x758] sm:$0xff]
  %v12071 = vld [vmem:[%s4 + $0x760] sm:$0xff]
  %v12072 = vld [vmem:[%s4 + $0x768] sm:$0xff]
  %v12073 = vld [vmem:[%s4 + $0x770] sm:$0xff]
  %v12074 = vld [vmem:[%s4 + $0x778] sm:$0xff]
  %v12075 = vld [vmem:[%s4 + $0x780] sm:$0xff]
  %v12076 = vld [vmem:[%s4 + $0x788] sm:$0xff]
  %v12077 = vld [vmem:[%s4 + $0x790] sm:$0xff]
  %v12078 = vld [vmem:[%s4 + $0x798] sm:$0xff]
  %v12079 = vld [vmem:[%s4 + $0x7a0] sm:$0xff]
  %v12080 = vld [vmem:[%s4 + $0x7a8] sm:$0xff]
  %v12081 = vld [vmem:[%s4 + $0x7b0] sm:$0xff]
  %v12082 = vld [vmem:[%s4 + $0x7b8] sm:$0xff]
  %v12083 = vld [vmem:[%s4 + $0x7c0] sm:$0xff]
  %v12084 = vld [vmem:[%s4 + $0x7c8] sm:$0xff]
  %v12085 = vld [vmem:[%s4 + $0x7d0] sm:$0xff]
  %v12086 = vld [vmem:[%s4 + $0x7d8] sm:$0xff]
  %v12087 = vld [vmem:[%s4 + $0x7e0] sm:$0xff]
  %v12088 = vld [vmem:[%s4 + $0x7e8] sm:$0xff]
  %v12089 = vld [vmem:[%s4 + $0x7f0] sm:$0xff]
  %v12090 = vld [vmem:[%s4 + $0x7f8] sm:$0xff]
  %v12091 = vcombine.low %v11562, %v11596
  %v12092 = vcombine.high %v11562, %v11596
  %v12093 = vcombine.low %v11630, %v11664
  %v12094 = vcombine.high %v11630, %v11664
  %v12096 = vunpack.c.l.s4 1983009808
  %v12097 = vunpack.c.0.s8 %v12096
  %v12098 = vlaneseq
  %v12099 = vshrl.u32 %v12098, 7
  %v12100 = vsub.s32 %v12097, %v12099
  %v12101 = vrot.slane %v12091, %v12100
  %v12103 = vunpack.c.l.s4 1983009808
  %v12104 = vunpack.c.0.s8 %v12103
  %v12105 = vlaneseq
  %v12106 = vshrl.u32 %v12105, 7
  %v12107 = vsub.s32 %v12104, %v12106
  %v12108 = vrot.slane %v12092, %v12107
  %v12110 = vunpack.c.l.s4 1983009808
  %v12111 = vunpack.c.0.s8 %v12110
  %v12112 = vlaneseq
  %v12113 = vshrl.u32 %v12112, 7
  %v12114 = vsub.s32 %v12111, %v12113
  %v12115 = vrot.slane %v12093, %v12114
  %v12117 = vunpack.c.l.s4 1983009808
  %v12118 = vunpack.c.0.s8 %v12117
  %v12119 = vlaneseq
  %v12120 = vshrl.u32 %v12119, 7
  %v12121 = vsub.s32 %v12118, %v12120
  %v12122 = vrot.slane %v12094, %v12121
  %v12123 = vcombine.low %v12101, %v12115
  %v12124 = vcombine.high %v12101, %v12115
  %v12125 = vcombine.low %v12108, %v12122
  %v12126 = vcombine.high %v12108, %v12122
  %v12127 = vcombine.low %v11579, %v11613
  %v12128 = vcombine.high %v11579, %v11613
  %v12129 = vcombine.low %v11647, %v11681
  %v12130 = vcombine.high %v11647, %v11681
  %v12132 = vunpack.c.l.s4 1983009808
  %v12133 = vunpack.c.0.s8 %v12132
  %v12134 = vlaneseq
  %v12135 = vshrl.u32 %v12134, 7
  %v12136 = vsub.s32 %v12133, %v12135
  %v12137 = vrot.slane %v12127, %v12136
  %v12139 = vunpack.c.l.s4 1983009808
  %v12140 = vunpack.c.0.s8 %v12139
  %v12141 = vlaneseq
  %v12142 = vshrl.u32 %v12141, 7
  %v12143 = vsub.s32 %v12140, %v12142
  %v12144 = vrot.slane %v12128, %v12143
  %v12146 = vunpack.c.l.s4 1983009808
  %v12147 = vunpack.c.0.s8 %v12146
  %v12148 = vlaneseq
  %v12149 = vshrl.u32 %v12148, 7
  %v12150 = vsub.s32 %v12147, %v12149
  %v12151 = vrot.slane %v12129, %v12150
  %v12153 = vunpack.c.l.s4 1983009808
  %v12154 = vunpack.c.0.s8 %v12153
  %v12155 = vlaneseq
  %v12156 = vshrl.u32 %v12155, 7
  %v12157 = vsub.s32 %v12154, %v12156
  %v12158 = vrot.slane %v12130, %v12157
  %v12159 = vcombine.low %v12137, %v12151
  %v12160 = vcombine.high %v12137, %v12151
  %v12161 = vcombine.low %v12144, %v12158
  %v12162 = vcombine.high %v12144, %v12158
  %v12163 = vcombine.low %v11596, %v11630
  %v12164 = vcombine.high %v11596, %v11630
  %v12165 = vcombine.low %v11664, %v11698
  %v12166 = vcombine.high %v11664, %v11698
  %v12168 = vunpack.c.l.s4 1983009808
  %v12169 = vunpack.c.0.s8 %v12168
  %v12170 = vlaneseq
  %v12171 = vshrl.u32 %v12170, 7
  %v12172 = vsub.s32 %v12169, %v12171
  %v12173 = vrot.slane %v12163, %v12172
  %v12175 = vunpack.c.l.s4 1983009808
  %v12176 = vunpack.c.0.s8 %v12175
  %v12177 = vlaneseq
  %v12178 = vshrl.u32 %v12177, 7
  %v12179 = vsub.s32 %v12176, %v12178
  %v12180 = vrot.slane %v12164, %v12179
  %v12182 = vunpack.c.l.s4 1983009808
  %v12183 = vunpack.c.0.s8 %v12182
  %v12184 = vlaneseq
  %v12185 = vshrl.u32 %v12184, 7
  %v12186 = vsub.s32 %v12183, %v12185
  %v12187 = vrot.slane %v12165, %v12186
  %v12189 = vunpack.c.l.s4 1983009808
  %v12190 = vunpack.c.0.s8 %v12189
  %v12191 = vlaneseq
  %v12192 = vshrl.u32 %v12191, 7
  %v12193 = vsub.s32 %v12190, %v12192
  %v12194 = vrot.slane %v12166, %v12193
  %v12195 = vcombine.low %v12173, %v12187
  %v12196 = vcombine.high %v12173, %v12187
  %v12197 = vcombine.low %v12180, %v12194
  %v12198 = vcombine.high %v12180, %v12194
  %v12199 = vcombine.low %v11613, %v11647
  %v12200 = vcombine.high %v11613, %v11647
  %v12201 = vcombine.low %v11681, %v11562
  %v12202 = vcombine.high %v11681, %v11562
  %v12204 = vunpack.c.l.s4 1983009808
  %v12205 = vunpack.c.0.s8 %v12204
  %v12206 = vlaneseq
  %v12207 = vshrl.u32 %v12206, 7
  %v12208 = vsub.s32 %v12205, %v12207
  %v12209 = vrot.slane %v12199, %v12208
  %v12211 = vunpack.c.l.s4 1983009808
  %v12212 = vunpack.c.0.s8 %v12211
  %v12213 = vlaneseq
  %v12214 = vshrl.u32 %v12213, 7
  %v12215 = vsub.s32 %v12212, %v12214
  %v12216 = vrot.slane %v12200, %v12215
  %v12218 = vunpack.c.l.s4 1983009808
  %v12219 = vunpack.c.0.s8 %v12218
  %v12220 = vlaneseq
  %v12221 = vshrl.u32 %v12220, 7
  %v12222 = vsub.s32 %v12219, %v12221
  %v12223 = vrot.slane %v12201, %v12222
  %v12225 = vunpack.c.l.s4 1983009808
  %v12226 = vunpack.c.0.s8 %v12225
  %v12227 = vlaneseq
  %v12228 = vshrl.u32 %v12227, 7
  %v12229 = vsub.s32 %v12226, %v12228
  %v12230 = vrot.slane %v12202, %v12229
  %v12231 = vcombine.low %v12209, %v12223
  %v12232 = vcombine.high %v12209, %v12223
  %v12233 = vcombine.low %v12216, %v12230
  %v12234 = vcombine.high %v12216, %v12230
  %v12235 = vcombine.low %v11562, %v11732
  %v12236 = vcombine.high %v11562, %v11732
  %v12237 = vcombine.low %v11766, %v11800
  %v12238 = vcombine.high %v11766, %v11800
  %v12240 = vunpack.c.l.s4 1983009808
  %v12241 = vunpack.c.0.s8 %v12240
  %v12242 = vlaneseq
  %v12243 = vshrl.u32 %v12242, 7
  %v12244 = vsub.s32 %v12241, %v12243
  %v12245 = vrot.slane %v12235, %v12244
  %v12247 = vunpack.c.l.s4 1983009808
  %v12248 = vunpack.c.0.s8 %v12247
  %v12249 = vlaneseq
  %v12250 = vshrl.u32 %v12249, 7
  %v12251 = vsub.s32 %v12248, %v12250
  %v12252 = vrot.slane %v12236, %v12251
  %v12254 = vunpack.c.l.s4 1983009808
  %v12255 = vunpack.c.0.s8 %v12254
  %v12256 = vlaneseq
  %v12257 = vshrl.u32 %v12256, 7
  %v12258 = vsub.s32 %v12255, %v12257
  %v12259 = vrot.slane %v12237, %v12258
  %v12261 = vunpack.c.l.s4 1983009808
  %v12262 = vunpack.c.0.s8 %v12261
  %v12263 = vlaneseq
  %v12264 = vshrl.u32 %v12263, 7
  %v12265 = vsub.s32 %v12262, %v12264
  %v12266 = vrot.slane %v12238, %v12265
  %v12267 = vcombine.low %v12245, %v12259
  %v12268 = vcombine.high %v12245, %v12259
  %v12269 = vcombine.low %v12252, %v12266
  %v12270 = vcombine.high %v12252, %v12266
  %v12271 = vcombine.low %v11715, %v11749
  %v12272 = vcombine.high %v11715, %v11749
  %v12273 = vcombine.low %v11783, %v11817
  %v12274 = vcombine.high %v11783, %v11817
  %v12276 = vunpack.c.l.s4 1983009808
  %v12277 = vunpack.c.0.s8 %v12276
  %v12278 = vlaneseq
  %v12279 = vshrl.u32 %v12278, 7
  %v12280 = vsub.s32 %v12277, %v12279
  %v12281 = vrot.slane %v12271, %v12280
  %v12283 = vunpack.c.l.s4 1983009808
  %v12284 = vunpack.c.0.s8 %v12283
  %v12285 = vlaneseq
  %v12286 = vshrl.u32 %v12285, 7
  %v12287 = vsub.s32 %v12284, %v12286
  %v12288 = vrot.slane %v12272, %v12287
  %v12290 = vunpack.c.l.s4 1983009808
  %v12291 = vunpack.c.0.s8 %v12290
  %v12292 = vlaneseq
  %v12293 = vshrl.u32 %v12292, 7
  %v12294 = vsub.s32 %v12291, %v12293
  %v12295 = vrot.slane %v12273, %v12294
  %v12297 = vunpack.c.l.s4 1983009808
  %v12298 = vunpack.c.0.s8 %v12297
  %v12299 = vlaneseq
  %v12300 = vshrl.u32 %v12299, 7
  %v12301 = vsub.s32 %v12298, %v12300
  %v12302 = vrot.slane %v12274, %v12301
  %v12303 = vcombine.low %v12281, %v12295
  %v12304 = vcombine.high %v12281, %v12295
  %v12305 = vcombine.low %v12288, %v12302
  %v12306 = vcombine.high %v12288, %v12302
  %v12307 = vcombine.low %v11732, %v11766
  %v12308 = vcombine.high %v11732, %v11766
  %v12309 = vcombine.low %v11800, %v11834
  %v12310 = vcombine.high %v11800, %v11834
  %v12312 = vunpack.c.l.s4 1983009808
  %v12313 = vunpack.c.0.s8 %v12312
  %v12314 = vlaneseq
  %v12315 = vshrl.u32 %v12314, 7
  %v12316 = vsub.s32 %v12313, %v12315
  %v12317 = vrot.slane %v12307, %v12316
  %v12319 = vunpack.c.l.s4 1983009808
  %v12320 = vunpack.c.0.s8 %v12319
  %v12321 = vlaneseq
  %v12322 = vshrl.u32 %v12321, 7
  %v12323 = vsub.s32 %v12320, %v12322
  %v12324 = vrot.slane %v12308, %v12323
  %v12326 = vunpack.c.l.s4 1983009808
  %v12327 = vunpack.c.0.s8 %v12326
  %v12328 = vlaneseq
  %v12329 = vshrl.u32 %v12328, 7
  %v12330 = vsub.s32 %v12327, %v12329
  %v12331 = vrot.slane %v12309, %v12330
  %v12333 = vunpack.c.l.s4 1983009808
  %v12334 = vunpack.c.0.s8 %v12333
  %v12335 = vlaneseq
  %v12336 = vshrl.u32 %v12335, 7
  %v12337 = vsub.s32 %v12334, %v12336
  %v12338 = vrot.slane %v12310, %v12337
  %v12339 = vcombine.low %v12317, %v12331
  %v12340 = vcombine.high %v12317, %v12331
  %v12341 = vcombine.low %v12324, %v12338
  %v12342 = vcombine.high %v12324, %v12338
  %v12343 = vcombine.low %v11749, %v11783
  %v12344 = vcombine.high %v11749, %v11783
  %v12345 = vcombine.low %v11817, %v11562
  %v12346 = vcombine.high %v11817, %v11562
  %v12348 = vunpack.c.l.s4 1983009808
  %v12349 = vunpack.c.0.s8 %v12348
  %v12350 = vlaneseq
  %v12351 = vshrl.u32 %v12350, 7
  %v12352 = vsub.s32 %v12349, %v12351
  %v12353 = vrot.slane %v12343, %v12352
  %v12355 = vunpack.c.l.s4 1983009808
  %v12356 = vunpack.c.0.s8 %v12355
  %v12357 = vlaneseq
  %v12358 = vshrl.u32 %v12357, 7
  %v12359 = vsub.s32 %v12356, %v12358
  %v12360 = vrot.slane %v12344, %v12359
  %v12362 = vunpack.c.l.s4 1983009808
  %v12363 = vunpack.c.0.s8 %v12362
  %v12364 = vlaneseq
  %v12365 = vshrl.u32 %v12364, 7
  %v12366 = vsub.s32 %v12363, %v12365
  %v12367 = vrot.slane %v12345, %v12366
  %v12369 = vunpack.c.l.s4 1983009808
  %v12370 = vunpack.c.0.s8 %v12369
  %v12371 = vlaneseq
  %v12372 = vshrl.u32 %v12371, 7
  %v12373 = vsub.s32 %v12370, %v12372
  %v12374 = vrot.slane %v12346, %v12373
  %v12375 = vcombine.low %v12353, %v12367
  %v12376 = vcombine.high %v12353, %v12367
  %v12377 = vcombine.low %v12360, %v12374
  %v12378 = vcombine.high %v12360, %v12374
  %v12667 = vunpack.c.l.b16 %v11835
  %v12668 = vunpack.c.h.b16 %v11835
  %v12669 = vunpack.c.l.b16 %v11836
  %v12670 = vunpack.c.h.b16 %v11836
  %v12671 = vunpack.c.l.b16 %v11837
  %v12672 = vunpack.c.h.b16 %v11837
  %v12673 = vunpack.c.l.b16 %v11838
  %v12674 = vunpack.c.h.b16 %v11838
  %v12675 = vunpack.c.l.b16 %v11839
  %v12676 = vunpack.c.h.b16 %v11839
  %v12677 = vunpack.c.l.b16 %v11840
  %v12678 = vunpack.c.h.b16 %v11840
  %v12679 = vunpack.c.l.b16 %v11841
  %v12680 = vunpack.c.h.b16 %v11841
  %v12681 = vunpack.c.l.b16 %v11842
  %v12682 = vunpack.c.h.b16 %v11842
  %v12683 = vunpack.c.l.b16 %v11843
  %v12684 = vunpack.c.h.b16 %v11843
  %v12685 = vunpack.c.l.b16 %v11844
  %v12686 = vunpack.c.h.b16 %v11844
  %v12687 = vunpack.c.l.b16 %v11845
  %v12688 = vunpack.c.h.b16 %v11845
  %v12689 = vunpack.c.l.b16 %v11846
  %v12690 = vunpack.c.h.b16 %v11846
  %v12691 = vunpack.c.l.b16 %v11847
  %v12692 = vunpack.c.h.b16 %v11847
  %v12693 = vunpack.c.l.b16 %v11848
  %v12694 = vunpack.c.h.b16 %v11848
  %v12695 = vunpack.c.l.b16 %v11849
  %v12696 = vunpack.c.h.b16 %v11849
  %v12697 = vunpack.c.l.b16 %v11850
  %v12698 = vunpack.c.h.b16 %v11850
  %v12699 = vunpack.c.l.b16 %v11851
  %v12700 = vunpack.c.h.b16 %v11851
  %v12701 = vunpack.c.l.b16 %v11852
  %v12702 = vunpack.c.h.b16 %v11852
  %v12703 = vunpack.c.l.b16 %v11853
  %v12704 = vunpack.c.h.b16 %v11853
  %v12705 = vunpack.c.l.b16 %v11854
  %v12706 = vunpack.c.h.b16 %v11854
  %v12707 = vunpack.c.l.b16 %v11855
  %v12708 = vunpack.c.h.b16 %v11855
  %v12709 = vunpack.c.l.b16 %v11856
  %v12710 = vunpack.c.h.b16 %v11856
  %v12711 = vunpack.c.l.b16 %v11857
  %v12712 = vunpack.c.h.b16 %v11857
  %v12713 = vunpack.c.l.b16 %v11858
  %v12714 = vunpack.c.h.b16 %v11858
  %v12715 = vunpack.c.l.b16 %v11859
  %v12716 = vunpack.c.h.b16 %v11859
  %v12717 = vunpack.c.l.b16 %v11860
  %v12718 = vunpack.c.h.b16 %v11860
  %v12719 = vunpack.c.l.b16 %v11861
  %v12720 = vunpack.c.h.b16 %v11861
  %v12721 = vunpack.c.l.b16 %v11862
  %v12722 = vunpack.c.h.b16 %v11862
  %v12723 = vunpack.c.l.b16 %v11863
  %v12724 = vunpack.c.h.b16 %v11863
  %v12725 = vunpack.c.l.b16 %v11864
  %v12726 = vunpack.c.h.b16 %v11864
  %v12727 = vunpack.c.l.b16 %v11865
  %v12728 = vunpack.c.h.b16 %v11865
  %v12729 = vunpack.c.l.b16 %v11866
  %v12730 = vunpack.c.h.b16 %v11866
  %v12731 = vunpack.c.l.b16 %v11867
  %v12732 = vunpack.c.h.b16 %v11867
  %v12733 = vunpack.c.l.b16 %v11868
  %v12734 = vunpack.c.h.b16 %v11868
  %v12735 = vunpack.c.l.b16 %v11869
  %v12736 = vunpack.c.h.b16 %v11869
  %v12737 = vunpack.c.l.b16 %v11870
  %v12738 = vunpack.c.h.b16 %v11870
  %v12739 = vunpack.c.l.b16 %v11871
  %v12740 = vunpack.c.h.b16 %v11871
  %v12741 = vunpack.c.l.b16 %v11872
  %v12742 = vunpack.c.h.b16 %v11872
  %v12743 = vunpack.c.l.b16 %v11873
  %v12744 = vunpack.c.h.b16 %v11873
  %v12745 = vunpack.c.l.b16 %v11874
  %v12746 = vunpack.c.h.b16 %v11874
  %v12747 = vunpack.c.l.b16 %v11875
  %v12748 = vunpack.c.h.b16 %v11875
  %v12749 = vunpack.c.l.b16 %v11876
  %v12750 = vunpack.c.h.b16 %v11876
  %v12751 = vunpack.c.l.b16 %v11877
  %v12752 = vunpack.c.h.b16 %v11877
  %v12753 = vunpack.c.l.b16 %v11878
  %v12754 = vunpack.c.h.b16 %v11878
  %v12755 = vunpack.c.l.b16 %v11879
  %v12756 = vunpack.c.h.b16 %v11879
  %v12757 = vunpack.c.l.b16 %v11880
  %v12758 = vunpack.c.h.b16 %v11880
  %v12759 = vunpack.c.l.b16 %v11881
  %v12760 = vunpack.c.h.b16 %v11881
  %v12761 = vunpack.c.l.b16 %v11882
  %v12762 = vunpack.c.h.b16 %v11882
  %v12763 = vunpack.c.l.b16 %v11883
  %v12764 = vunpack.c.h.b16 %v11883
  %v12765 = vunpack.c.l.b16 %v11884
  %v12766 = vunpack.c.h.b16 %v11884
  %v12767 = vunpack.c.l.b16 %v11885
  %v12768 = vunpack.c.h.b16 %v11885
  %v12769 = vunpack.c.l.b16 %v11886
  %v12770 = vunpack.c.h.b16 %v11886
  %v12771 = vunpack.c.l.b16 %v11887
  %v12772 = vunpack.c.h.b16 %v11887
  %v12773 = vunpack.c.l.b16 %v11888
  %v12774 = vunpack.c.h.b16 %v11888
  %v12775 = vunpack.c.l.b16 %v11889
  %v12776 = vunpack.c.h.b16 %v11889
  %v12777 = vunpack.c.l.b16 %v11890
  %v12778 = vunpack.c.h.b16 %v11890
  %v12779 = vunpack.c.l.b16 %v11891
  %v12780 = vunpack.c.h.b16 %v11891
  %v12781 = vunpack.c.l.b16 %v11892
  %v12782 = vunpack.c.h.b16 %v11892
  %v12783 = vunpack.c.l.b16 %v11893
  %v12784 = vunpack.c.h.b16 %v11893
  %v12785 = vunpack.c.l.b16 %v11894
  %v12786 = vunpack.c.h.b16 %v11894
  %v12787 = vunpack.c.l.b16 %v11895
  %v12788 = vunpack.c.h.b16 %v11895
  %v12789 = vunpack.c.l.b16 %v11896
  %v12790 = vunpack.c.h.b16 %v11896
  %v12791 = vunpack.c.l.b16 %v11897
  %v12792 = vunpack.c.h.b16 %v11897
  %v12793 = vunpack.c.l.b16 %v11898
  %v12794 = vunpack.c.h.b16 %v11898
  %v12795 = vunpack.c.l.b16 %v11899
  %v12796 = vunpack.c.h.b16 %v11899
  %v12797 = vunpack.c.l.b16 %v11900
  %v12798 = vunpack.c.h.b16 %v11900
  %v12799 = vunpack.c.l.b16 %v11901
  %v12800 = vunpack.c.h.b16 %v11901
  %v12801 = vunpack.c.l.b16 %v11902
  %v12802 = vunpack.c.h.b16 %v11902
  %v12803 = vunpack.c.l.b16 %v11903
  %v12804 = vunpack.c.h.b16 %v11903
  %v12805 = vunpack.c.l.b16 %v11904
  %v12806 = vunpack.c.h.b16 %v11904
  %v12807 = vunpack.c.l.b16 %v11905
  %v12808 = vunpack.c.h.b16 %v11905
  %v12809 = vunpack.c.l.b16 %v11906
  %v12810 = vunpack.c.h.b16 %v11906
  %v12811 = vunpack.c.l.b16 %v11907
  %v12812 = vunpack.c.h.b16 %v11907
  %v12813 = vunpack.c.l.b16 %v11908
  %v12814 = vunpack.c.h.b16 %v11908
  %v12815 = vunpack.c.l.b16 %v11909
  %v12816 = vunpack.c.h.b16 %v11909
  %v12817 = vunpack.c.l.b16 %v11910
  %v12818 = vunpack.c.h.b16 %v11910
  %v12819 = vunpack.c.l.b16 %v11911
  %v12820 = vunpack.c.h.b16 %v11911
  %v12821 = vunpack.c.l.b16 %v11912
  %v12822 = vunpack.c.h.b16 %v11912
  %v12823 = vunpack.c.l.b16 %v11913
  %v12824 = vunpack.c.h.b16 %v11913
  %v12825 = vunpack.c.l.b16 %v11914
  %v12826 = vunpack.c.h.b16 %v11914
  %v12827 = vunpack.c.l.b16 %v11915
  %v12828 = vunpack.c.h.b16 %v11915
  %v12829 = vunpack.c.l.b16 %v11916
  %v12830 = vunpack.c.h.b16 %v11916
  %v12831 = vunpack.c.l.b16 %v11917
  %v12832 = vunpack.c.h.b16 %v11917
  %v12833 = vunpack.c.l.b16 %v11918
  %v12834 = vunpack.c.h.b16 %v11918
  %v12835 = vunpack.c.l.b16 %v11919
  %v12836 = vunpack.c.h.b16 %v11919
  %v12837 = vunpack.c.l.b16 %v11920
  %v12838 = vunpack.c.h.b16 %v11920
  %v12839 = vunpack.c.l.b16 %v11921
  %v12840 = vunpack.c.h.b16 %v11921
  %v12841 = vunpack.c.l.b16 %v11922
  %v12842 = vunpack.c.h.b16 %v11922
  %v12843 = vunpack.c.l.b16 %v11923
  %v12844 = vunpack.c.h.b16 %v11923
  %v12845 = vunpack.c.l.b16 %v11924
  %v12846 = vunpack.c.h.b16 %v11924
  %v12847 = vunpack.c.l.b16 %v11925
  %v12848 = vunpack.c.h.b16 %v11925
  %v12849 = vunpack.c.l.b16 %v11926
  %v12850 = vunpack.c.h.b16 %v11926
  %v12851 = vunpack.c.l.b16 %v11927
  %v12852 = vunpack.c.h.b16 %v11927
  %v12853 = vunpack.c.l.b16 %v11928
  %v12854 = vunpack.c.h.b16 %v11928
  %v12855 = vunpack.c.l.b16 %v11929
  %v12856 = vunpack.c.h.b16 %v11929
  %v12857 = vunpack.c.l.b16 %v11930
  %v12858 = vunpack.c.h.b16 %v11930
  %v12859 = vunpack.c.l.b16 %v11931
  %v12860 = vunpack.c.h.b16 %v11931
  %v12861 = vunpack.c.l.b16 %v11932
  %v12862 = vunpack.c.h.b16 %v11932
  %v12863 = vunpack.c.l.b16 %v11933
  %v12864 = vunpack.c.h.b16 %v11933
  %v12865 = vunpack.c.l.b16 %v11934
  %v12866 = vunpack.c.h.b16 %v11934
  %v12867 = vunpack.c.l.b16 %v11935
  %v12868 = vunpack.c.h.b16 %v11935
  %v12869 = vunpack.c.l.b16 %v11936
  %v12870 = vunpack.c.h.b16 %v11936
  %v12871 = vunpack.c.l.b16 %v11937
  %v12872 = vunpack.c.h.b16 %v11937
  %v12873 = vunpack.c.l.b16 %v11938
  %v12874 = vunpack.c.h.b16 %v11938
  %v12875 = vunpack.c.l.b16 %v11939
  %v12876 = vunpack.c.h.b16 %v11939
  %v12877 = vunpack.c.l.b16 %v11940
  %v12878 = vunpack.c.h.b16 %v11940
  %v12879 = vunpack.c.l.b16 %v11941
  %v12880 = vunpack.c.h.b16 %v11941
  %v12881 = vunpack.c.l.b16 %v11942
  %v12882 = vunpack.c.h.b16 %v11942
  %v12883 = vunpack.c.l.b16 %v11943
  %v12884 = vunpack.c.h.b16 %v11943
  %v12885 = vunpack.c.l.b16 %v11944
  %v12886 = vunpack.c.h.b16 %v11944
  %v12887 = vunpack.c.l.b16 %v11945
  %v12888 = vunpack.c.h.b16 %v11945
  %v12889 = vunpack.c.l.b16 %v11946
  %v12890 = vunpack.c.h.b16 %v11946
  %v12891 = vunpack.c.l.b16 %v11947
  %v12892 = vunpack.c.h.b16 %v11947
  %v12893 = vunpack.c.l.b16 %v11948
  %v12894 = vunpack.c.h.b16 %v11948
  %v12895 = vunpack.c.l.b16 %v11949
  %v12896 = vunpack.c.h.b16 %v11949
  %v12897 = vunpack.c.l.b16 %v11950
  %v12898 = vunpack.c.h.b16 %v11950
  %v12899 = vunpack.c.l.b16 %v11951
  %v12900 = vunpack.c.h.b16 %v11951
  %v12901 = vunpack.c.l.b16 %v11952
  %v12902 = vunpack.c.h.b16 %v11952
  %v12903 = vunpack.c.l.b16 %v11953
  %v12904 = vunpack.c.h.b16 %v11953
  %v12905 = vunpack.c.l.b16 %v11954
  %v12906 = vunpack.c.h.b16 %v11954
  %v12907 = vunpack.c.l.b16 %v11955
  %v12908 = vunpack.c.h.b16 %v11955
  %v12909 = vunpack.c.l.b16 %v11956
  %v12910 = vunpack.c.h.b16 %v11956
  %v12911 = vunpack.c.l.b16 %v11957
  %v12912 = vunpack.c.h.b16 %v11957
  %v12913 = vunpack.c.l.b16 %v11958
  %v12914 = vunpack.c.h.b16 %v11958
  %v12915 = vunpack.c.l.b16 %v11959
  %v12916 = vunpack.c.h.b16 %v11959
  %v12917 = vunpack.c.l.b16 %v11960
  %v12918 = vunpack.c.h.b16 %v11960
  %v12919 = vunpack.c.l.b16 %v11961
  %v12920 = vunpack.c.h.b16 %v11961
  %v12921 = vunpack.c.l.b16 %v11962
  %v12922 = vunpack.c.h.b16 %v11962
  %v12923 = vunpack.c.l.b16 %v11963
  %v12924 = vunpack.c.h.b16 %v11963
  %v12925 = vunpack.c.l.b16 %v11964
  %v12926 = vunpack.c.h.b16 %v11964
  %v12927 = vunpack.c.l.b16 %v11965
  %v12928 = vunpack.c.h.b16 %v11965
  %v12929 = vunpack.c.l.b16 %v11966
  %v12930 = vunpack.c.h.b16 %v11966
  %v12931 = vunpack.c.l.b16 %v11967
  %v12932 = vunpack.c.h.b16 %v11967
  %v12933 = vunpack.c.l.b16 %v11968
  %v12934 = vunpack.c.h.b16 %v11968
  %v12935 = vunpack.c.l.b16 %v11969
  %v12936 = vunpack.c.h.b16 %v11969
  %v12937 = vunpack.c.l.b16 %v11970
  %v12938 = vunpack.c.h.b16 %v11970
  %v12939 = vunpack.c.l.b16 %v11971
  %v12940 = vunpack.c.h.b16 %v11971
  %v12941 = vunpack.c.l.b16 %v11972
  %v12942 = vunpack.c.h.b16 %v11972
  %v12943 = vunpack.c.l.b16 %v11973
  %v12944 = vunpack.c.h.b16 %v11973
  %v12945 = vunpack.c.l.b16 %v11974
  %v12946 = vunpack.c.h.b16 %v11974
  %v12947 = vunpack.c.l.b16 %v11975
  %v12948 = vunpack.c.h.b16 %v11975
  %v12949 = vunpack.c.l.b16 %v11976
  %v12950 = vunpack.c.h.b16 %v11976
  %v12951 = vunpack.c.l.b16 %v11977
  %v12952 = vunpack.c.h.b16 %v11977
  %v12953 = vunpack.c.l.b16 %v11978
  %v12954 = vunpack.c.h.b16 %v11978
  %v12955 = vunpack.c.l.b16 %v11979
  %v12956 = vunpack.c.h.b16 %v11979
  %v12957 = vunpack.c.l.b16 %v11980
  %v12958 = vunpack.c.h.b16 %v11980
  %v12959 = vunpack.c.l.b16 %v11981
  %v12960 = vunpack.c.h.b16 %v11981
  %v12961 = vunpack.c.l.b16 %v11982
  %v12962 = vunpack.c.h.b16 %v11982
  %v12963 = vunpack.c.l.b16 %v11983
  %v12964 = vunpack.c.h.b16 %v11983
  %v12965 = vunpack.c.l.b16 %v11984
  %v12966 = vunpack.c.h.b16 %v11984
  %v12967 = vunpack.c.l.b16 %v11985
  %v12968 = vunpack.c.h.b16 %v11985
  %v12969 = vunpack.c.l.b16 %v11986
  %v12970 = vunpack.c.h.b16 %v11986
  %v12971 = vunpack.c.l.b16 %v11987
  %v12972 = vunpack.c.h.b16 %v11987
  %v12973 = vunpack.c.l.b16 %v11988
  %v12974 = vunpack.c.h.b16 %v11988
  %v12975 = vunpack.c.l.b16 %v11989
  %v12976 = vunpack.c.h.b16 %v11989
  %v12977 = vunpack.c.l.b16 %v11990
  %v12978 = vunpack.c.h.b16 %v11990
  %v12979 = vunpack.c.l.b16 %v11991
  %v12980 = vunpack.c.h.b16 %v11991
  %v12981 = vunpack.c.l.b16 %v11992
  %v12982 = vunpack.c.h.b16 %v11992
  %v12983 = vunpack.c.l.b16 %v11993
  %v12984 = vunpack.c.h.b16 %v11993
  %v12985 = vunpack.c.l.b16 %v11994
  %v12986 = vunpack.c.h.b16 %v11994
  %v12987 = vunpack.c.l.b16 %v11995
  %v12988 = vunpack.c.h.b16 %v11995
  %v12989 = vunpack.c.l.b16 %v11996
  %v12990 = vunpack.c.h.b16 %v11996
  %v12991 = vunpack.c.l.b16 %v11997
  %v12992 = vunpack.c.h.b16 %v11997
  %v12993 = vunpack.c.l.b16 %v11998
  %v12994 = vunpack.c.h.b16 %v11998
  %v12995 = vunpack.c.l.b16 %v11999
  %v12996 = vunpack.c.h.b16 %v11999
  %v12997 = vunpack.c.l.b16 %v12000
  %v12998 = vunpack.c.h.b16 %v12000
  %v12999 = vunpack.c.l.b16 %v12001
  %v13000 = vunpack.c.h.b16 %v12001
  %v13001 = vunpack.c.l.b16 %v12002
  %v13002 = vunpack.c.h.b16 %v12002
  %v13003 = vunpack.c.l.b16 %v12003
  %v13004 = vunpack.c.h.b16 %v12003
  %v13005 = vunpack.c.l.b16 %v12004
  %v13006 = vunpack.c.h.b16 %v12004
  %v13007 = vunpack.c.l.b16 %v12005
  %v13008 = vunpack.c.h.b16 %v12005
  %v13009 = vunpack.c.l.b16 %v12006
  %v13010 = vunpack.c.h.b16 %v12006
  %v13011 = vunpack.c.l.b16 %v12007
  %v13012 = vunpack.c.h.b16 %v12007
  %v13013 = vunpack.c.l.b16 %v12008
  %v13014 = vunpack.c.h.b16 %v12008
  %v13015 = vunpack.c.l.b16 %v12009
  %v13016 = vunpack.c.h.b16 %v12009
  %v13017 = vunpack.c.l.b16 %v12010
  %v13018 = vunpack.c.h.b16 %v12010
  %v13019 = vunpack.c.l.b16 %v12011
  %v13020 = vunpack.c.h.b16 %v12011
  %v13021 = vunpack.c.l.b16 %v12012
  %v13022 = vunpack.c.h.b16 %v12012
  %v13023 = vunpack.c.l.b16 %v12013
  %v13024 = vunpack.c.h.b16 %v12013
  %v13025 = vunpack.c.l.b16 %v12014
  %v13026 = vunpack.c.h.b16 %v12014
  %v13027 = vunpack.c.l.b16 %v12015
  %v13028 = vunpack.c.h.b16 %v12015
  %v13029 = vunpack.c.l.b16 %v12016
  %v13030 = vunpack.c.h.b16 %v12016
  %v13031 = vunpack.c.l.b16 %v12017
  %v13032 = vunpack.c.h.b16 %v12017
  %v13033 = vunpack.c.l.b16 %v12018
  %v13034 = vunpack.c.h.b16 %v12018
  %v13035 = vunpack.c.l.b16 %v12019
  %v13036 = vunpack.c.h.b16 %v12019
  %v13037 = vunpack.c.l.b16 %v12020
  %v13038 = vunpack.c.h.b16 %v12020
  %v13039 = vunpack.c.l.b16 %v12021
  %v13040 = vunpack.c.h.b16 %v12021
  %v13041 = vunpack.c.l.b16 %v12022
  %v13042 = vunpack.c.h.b16 %v12022
  %v13043 = vunpack.c.l.b16 %v12023
  %v13044 = vunpack.c.h.b16 %v12023
  %v13045 = vunpack.c.l.b16 %v12024
  %v13046 = vunpack.c.h.b16 %v12024
  %v13047 = vunpack.c.l.b16 %v12025
  %v13048 = vunpack.c.h.b16 %v12025
  %v13049 = vunpack.c.l.b16 %v12026
  %v13050 = vunpack.c.h.b16 %v12026
  %v13051 = vunpack.c.l.b16 %v12027
  %v13052 = vunpack.c.h.b16 %v12027
  %v13053 = vunpack.c.l.b16 %v12028
  %v13054 = vunpack.c.h.b16 %v12028
  %v13055 = vunpack.c.l.b16 %v12029
  %v13056 = vunpack.c.h.b16 %v12029
  %v13057 = vunpack.c.l.b16 %v12030
  %v13058 = vunpack.c.h.b16 %v12030
  %v13059 = vunpack.c.l.b16 %v12031
  %v13060 = vunpack.c.h.b16 %v12031
  %v13061 = vunpack.c.l.b16 %v12032
  %v13062 = vunpack.c.h.b16 %v12032
  %v13063 = vunpack.c.l.b16 %v12033
  %v13064 = vunpack.c.h.b16 %v12033
  %v13065 = vunpack.c.l.b16 %v12034
  %v13066 = vunpack.c.h.b16 %v12034
  %v13067 = vunpack.c.l.b16 %v12035
  %v13068 = vunpack.c.h.b16 %v12035
  %v13069 = vunpack.c.l.b16 %v12036
  %v13070 = vunpack.c.h.b16 %v12036
  %v13071 = vunpack.c.l.b16 %v12037
  %v13072 = vunpack.c.h.b16 %v12037
  %v13073 = vunpack.c.l.b16 %v12038
  %v13074 = vunpack.c.h.b16 %v12038
  %v13075 = vunpack.c.l.b16 %v12039
  %v13076 = vunpack.c.h.b16 %v12039
  %v13077 = vunpack.c.l.b16 %v12040
  %v13078 = vunpack.c.h.b16 %v12040
  %v13079 = vunpack.c.l.b16 %v12041
  %v13080 = vunpack.c.h.b16 %v12041
  %v13081 = vunpack.c.l.b16 %v12042
  %v13082 = vunpack.c.h.b16 %v12042
  %v13083 = vunpack.c.l.b16 %v12043
  %v13084 = vunpack.c.h.b16 %v12043
  %v13085 = vunpack.c.l.b16 %v12044
  %v13086 = vunpack.c.h.b16 %v12044
  %v13087 = vunpack.c.l.b16 %v12045
  %v13088 = vunpack.c.h.b16 %v12045
  %v13089 = vunpack.c.l.b16 %v12046
  %v13090 = vunpack.c.h.b16 %v12046
  %v13091 = vunpack.c.l.b16 %v12047
  %v13092 = vunpack.c.h.b16 %v12047
  %v13093 = vunpack.c.l.b16 %v12048
  %v13094 = vunpack.c.h.b16 %v12048
  %v13095 = vunpack.c.l.b16 %v12049
  %v13096 = vunpack.c.h.b16 %v12049
  %v13097 = vunpack.c.l.b16 %v12050
  %v13098 = vunpack.c.h.b16 %v12050
  %v13099 = vunpack.c.l.b16 %v12051
  %v13100 = vunpack.c.h.b16 %v12051
  %v13101 = vunpack.c.l.b16 %v12052
  %v13102 = vunpack.c.h.b16 %v12052
  %v13103 = vunpack.c.l.b16 %v12053
  %v13104 = vunpack.c.h.b16 %v12053
  %v13105 = vunpack.c.l.b16 %v12054
  %v13106 = vunpack.c.h.b16 %v12054
  %v13107 = vunpack.c.l.b16 %v12055
  %v13108 = vunpack.c.h.b16 %v12055
  %v13109 = vunpack.c.l.b16 %v12056
  %v13110 = vunpack.c.h.b16 %v12056
  %v13111 = vunpack.c.l.b16 %v12057
  %v13112 = vunpack.c.h.b16 %v12057
  %v13113 = vunpack.c.l.b16 %v12058
  %v13114 = vunpack.c.h.b16 %v12058
  %v13115 = vunpack.c.l.b16 %v12059
  %v13116 = vunpack.c.h.b16 %v12059
  %v13117 = vunpack.c.l.b16 %v12060
  %v13118 = vunpack.c.h.b16 %v12060
  %v13119 = vunpack.c.l.b16 %v12061
  %v13120 = vunpack.c.h.b16 %v12061
  %v13121 = vunpack.c.l.b16 %v12062
  %v13122 = vunpack.c.h.b16 %v12062
  %v13123 = vunpack.c.l.b16 %v12063
  %v13124 = vunpack.c.h.b16 %v12063
  %v13125 = vunpack.c.l.b16 %v12064
  %v13126 = vunpack.c.h.b16 %v12064
  %v13127 = vunpack.c.l.b16 %v12065
  %v13128 = vunpack.c.h.b16 %v12065
  %v13129 = vunpack.c.l.b16 %v12066
  %v13130 = vunpack.c.h.b16 %v12066
  %v13131 = vunpack.c.l.b16 %v12067
  %v13132 = vunpack.c.h.b16 %v12067
  %v13133 = vunpack.c.l.b16 %v12068
  %v13134 = vunpack.c.h.b16 %v12068
  %v13135 = vunpack.c.l.b16 %v12069
  %v13136 = vunpack.c.h.b16 %v12069
  %v13137 = vunpack.c.l.b16 %v12070
  %v13138 = vunpack.c.h.b16 %v12070
  %v13139 = vunpack.c.l.b16 %v12071
  %v13140 = vunpack.c.h.b16 %v12071
  %v13141 = vunpack.c.l.b16 %v12072
  %v13142 = vunpack.c.h.b16 %v12072
  %v13143 = vunpack.c.l.b16 %v12073
  %v13144 = vunpack.c.h.b16 %v12073
  %v13145 = vunpack.c.l.b16 %v12074
  %v13146 = vunpack.c.h.b16 %v12074
  %v13147 = vunpack.c.l.b16 %v12075
  %v13148 = vunpack.c.h.b16 %v12075
  %v13149 = vunpack.c.l.b16 %v12076
  %v13150 = vunpack.c.h.b16 %v12076
  %v13151 = vunpack.c.l.b16 %v12077
  %v13152 = vunpack.c.h.b16 %v12077
  %v13153 = vunpack.c.l.b16 %v12078
  %v13154 = vunpack.c.h.b16 %v12078
  %v13155 = vunpack.c.l.b16 %v12079
  %v13156 = vunpack.c.h.b16 %v12079
  %v13157 = vunpack.c.l.b16 %v12080
  %v13158 = vunpack.c.h.b16 %v12080
  %v13159 = vunpack.c.l.b16 %v12081
  %v13160 = vunpack.c.h.b16 %v12081
  %v13161 = vunpack.c.l.b16 %v12082
  %v13162 = vunpack.c.h.b16 %v12082
  %v13163 = vunpack.c.l.b16 %v12083
  %v13164 = vunpack.c.h.b16 %v12083
  %v13165 = vunpack.c.l.b16 %v12084
  %v13166 = vunpack.c.h.b16 %v12084
  %v13167 = vunpack.c.l.b16 %v12085
  %v13168 = vunpack.c.h.b16 %v12085
  %v13169 = vunpack.c.l.b16 %v12086
  %v13170 = vunpack.c.h.b16 %v12086
  %v13171 = vunpack.c.l.b16 %v12087
  %v13172 = vunpack.c.h.b16 %v12087
  %v13173 = vunpack.c.l.b16 %v12088
  %v13174 = vunpack.c.h.b16 %v12088
  %v13175 = vunpack.c.l.b16 %v12089
  %v13176 = vunpack.c.h.b16 %v12089
  %v13177 = vunpack.c.l.b16 %v12090
  %v13178 = vunpack.c.h.b16 %v12090
  %v13179 = vpack.c.b16 %v12669, %v12667
  %v13180 = vpack.c.b16 %v12670, %v12668
  %v13181 = vpack.c.b16 %v12673, %v12671
  %v13182 = vpack.c.b16 %v12674, %v12672
  %v13183 = vpack.c.b16 %v12677, %v12675
  %v13184 = vpack.c.b16 %v12678, %v12676
  %v13185 = vpack.c.b16 %v12681, %v12679
  %v13186 = vpack.c.b16 %v12682, %v12680
  %v13187 = vpack.c.b16 %v12685, %v12683
  %v13188 = vpack.c.b16 %v12686, %v12684
  %v13189 = vpack.c.b16 %v12689, %v12687
  %v13190 = vpack.c.b16 %v12690, %v12688
  %v13191 = vpack.c.b16 %v12693, %v12691
  %v13192 = vpack.c.b16 %v12694, %v12692
  %v13193 = vpack.c.b16 %v12697, %v12695
  %v13194 = vpack.c.b16 %v12698, %v12696
  %v13195 = vpack.c.b16 %v12701, %v12699
  %v13196 = vpack.c.b16 %v12702, %v12700
  %v13197 = vpack.c.b16 %v12705, %v12703
  %v13198 = vpack.c.b16 %v12706, %v12704
  %v13199 = vpack.c.b16 %v12709, %v12707
  %v13200 = vpack.c.b16 %v12710, %v12708
  %v13201 = vpack.c.b16 %v12713, %v12711
  %v13202 = vpack.c.b16 %v12714, %v12712
  %v13203 = vpack.c.b16 %v12717, %v12715
  %v13204 = vpack.c.b16 %v12718, %v12716
  %v13205 = vpack.c.b16 %v12721, %v12719
  %v13206 = vpack.c.b16 %v12722, %v12720
  %v13207 = vpack.c.b16 %v12725, %v12723
  %v13208 = vpack.c.b16 %v12726, %v12724
  %v13209 = vpack.c.b16 %v12729, %v12727
  %v13210 = vpack.c.b16 %v12730, %v12728
  %v13211 = vpack.c.b16 %v12733, %v12731
  %v13212 = vpack.c.b16 %v12734, %v12732
  %v13213 = vpack.c.b16 %v12737, %v12735
  %v13214 = vpack.c.b16 %v12738, %v12736
  %v13215 = vpack.c.b16 %v12741, %v12739
  %v13216 = vpack.c.b16 %v12742, %v12740
  %v13217 = vpack.c.b16 %v12745, %v12743
  %v13218 = vpack.c.b16 %v12746, %v12744
  %v13219 = vpack.c.b16 %v12749, %v12747
  %v13220 = vpack.c.b16 %v12750, %v12748
  %v13221 = vpack.c.b16 %v12753, %v12751
  %v13222 = vpack.c.b16 %v12754, %v12752
  %v13223 = vpack.c.b16 %v12757, %v12755
  %v13224 = vpack.c.b16 %v12758, %v12756
  %v13225 = vpack.c.b16 %v12761, %v12759
  %v13226 = vpack.c.b16 %v12762, %v12760
  %v13227 = vpack.c.b16 %v12765, %v12763
  %v13228 = vpack.c.b16 %v12766, %v12764
  %v13229 = vpack.c.b16 %v12769, %v12767
  %v13230 = vpack.c.b16 %v12770, %v12768
  %v13231 = vpack.c.b16 %v12773, %v12771
  %v13232 = vpack.c.b16 %v12774, %v12772
  %v13233 = vpack.c.b16 %v12777, %v12775
  %v13234 = vpack.c.b16 %v12778, %v12776
  %v13235 = vpack.c.b16 %v12781, %v12779
  %v13236 = vpack.c.b16 %v12782, %v12780
  %v13237 = vpack.c.b16 %v12785, %v12783
  %v13238 = vpack.c.b16 %v12786, %v12784
  %v13239 = vpack.c.b16 %v12789, %v12787
  %v13240 = vpack.c.b16 %v12790, %v12788
  %v13241 = vpack.c.b16 %v12793, %v12791
  %v13242 = vpack.c.b16 %v12794, %v12792
  %v13243 = vpack.c.b16 %v12797, %v12795
  %v13244 = vpack.c.b16 %v12798, %v12796
  %v13245 = vpack.c.b16 %v12801, %v12799
  %v13246 = vpack.c.b16 %v12802, %v12800
  %v13247 = vpack.c.b16 %v12805, %v12803
  %v13248 = vpack.c.b16 %v12806, %v12804
  %v13249 = vpack.c.b16 %v12809, %v12807
  %v13250 = vpack.c.b16 %v12810, %v12808
  %v13251 = vpack.c.b16 %v12813, %v12811
  %v13252 = vpack.c.b16 %v12814, %v12812
  %v13253 = vpack.c.b16 %v12817, %v12815
  %v13254 = vpack.c.b16 %v12818, %v12816
  %v13255 = vpack.c.b16 %v12821, %v12819
  %v13256 = vpack.c.b16 %v12822, %v12820
  %v13257 = vpack.c.b16 %v12825, %v12823
  %v13258 = vpack.c.b16 %v12826, %v12824
  %v13259 = vpack.c.b16 %v12829, %v12827
  %v13260 = vpack.c.b16 %v12830, %v12828
  %v13261 = vpack.c.b16 %v12833, %v12831
  %v13262 = vpack.c.b16 %v12834, %v12832
  %v13263 = vpack.c.b16 %v12837, %v12835
  %v13264 = vpack.c.b16 %v12838, %v12836
  %v13265 = vpack.c.b16 %v12841, %v12839
  %v13266 = vpack.c.b16 %v12842, %v12840
  %v13267 = vpack.c.b16 %v12845, %v12843
  %v13268 = vpack.c.b16 %v12846, %v12844
  %v13269 = vpack.c.b16 %v12849, %v12847
  %v13270 = vpack.c.b16 %v12850, %v12848
  %v13271 = vpack.c.b16 %v12853, %v12851
  %v13272 = vpack.c.b16 %v12854, %v12852
  %v13273 = vpack.c.b16 %v12857, %v12855
  %v13274 = vpack.c.b16 %v12858, %v12856
  %v13275 = vpack.c.b16 %v12861, %v12859
  %v13276 = vpack.c.b16 %v12862, %v12860
  %v13277 = vpack.c.b16 %v12865, %v12863
  %v13278 = vpack.c.b16 %v12866, %v12864
  %v13279 = vpack.c.b16 %v12869, %v12867
  %v13280 = vpack.c.b16 %v12870, %v12868
  %v13281 = vpack.c.b16 %v12873, %v12871
  %v13282 = vpack.c.b16 %v12874, %v12872
  %v13283 = vpack.c.b16 %v12877, %v12875
  %v13284 = vpack.c.b16 %v12878, %v12876
  %v13285 = vpack.c.b16 %v12881, %v12879
  %v13286 = vpack.c.b16 %v12882, %v12880
  %v13287 = vpack.c.b16 %v12885, %v12883
  %v13288 = vpack.c.b16 %v12886, %v12884
  %v13289 = vpack.c.b16 %v12889, %v12887
  %v13290 = vpack.c.b16 %v12890, %v12888
  %v13291 = vpack.c.b16 %v12893, %v12891
  %v13292 = vpack.c.b16 %v12894, %v12892
  %v13293 = vpack.c.b16 %v12897, %v12895
  %v13294 = vpack.c.b16 %v12898, %v12896
  %v13295 = vpack.c.b16 %v12901, %v12899
  %v13296 = vpack.c.b16 %v12902, %v12900
  %v13297 = vpack.c.b16 %v12905, %v12903
  %v13298 = vpack.c.b16 %v12906, %v12904
  %v13299 = vpack.c.b16 %v12909, %v12907
  %v13300 = vpack.c.b16 %v12910, %v12908
  %v13301 = vpack.c.b16 %v12913, %v12911
  %v13302 = vpack.c.b16 %v12914, %v12912
  %v13303 = vpack.c.b16 %v12917, %v12915
  %v13304 = vpack.c.b16 %v12918, %v12916
  %v13305 = vpack.c.b16 %v12921, %v12919
  %v13306 = vpack.c.b16 %v12922, %v12920
  %v13307 = vpack.c.b16 %v12925, %v12923
  %v13308 = vpack.c.b16 %v12926, %v12924
  %v13309 = vpack.c.b16 %v12929, %v12927
  %v13310 = vpack.c.b16 %v12930, %v12928
  %v13311 = vpack.c.b16 %v12933, %v12931
  %v13312 = vpack.c.b16 %v12934, %v12932
  %v13313 = vpack.c.b16 %v12937, %v12935
  %v13314 = vpack.c.b16 %v12938, %v12936
  %v13315 = vpack.c.b16 %v12941, %v12939
  %v13316 = vpack.c.b16 %v12942, %v12940
  %v13317 = vpack.c.b16 %v12945, %v12943
  %v13318 = vpack.c.b16 %v12946, %v12944
  %v13319 = vpack.c.b16 %v12949, %v12947
  %v13320 = vpack.c.b16 %v12950, %v12948
  %v13321 = vpack.c.b16 %v12953, %v12951
  %v13322 = vpack.c.b16 %v12954, %v12952
  %v13323 = vpack.c.b16 %v12957, %v12955
  %v13324 = vpack.c.b16 %v12958, %v12956
  %v13325 = vpack.c.b16 %v12961, %v12959
  %v13326 = vpack.c.b16 %v12962, %v12960
  %v13327 = vpack.c.b16 %v12965, %v12963
  %v13328 = vpack.c.b16 %v12966, %v12964
  %v13329 = vpack.c.b16 %v12969, %v12967
  %v13330 = vpack.c.b16 %v12970, %v12968
  %v13331 = vpack.c.b16 %v12973, %v12971
  %v13332 = vpack.c.b16 %v12974, %v12972
  %v13333 = vpack.c.b16 %v12977, %v12975
  %v13334 = vpack.c.b16 %v12978, %v12976
  %v13335 = vpack.c.b16 %v12981, %v12979
  %v13336 = vpack.c.b16 %v12982, %v12980
  %v13337 = vpack.c.b16 %v12985, %v12983
  %v13338 = vpack.c.b16 %v12986, %v12984
  %v13339 = vpack.c.b16 %v12989, %v12987
  %v13340 = vpack.c.b16 %v12990, %v12988
  %v13341 = vpack.c.b16 %v12993, %v12991
  %v13342 = vpack.c.b16 %v12994, %v12992
  %v13343 = vpack.c.b16 %v12997, %v12995
  %v13344 = vpack.c.b16 %v12998, %v12996
  %v13345 = vpack.c.b16 %v13001, %v12999
  %v13346 = vpack.c.b16 %v13002, %v13000
  %v13347 = vpack.c.b16 %v13005, %v13003
  %v13348 = vpack.c.b16 %v13006, %v13004
  %v13349 = vpack.c.b16 %v13009, %v13007
  %v13350 = vpack.c.b16 %v13010, %v13008
  %v13351 = vpack.c.b16 %v13013, %v13011
  %v13352 = vpack.c.b16 %v13014, %v13012
  %v13353 = vpack.c.b16 %v13017, %v13015
  %v13354 = vpack.c.b16 %v13018, %v13016
  %v13355 = vpack.c.b16 %v13021, %v13019
  %v13356 = vpack.c.b16 %v13022, %v13020
  %v13357 = vpack.c.b16 %v13025, %v13023
  %v13358 = vpack.c.b16 %v13026, %v13024
  %v13359 = vpack.c.b16 %v13029, %v13027
  %v13360 = vpack.c.b16 %v13030, %v13028
  %v13361 = vpack.c.b16 %v13033, %v13031
  %v13362 = vpack.c.b16 %v13034, %v13032
  %v13363 = vpack.c.b16 %v13037, %v13035
  %v13364 = vpack.c.b16 %v13038, %v13036
  %v13365 = vpack.c.b16 %v13041, %v13039
  %v13366 = vpack.c.b16 %v13042, %v13040
  %v13367 = vpack.c.b16 %v13045, %v13043
  %v13368 = vpack.c.b16 %v13046, %v13044
  %v13369 = vpack.c.b16 %v13049, %v13047
  %v13370 = vpack.c.b16 %v13050, %v13048
  %v13371 = vpack.c.b16 %v13053, %v13051
  %v13372 = vpack.c.b16 %v13054, %v13052
  %v13373 = vpack.c.b16 %v13057, %v13055
  %v13374 = vpack.c.b16 %v13058, %v13056
  %v13375 = vpack.c.b16 %v13061, %v13059
  %v13376 = vpack.c.b16 %v13062, %v13060
  %v13377 = vpack.c.b16 %v13065, %v13063
  %v13378 = vpack.c.b16 %v13066, %v13064
  %v13379 = vpack.c.b16 %v13069, %v13067
  %v13380 = vpack.c.b16 %v13070, %v13068
  %v13381 = vpack.c.b16 %v13073, %v13071
  %v13382 = vpack.c.b16 %v13074, %v13072
  %v13383 = vpack.c.b16 %v13077, %v13075
  %v13384 = vpack.c.b16 %v13078, %v13076
  %v13385 = vpack.c.b16 %v13081, %v13079
  %v13386 = vpack.c.b16 %v13082, %v13080
  %v13387 = vpack.c.b16 %v13085, %v13083
  %v13388 = vpack.c.b16 %v13086, %v13084
  %v13389 = vpack.c.b16 %v13089, %v13087
  %v13390 = vpack.c.b16 %v13090, %v13088
  %v13391 = vpack.c.b16 %v13093, %v13091
  %v13392 = vpack.c.b16 %v13094, %v13092
  %v13393 = vpack.c.b16 %v13097, %v13095
  %v13394 = vpack.c.b16 %v13098, %v13096
  %v13395 = vpack.c.b16 %v13101, %v13099
  %v13396 = vpack.c.b16 %v13102, %v13100
  %v13397 = vpack.c.b16 %v13105, %v13103
  %v13398 = vpack.c.b16 %v13106, %v13104
  %v13399 = vpack.c.b16 %v13109, %v13107
  %v13400 = vpack.c.b16 %v13110, %v13108
  %v13401 = vpack.c.b16 %v13113, %v13111
  %v13402 = vpack.c.b16 %v13114, %v13112
  %v13403 = vpack.c.b16 %v13117, %v13115
  %v13404 = vpack.c.b16 %v13118, %v13116
  %v13405 = vpack.c.b16 %v13121, %v13119
  %v13406 = vpack.c.b16 %v13122, %v13120
  %v13407 = vpack.c.b16 %v13125, %v13123
  %v13408 = vpack.c.b16 %v13126, %v13124
  %v13409 = vpack.c.b16 %v13129, %v13127
  %v13410 = vpack.c.b16 %v13130, %v13128
  %v13411 = vpack.c.b16 %v13133, %v13131
  %v13412 = vpack.c.b16 %v13134, %v13132
  %v13413 = vpack.c.b16 %v13137, %v13135
  %v13414 = vpack.c.b16 %v13138, %v13136
  %v13415 = vpack.c.b16 %v13141, %v13139
  %v13416 = vpack.c.b16 %v13142, %v13140
  %v13417 = vpack.c.b16 %v13145, %v13143
  %v13418 = vpack.c.b16 %v13146, %v13144
  %v13419 = vpack.c.b16 %v13149, %v13147
  %v13420 = vpack.c.b16 %v13150, %v13148
  %v13421 = vpack.c.b16 %v13153, %v13151
  %v13422 = vpack.c.b16 %v13154, %v13152
  %v13423 = vpack.c.b16 %v13157, %v13155
  %v13424 = vpack.c.b16 %v13158, %v13156
  %v13425 = vpack.c.b16 %v13161, %v13159
  %v13426 = vpack.c.b16 %v13162, %v13160
  %v13427 = vpack.c.b16 %v13165, %v13163
  %v13428 = vpack.c.b16 %v13166, %v13164
  %v13429 = vpack.c.b16 %v13169, %v13167
  %v13430 = vpack.c.b16 %v13170, %v13168
  %v13431 = vpack.c.b16 %v13173, %v13171
  %v13432 = vpack.c.b16 %v13174, %v13172
  %v13433 = vpack.c.b16 %v13177, %v13175
  %v13434 = vpack.c.b16 %v13178, %v13176
  %13691 = vmatprep.subr.bf16.mxu0 %v13194
  %13692 = vmatpush1.bf16.msra.mxu0 %v13193
  %13693 = vmatprep.subr.bf16.mxu0 %v13192
  %13694 = vmatpush1.bf16.msra.mxu0 %v13191
  %13695 = vmatprep.subr.bf16.mxu0 %v13190
  %13696 = vmatpush1.bf16.msra.mxu0 %v13189
  %13697 = vmatprep.subr.bf16.mxu0 %v13188
  %13698 = vmatpush1.bf16.msra.mxu0 %v13187
  %13699 = vmatprep.subr.bf16.mxu0 %v13186
  %13700 = vmatpush1.bf16.msra.mxu0 %v13185
  %13701 = vmatprep.subr.bf16.mxu0 %v13184
  %13702 = vmatpush1.bf16.msra.mxu0 %v13183
  %13703 = vmatprep.subr.bf16.mxu0 %v13182
  %13704 = vmatpush1.bf16.msra.mxu0 %v13181
  %13705 = vmatprep.subr.bf16.mxu0 %v13180
  %13706 = vmatpush1.bf16.msra.mxu0 %v13179
  %13707 = vmatprep.subr.bf16.mxu0 %v13210
  %13708 = vmatpush2.bf16.msra.mxu0 %v13209
  %13709 = vmatprep.subr.bf16.mxu0 %v13208
  %13710 = vmatpush2.bf16.msra.mxu0 %v13207
  %13711 = vmatprep.subr.bf16.mxu0 %v13206
  %13712 = vmatpush2.bf16.msra.mxu0 %v13205
  %13713 = vmatprep.subr.bf16.mxu0 %v13204
  %13714 = vmatpush2.bf16.msra.mxu0 %v13203
  %13715 = vmatprep.subr.bf16.mxu0 %v13202
  %13716 = vmatpush2.bf16.msra.mxu0 %v13201
  %13717 = vmatprep.subr.bf16.mxu0 %v13200
  %13718 = vmatpush2.bf16.msra.mxu0 %v13199
  %13719 = vmatprep.subr.bf16.mxu0 %v13198
  %13720 = vmatpush2.bf16.msra.mxu0 %v13197
  %13721 = vmatprep.subr.bf16.mxu0 %v13196
  %13722 = vmatpush2.bf16.msra.mxu0 %v13195
  %13723 = vmatprep.mubr.bf16.mxu0 %v12124
  %13724 = vmatmul.mubr.bf16.gmra.mxu0 %v12123
  %v13725 = vpop.f32.mrf.mxu0
  %v13726 = vadd.f32 0.0, %v13725
  %v13727 = vpop.f32.mrf.mxu0
  %v13728 = vadd.f32 0.0, %v13727
  %v13729 = vpop.f32.mrf.mxu0
  %v13730 = vadd.f32 0.0, %v13729
  %v13731 = vpop.f32.mrf.mxu0
  %v13732 = vadd.f32 0.0, %v13731
  %13733 = vmatprep.mubr.bf16.mxu0 %v12268
  %13734 = vmatmul.mubr.bf16.gmra.mxu0 %v12267
  %v13735 = vpop.f32.mrf.mxu0
  %v13736 = vadd.f32 0.0, %v13735
  %v13737 = vpop.f32.mrf.mxu0
  %v13738 = vadd.f32 0.0, %v13737
  %v13739 = vpop.f32.mrf.mxu0
  %v13740 = vadd.f32 0.0, %v13739
  %v13741 = vpop.f32.mrf.mxu0
  %v13742 = vadd.f32 0.0, %v13741
  %13743 = vdwg.mxu0
  %13744 = vmatprep.subr.bf16.mxu0 %v13226
  %13745 = vmatpush1.bf16.msra.mxu0 %v13225
  %13746 = vmatprep.subr.bf16.mxu0 %v13224
  %13747 = vmatpush1.bf16.msra.mxu0 %v13223
  %13748 = vmatprep.subr.bf16.mxu0 %v13222
  %13749 = vmatpush1.bf16.msra.mxu0 %v13221
  %13750 = vmatprep.subr.bf16.mxu0 %v13220
  %13751 = vmatpush1.bf16.msra.mxu0 %v13219
  %13752 = vmatprep.subr.bf16.mxu0 %v13218
  %13753 = vmatpush1.bf16.msra.mxu0 %v13217
  %13754 = vmatprep.subr.bf16.mxu0 %v13216
  %13755 = vmatpush1.bf16.msra.mxu0 %v13215
  %13756 = vmatprep.subr.bf16.mxu0 %v13214
  %13757 = vmatpush1.bf16.msra.mxu0 %v13213
  %13758 = vmatprep.subr.bf16.mxu0 %v13212
  %13759 = vmatpush1.bf16.msra.mxu0 %v13211
  %13760 = vmatprep.subr.bf16.mxu0 %v13242
  %13761 = vmatpush2.bf16.msra.mxu0 %v13241
  %13762 = vmatprep.subr.bf16.mxu0 %v13240
  %13763 = vmatpush2.bf16.msra.mxu0 %v13239
  %13764 = vmatprep.subr.bf16.mxu0 %v13238
  %13765 = vmatpush2.bf16.msra.mxu0 %v13237
  %13766 = vmatprep.subr.bf16.mxu0 %v13236
  %13767 = vmatpush2.bf16.msra.mxu0 %v13235
  %13768 = vmatprep.subr.bf16.mxu0 %v13234
  %13769 = vmatpush2.bf16.msra.mxu0 %v13233
  %13770 = vmatprep.subr.bf16.mxu0 %v13232
  %13771 = vmatpush2.bf16.msra.mxu0 %v13231
  %13772 = vmatprep.subr.bf16.mxu0 %v13230
  %13773 = vmatpush2.bf16.msra.mxu0 %v13229
  %13774 = vmatprep.subr.bf16.mxu0 %v13228
  %13775 = vmatpush2.bf16.msra.mxu0 %v13227
  %13776 = vmatprep.mubr.bf16.mxu0 %v12126
  %13777 = vmatmul.mubr.bf16.gmra.mxu0 %v12125
  %v13778 = vpop.f32.mrf.mxu0
  %v13779 = vadd.f32 %v13726, %v13778
  %v13780 = vpop.f32.mrf.mxu0
  %v13781 = vadd.f32 %v13728, %v13780
  %v13782 = vpop.f32.mrf.mxu0
  %v13783 = vadd.f32 %v13730, %v13782
  %v13784 = vpop.f32.mrf.mxu0
  %v13785 = vadd.f32 %v13732, %v13784
  %13786 = vmatprep.mubr.bf16.mxu0 %v12270
  %13787 = vmatmul.mubr.bf16.gmra.mxu0 %v12269
  %v13788 = vpop.f32.mrf.mxu0
  %v13789 = vadd.f32 %v13736, %v13788
  %v13790 = vpop.f32.mrf.mxu0
  %v13791 = vadd.f32 %v13738, %v13790
  %v13792 = vpop.f32.mrf.mxu0
  %v13793 = vadd.f32 %v13740, %v13792
  %v13794 = vpop.f32.mrf.mxu0
  %v13795 = vadd.f32 %v13742, %v13794
  %13796 = vdwg.mxu0
  %13797 = vmatprep.subr.bf16.mxu0 %v13258
  %13798 = vmatpush1.bf16.msra.mxu0 %v13257
  %13799 = vmatprep.subr.bf16.mxu0 %v13256
  %13800 = vmatpush1.bf16.msra.mxu0 %v13255
  %13801 = vmatprep.subr.bf16.mxu0 %v13254
  %13802 = vmatpush1.bf16.msra.mxu0 %v13253
  %13803 = vmatprep.subr.bf16.mxu0 %v13252
  %13804 = vmatpush1.bf16.msra.mxu0 %v13251
  %13805 = vmatprep.subr.bf16.mxu0 %v13250
  %13806 = vmatpush1.bf16.msra.mxu0 %v13249
  %13807 = vmatprep.subr.bf16.mxu0 %v13248
  %13808 = vmatpush1.bf16.msra.mxu0 %v13247
  %13809 = vmatprep.subr.bf16.mxu0 %v13246
  %13810 = vmatpush1.bf16.msra.mxu0 %v13245
  %13811 = vmatprep.subr.bf16.mxu0 %v13244
  %13812 = vmatpush1.bf16.msra.mxu0 %v13243
  %13813 = vmatprep.subr.bf16.mxu0 %v13274
  %13814 = vmatpush2.bf16.msra.mxu0 %v13273
  %13815 = vmatprep.subr.bf16.mxu0 %v13272
  %13816 = vmatpush2.bf16.msra.mxu0 %v13271
  %13817 = vmatprep.subr.bf16.mxu0 %v13270
  %13818 = vmatpush2.bf16.msra.mxu0 %v13269
  %13819 = vmatprep.subr.bf16.mxu0 %v13268
  %13820 = vmatpush2.bf16.msra.mxu0 %v13267
  %13821 = vmatprep.subr.bf16.mxu0 %v13266
  %13822 = vmatpush2.bf16.msra.mxu0 %v13265
  %13823 = vmatprep.subr.bf16.mxu0 %v13264
  %13824 = vmatpush2.bf16.msra.mxu0 %v13263
  %13825 = vmatprep.subr.bf16.mxu0 %v13262
  %13826 = vmatpush2.bf16.msra.mxu0 %v13261
  %13827 = vmatprep.subr.bf16.mxu0 %v13260
  %13828 = vmatpush2.bf16.msra.mxu0 %v13259
  %13829 = vmatprep.mubr.bf16.mxu0 %v12160
  %13830 = vmatmul.mubr.bf16.gmra.mxu0 %v12159
  %v13831 = vpop.f32.mrf.mxu0
  %v13832 = vadd.f32 %v13779, %v13831
  %v13833 = vpop.f32.mrf.mxu0
  %v13834 = vadd.f32 %v13781, %v13833
  %v13835 = vpop.f32.mrf.mxu0
  %v13836 = vadd.f32 %v13783, %v13835
  %v13837 = vpop.f32.mrf.mxu0
  %v13838 = vadd.f32 %v13785, %v13837
  %13839 = vmatprep.mubr.bf16.mxu0 %v12304
  %13840 = vmatmul.mubr.bf16.gmra.mxu0 %v12303
  %v13841 = vpop.f32.mrf.mxu0
  %v13842 = vadd.f32 %v13789, %v13841
  %v13843 = vpop.f32.mrf.mxu0
  %v13844 = vadd.f32 %v13791, %v13843
  %v13845 = vpop.f32.mrf.mxu0
  %v13846 = vadd.f32 %v13793, %v13845
  %v13847 = vpop.f32.mrf.mxu0
  %v13848 = vadd.f32 %v13795, %v13847
  %13849 = vdwg.mxu0
  %13850 = vmatprep.subr.bf16.mxu0 %v13290
  %13851 = vmatpush1.bf16.msra.mxu0 %v13289
  %13852 = vmatprep.subr.bf16.mxu0 %v13288
  %13853 = vmatpush1.bf16.msra.mxu0 %v13287
  %13854 = vmatprep.subr.bf16.mxu0 %v13286
  %13855 = vmatpush1.bf16.msra.mxu0 %v13285
  %13856 = vmatprep.subr.bf16.mxu0 %v13284
  %13857 = vmatpush1.bf16.msra.mxu0 %v13283
  %13858 = vmatprep.subr.bf16.mxu0 %v13282
  %13859 = vmatpush1.bf16.msra.mxu0 %v13281
  %13860 = vmatprep.subr.bf16.mxu0 %v13280
  %13861 = vmatpush1.bf16.msra.mxu0 %v13279
  %13862 = vmatprep.subr.bf16.mxu0 %v13278
  %13863 = vmatpush1.bf16.msra.mxu0 %v13277
  %13864 = vmatprep.subr.bf16.mxu0 %v13276
  %13865 = vmatpush1.bf16.msra.mxu0 %v13275
  %13866 = vmatprep.subr.bf16.mxu0 %v13306
  %13867 = vmatpush2.bf16.msra.mxu0 %v13305
  %13868 = vmatprep.subr.bf16.mxu0 %v13304
  %13869 = vmatpush2.bf16.msra.mxu0 %v13303
  %13870 = vmatprep.subr.bf16.mxu0 %v13302
  %13871 = vmatpush2.bf16.msra.mxu0 %v13301
  %13872 = vmatprep.subr.bf16.mxu0 %v13300
  %13873 = vmatpush2.bf16.msra.mxu0 %v13299
  %13874 = vmatprep.subr.bf16.mxu0 %v13298
  %13875 = vmatpush2.bf16.msra.mxu0 %v13297
  %13876 = vmatprep.subr.bf16.mxu0 %v13296
  %13877 = vmatpush2.bf16.msra.mxu0 %v13295
  %13878 = vmatprep.subr.bf16.mxu0 %v13294
  %13879 = vmatpush2.bf16.msra.mxu0 %v13293
  %13880 = vmatprep.subr.bf16.mxu0 %v13292
  %13881 = vmatpush2.bf16.msra.mxu0 %v13291
  %13882 = vmatprep.mubr.bf16.mxu0 %v12162
  %13883 = vmatmul.mubr.bf16.gmra.mxu0 %v12161
  %v13884 = vpop.f32.mrf.mxu0
  %v13885 = vadd.f32 %v13832, %v13884
  %v13886 = vpop.f32.mrf.mxu0
  %v13887 = vadd.f32 %v13834, %v13886
  %v13888 = vpop.f32.mrf.mxu0
  %v13889 = vadd.f32 %v13836, %v13888
  %v13890 = vpop.f32.mrf.mxu0
  %v13891 = vadd.f32 %v13838, %v13890
  %13892 = vmatprep.mubr.bf16.mxu0 %v12306
  %13893 = vmatmul.mubr.bf16.gmra.mxu0 %v12305
  %v13894 = vpop.f32.mrf.mxu0
  %v13895 = vadd.f32 %v13842, %v13894
  %v13896 = vpop.f32.mrf.mxu0
  %v13897 = vadd.f32 %v13844, %v13896
  %v13898 = vpop.f32.mrf.mxu0
  %v13899 = vadd.f32 %v13846, %v13898
  %v13900 = vpop.f32.mrf.mxu0
  %v13901 = vadd.f32 %v13848, %v13900
  %13902 = vdwg.mxu0
  %13903 = vmatprep.subr.bf16.mxu0 %v13322
  %13904 = vmatpush1.bf16.msra.mxu0 %v13321
  %13905 = vmatprep.subr.bf16.mxu0 %v13320
  %13906 = vmatpush1.bf16.msra.mxu0 %v13319
  %13907 = vmatprep.subr.bf16.mxu0 %v13318
  %13908 = vmatpush1.bf16.msra.mxu0 %v13317
  %13909 = vmatprep.subr.bf16.mxu0 %v13316
  %13910 = vmatpush1.bf16.msra.mxu0 %v13315
  %13911 = vmatprep.subr.bf16.mxu0 %v13314
  %13912 = vmatpush1.bf16.msra.mxu0 %v13313
  %13913 = vmatprep.subr.bf16.mxu0 %v13312
  %13914 = vmatpush1.bf16.msra.mxu0 %v13311
  %13915 = vmatprep.subr.bf16.mxu0 %v13310
  %13916 = vmatpush1.bf16.msra.mxu0 %v13309
  %13917 = vmatprep.subr.bf16.mxu0 %v13308
  %13918 = vmatpush1.bf16.msra.mxu0 %v13307
  %13919 = vmatprep.subr.bf16.mxu0 %v13338
  %13920 = vmatpush2.bf16.msra.mxu0 %v13337
  %13921 = vmatprep.subr.bf16.mxu0 %v13336
  %13922 = vmatpush2.bf16.msra.mxu0 %v13335
  %13923 = vmatprep.subr.bf16.mxu0 %v13334
  %13924 = vmatpush2.bf16.msra.mxu0 %v13333
  %13925 = vmatprep.subr.bf16.mxu0 %v13332
  %13926 = vmatpush2.bf16.msra.mxu0 %v13331
  %13927 = vmatprep.subr.bf16.mxu0 %v13330
  %13928 = vmatpush2.bf16.msra.mxu0 %v13329
  %13929 = vmatprep.subr.bf16.mxu0 %v13328
  %13930 = vmatpush2.bf16.msra.mxu0 %v13327
  %13931 = vmatprep.subr.bf16.mxu0 %v13326
  %13932 = vmatpush2.bf16.msra.mxu0 %v13325
  %13933 = vmatprep.subr.bf16.mxu0 %v13324
  %13934 = vmatpush2.bf16.msra.mxu0 %v13323
  %13935 = vmatprep.mubr.bf16.mxu0 %v12196
  %13936 = vmatmul.mubr.bf16.gmra.mxu0 %v12195
  %v13937 = vpop.f32.mrf.mxu0
  %v13938 = vadd.f32 %v13885, %v13937
  %v13939 = vpop.f32.mrf.mxu0
  %v13940 = vadd.f32 %v13887, %v13939
  %v13941 = vpop.f32.mrf.mxu0
  %v13942 = vadd.f32 %v13889, %v13941
  %v13943 = vpop.f32.mrf.mxu0
  %v13944 = vadd.f32 %v13891, %v13943
  %13945 = vmatprep.mubr.bf16.mxu0 %v12340
  %13946 = vmatmul.mubr.bf16.gmra.mxu0 %v12339
  %v13947 = vpop.f32.mrf.mxu0
  %v13948 = vadd.f32 %v13895, %v13947
  %v13949 = vpop.f32.mrf.mxu0
  %v13950 = vadd.f32 %v13897, %v13949
  %v13951 = vpop.f32.mrf.mxu0
  %v13952 = vadd.f32 %v13899, %v13951
  %v13953 = vpop.f32.mrf.mxu0
  %v13954 = vadd.f32 %v13901, %v13953
  %13955 = vdwg.mxu0
  %13956 = vmatprep.subr.bf16.mxu0 %v13354
  %13957 = vmatpush1.bf16.msra.mxu0 %v13353
  %13958 = vmatprep.subr.bf16.mxu0 %v13352
  %13959 = vmatpush1.bf16.msra.mxu0 %v13351
  %13960 = vmatprep.subr.bf16.mxu0 %v13350
  %13961 = vmatpush1.bf16.msra.mxu0 %v13349
  %13962 = vmatprep.subr.bf16.mxu0 %v13348
  %13963 = vmatpush1.bf16.msra.mxu0 %v13347
  %13964 = vmatprep.subr.bf16.mxu0 %v13346
  %13965 = vmatpush1.bf16.msra.mxu0 %v13345
  %13966 = vmatprep.subr.bf16.mxu0 %v13344
  %13967 = vmatpush1.bf16.msra.mxu0 %v13343
  %13968 = vmatprep.subr.bf16.mxu0 %v13342
  %13969 = vmatpush1.bf16.msra.mxu0 %v13341
  %13970 = vmatprep.subr.bf16.mxu0 %v13340
  %13971 = vmatpush1.bf16.msra.mxu0 %v13339
  %13972 = vmatprep.subr.bf16.mxu0 %v13370
  %13973 = vmatpush2.bf16.msra.mxu0 %v13369
  %13974 = vmatprep.subr.bf16.mxu0 %v13368
  %13975 = vmatpush2.bf16.msra.mxu0 %v13367
  %13976 = vmatprep.subr.bf16.mxu0 %v13366
  %13977 = vmatpush2.bf16.msra.mxu0 %v13365
  %13978 = vmatprep.subr.bf16.mxu0 %v13364
  %13979 = vmatpush2.bf16.msra.mxu0 %v13363
  %13980 = vmatprep.subr.bf16.mxu0 %v13362
  %13981 = vmatpush2.bf16.msra.mxu0 %v13361
  %13982 = vmatprep.subr.bf16.mxu0 %v13360
  %13983 = vmatpush2.bf16.msra.mxu0 %v13359
  %13984 = vmatprep.subr.bf16.mxu0 %v13358
  %13985 = vmatpush2.bf16.msra.mxu0 %v13357
  %13986 = vmatprep.subr.bf16.mxu0 %v13356
  %13987 = vmatpush2.bf16.msra.mxu0 %v13355
  %13988 = vmatprep.mubr.bf16.mxu0 %v12198
  %13989 = vmatmul.mubr.bf16.gmra.mxu0 %v12197
  %v13990 = vpop.f32.mrf.mxu0
  %v13991 = vadd.f32 %v13938, %v13990
  %v13992 = vpop.f32.mrf.mxu0
  %v13993 = vadd.f32 %v13940, %v13992
  %v13994 = vpop.f32.mrf.mxu0
  %v13995 = vadd.f32 %v13942, %v13994
  %v13996 = vpop.f32.mrf.mxu0
  %v13997 = vadd.f32 %v13944, %v13996
  %13998 = vmatprep.mubr.bf16.mxu0 %v12342
  %13999 = vmatmul.mubr.bf16.gmra.mxu0 %v12341
  %v14000 = vpop.f32.mrf.mxu0
  %v14001 = vadd.f32 %v13948, %v14000
  %v14002 = vpop.f32.mrf.mxu0
  %v14003 = vadd.f32 %v13950, %v14002
  %v14004 = vpop.f32.mrf.mxu0
  %v14005 = vadd.f32 %v13952, %v14004
  %v14006 = vpop.f32.mrf.mxu0
  %v14007 = vadd.f32 %v13954, %v14006
  %14008 = vdwg.mxu0
  %14009 = vmatprep.subr.bf16.mxu0 %v13386
  %14010 = vmatpush1.bf16.msra.mxu0 %v13385
  %14011 = vmatprep.subr.bf16.mxu0 %v13384
  %14012 = vmatpush1.bf16.msra.mxu0 %v13383
  %14013 = vmatprep.subr.bf16.mxu0 %v13382
  %14014 = vmatpush1.bf16.msra.mxu0 %v13381
  %14015 = vmatprep.subr.bf16.mxu0 %v13380
  %14016 = vmatpush1.bf16.msra.mxu0 %v13379
  %14017 = vmatprep.subr.bf16.mxu0 %v13378
  %14018 = vmatpush1.bf16.msra.mxu0 %v13377
  %14019 = vmatprep.subr.bf16.mxu0 %v13376
  %14020 = vmatpush1.bf16.msra.mxu0 %v13375
  %14021 = vmatprep.subr.bf16.mxu0 %v13374
  %14022 = vmatpush1.bf16.msra.mxu0 %v13373
  %14023 = vmatprep.subr.bf16.mxu0 %v13372
  %14024 = vmatpush1.bf16.msra.mxu0 %v13371
  %14025 = vmatprep.subr.bf16.mxu0 %v13402
  %14026 = vmatpush2.bf16.msra.mxu0 %v13401
  %14027 = vmatprep.subr.bf16.mxu0 %v13400
  %14028 = vmatpush2.bf16.msra.mxu0 %v13399
  %14029 = vmatprep.subr.bf16.mxu0 %v13398
  %14030 = vmatpush2.bf16.msra.mxu0 %v13397
  %14031 = vmatprep.subr.bf16.mxu0 %v13396
  %14032 = vmatpush2.bf16.msra.mxu0 %v13395
  %14033 = vmatprep.subr.bf16.mxu0 %v13394
  %14034 = vmatpush2.bf16.msra.mxu0 %v13393
  %14035 = vmatprep.subr.bf16.mxu0 %v13392
  %14036 = vmatpush2.bf16.msra.mxu0 %v13391
  %14037 = vmatprep.subr.bf16.mxu0 %v13390
  %14038 = vmatpush2.bf16.msra.mxu0 %v13389
  %14039 = vmatprep.subr.bf16.mxu0 %v13388
  %14040 = vmatpush2.bf16.msra.mxu0 %v13387
  %14041 = vmatprep.mubr.bf16.mxu0 %v12232
  %14042 = vmatmul.mubr.bf16.gmra.mxu0 %v12231
  %v14043 = vpop.f32.mrf.mxu0
  %v14044 = vadd.f32 %v13991, %v14043
  %v14045 = vpop.f32.mrf.mxu0
  %v14046 = vadd.f32 %v13993, %v14045
  %v14047 = vpop.f32.mrf.mxu0
  %v14048 = vadd.f32 %v13995, %v14047
  %v14049 = vpop.f32.mrf.mxu0
  %v14050 = vadd.f32 %v13997, %v14049
  %14051 = vmatprep.mubr.bf16.mxu0 %v12376
  %14052 = vmatmul.mubr.bf16.gmra.mxu0 %v12375
  %v14053 = vpop.f32.mrf.mxu0
  %v14054 = vadd.f32 %v14001, %v14053
  %v14055 = vpop.f32.mrf.mxu0
  %v14056 = vadd.f32 %v14003, %v14055
  %v14057 = vpop.f32.mrf.mxu0
  %v14058 = vadd.f32 %v14005, %v14057
  %v14059 = vpop.f32.mrf.mxu0
  %v14060 = vadd.f32 %v14007, %v14059
  %14061 = vdwg.mxu0
  %14062 = vmatprep.subr.bf16.mxu0 %v13418
  %14063 = vmatpush1.bf16.msra.mxu0 %v13417
  %14064 = vmatprep.subr.bf16.mxu0 %v13416
  %14065 = vmatpush1.bf16.msra.mxu0 %v13415
  %14066 = vmatprep.subr.bf16.mxu0 %v13414
  %14067 = vmatpush1.bf16.msra.mxu0 %v13413
  %14068 = vmatprep.subr.bf16.mxu0 %v13412
  %14069 = vmatpush1.bf16.msra.mxu0 %v13411
  %14070 = vmatprep.subr.bf16.mxu0 %v13410
  %14071 = vmatpush1.bf16.msra.mxu0 %v13409
  %14072 = vmatprep.subr.bf16.mxu0 %v13408
  %14073 = vmatpush1.bf16.msra.mxu0 %v13407
  %14074 = vmatprep.subr.bf16.mxu0 %v13406
  %14075 = vmatpush1.bf16.msra.mxu0 %v13405
  %14076 = vmatprep.subr.bf16.mxu0 %v13404
  %14077 = vmatpush1.bf16.msra.mxu0 %v13403
  %14078 = vmatprep.subr.bf16.mxu0 %v13434
  %14079 = vmatpush2.bf16.msra.mxu0 %v13433
  %14080 = vmatprep.subr.bf16.mxu0 %v13432
  %14081 = vmatpush2.bf16.msra.mxu0 %v13431
  %14082 = vmatprep.subr.bf16.mxu0 %v13430
  %14083 = vmatpush2.bf16.msra.mxu0 %v13429
  %14084 = vmatprep.subr.bf16.mxu0 %v13428
  %14085 = vmatpush2.bf16.msra.mxu0 %v13427
  %14086 = vmatprep.subr.bf16.mxu0 %v13426
  %14087 = vmatpush2.bf16.msra.mxu0 %v13425
  %14088 = vmatprep.subr.bf16.mxu0 %v13424
  %14089 = vmatpush2.bf16.msra.mxu0 %v13423
  %14090 = vmatprep.subr.bf16.mxu0 %v13422
  %14091 = vmatpush2.bf16.msra.mxu0 %v13421
  %14092 = vmatprep.subr.bf16.mxu0 %v13420
  %14093 = vmatpush2.bf16.msra.mxu0 %v13419
  %14094 = vmatprep.mubr.bf16.mxu0 %v12234
  %14095 = vmatmul.mubr.bf16.gmra.mxu0 %v12233
  %v14096 = vpop.f32.mrf.mxu0
  %v14097 = vadd.f32 %v14044, %v14096
  %v14098 = vpop.f32.mrf.mxu0
  %v14099 = vadd.f32 %v14046, %v14098
  %v14100 = vpop.f32.mrf.mxu0
  %v14101 = vadd.f32 %v14048, %v14100
  %v14102 = vpop.f32.mrf.mxu0
  %v14103 = vadd.f32 %v14050, %v14102
  %14104 = vmatprep.mubr.bf16.mxu0 %v12378
  %14105 = vmatmul.mubr.bf16.gmra.mxu0 %v12377
  %v14106 = vpop.f32.mrf.mxu0
  %v14107 = vadd.f32 %v14054, %v14106
  %v14108 = vpop.f32.mrf.mxu0
  %v14109 = vadd.f32 %v14056, %v14108
  %v14110 = vpop.f32.mrf.mxu0
  %v14111 = vadd.f32 %v14058, %v14110
  %v14112 = vpop.f32.mrf.mxu0
  %v14113 = vadd.f32 %v14060, %v14112
  %14114 = vdwg.mxu0
  %vm14115 = vcmp.ge.f32.partialorder %v14097, 0.0
  %vm14116 = vcmp.ge.f32.partialorder %v14099, 0.0
  %vm14117 = vcmp.ge.f32.partialorder %v14101, 0.0
  %vm14118 = vcmp.ge.f32.partialorder %v14103, 0.0
  %vm14119 = vcmp.ge.f32.partialorder %v14107, 0.0
  %vm14120 = vcmp.ge.f32.partialorder %v14109, 0.0
  %vm14121 = vcmp.ge.f32.partialorder %v14111, 0.0
  %vm14122 = vcmp.ge.f32.partialorder %v14113, 0.0
  %v14123 = vmul.f32 %v14097, 0.2
  %v14124 = vmul.f32 %v14099, 0.2
  %v14125 = vmul.f32 %v14101, 0.2
  %v14126 = vmul.f32 %v14103, 0.2
  %v14127 = vmul.f32 %v14107, 0.2
  %v14128 = vmul.f32 %v14109, 0.2
  %v14129 = vmul.f32 %v14111, 0.2
  %v14130 = vmul.f32 %v14113, 0.2
  %v14131 = vsel %vm14115, %v14097, %v14123
  %v14132 = vsel %vm14116, %v14099, %v14124
  %v14133 = vsel %vm14117, %v14101, %v14125
  %v14134 = vsel %vm14118, %v14103, %v14126
  %v14135 = vsel %vm14119, %v14107, %v14127
  %v14136 = vsel %vm14120, %v14109, %v14128
  %v14137 = vsel %vm14121, %v14111, %v14129
  %v14138 = vsel %vm14122, %v14113, %v14130
  %v14139 = vld [vmem:[%s5] sm:$0x3]
  %v14140 = vld [vmem:[%s6] sm:$0x3]
  %v14141 = vadd.f32 %v14131, %v14133
  %v14142 = vadd.f32 %v14141, %v14135
  %v14143 = vadd.f32 %v14142, %v14137
  %v14144 = vrot.slane %v14143, 4
  %v14145 = vadd.f32 %v14143, %v14144
  %v14146 = vrot.slane %v14145, 2
  %v14147 = vadd.f32 %v14145, %v14146
  %v14148 = vrot.slane %v14147, 1
  %v14149 = vadd.f32 %v14147, %v14148
  %v14150 = vadd.f32 %v14132, %v14134
  %v14151 = vadd.f32 %v14150, %v14136
  %v14152 = vadd.f32 %v14151, %v14138
  %v14153 = vrot.slane %v14152, 4
  %v14154 = vadd.f32 %v14152, %v14153
  %v14155 = vrot.slane %v14154, 2
  %v14156 = vadd.f32 %v14154, %v14155
  %v14157 = vrot.slane %v14156, 1
  %v14158 = vadd.f32 %v14156, %v14157
  %v14159 = vrcp.pop 32.0
  %v14160 = vmul.f32 %v14149, %v14159
  %v14161 = vmul.f32 %v14158, %v14159
  %v14162 = vsub.f32 %v14131, %v14160
  %v14163 = vsub.f32 %v14132, %v14161
  %v14164 = vsub.f32 %v14133, %v14160
  %v14165 = vsub.f32 %v14134, %v14161
  %v14166 = vsub.f32 %v14135, %v14160
  %v14167 = vsub.f32 %v14136, %v14161
  %v14168 = vsub.f32 %v14137, %v14160
  %v14169 = vsub.f32 %v14138, %v14161
  %v14170 = vmul.f32 %v14162, %v14162
  %v14171 = vmul.f32 %v14163, %v14163
  %v14172 = vmul.f32 %v14164, %v14164
  %v14173 = vmul.f32 %v14165, %v14165
  %v14174 = vmul.f32 %v14166, %v14166
  %v14175 = vmul.f32 %v14167, %v14167
  %v14176 = vmul.f32 %v14168, %v14168
  %v14177 = vmul.f32 %v14169, %v14169
  %v14178 = vadd.f32 %v14170, %v14172
  %v14179 = vadd.f32 %v14178, %v14174
  %v14180 = vadd.f32 %v14179, %v14176
  %v14181 = vrot.slane %v14180, 4
  %v14182 = vadd.f32 %v14180, %v14181
  %v14183 = vrot.slane %v14182, 2
  %v14184 = vadd.f32 %v14182, %v14183
  %v14185 = vrot.slane %v14184, 1
  %v14186 = vadd.f32 %v14184, %v14185
  %v14187 = vadd.f32 %v14171, %v14173
  %v14188 = vadd.f32 %v14187, %v14175
  %v14189 = vadd.f32 %v14188, %v14177
  %v14190 = vrot.slane %v14189, 4
  %v14191 = vadd.f32 %v14189, %v14190
  %v14192 = vrot.slane %v14191, 2
  %v14193 = vadd.f32 %v14191, %v14192
  %v14194 = vrot.slane %v14193, 1
  %v14195 = vadd.f32 %v14193, %v14194
  %v14196 = vmul.f32 %v14186, %v14159
  %v14197 = vmul.f32 %v14195, %v14159
  %v14198 = vadd.f32 %v14196, 1e-05
  %v14199 = vadd.f32 %v14197, 1e-05
  %v14200 = vrsqrt.pop %v14198
  %v14201 = vrsqrt.pop %v14199
  %v14202 = vmul.f32 %v14162, %v14200
  %v14203 = vmul.f32 %v14163, %v14201
  %v14204 = vmul.f32 %v14164, %v14200
  %v14205 = vmul.f32 %v14165, %v14201
  %v14206 = vmul.f32 %v14166, %v14200
  %v14207 = vmul.f32 %v14167, %v14201
  %v14208 = vmul.f32 %v14168, %v14200
  %v14209 = vmul.f32 %v14169, %v14201
  %v14211 = vlaneseq
  %v14212 = vshrl.u32 %v14211, 7
  %v14213 = vsub.s32 0, %v14212
  %v14214 = vrot.slane %v14139, %v14213
  %v14215 = vlaneseq
  %v14216 = vshrl.u32 %v14215, 7
  %v14217 = vsub.s32 1, %v14216
  %v14218 = vrot.slane %v14139, %v14217
  %v14221 = vmul.f32 %v14202, %v14214
  %v14222 = vmul.f32 %v14203, %v14218
  %v14223 = vmul.f32 %v14204, %v14214
  %v14224 = vmul.f32 %v14205, %v14218
  %v14225 = vmul.f32 %v14206, %v14214
  %v14226 = vmul.f32 %v14207, %v14218
  %v14227 = vmul.f32 %v14208, %v14214
  %v14228 = vmul.f32 %v14209, %v14218
  %v14230 = vlaneseq
  %v14231 = vshrl.u32 %v14230, 7
  %v14232 = vsub.s32 0, %v14231
  %v14233 = vrot.slane %v14140, %v14232
  %v14234 = vlaneseq
  %v14235 = vshrl.u32 %v14234, 7
  %v14236 = vsub.s32 1, %v14235
  %v14237 = vrot.slane %v14140, %v14236
  %v14240 = vadd.f32 %v14221, %v14233
  %v14241 = vadd.f32 %v14222, %v14237
  %v14242 = vadd.f32 %v14223, %v14233
  %v14243 = vadd.f32 %v14224, %v14237
  %v14244 = vadd.f32 %v14225, %v14233
  %v14245 = vadd.f32 %v14226, %v14237
  %v14246 = vadd.f32 %v14227, %v14233
  %v14247 = vadd.f32 %v14228, %v14237
  %v14248 = vld [vmem:[%s7] sm:$0xff]
  %v14249 = vld [vmem:[%s7 + $0x8] sm:$0xff]
  %v14250 = vld [vmem:[%s7 + $0x10] sm:$0xff]
  %v14251 = vld [vmem:[%s7 + $0x18] sm:$0xff]
  %v14252 = vmul.f32 %v14240, %v14248
  %v14253 = vmul.f32 %v14241, %v14249
  %v14254 = vmul.f32 %v14242, %v14250
  %v14255 = vmul.f32 %v14243, %v14251
  %v14256 = vmul.f32 %v14244, %v14248
  %v14257 = vmul.f32 %v14245, %v14249
  %v14258 = vmul.f32 %v14246, %v14250
  %v14259 = vmul.f32 %v14247, %v14251
  %v14260 = vadd.f32 %v14252, %v14253
  %14261 = vadd.xlane.f32.xlu0 %v14260
  %v14262 = vpop.xlane.xlu0 %14261
  %v14263 = vadd.f32 %v14254, %v14255
  %14264 = vadd.xlane.f32.xlu0 %v14263
  %v14265 = vpop.xlane.xlu0 %14264
  %v14266 = vadd.f32 %v14256, %v14257
  %14267 = vadd.xlane.f32.xlu0 %v14266
  %v14268 = vpop.xlane.xlu0 %14267
  %v14269 = vadd.f32 %v14258, %v14259
  %14270 = vadd.xlane.f32.xlu0 %v14269
  %v14271 = vpop.xlane.xlu0 %14270
  %v14276 = vlaneseq
  %v14277 = vand.u32 %v14276, 127
  %v14278 = vlaneseq
  %v14279 = vshrl.u32 %v14278, 7
  %v14280 = vsub.s32 %v14277, %v14279
  %v14281 = vrot.slane %v14262, %v14280
  %v14282 = vadd.s32 %v14277, 4294967288
  %v14283 = vlaneseq
  %v14284 = vshrl.u32 %v14283, 7
  %v14285 = vsub.s32 %v14282, %v14284
  %v14286 = vrot.slane %v14265, %v14285
  %vm14287 = vcmask 130112
  %v14288 = vsel %vm14287, %v14286, %v14281
  %v14289 = vlaneseq
  %v14290 = vshrl.u32 %v14289, 7
  %v14291 = vsub.s32 %v14277, %v14290
  %v14292 = vrot.slane %v14268, %v14291
  %v14293 = vlaneseq
  %v14294 = vshrl.u32 %v14293, 7
  %v14295 = vsub.s32 %v14282, %v14294
  %v14296 = vrot.slane %v14271, %v14295
  %v14297 = vsel %vm14287, %v14296, %v14292
  %v14298 = vsel %vm2815, %v14297, %v14288
  %vm14300 = vcmask 123904
  %v14301 = vsel %vm14300, %v14298, 0.0
  %14302 = vadd.xlane.f32.xlu0 %v14301
  %v14303 = vpop.xlane.xlu0 %14302
  %v14304 = vxor.u32 %v14303, 2147483648
  %v14305 = vmul.f32 %v14304, 1.442695
  %v14306 = vpow.pop %v14305
  %v14307 = vadd.f32 %v14306, 1.0
  %v14308 = vrcp.pop %v14307
  %v14309 = vmul.f32 1.0, %v14308
  %vm14310 = vcmask 1024
  %14311 = vst.msk [vmem:[%s8] sm:$0x3] %vm14310, %v14309
  // Predicated region
  $region34: #{discriminator_forward.3} parent=0 // pred_check
    _
  $region35: #{discriminator_forward.3} parent=0 // pred_check_branch
    %14313 = sbr.rel (0) target = $region37
  $region36: #{discriminator_forward.3} parent=0 // pred_region
    _
  $region37: #{discriminator_forward.3} parent=0 // pred_fallthru
    _
  // Predicated region
  $region38: #{discriminator_forward.3} parent=0 // pred_check
    _
  $region39: #{discriminator_forward.3} parent=0 // pred_check_branch
    %14315 = sbr.rel (0) target = $region41
  $region40: #{discriminator_forward.3} parent=0 // pred_region
    _
  $region41: #{discriminator_forward.3} parent=0 // pred_fallthru
    _

</llo_original>
